<compile_context>
chip_gen: v7x
topology: tpu7x:2x2x1
jax: 0.10.0
libtpu: 0.0.40
codegen_flags: <defaults>
</compile_context>

<pallas_src>
import functools

import jax
import jax.numpy as jnp
from jax import lax
from jax.experimental import pallas as pl
from jax.experimental.pallas import tpu as pltpu

D_IN = 1024 * 3          # 3072
H1, H2, H3 = 1024, 512, 256
OUT_PAD = 128            # fc4 true output dim is 1; padded for lane-dense stores
DROP_P = 0.3
NEG_SLOPE = 0.2
_KEEP_SCALE = 1.0 / (1.0 - DROP_P)
# keep element iff hash_bits >= threshold  ->  P(keep) = 1 - DROP_P
_DROP_THRESH = int(DROP_P * (1 << 32)) & 0xFFFFFFFF


def _round_up(x, m):
    return (x + m - 1) // m * m


def _cdiv(a, b):
    return (a + b - 1) // b


def _mix32(x):
    """splitmix32-style integer hash on uint32 values.

    Pure VPU integer ops (xor/shift/mul) so it lowers on TPU Mosaic *and* in
    interpret mode -- unlike pltpu.prng_seed / prng_random_bits.
    """
    x = x ^ (x >> jnp.uint32(16))
    x = x * jnp.uint32(0x7FEB352D)
    x = x ^ (x >> jnp.uint32(15))
    x = x * jnp.uint32(0x846CA68B)
    x = x ^ (x >> jnp.uint32(16))
    return x


# ----------------------------------------------------------------------------
# Fused MLP kernel: one grid axis over batch tiles; all weights VMEM-resident.
# ----------------------------------------------------------------------------
def _disc_kernel(seed_ref,                      # scalar-prefetch (SMEM)
                 x_ref, w1_ref, b1_ref, w2_ref, b2_ref,
                 w3_ref, b3_ref, w4_ref, b4_ref,
                 o_ref, *, training):
    if training:
        # Per-tile salt: decorrelates dropout masks across batch tiles.
        seed_u = seed_ref[0].astype(jnp.uint32)
        pid_u = pl.program_id(0).astype(jnp.uint32)
        base_salt = _mix32(seed_u ^ (pid_u * jnp.uint32(0x9E3779B9)))

    def leaky(h):
        return jnp.maximum(h, h * jnp.asarray(NEG_SLOPE, h.dtype))

    def dropout(h, layer_salt):
        if not training:
            return h
        rows = lax.broadcasted_iota(jnp.int32, h.shape, 0)
        cols = lax.broadcasted_iota(jnp.int32, h.shape, 1)
        idx = (rows * h.shape[1] + cols).astype(jnp.uint32)
        bits = _mix32(idx ^ base_salt ^ jnp.uint32(layer_salt))
        keep = bits >= jnp.uint32(_DROP_THRESH)          # direct 32-bit compare
        scale = jnp.asarray(_KEEP_SCALE, h.dtype)
        return jnp.where(keep, h * scale, jnp.zeros_like(h))

    # Cast activations to bf16 on-chip (input may arrive as f32).
    x = x_ref[...].astype(jnp.bfloat16)                  # (tm, 3072)

    h = jnp.dot(x, w1_ref[...], preferred_element_type=jnp.float32) + b1_ref[...]
    h = dropout(leaky(h.astype(jnp.bfloat16)), 0x85EBCA6B)   # (tm, 1024) bf16

    h = jnp.dot(h, w2_ref[...], preferred_element_type=jnp.float32) + b2_ref[...]
    h = dropout(leaky(h.astype(jnp.bfloat16)), 0xC2B2AE35)   # (tm, 512) bf16

    h = jnp.dot(h, w3_ref[...], preferred_element_type=jnp.float32) + b3_ref[...]
    h = dropout(leaky(h.astype(jnp.bfloat16)), 0x27D4EB2F)   # (tm, 256) bf16

    logits = jnp.dot(h, w4_ref[...], preferred_element_type=jnp.float32) + b4_ref[...]
    o_ref[...] = jax.nn.sigmoid(logits)                  # (tm, 128); col 0 is real


def _const_spec(shape):
    """BlockSpec for a weight/bias block that is resident for the whole grid.

    Constant index_map -> never re-fetched; single-buffer it when the JAX
    version supports pipeline_mode so weight VMEM is ~7.3 MiB instead of ~14.6.
    """
    index_map = lambda i, *_: (0,) * len(shape)
    if hasattr(pl, "Buffered"):
        try:
            return pl.BlockSpec(shape, index_map, pipeline_mode=pl.Buffered(1))
        except TypeError:
            pass
    return pl.BlockSpec(shape, index_map)


# ----------------------------------------------------------------------------
# One-time weight preparation (hoisted out of the per-step hot path)
# ----------------------------------------------------------------------------
def prepare_params(params):
    """Convert torch nn.Linear layout (out,in)/(out,) -> kernel layout:
    (in,out) bf16 weights, f32 row biases, fc4 padded to 128 zero columns."""
    w4 = jnp.zeros((H3, OUT_PAD), jnp.bfloat16).at[:, :1].set(
        params["fc4_w"].T.astype(jnp.bfloat16))
    b4 = jnp.zeros((1, OUT_PAD), jnp.float32).at[:, :1].set(
        params["fc4_b"].astype(jnp.float32)[None, :])
    return {
        "w1": params["fc1_w"].T.astype(jnp.bfloat16),
        "b1": params["fc1_b"].astype(jnp.float32)[None, :],
        "w2": params["fc2_w"].T.astype(jnp.bfloat16),
        "b2": params["fc2_b"].astype(jnp.float32)[None, :],
        "w3": params["fc3_w"].T.astype(jnp.bfloat16),
        "b3": params["fc3_b"].astype(jnp.float32)[None, :],
        "w4": w4,
        "b4": b4,
    }


# ----------------------------------------------------------------------------
# Wrapper
# ----------------------------------------------------------------------------
def discriminator_forward(prepped, x, seed=0, training=True):
    """prepped: output of prepare_params; x: (B, 1024, 3) or (B, 3072).
    Returns sigmoid(fc4(...)) of shape (B, 1), float32."""
    B = x.shape[0]
    xf = x.reshape(B, D_IN)          # no cast here; kernel casts on-chip

    # Batch tile: multiple of 16 (bf16 sublane packing), capped at 256, sized
    # so there are >=2 tiles when B allows (dual-TensorCore v7x sharding).
    tm = max(16, min(256, _round_up(_cdiv(B, 2), 16)))
    Mp = _round_up(B, tm)
    if Mp != B:                      # only pad the ragged edge
        xf = jnp.zeros((Mp, D_IN), xf.dtype).at[:B].set(xf)

    seed_arr = jnp.asarray([seed], jnp.int32)
    kernel = functools.partial(_disc_kernel, training=training)

    out = pl.pallas_call(
        kernel,
        out_shape=jax.ShapeDtypeStruct((Mp, OUT_PAD), jnp.float32),
        grid_spec=pltpu.PrefetchScalarGridSpec(
            num_scalar_prefetch=1,
            grid=(Mp // tm,),
            in_specs=[
                pl.BlockSpec((tm, D_IN), lambda i, *_: (i, 0)),   # x tile
                _const_spec((D_IN, H1)),                          # W1 (resident)
                _const_spec((1, H1)),                             # b1
                _const_spec((H1, H2)),                            # W2
                _const_spec((1, H2)),                             # b2
                _const_spec((H2, H3)),                            # W3
                _const_spec((1, H3)),                             # b3
                _const_spec((H3, OUT_PAD)),                       # W4 (padded)
                _const_spec((1, OUT_PAD)),                        # b4 (padded)
            ],
            out_specs=pl.BlockSpec((tm, OUT_PAD), lambda i, *_: (i, 0)),
        ),
        compiler_params=pltpu.CompilerParams(
            dimension_semantics=("parallel",),
            # ~7.3 MiB single-buffered weights + f32 x tile (<=3 MiB x2) +
            # padded output: well under 32 MiB even at tm=256, above v5e's
            # 16 MiB default scoped limit, with headroom on v7x's 64 MiB.
            vmem_limit_bytes=32 * 1024 * 1024,
        ),
    )(seed_arr, xf,
      prepped["w1"], prepped["b1"], prepped["w2"], prepped["b2"],
      prepped["w3"], prepped["b3"], prepped["w4"], prepped["b4"])

    return out[:B, :1]


# ----------------------------------------------------------------------------
# Parameter init (matches nn.Linear default uniform init; torch layout)
# ----------------------------------------------------------------------------
def init_params(key):
    dims = [("fc1", D_IN, H1), ("fc2", H1, H2), ("fc3", H2, H3), ("fc4", H3, 1)]
    params = {}
    keys = jax.random.split(key, 2 * len(dims))
    for n, (name, fan_in, fan_out) in enumerate(dims):
        bound = float(fan_in) ** -0.5
        params[name + "_w"] = jax.random.uniform(
            keys[2 * n], (fan_out, fan_in), jnp.float32, -bound, bound)
        params[name + "_b"] = jax.random.uniform(
            keys[2 * n + 1], (fan_out,), jnp.float32, -bound, bound)
    return params


if __name__ == "__main__":
    key = jax.random.PRNGKey(0)
    k_x, k_p = jax.random.split(key)
    B = 4
    x = jax.random.normal(k_x, (B, 1024, 3), jnp.float32)   # (B, 1024, 3) point cloud
    params = init_params(k_p)
    prepped = prepare_params(params)                         # one-time weight prep

    # TODO(synk): at the real training call-site, prefetch the ~7.3 MiB of
    # prepared weights across pallas_calls (P10) so the cold weight load hides
    # behind the preceding generator step.
    fwd = jax.jit(functools.partial(discriminator_forward, seed=0, training=True))
    out = fwd(prepped, x)
    jax.block_until_ready(out)

    assert out.shape == (B, 1)
    assert bool(jnp.all(jnp.isfinite(out)))
    assert bool(jnp.all((out >= 0.0) & (out <= 1.0)))
    print("KERNEL_OK")
</pallas_src>

<mosaic_0001>
module attributes {stable_mosaic.version = 11 : i64} {
  func.func @_disc_kernel(%arg0: i32, %arg1: memref<1xi32, #tpu.memory_space<smem>>, %arg2: memref<16x3072xf32, #tpu.memory_space<vmem>>, %arg3: memref<3072x1024xbf16, #tpu.memory_space<vmem>>, %arg4: memref<1x1024xf32, #tpu.memory_space<vmem>>, %arg5: memref<1024x512xbf16, #tpu.memory_space<vmem>>, %arg6: memref<1x512xf32, #tpu.memory_space<vmem>>, %arg7: memref<512x256xbf16, #tpu.memory_space<vmem>>, %arg8: memref<1x256xf32, #tpu.memory_space<vmem>>, %arg9: memref<256x128xbf16, #tpu.memory_space<vmem>>, %arg10: memref<1x128xf32, #tpu.memory_space<vmem>>, %arg11: memref<16x128xf32, #tpu.memory_space<vmem>>) attributes {dimension_semantics = [#tpu.dimension_semantics<parallel>], iteration_bounds = array<i64: 1>, scalar_prefetch = 1 : i64, scratch_operands = 0 : i64, tpu.core_type = #tpu.core_type<tc>, window_params = [{transform_indices = @transform_0, window_bounds = array<i64: 16, 3072>}, {pipeline_mode = #tpu.pipeline_mode<synchronous>, transform_indices = @transform_1, window_bounds = array<i64: 3072, 1024>}, {pipeline_mode = #tpu.pipeline_mode<synchronous>, transform_indices = @transform_2, window_bounds = array<i64: 1, 1024>}, {pipeline_mode = #tpu.pipeline_mode<synchronous>, transform_indices = @transform_3, window_bounds = array<i64: 1024, 512>}, {pipeline_mode = #tpu.pipeline_mode<synchronous>, transform_indices = @transform_4, window_bounds = array<i64: 1, 512>}, {pipeline_mode = #tpu.pipeline_mode<synchronous>, transform_indices = @transform_5, window_bounds = array<i64: 512, 256>}, {pipeline_mode = #tpu.pipeline_mode<synchronous>, transform_indices = @transform_6, window_bounds = array<i64: 1, 256>}, {pipeline_mode = #tpu.pipeline_mode<synchronous>, transform_indices = @transform_7, window_bounds = array<i64: 256, 128>}, {pipeline_mode = #tpu.pipeline_mode<synchronous>, transform_indices = @transform_8, window_bounds = array<i64: 1, 128>}, {transform_indices = @transform_9, window_bounds = array<i64: 16, 128>}]} {
    %c0 = arith.constant 0 : index
    %0 = memref.load %arg1[%c0] : memref<1xi32, #tpu.memory_space<smem>>
    %c-1640531527_i32 = arith.constant -1640531527 : i32
    %1 = arith.muli %arg0, %c-1640531527_i32 : i32
    %2 = arith.xori %0, %1 : i32
    %c16_i32 = arith.constant 16 : i32
    %3 = arith.shrui %2, %c16_i32 : i32
    %4 = arith.xori %2, %3 : i32
    %c2146121005_i32 = arith.constant 2146121005 : i32
    %5 = arith.muli %4, %c2146121005_i32 : i32
    %c15_i32 = arith.constant 15 : i32
    %6 = arith.shrui %5, %c15_i32 : i32
    %7 = arith.xori %5, %6 : i32
    %c-2073254261_i32 = arith.constant -2073254261 : i32
    %8 = arith.muli %7, %c-2073254261_i32 : i32
    %c16_i32_0 = arith.constant 16 : i32
    %9 = arith.shrui %8, %c16_i32_0 : i32
    %10 = arith.xori %8, %9 : i32
    %c0_1 = arith.constant 0 : index
    %c0_2 = arith.constant 0 : index
    %11 = vector.load %arg2[%c0_1, %c0_2] : memref<16x3072xf32, #tpu.memory_space<vmem>>, vector<16x3072xf32>
    %12 = arith.truncf %11 : vector<16x3072xf32> to vector<16x3072xbf16>
    %c0_3 = arith.constant 0 : index
    %c0_4 = arith.constant 0 : index
    %13 = vector.load %arg3[%c0_3, %c0_4] : memref<3072x1024xbf16, #tpu.memory_space<vmem>>, vector<3072x1024xbf16>
    %cst = arith.constant dense<0.000000e+00> : vector<16x1024xf32>
    %14 = tpu.matmul %12, %13, %cst {dimension_numbers = #tpu.dot_dimension_numbers<[1], [0], [0], [1], [0, 0, 1, 1], [], []>} : vector<16x3072xbf16>, vector<3072x1024xbf16>, vector<16x1024xf32> -> vector<16x1024xf32>
    %c0_5 = arith.constant 0 : index
    %c0_6 = arith.constant 0 : index
    %15 = vector.load %arg4[%c0_5, %c0_6] : memref<1x1024xf32, #tpu.memory_space<vmem>>, vector<1x1024xf32>
    %16 = vector.broadcast %15 : vector<1x1024xf32> to vector<16x1024xf32>
    %17 = arith.addf %14, %16 : vector<16x1024xf32>
    %18 = arith.truncf %17 : vector<16x1024xf32> to vector<16x1024xbf16>
    %cst_7 = arith.constant 2.001950e-01 : bf16
    %19 = vector.broadcast %cst_7 : bf16 to vector<16x1024xbf16>
    %20 = arith.mulf %18, %19 : vector<16x1024xbf16>
    %21 = arith.maximumf %18, %20 : vector<16x1024xbf16>
    %22 = tpu.iota {dimensions = array<i32: 0>} : vector<16x1024xi32>
    %23 = tpu.iota {dimensions = array<i32: 1>} : vector<16x1024xi32>
    %c1024_i32 = arith.constant 1024 : i32
    %24 = vector.broadcast %c1024_i32 : i32 to vector<16x1024xi32>
    %25 = arith.muli %22, %24 : vector<16x1024xi32>
    %26 = arith.addi %25, %23 : vector<16x1024xi32>
    %27 = vector.broadcast %10 : i32 to vector<16x1024xi32>
    %28 = arith.xori %26, %27 : vector<16x1024xi32>
    %c-2048144789_i32 = arith.constant -2048144789 : i32
    %29 = vector.broadcast %c-2048144789_i32 : i32 to vector<16x1024xi32>
    %30 = arith.xori %28, %29 : vector<16x1024xi32>
    %c16_i32_8 = arith.constant 16 : i32
    %31 = vector.broadcast %c16_i32_8 : i32 to vector<16x1024xi32>
    %32 = arith.shrui %30, %31 : vector<16x1024xi32>
    %33 = arith.xori %30, %32 : vector<16x1024xi32>
    %c2146121005_i32_9 = arith.constant 2146121005 : i32
    %34 = vector.broadcast %c2146121005_i32_9 : i32 to vector<16x1024xi32>
    %35 = arith.muli %33, %34 : vector<16x1024xi32>
    %c15_i32_10 = arith.constant 15 : i32
    %36 = vector.broadcast %c15_i32_10 : i32 to vector<16x1024xi32>
    %37 = arith.shrui %35, %36 : vector<16x1024xi32>
    %38 = arith.xori %35, %37 : vector<16x1024xi32>
    %c-2073254261_i32_11 = arith.constant -2073254261 : i32
    %39 = vector.broadcast %c-2073254261_i32_11 : i32 to vector<16x1024xi32>
    %40 = arith.muli %38, %39 : vector<16x1024xi32>
    %c16_i32_12 = arith.constant 16 : i32
    %41 = vector.broadcast %c16_i32_12 : i32 to vector<16x1024xi32>
    %42 = arith.shrui %40, %41 : vector<16x1024xi32>
    %43 = arith.xori %40, %42 : vector<16x1024xi32>
    %c1288490188_i32 = arith.constant 1288490188 : i32
    %44 = vector.broadcast %c1288490188_i32 : i32 to vector<16x1024xi32>
    %45 = arith.cmpi uge, %43, %44 : vector<16x1024xi32>
    %cst_13 = arith.constant 1.429690e+00 : bf16
    %46 = vector.broadcast %cst_13 : bf16 to vector<16x1024xbf16>
    %47 = arith.mulf %21, %46 : vector<16x1024xbf16>
    %cst_14 = arith.constant 0.000000e+00 : bf16
    %48 = vector.broadcast %cst_14 : bf16 to vector<16x1024xbf16>
    %49 = arith.select %45, %47, %48 : vector<16x1024xi1>, vector<16x1024xbf16>
    %c0_15 = arith.constant 0 : index
    %c0_16 = arith.constant 0 : index
    %50 = vector.load %arg5[%c0_15, %c0_16] : memref<1024x512xbf16, #tpu.memory_space<vmem>>, vector<1024x512xbf16>
    %cst_17 = arith.constant dense<0.000000e+00> : vector<16x512xf32>
    %51 = tpu.matmul %49, %50, %cst_17 {dimension_numbers = #tpu.dot_dimension_numbers<[1], [0], [0], [1], [0, 0, 1, 1], [], []>} : vector<16x1024xbf16>, vector<1024x512xbf16>, vector<16x512xf32> -> vector<16x512xf32>
    %c0_18 = arith.constant 0 : index
    %c0_19 = arith.constant 0 : index
    %52 = vector.load %arg6[%c0_18, %c0_19] : memref<1x512xf32, #tpu.memory_space<vmem>>, vector<1x512xf32>
    %53 = vector.broadcast %52 : vector<1x512xf32> to vector<16x512xf32>
    %54 = arith.addf %51, %53 : vector<16x512xf32>
    %55 = arith.truncf %54 : vector<16x512xf32> to vector<16x512xbf16>
    %cst_20 = arith.constant 2.001950e-01 : bf16
    %56 = vector.broadcast %cst_20 : bf16 to vector<16x512xbf16>
    %57 = arith.mulf %55, %56 : vector<16x512xbf16>
    %58 = arith.maximumf %55, %57 : vector<16x512xbf16>
    %59 = tpu.iota {dimensions = array<i32: 0>} : vector<16x512xi32>
    %60 = tpu.iota {dimensions = array<i32: 1>} : vector<16x512xi32>
    %c512_i32 = arith.constant 512 : i32
    %61 = vector.broadcast %c512_i32 : i32 to vector<16x512xi32>
    %62 = arith.muli %59, %61 : vector<16x512xi32>
    %63 = arith.addi %62, %60 : vector<16x512xi32>
    %64 = vector.broadcast %10 : i32 to vector<16x512xi32>
    %65 = arith.xori %63, %64 : vector<16x512xi32>
    %c-1028477387_i32 = arith.constant -1028477387 : i32
    %66 = vector.broadcast %c-1028477387_i32 : i32 to vector<16x512xi32>
    %67 = arith.xori %65, %66 : vector<16x512xi32>
    %c16_i32_21 = arith.constant 16 : i32
    %68 = vector.broadcast %c16_i32_21 : i32 to vector<16x512xi32>
    %69 = arith.shrui %67, %68 : vector<16x512xi32>
    %70 = arith.xori %67, %69 : vector<16x512xi32>
    %c2146121005_i32_22 = arith.constant 2146121005 : i32
    %71 = vector.broadcast %c2146121005_i32_22 : i32 to vector<16x512xi32>
    %72 = arith.muli %70, %71 : vector<16x512xi32>
    %c15_i32_23 = arith.constant 15 : i32
    %73 = vector.broadcast %c15_i32_23 : i32 to vector<16x512xi32>
    %74 = arith.shrui %72, %73 : vector<16x512xi32>
    %75 = arith.xori %72, %74 : vector<16x512xi32>
    %c-2073254261_i32_24 = arith.constant -2073254261 : i32
    %76 = vector.broadcast %c-2073254261_i32_24 : i32 to vector<16x512xi32>
    %77 = arith.muli %75, %76 : vector<16x512xi32>
    %c16_i32_25 = arith.constant 16 : i32
    %78 = vector.broadcast %c16_i32_25 : i32 to vector<16x512xi32>
    %79 = arith.shrui %77, %78 : vector<16x512xi32>
    %80 = arith.xori %77, %79 : vector<16x512xi32>
    %c1288490188_i32_26 = arith.constant 1288490188 : i32
    %81 = vector.broadcast %c1288490188_i32_26 : i32 to vector<16x512xi32>
    %82 = arith.cmpi uge, %80, %81 : vector<16x512xi32>
    %cst_27 = arith.constant 1.429690e+00 : bf16
    %83 = vector.broadcast %cst_27 : bf16 to vector<16x512xbf16>
    %84 = arith.mulf %58, %83 : vector<16x512xbf16>
    %cst_28 = arith.constant 0.000000e+00 : bf16
    %85 = vector.broadcast %cst_28 : bf16 to vector<16x512xbf16>
    %86 = arith.select %82, %84, %85 : vector<16x512xi1>, vector<16x512xbf16>
    %c0_29 = arith.constant 0 : index
    %c0_30 = arith.constant 0 : index
    %87 = vector.load %arg7[%c0_29, %c0_30] : memref<512x256xbf16, #tpu.memory_space<vmem>>, vector<512x256xbf16>
    %cst_31 = arith.constant dense<0.000000e+00> : vector<16x256xf32>
    %88 = tpu.matmul %86, %87, %cst_31 {dimension_numbers = #tpu.dot_dimension_numbers<[1], [0], [0], [1], [0, 0, 1, 1], [], []>} : vector<16x512xbf16>, vector<512x256xbf16>, vector<16x256xf32> -> vector<16x256xf32>
    %c0_32 = arith.constant 0 : index
    %c0_33 = arith.constant 0 : index
    %89 = vector.load %arg8[%c0_32, %c0_33] : memref<1x256xf32, #tpu.memory_space<vmem>>, vector<1x256xf32>
    %90 = vector.broadcast %89 : vector<1x256xf32> to vector<16x256xf32>
    %91 = arith.addf %88, %90 : vector<16x256xf32>
    %92 = arith.truncf %91 : vector<16x256xf32> to vector<16x256xbf16>
    %cst_34 = arith.constant 2.001950e-01 : bf16
    %93 = vector.broadcast %cst_34 : bf16 to vector<16x256xbf16>
    %94 = arith.mulf %92, %93 : vector<16x256xbf16>
    %95 = arith.maximumf %92, %94 : vector<16x256xbf16>
    %96 = tpu.iota {dimensions = array<i32: 0>} : vector<16x256xi32>
    %97 = tpu.iota {dimensions = array<i32: 1>} : vector<16x256xi32>
    %c256_i32 = arith.constant 256 : i32
    %98 = vector.broadcast %c256_i32 : i32 to vector<16x256xi32>
    %99 = arith.muli %96, %98 : vector<16x256xi32>
    %100 = arith.addi %99, %97 : vector<16x256xi32>
    %101 = vector.broadcast %10 : i32 to vector<16x256xi32>
    %102 = arith.xori %100, %101 : vector<16x256xi32>
    %c668265263_i32 = arith.constant 668265263 : i32
    %103 = vector.broadcast %c668265263_i32 : i32 to vector<16x256xi32>
    %104 = arith.xori %102, %103 : vector<16x256xi32>
    %c16_i32_35 = arith.constant 16 : i32
    %105 = vector.broadcast %c16_i32_35 : i32 to vector<16x256xi32>
    %106 = arith.shrui %104, %105 : vector<16x256xi32>
    %107 = arith.xori %104, %106 : vector<16x256xi32>
    %c2146121005_i32_36 = arith.constant 2146121005 : i32
    %108 = vector.broadcast %c2146121005_i32_36 : i32 to vector<16x256xi32>
    %109 = arith.muli %107, %108 : vector<16x256xi32>
    %c15_i32_37 = arith.constant 15 : i32
    %110 = vector.broadcast %c15_i32_37 : i32 to vector<16x256xi32>
    %111 = arith.shrui %109, %110 : vector<16x256xi32>
    %112 = arith.xori %109, %111 : vector<16x256xi32>
    %c-2073254261_i32_38 = arith.constant -2073254261 : i32
    %113 = vector.broadcast %c-2073254261_i32_38 : i32 to vector<16x256xi32>
    %114 = arith.muli %112, %113 : vector<16x256xi32>
    %c16_i32_39 = arith.constant 16 : i32
    %115 = vector.broadcast %c16_i32_39 : i32 to vector<16x256xi32>
    %116 = arith.shrui %114, %115 : vector<16x256xi32>
    %117 = arith.xori %114, %116 : vector<16x256xi32>
    %c1288490188_i32_40 = arith.constant 1288490188 : i32
    %118 = vector.broadcast %c1288490188_i32_40 : i32 to vector<16x256xi32>
    %119 = arith.cmpi uge, %117, %118 : vector<16x256xi32>
    %cst_41 = arith.constant 1.429690e+00 : bf16
    %120 = vector.broadcast %cst_41 : bf16 to vector<16x256xbf16>
    %121 = arith.mulf %95, %120 : vector<16x256xbf16>
    %cst_42 = arith.constant 0.000000e+00 : bf16
    %122 = vector.broadcast %cst_42 : bf16 to vector<16x256xbf16>
    %123 = arith.select %119, %121, %122 : vector<16x256xi1>, vector<16x256xbf16>
    %c0_43 = arith.constant 0 : index
    %c0_44 = arith.constant 0 : index
    %124 = vector.load %arg9[%c0_43, %c0_44] : memref<256x128xbf16, #tpu.memory_space<vmem>>, vector<256x128xbf16>
    %cst_45 = arith.constant dense<0.000000e+00> : vector<16x128xf32>
    %125 = tpu.matmul %123, %124, %cst_45 {dimension_numbers = #tpu.dot_dimension_numbers<[1], [0], [0], [1], [0, 0, 1, 1], [], []>} : vector<16x256xbf16>, vector<256x128xbf16>, vector<16x128xf32> -> vector<16x128xf32>
    %c0_46 = arith.constant 0 : index
    %c0_47 = arith.constant 0 : index
    %126 = vector.load %arg10[%c0_46, %c0_47] : memref<1x128xf32, #tpu.memory_space<vmem>>, vector<1x128xf32>
    %127 = vector.broadcast %126 : vector<1x128xf32> to vector<16x128xf32>
    %128 = arith.addf %125, %127 : vector<16x128xf32>
    %129 = arith.negf %128 : vector<16x128xf32>
    %130 = math.exp %129 : vector<16x128xf32>
    %cst_48 = arith.constant 1.000000e+00 : f32
    %131 = vector.broadcast %cst_48 : f32 to vector<16x128xf32>
    %132 = arith.addf %131, %130 : vector<16x128xf32>
    %133 = arith.divf %131, %132 : vector<16x128xf32>
    %c0_49 = arith.constant 0 : index
    %c0_50 = arith.constant 0 : index
    %134 = vector.load %arg11[%c0_49, %c0_50] : memref<16x128xf32, #tpu.memory_space<vmem>>, vector<16x128xf32>
    tpu.vector_store %arg11[%c0_49, %c0_50], %133 {strides = array<i32>} : memref<16x128xf32, #tpu.memory_space<vmem>>, vector<16x128xf32>,
    return
  }
  func.func @transform_0(%arg0: i32, %arg1: memref<1xi32, #tpu.memory_space<smem>>) -> (i32, i32) {
    %c0_i32 = arith.constant 0 : i32
    %c0_i32_0 = arith.constant 0 : i32
    return %arg0, %c0_i32 : i32, i32
  }
  func.func @transform_1(%arg0: i32, %arg1: memref<1xi32, #tpu.memory_space<smem>>) -> (i32, i32) {
    %c0_i32 = arith.constant 0 : i32
    %c0_i32_0 = arith.constant 0 : i32
    %c0_i32_1 = arith.constant 0 : i32
    return %c0_i32, %c0_i32_0 : i32, i32
  }
  func.func @transform_2(%arg0: i32, %arg1: memref<1xi32, #tpu.memory_space<smem>>) -> (i32, i32) {
    %c0_i32 = arith.constant 0 : i32
    %c0_i32_0 = arith.constant 0 : i32
    %c0_i32_1 = arith.constant 0 : i32
    return %c0_i32, %c0_i32_0 : i32, i32
  }
  func.func @transform_3(%arg0: i32, %arg1: memref<1xi32, #tpu.memory_space<smem>>) -> (i32, i32) {
    %c0_i32 = arith.constant 0 : i32
    %c0_i32_0 = arith.constant 0 : i32
    %c0_i32_1 = arith.constant 0 : i32
    return %c0_i32, %c0_i32_0 : i32, i32
  }
  func.func @transform_4(%arg0: i32, %arg1: memref<1xi32, #tpu.memory_space<smem>>) -> (i32, i32) {
    %c0_i32 = arith.constant 0 : i32
    %c0_i32_0 = arith.constant 0 : i32
    %c0_i32_1 = arith.constant 0 : i32
    return %c0_i32, %c0_i32_0 : i32, i32
  }
  func.func @transform_5(%arg0: i32, %arg1: memref<1xi32, #tpu.memory_space<smem>>) -> (i32, i32) {
    %c0_i32 = arith.constant 0 : i32
    %c0_i32_0 = arith.constant 0 : i32
    %c0_i32_1 = arith.constant 0 : i32
    return %c0_i32, %c0_i32_0 : i32, i32
  }
  func.func @transform_6(%arg0: i32, %arg1: memref<1xi32, #tpu.memory_space<smem>>) -> (i32, i32) {
    %c0_i32 = arith.constant 0 : i32
    %c0_i32_0 = arith.constant 0 : i32
    %c0_i32_1 = arith.constant 0 : i32
    return %c0_i32, %c0_i32_0 : i32, i32
  }
  func.func @transform_7(%arg0: i32, %arg1: memref<1xi32, #tpu.memory_space<smem>>) -> (i32, i32) {
    %c0_i32 = arith.constant 0 : i32
    %c0_i32_0 = arith.constant 0 : i32
    %c0_i32_1 = arith.constant 0 : i32
    return %c0_i32, %c0_i32_0 : i32, i32
  }
  func.func @transform_8(%arg0: i32, %arg1: memref<1xi32, #tpu.memory_space<smem>>) -> (i32, i32) {
    %c0_i32 = arith.constant 0 : i32
    %c0_i32_0 = arith.constant 0 : i32
    %c0_i32_1 = arith.constant 0 : i32
    return %c0_i32, %c0_i32_0 : i32, i32
  }
  func.func @transform_9(%arg0: i32, %arg1: memref<1xi32, #tpu.memory_space<smem>>) -> (i32, i32) {
    %c0_i32 = arith.constant 0 : i32
    %c0_i32_0 = arith.constant 0 : i32
    return %arg0, %c0_i32 : i32, i32
  }
}

</mosaic_0001>

<llo_original>
// kernel: discriminator_forward.1
$region0: #{discriminator_forward.1}
  #allocation0 [shape = 'u32[]', space=smem, size = 0x4, offset = 0x4, fixed_abs, tag = 'smem constant byte address 0x4 - core index']
  #allocation1 [shape = 'u32[144,128]{1,0:T(1,128)}', space=vmem, size = 0x12000, scoped, tag = 'internal scratch']
  #allocation2 [shape = 's32[1]{0}', space=sflag, size = 0x4, scoped, tag = 'scoped memory for discriminator_forward.1']
  #allocation3 [shape = 's32[1]{0:T(128)S(6)}', space=smem, size = 0x200, scoped, tag = 'prefetched SMEM operand 0']
  %s0 = inlined_call_operand.<no memory space> [shape: s32[1], index: 0, kind: input, shape index: {}]
  %s1 = inlined_call_operand.vmem [shape: f32[16,3072], index: 1, kind: input, shape index: {}]
  %s2 = inlined_call_operand.hbm [shape: bf16[3072,1024], index: 2, kind: input, shape index: {}]
  %s3 = inlined_call_operand.hbm [shape: f32[1,1024], index: 3, kind: input, shape index: {}]
  %s4 = inlined_call_operand.hbm [shape: bf16[1024,512], index: 4, kind: input, shape index: {}]
  %s5 = inlined_call_operand.hbm [shape: f32[1,512], index: 5, kind: input, shape index: {}]
  %s6 = inlined_call_operand.hbm [shape: bf16[512,256], index: 6, kind: input, shape index: {}]
  %s7 = inlined_call_operand.hbm [shape: f32[1,256], index: 7, kind: input, shape index: {}]
  %s8 = inlined_call_operand.hbm [shape: bf16[256,128], index: 8, kind: input, shape index: {}]
  %s9 = inlined_call_operand.hbm [shape: f32[1,128], index: 9, kind: input, shape index: {}]
  %s10 = inlined_call_operand.vmem [shape: f32[16,128], index: 10, kind: output, shape index: {}]
  %s11 = sld [smem:[#allocation0]]
  $region78: #{discriminator_forward.1} parent=0
    _
  %s13 = ssub.s32 1, %s11
  %s14 = scalar_select 0, %s13, %s11
  %15 = sst [smem:[#allocation3]] %s0
  $region1: #{discriminator_forward.1} parent=0
    #allocation4 [shape = 'u8[6291456]{0}', space=vmem, size = 0x600000, scoped, tag = 'input window, operand 2, single buffered']
    #allocation5 [shape = 's32[1]{0}', space=sflag, size = 0x4, scoped, tag = 'scoped memory for discriminator_forward.1']
    #allocation6 [shape = 'u8[4096]{0}', space=vmem, size = 0x1000, scoped, tag = 'input window, operand 3, single buffered']
    #allocation7 [shape = 's32[1]{0}', space=sflag, size = 0x4, scoped, tag = 'scoped memory for discriminator_forward.1']
    #allocation8 [shape = 'u8[1048576]{0}', space=vmem, size = 0x100000, scoped, tag = 'input window, operand 4, single buffered']
    #allocation9 [shape = 'u8[2048]{0}', space=vmem, size = 0x800, scoped, tag = 'input window, operand 5, single buffered']
    #allocation10 [shape = 's32[1]{0}', space=sflag, size = 0x4, scoped, tag = 'scoped memory for discriminator_forward.1']
    #allocation11 [shape = 'u8[262144]{0}', space=vmem, size = 0x40000, scoped, tag = 'input window, operand 6, single buffered']
    #allocation12 [shape = 'u8[1024]{0}', space=vmem, size = 0x400, scoped, tag = 'input window, operand 7, single buffered']
    #allocation13 [shape = 's32[1]{0}', space=sflag, size = 0x4, scoped, tag = 'scoped memory for discriminator_forward.1']
    #allocation14 [shape = 'u8[65536]{0}', space=vmem, size = 0x10000, scoped, tag = 'input window, operand 8, single buffered']
    #allocation15 [shape = 'u8[512]{0}', space=vmem, size = 0x400, scoped, tag = 'input window, operand 9, single buffered']
    #allocation16 [shape = 's32[1]{0}', space=sflag, size = 0x4, scoped, tag = 'scoped memory for discriminator_forward.1']
    %16 = vsyncpa [#allocation5], 0
    %17 = vsyncpa [#allocation7], 0
    %18 = vsyncpa [#allocation10], 0
    %19 = vsyncpa [#allocation13], 0
    %20 = vsyncpa [#allocation16], 0
    // Predicated region
    $region2: #{discriminator_forward.1} parent=1 // pred_check
      _
    $region3: #{discriminator_forward.1} parent=1 // pred_check_branch
      %22 = sbr.rel (0) target = $region5
    $region4: #{discriminator_forward.1} parent=1 // pred_region
      _
    $region5: #{discriminator_forward.1} parent=1 // pred_fallthru
      _
    // Predicated region
    $region6: #{discriminator_forward.1} parent=1 // pred_check
      _
    $region7: #{discriminator_forward.1} parent=1 // pred_check_branch
      %24 = sbr.rel (0) target = $region9
    $region8: #{discriminator_forward.1} parent=1 // pred_region
      %s26 = ssub.s32 196608, 196608
      %27 = vsyncadd [#allocation5], %s26
      %s28 = sshll.u32 [#allocation4], 4
      %s29 = int_to_ptr.vmem [resolvable:$true] %s28
      %34 = dma.hbm_to_vmem [thread:$0]  %s2, 196608, %s29, [#allocation5], 512, 512, 32
    $region9: #{discriminator_forward.1} parent=1 // pred_fallthru
      _
    // Predicated region
    $region10: #{discriminator_forward.1} parent=1 // pred_check
      _
    $region11: #{discriminator_forward.1} parent=1 // pred_check_branch
      %36 = sbr.rel (0) target = $region13
    $region12: #{discriminator_forward.1} parent=1 // pred_region
      %s38 = ssub.s32 128, 128
      %39 = vsyncadd [#allocation7], %s38
      %s41 = sshll.u32 [#allocation6], 4
      %s42 = int_to_ptr.vmem [resolvable:$true] %s41
      %44 = dma.hbm_to_vmem [thread:$0]  %s3, 128, %s42, [#allocation7]
    $region13: #{discriminator_forward.1} parent=1 // pred_fallthru
      _
    // Predicated region
    $region14: #{discriminator_forward.1} parent=1 // pred_check
      _
    $region15: #{discriminator_forward.1} parent=1 // pred_check_branch
      %46 = sbr.rel (0) target = $region17
    $region16: #{discriminator_forward.1} parent=1 // pred_region
      %s48 = ssub.s32 32768, 32768
      %49 = vsyncadd [#allocation7], %s48
      %s50 = sshll.u32 [#allocation8], 4
      %s51 = int_to_ptr.vmem [resolvable:$true] %s50
      %56 = dma.hbm_to_vmem [thread:$0]  %s4, 32768, %s51, [#allocation7], 256, 256, 16
    $region17: #{discriminator_forward.1} parent=1 // pred_fallthru
      _
    // Predicated region
    $region18: #{discriminator_forward.1} parent=1 // pred_check
      _
    $region19: #{discriminator_forward.1} parent=1 // pred_check_branch
      %58 = sbr.rel (0) target = $region21
    $region20: #{discriminator_forward.1} parent=1 // pred_region
      %s60 = ssub.s32 64, 64
      %61 = vsyncadd [#allocation10], %s60
      %s63 = sshll.u32 [#allocation9], 4
      %s64 = int_to_ptr.vmem [resolvable:$true] %s63
      %66 = dma.hbm_to_vmem [thread:$0]  %s5, 64, %s64, [#allocation10]
    $region21: #{discriminator_forward.1} parent=1 // pred_fallthru
      _
    // Predicated region
    $region22: #{discriminator_forward.1} parent=1 // pred_check
      _
    $region23: #{discriminator_forward.1} parent=1 // pred_check_branch
      %68 = sbr.rel (0) target = $region25
    $region24: #{discriminator_forward.1} parent=1 // pred_region
      %s70 = ssub.s32 8192, 8192
      %71 = vsyncadd [#allocation10], %s70
      %s72 = sshll.u32 [#allocation11], 4
      %s73 = int_to_ptr.vmem [resolvable:$true] %s72
      %78 = dma.hbm_to_vmem [thread:$0]  %s6, 8192, %s73, [#allocation10], 128, 128, 8
    $region25: #{discriminator_forward.1} parent=1 // pred_fallthru
      _
    // Predicated region
    $region26: #{discriminator_forward.1} parent=1 // pred_check
      _
    $region27: #{discriminator_forward.1} parent=1 // pred_check_branch
      %80 = sbr.rel (0) target = $region29
    $region28: #{discriminator_forward.1} parent=1 // pred_region
      %s82 = ssub.s32 32, 32
      %83 = vsyncadd [#allocation13], %s82
      %s85 = sshll.u32 [#allocation12], 4
      %s86 = int_to_ptr.vmem [resolvable:$true] %s85
      %88 = dma.hbm_to_vmem [thread:$0]  %s7, 32, %s86, [#allocation13]
    $region29: #{discriminator_forward.1} parent=1 // pred_fallthru
      _
    // Predicated region
    $region30: #{discriminator_forward.1} parent=1 // pred_check
      _
    $region31: #{discriminator_forward.1} parent=1 // pred_check_branch
      %90 = sbr.rel (0) target = $region33
    $region32: #{discriminator_forward.1} parent=1 // pred_region
      %s92 = ssub.s32 2048, 2048
      %93 = vsyncadd [#allocation13], %s92
      %s94 = sshll.u32 [#allocation14], 4
      %s95 = int_to_ptr.vmem [resolvable:$true] %s94
      %100 = dma.hbm_to_vmem [thread:$0]  %s8, 2048, %s95, [#allocation13], 64, 64, 4
    $region33: #{discriminator_forward.1} parent=1 // pred_fallthru
      _
    // Predicated region
    $region34: #{discriminator_forward.1} parent=1 // pred_check
      _
    $region35: #{discriminator_forward.1} parent=1 // pred_check_branch
      %102 = sbr.rel (0) target = $region37
    $region36: #{discriminator_forward.1} parent=1 // pred_region
      %s104 = ssub.s32 16, 16
      %105 = vsyncadd [#allocation16], %s104
      %s107 = sshll.u32 [#allocation15], 4
      %s108 = int_to_ptr.vmem [resolvable:$true] %s107
      %110 = dma.hbm_to_vmem [thread:$0]  %s9, 16, %s108, [#allocation16]
    $region37: #{discriminator_forward.1} parent=1 // pred_fallthru
      _
    // Predicated region
    $region38: #{discriminator_forward.1} parent=1 // pred_check
      _
    $region39: #{discriminator_forward.1} parent=1 // pred_check_branch
      %112 = sbr.rel (0) target = $region41
    $region40: #{discriminator_forward.1} parent=1 // pred_region
      %113 = dma.done [#allocation5], 196608
    $region41: #{discriminator_forward.1} parent=1 // pred_fallthru
      _
    // Predicated region
    $region42: #{discriminator_forward.1} parent=1 // pred_check
      _
    $region43: #{discriminator_forward.1} parent=1 // pred_check_branch
      %115 = sbr.rel (0) target = $region45
    $region44: #{discriminator_forward.1} parent=1 // pred_region
      %116 = dma.done [#allocation7], 128
    $region45: #{discriminator_forward.1} parent=1 // pred_fallthru
      _
    // Predicated region
    $region46: #{discriminator_forward.1} parent=1 // pred_check
      _
    $region47: #{discriminator_forward.1} parent=1 // pred_check_branch
      %118 = sbr.rel (0) target = $region49
    $region48: #{discriminator_forward.1} parent=1 // pred_region
      %119 = dma.done [#allocation7], 32768
    $region49: #{discriminator_forward.1} parent=1 // pred_fallthru
      _
    // Predicated region
    $region50: #{discriminator_forward.1} parent=1 // pred_check
      _
    $region51: #{discriminator_forward.1} parent=1 // pred_check_branch
      %121 = sbr.rel (0) target = $region53
    $region52: #{discriminator_forward.1} parent=1 // pred_region
      %122 = dma.done [#allocation10], 64
    $region53: #{discriminator_forward.1} parent=1 // pred_fallthru
      _
    // Predicated region
    $region54: #{discriminator_forward.1} parent=1 // pred_check
      _
    $region55: #{discriminator_forward.1} parent=1 // pred_check_branch
      %124 = sbr.rel (0) target = $region57
    $region56: #{discriminator_forward.1} parent=1 // pred_region
      %125 = dma.done [#allocation10], 8192
    $region57: #{discriminator_forward.1} parent=1 // pred_fallthru
      _
    // Predicated region
    $region58: #{discriminator_forward.1} parent=1 // pred_check
      _
    $region59: #{discriminator_forward.1} parent=1 // pred_check_branch
      %127 = sbr.rel (0) target = $region61
    $region60: #{discriminator_forward.1} parent=1 // pred_region
      %128 = dma.done [#allocation13], 32
    $region61: #{discriminator_forward.1} parent=1 // pred_fallthru
      _
    // Predicated region
    $region62: #{discriminator_forward.1} parent=1 // pred_check
      _
    $region63: #{discriminator_forward.1} parent=1 // pred_check_branch
      %130 = sbr.rel (0) target = $region65
    $region64: #{discriminator_forward.1} parent=1 // pred_region
      %131 = dma.done [#allocation13], 2048
    $region65: #{discriminator_forward.1} parent=1 // pred_fallthru
      _
    // Predicated region
    $region66: #{discriminator_forward.1} parent=1 // pred_check
      _
    $region67: #{discriminator_forward.1} parent=1 // pred_check_branch
      %133 = sbr.rel (0) target = $region69
    $region68: #{discriminator_forward.1} parent=1 // pred_region
      %134 = dma.done [#allocation16], 16
    $region69: #{discriminator_forward.1} parent=1 // pred_fallthru
      _
    %s138 = sld [smem:[#allocation3]]
    %s139 = smul.u32 0, 2654435769
    %s140 = sxor.u32 %s138, %s139
    %s141 = sshrl.u32 %s140, 16
    %s142 = sxor.u32 %s140, %s141
    %s143 = smul.u32 %s142, 2146121005
    %s144 = sshrl.u32 %s143, 15
    %s145 = sxor.u32 %s143, %s144
    %s146 = smul.u32 %s145, 2221713035
    %s147 = sshrl.u32 %s146, 16
    %s148 = sxor.u32 %s146, %s147
    %v149 = vld [vmem:[%s1] sm:$0xff]
    %v150 = vld [vmem:[%s1 + $0x8] sm:$0xff]
    %v151 = vld [vmem:[%s1 + $0x10] sm:$0xff]
    %v152 = vld [vmem:[%s1 + $0x18] sm:$0xff]
    %v153 = vld [vmem:[%s1 + $0x20] sm:$0xff]
    %v154 = vld [vmem:[%s1 + $0x28] sm:$0xff]
    %v155 = vld [vmem:[%s1 + $0x30] sm:$0xff]
    %v156 = vld [vmem:[%s1 + $0x38] sm:$0xff]
    %v157 = vld [vmem:[%s1 + $0x40] sm:$0xff]
    %v158 = vld [vmem:[%s1 + $0x48] sm:$0xff]
    %v159 = vld [vmem:[%s1 + $0x50] sm:$0xff]
    %v160 = vld [vmem:[%s1 + $0x58] sm:$0xff]
    %v161 = vld [vmem:[%s1 + $0x60] sm:$0xff]
    %v162 = vld [vmem:[%s1 + $0x68] sm:$0xff]
    %v163 = vld [vmem:[%s1 + $0x70] sm:$0xff]
    %v164 = vld [vmem:[%s1 + $0x78] sm:$0xff]
    %v165 = vld [vmem:[%s1 + $0x80] sm:$0xff]
    %v166 = vld [vmem:[%s1 + $0x88] sm:$0xff]
    %v167 = vld [vmem:[%s1 + $0x90] sm:$0xff]
    %v168 = vld [vmem:[%s1 + $0x98] sm:$0xff]
    %v169 = vld [vmem:[%s1 + $0xa0] sm:$0xff]
    %v170 = vld [vmem:[%s1 + $0xa8] sm:$0xff]
    %v171 = vld [vmem:[%s1 + $0xb0] sm:$0xff]
    %v172 = vld [vmem:[%s1 + $0xb8] sm:$0xff]
    %v173 = vld [vmem:[%s1 + $0xc0] sm:$0xff]
    %v174 = vld [vmem:[%s1 + $0xc8] sm:$0xff]
    %v175 = vld [vmem:[%s1 + $0xd0] sm:$0xff]
    %v176 = vld [vmem:[%s1 + $0xd8] sm:$0xff]
    %v177 = vld [vmem:[%s1 + $0xe0] sm:$0xff]
    %v178 = vld [vmem:[%s1 + $0xe8] sm:$0xff]
    %v179 = vld [vmem:[%s1 + $0xf0] sm:$0xff]
    %v180 = vld [vmem:[%s1 + $0xf8] sm:$0xff]
    %v181 = vld [vmem:[%s1 + $0x100] sm:$0xff]
    %v182 = vld [vmem:[%s1 + $0x108] sm:$0xff]
    %v183 = vld [vmem:[%s1 + $0x110] sm:$0xff]
    %v184 = vld [vmem:[%s1 + $0x118] sm:$0xff]
    %v185 = vld [vmem:[%s1 + $0x120] sm:$0xff]
    %v186 = vld [vmem:[%s1 + $0x128] sm:$0xff]
    %v187 = vld [vmem:[%s1 + $0x130] sm:$0xff]
    %v188 = vld [vmem:[%s1 + $0x138] sm:$0xff]
    %v189 = vld [vmem:[%s1 + $0x140] sm:$0xff]
    %v190 = vld [vmem:[%s1 + $0x148] sm:$0xff]
    %v191 = vld [vmem:[%s1 + $0x150] sm:$0xff]
    %v192 = vld [vmem:[%s1 + $0x158] sm:$0xff]
    %v193 = vld [vmem:[%s1 + $0x160] sm:$0xff]
    %v194 = vld [vmem:[%s1 + $0x168] sm:$0xff]
    %v195 = vld [vmem:[%s1 + $0x170] sm:$0xff]
    %v196 = vld [vmem:[%s1 + $0x178] sm:$0xff]
    %v197 = vpack.c.bf16 %v173, %v149
    %v198 = vpack.c.bf16 %v174, %v150
    %v199 = vpack.c.bf16 %v175, %v151
    %v200 = vpack.c.bf16 %v176, %v152
    %v201 = vpack.c.bf16 %v177, %v153
    %v202 = vpack.c.bf16 %v178, %v154
    %v203 = vpack.c.bf16 %v179, %v155
    %v204 = vpack.c.bf16 %v180, %v156
    %v205 = vpack.c.bf16 %v181, %v157
    %v206 = vpack.c.bf16 %v182, %v158
    %v207 = vpack.c.bf16 %v183, %v159
    %v208 = vpack.c.bf16 %v184, %v160
    %v209 = vpack.c.bf16 %v185, %v161
    %v210 = vpack.c.bf16 %v186, %v162
    %v211 = vpack.c.bf16 %v187, %v163
    %v212 = vpack.c.bf16 %v188, %v164
    %v213 = vpack.c.bf16 %v189, %v165
    %v214 = vpack.c.bf16 %v190, %v166
    %v215 = vpack.c.bf16 %v191, %v167
    %v216 = vpack.c.bf16 %v192, %v168
    %v217 = vpack.c.bf16 %v193, %v169
    %v218 = vpack.c.bf16 %v194, %v170
    %v219 = vpack.c.bf16 %v195, %v171
    %v220 = vpack.c.bf16 %v196, %v172
    %v221 = vld [vmem:[#allocation4] sm:$0xff]
    %v222 = vld [vmem:[#allocation4 + $0x8] sm:$0xff]
    %v223 = vld [vmem:[#allocation4 + $0x10] sm:$0xff]
    %v224 = vld [vmem:[#allocation4 + $0x18] sm:$0xff]
    %v225 = vld [vmem:[#allocation4 + $0x20] sm:$0xff]
    %v226 = vld [vmem:[#allocation4 + $0x28] sm:$0xff]
    %v227 = vld [vmem:[#allocation4 + $0x30] sm:$0xff]
    %v228 = vld [vmem:[#allocation4 + $0x38] sm:$0xff]
    %v229 = vld [vmem:[#allocation4 + $0x40] sm:$0xff]
    %v230 = vld [vmem:[#allocation4 + $0x48] sm:$0xff]
    %v231 = vld [vmem:[#allocation4 + $0x50] sm:$0xff]
    %v232 = vld [vmem:[#allocation4 + $0x58] sm:$0xff]
    %v233 = vld [vmem:[#allocation4 + $0x60] sm:$0xff]
    %v234 = vld [vmem:[#allocation4 + $0x68] sm:$0xff]
    %v235 = vld [vmem:[#allocation4 + $0x70] sm:$0xff]
    %v236 = vld [vmem:[#allocation4 + $0x78] sm:$0xff]
    %v237 = vld [vmem:[#allocation4 + $0x80] sm:$0xff]
    %v238 = vld [vmem:[#allocation4 + $0x88] sm:$0xff]
    %v239 = vld [vmem:[#allocation4 + $0x90] sm:$0xff]
    %v240 = vld [vmem:[#allocation4 + $0x98] sm:$0xff]
    %v241 = vld [vmem:[#allocation4 + $0xa0] sm:$0xff]
    %v242 = vld [vmem:[#allocation4 + $0xa8] sm:$0xff]
    %v243 = vld [vmem:[#allocation4 + $0xb0] sm:$0xff]
    %v244 = vld [vmem:[#allocation4 + $0xb8] sm:$0xff]
    %v245 = vld [vmem:[#allocation4 + $0xc0] sm:$0xff]
    %v246 = vld [vmem:[#allocation4 + $0xc8] sm:$0xff]
    %v247 = vld [vmem:[#allocation4 + $0xd0] sm:$0xff]
    %v248 = vld [vmem:[#allocation4 + $0xd8] sm:$0xff]
    %v249 = vld [vmem:[#allocation4 + $0xe0] sm:$0xff]
    %v250 = vld [vmem:[#allocation4 + $0xe8] sm:$0xff]
    %v251 = vld [vmem:[#allocation4 + $0xf0] sm:$0xff]
    %v252 = vld [vmem:[#allocation4 + $0xf8] sm:$0xff]
    %v253 = vld [vmem:[#allocation4 + $0x100] sm:$0xff]
    %v254 = vld [vmem:[#allocation4 + $0x108] sm:$0xff]
    %v255 = vld [vmem:[#allocation4 + $0x110] sm:$0xff]
    %v256 = vld [vmem:[#allocation4 + $0x118] sm:$0xff]
    %v257 = vld [vmem:[#allocation4 + $0x120] sm:$0xff]
    %v258 = vld [vmem:[#allocation4 + $0x128] sm:$0xff]
    %v259 = vld [vmem:[#allocation4 + $0x130] sm:$0xff]
    %v260 = vld [vmem:[#allocation4 + $0x138] sm:$0xff]
    %v261 = vld [vmem:[#allocation4 + $0x140] sm:$0xff]
    %v262 = vld [vmem:[#allocation4 + $0x148] sm:$0xff]
    %v263 = vld [vmem:[#allocation4 + $0x150] sm:$0xff]
    %v264 = vld [vmem:[#allocation4 + $0x158] sm:$0xff]
    %v265 = vld [vmem:[#allocation4 + $0x160] sm:$0xff]
    %v266 = vld [vmem:[#allocation4 + $0x168] sm:$0xff]
    %v267 = vld [vmem:[#allocation4 + $0x170] sm:$0xff]
    %v268 = vld [vmem:[#allocation4 + $0x178] sm:$0xff]
    %v269 = vld [vmem:[#allocation4 + $0x180] sm:$0xff]
    %v270 = vld [vmem:[#allocation4 + $0x188] sm:$0xff]
    %v271 = vld [vmem:[#allocation4 + $0x190] sm:$0xff]
    %v272 = vld [vmem:[#allocation4 + $0x198] sm:$0xff]
    %v273 = vld [vmem:[#allocation4 + $0x1a0] sm:$0xff]
    %v274 = vld [vmem:[#allocation4 + $0x1a8] sm:$0xff]
    %v275 = vld [vmem:[#allocation4 + $0x1b0] sm:$0xff]
    %v276 = vld [vmem:[#allocation4 + $0x1b8] sm:$0xff]
    %v277 = vld [vmem:[#allocation4 + $0x1c0] sm:$0xff]
    %v278 = vld [vmem:[#allocation4 + $0x1c8] sm:$0xff]
    %v279 = vld [vmem:[#allocation4 + $0x1d0] sm:$0xff]
    %v280 = vld [vmem:[#allocation4 + $0x1d8] sm:$0xff]
    %v281 = vld [vmem:[#allocation4 + $0x1e0] sm:$0xff]
    %v282 = vld [vmem:[#allocation4 + $0x1e8] sm:$0xff]
    %v283 = vld [vmem:[#allocation4 + $0x1f0] sm:$0xff]
    %v284 = vld [vmem:[#allocation4 + $0x1f8] sm:$0xff]
    %v285 = vld [vmem:[#allocation4 + $0x200] sm:$0xff]
    %v286 = vld [vmem:[#allocation4 + $0x208] sm:$0xff]
    %v287 = vld [vmem:[#allocation4 + $0x210] sm:$0xff]
    %v288 = vld [vmem:[#allocation4 + $0x218] sm:$0xff]
    %v289 = vld [vmem:[#allocation4 + $0x220] sm:$0xff]
    %v290 = vld [vmem:[#allocation4 + $0x228] sm:$0xff]
    %v291 = vld [vmem:[#allocation4 + $0x230] sm:$0xff]
    %v292 = vld [vmem:[#allocation4 + $0x238] sm:$0xff]
    %v293 = vld [vmem:[#allocation4 + $0x240] sm:$0xff]
    %v294 = vld [vmem:[#allocation4 + $0x248] sm:$0xff]
    %v295 = vld [vmem:[#allocation4 + $0x250] sm:$0xff]
    %v296 = vld [vmem:[#allocation4 + $0x258] sm:$0xff]
    %v297 = vld [vmem:[#allocation4 + $0x260] sm:$0xff]
    %v298 = vld [vmem:[#allocation4 + $0x268] sm:$0xff]
    %v299 = vld [vmem:[#allocation4 + $0x270] sm:$0xff]
    %v300 = vld [vmem:[#allocation4 + $0x278] sm:$0xff]
    %v301 = vld [vmem:[#allocation4 + $0x280] sm:$0xff]
    %v302 = vld [vmem:[#allocation4 + $0x288] sm:$0xff]
    %v303 = vld [vmem:[#allocation4 + $0x290] sm:$0xff]
    %v304 = vld [vmem:[#allocation4 + $0x298] sm:$0xff]
    %v305 = vld [vmem:[#allocation4 + $0x2a0] sm:$0xff]
    %v306 = vld [vmem:[#allocation4 + $0x2a8] sm:$0xff]
    %v307 = vld [vmem:[#allocation4 + $0x2b0] sm:$0xff]
    %v308 = vld [vmem:[#allocation4 + $0x2b8] sm:$0xff]
    %v309 = vld [vmem:[#allocation4 + $0x2c0] sm:$0xff]
    %v310 = vld [vmem:[#allocation4 + $0x2c8] sm:$0xff]
    %v311 = vld [vmem:[#allocation4 + $0x2d0] sm:$0xff]
    %v312 = vld [vmem:[#allocation4 + $0x2d8] sm:$0xff]
    %v313 = vld [vmem:[#allocation4 + $0x2e0] sm:$0xff]
    %v314 = vld [vmem:[#allocation4 + $0x2e8] sm:$0xff]
    %v315 = vld [vmem:[#allocation4 + $0x2f0] sm:$0xff]
    %v316 = vld [vmem:[#allocation4 + $0x2f8] sm:$0xff]
    %v317 = vld [vmem:[#allocation4 + $0x300] sm:$0xff]
    %v318 = vld [vmem:[#allocation4 + $0x308] sm:$0xff]
    %v319 = vld [vmem:[#allocation4 + $0x310] sm:$0xff]
    %v320 = vld [vmem:[#allocation4 + $0x318] sm:$0xff]
    %v321 = vld [vmem:[#allocation4 + $0x320] sm:$0xff]
    %v322 = vld [vmem:[#allocation4 + $0x328] sm:$0xff]
    %v323 = vld [vmem:[#allocation4 + $0x330] sm:$0xff]
    %v324 = vld [vmem:[#allocation4 + $0x338] sm:$0xff]
    %v325 = vld [vmem:[#allocation4 + $0x340] sm:$0xff]
    %v326 = vld [vmem:[#allocation4 + $0x348] sm:$0xff]
    %v327 = vld [vmem:[#allocation4 + $0x350] sm:$0xff]
    %v328 = vld [vmem:[#allocation4 + $0x358] sm:$0xff]
    %v329 = vld [vmem:[#allocation4 + $0x360] sm:$0xff]
    %v330 = vld [vmem:[#allocation4 + $0x368] sm:$0xff]
    %v331 = vld [vmem:[#allocation4 + $0x370] sm:$0xff]
    %v332 = vld [vmem:[#allocation4 + $0x378] sm:$0xff]
    %v333 = vld [vmem:[#allocation4 + $0x380] sm:$0xff]
    %v334 = vld [vmem:[#allocation4 + $0x388] sm:$0xff]
    %v335 = vld [vmem:[#allocation4 + $0x390] sm:$0xff]
    %v336 = vld [vmem:[#allocation4 + $0x398] sm:$0xff]
    %v337 = vld [vmem:[#allocation4 + $0x3a0] sm:$0xff]
    %v338 = vld [vmem:[#allocation4 + $0x3a8] sm:$0xff]
    %v339 = vld [vmem:[#allocation4 + $0x3b0] sm:$0xff]
    %v340 = vld [vmem:[#allocation4 + $0x3b8] sm:$0xff]
    %v341 = vld [vmem:[#allocation4 + $0x3c0] sm:$0xff]
    %v342 = vld [vmem:[#allocation4 + $0x3c8] sm:$0xff]
    %v343 = vld [vmem:[#allocation4 + $0x3d0] sm:$0xff]
    %v344 = vld [vmem:[#allocation4 + $0x3d8] sm:$0xff]
    %v345 = vld [vmem:[#allocation4 + $0x3e0] sm:$0xff]
    %v346 = vld [vmem:[#allocation4 + $0x3e8] sm:$0xff]
    %v347 = vld [vmem:[#allocation4 + $0x3f0] sm:$0xff]
    %v348 = vld [vmem:[#allocation4 + $0x3f8] sm:$0xff]
    %v349 = vld [vmem:[#allocation4 + $0x400] sm:$0xff]
    %v350 = vld [vmem:[#allocation4 + $0x408] sm:$0xff]
    %v351 = vld [vmem:[#allocation4 + $0x410] sm:$0xff]
    %v352 = vld [vmem:[#allocation4 + $0x418] sm:$0xff]
    %v353 = vld [vmem:[#allocation4 + $0x420] sm:$0xff]
    %v354 = vld [vmem:[#allocation4 + $0x428] sm:$0xff]
    %v355 = vld [vmem:[#allocation4 + $0x430] sm:$0xff]
    %v356 = vld [vmem:[#allocation4 + $0x438] sm:$0xff]
    %v357 = vld [vmem:[#allocation4 + $0x440] sm:$0xff]
    %v358 = vld [vmem:[#allocation4 + $0x448] sm:$0xff]
    %v359 = vld [vmem:[#allocation4 + $0x450] sm:$0xff]
    %v360 = vld [vmem:[#allocation4 + $0x458] sm:$0xff]
    %v361 = vld [vmem:[#allocation4 + $0x460] sm:$0xff]
    %v362 = vld [vmem:[#allocation4 + $0x468] sm:$0xff]
    %v363 = vld [vmem:[#allocation4 + $0x470] sm:$0xff]
    %v364 = vld [vmem:[#allocation4 + $0x478] sm:$0xff]
    %v365 = vld [vmem:[#allocation4 + $0x480] sm:$0xff]
    %v366 = vld [vmem:[#allocation4 + $0x488] sm:$0xff]
    %v367 = vld [vmem:[#allocation4 + $0x490] sm:$0xff]
    %v368 = vld [vmem:[#allocation4 + $0x498] sm:$0xff]
    %v369 = vld [vmem:[#allocation4 + $0x4a0] sm:$0xff]
    %v370 = vld [vmem:[#allocation4 + $0x4a8] sm:$0xff]
    %v371 = vld [vmem:[#allocation4 + $0x4b0] sm:$0xff]
    %v372 = vld [vmem:[#allocation4 + $0x4b8] sm:$0xff]
    %v373 = vld [vmem:[#allocation4 + $0x4c0] sm:$0xff]
    %v374 = vld [vmem:[#allocation4 + $0x4c8] sm:$0xff]
    %v375 = vld [vmem:[#allocation4 + $0x4d0] sm:$0xff]
    %v376 = vld [vmem:[#allocation4 + $0x4d8] sm:$0xff]
    %v377 = vld [vmem:[#allocation4 + $0x4e0] sm:$0xff]
    %v378 = vld [vmem:[#allocation4 + $0x4e8] sm:$0xff]
    %v379 = vld [vmem:[#allocation4 + $0x4f0] sm:$0xff]
    %v380 = vld [vmem:[#allocation4 + $0x4f8] sm:$0xff]
    %v381 = vld [vmem:[#allocation4 + $0x500] sm:$0xff]
    %v382 = vld [vmem:[#allocation4 + $0x508] sm:$0xff]
    %v383 = vld [vmem:[#allocation4 + $0x510] sm:$0xff]
    %v384 = vld [vmem:[#allocation4 + $0x518] sm:$0xff]
    %v385 = vld [vmem:[#allocation4 + $0x520] sm:$0xff]
    %v386 = vld [vmem:[#allocation4 + $0x528] sm:$0xff]
    %v387 = vld [vmem:[#allocation4 + $0x530] sm:$0xff]
    %v388 = vld [vmem:[#allocation4 + $0x538] sm:$0xff]
    %v389 = vld [vmem:[#allocation4 + $0x540] sm:$0xff]
    %v390 = vld [vmem:[#allocation4 + $0x548] sm:$0xff]
    %v391 = vld [vmem:[#allocation4 + $0x550] sm:$0xff]
    %v392 = vld [vmem:[#allocation4 + $0x558] sm:$0xff]
    %v393 = vld [vmem:[#allocation4 + $0x560] sm:$0xff]
    %v394 = vld [vmem:[#allocation4 + $0x568] sm:$0xff]
    %v395 = vld [vmem:[#allocation4 + $0x570] sm:$0xff]
    %v396 = vld [vmem:[#allocation4 + $0x578] sm:$0xff]
    %v397 = vld [vmem:[#allocation4 + $0x580] sm:$0xff]
    %v398 = vld [vmem:[#allocation4 + $0x588] sm:$0xff]
    %v399 = vld [vmem:[#allocation4 + $0x590] sm:$0xff]
    %v400 = vld [vmem:[#allocation4 + $0x598] sm:$0xff]
    %v401 = vld [vmem:[#allocation4 + $0x5a0] sm:$0xff]
    %v402 = vld [vmem:[#allocation4 + $0x5a8] sm:$0xff]
    %v403 = vld [vmem:[#allocation4 + $0x5b0] sm:$0xff]
    %v404 = vld [vmem:[#allocation4 + $0x5b8] sm:$0xff]
    %v405 = vld [vmem:[#allocation4 + $0x5c0] sm:$0xff]
    %v406 = vld [vmem:[#allocation4 + $0x5c8] sm:$0xff]
    %v407 = vld [vmem:[#allocation4 + $0x5d0] sm:$0xff]
    %v408 = vld [vmem:[#allocation4 + $0x5d8] sm:$0xff]
    %v409 = vld [vmem:[#allocation4 + $0x5e0] sm:$0xff]
    %v410 = vld [vmem:[#allocation4 + $0x5e8] sm:$0xff]
    %v411 = vld [vmem:[#allocation4 + $0x5f0] sm:$0xff]
    %v412 = vld [vmem:[#allocation4 + $0x5f8] sm:$0xff]
    %v413 = vld [vmem:[#allocation4 + $0x600] sm:$0xff]
    %v414 = vld [vmem:[#allocation4 + $0x608] sm:$0xff]
    %v415 = vld [vmem:[#allocation4 + $0x610] sm:$0xff]
    %v416 = vld [vmem:[#allocation4 + $0x618] sm:$0xff]
    %v417 = vld [vmem:[#allocation4 + $0x620] sm:$0xff]
    %v418 = vld [vmem:[#allocation4 + $0x628] sm:$0xff]
    %v419 = vld [vmem:[#allocation4 + $0x630] sm:$0xff]
    %v420 = vld [vmem:[#allocation4 + $0x638] sm:$0xff]
    %v421 = vld [vmem:[#allocation4 + $0x640] sm:$0xff]
    %v422 = vld [vmem:[#allocation4 + $0x648] sm:$0xff]
    %v423 = vld [vmem:[#allocation4 + $0x650] sm:$0xff]
    %v424 = vld [vmem:[#allocation4 + $0x658] sm:$0xff]
    %v425 = vld [vmem:[#allocation4 + $0x660] sm:$0xff]
    %v426 = vld [vmem:[#allocation4 + $0x668] sm:$0xff]
    %v427 = vld [vmem:[#allocation4 + $0x670] sm:$0xff]
    %v428 = vld [vmem:[#allocation4 + $0x678] sm:$0xff]
    %v429 = vld [vmem:[#allocation4 + $0x680] sm:$0xff]
    %v430 = vld [vmem:[#allocation4 + $0x688] sm:$0xff]
    %v431 = vld [vmem:[#allocation4 + $0x690] sm:$0xff]
    %v432 = vld [vmem:[#allocation4 + $0x698] sm:$0xff]
    %v433 = vld [vmem:[#allocation4 + $0x6a0] sm:$0xff]
    %v434 = vld [vmem:[#allocation4 + $0x6a8] sm:$0xff]
    %v435 = vld [vmem:[#allocation4 + $0x6b0] sm:$0xff]
    %v436 = vld [vmem:[#allocation4 + $0x6b8] sm:$0xff]
    %v437 = vld [vmem:[#allocation4 + $0x6c0] sm:$0xff]
    %v438 = vld [vmem:[#allocation4 + $0x6c8] sm:$0xff]
    %v439 = vld [vmem:[#allocation4 + $0x6d0] sm:$0xff]
    %v440 = vld [vmem:[#allocation4 + $0x6d8] sm:$0xff]
    %v441 = vld [vmem:[#allocation4 + $0x6e0] sm:$0xff]
    %v442 = vld [vmem:[#allocation4 + $0x6e8] sm:$0xff]
    %v443 = vld [vmem:[#allocation4 + $0x6f0] sm:$0xff]
    %v444 = vld [vmem:[#allocation4 + $0x6f8] sm:$0xff]
    %v445 = vld [vmem:[#allocation4 + $0x700] sm:$0xff]
    %v446 = vld [vmem:[#allocation4 + $0x708] sm:$0xff]
    %v447 = vld [vmem:[#allocation4 + $0x710] sm:$0xff]
    %v448 = vld [vmem:[#allocation4 + $0x718] sm:$0xff]
    %v449 = vld [vmem:[#allocation4 + $0x720] sm:$0xff]
    %v450 = vld [vmem:[#allocation4 + $0x728] sm:$0xff]
    %v451 = vld [vmem:[#allocation4 + $0x730] sm:$0xff]
    %v452 = vld [vmem:[#allocation4 + $0x738] sm:$0xff]
    %v453 = vld [vmem:[#allocation4 + $0x740] sm:$0xff]
    %v454 = vld [vmem:[#allocation4 + $0x748] sm:$0xff]
    %v455 = vld [vmem:[#allocation4 + $0x750] sm:$0xff]
    %v456 = vld [vmem:[#allocation4 + $0x758] sm:$0xff]
    %v457 = vld [vmem:[#allocation4 + $0x760] sm:$0xff]
    %v458 = vld [vmem:[#allocation4 + $0x768] sm:$0xff]
    %v459 = vld [vmem:[#allocation4 + $0x770] sm:$0xff]
    %v460 = vld [vmem:[#allocation4 + $0x778] sm:$0xff]
    %v461 = vld [vmem:[#allocation4 + $0x780] sm:$0xff]
    %v462 = vld [vmem:[#allocation4 + $0x788] sm:$0xff]
    %v463 = vld [vmem:[#allocation4 + $0x790] sm:$0xff]
    %v464 = vld [vmem:[#allocation4 + $0x798] sm:$0xff]
    %v465 = vld [vmem:[#allocation4 + $0x7a0] sm:$0xff]
    %v466 = vld [vmem:[#allocation4 + $0x7a8] sm:$0xff]
    %v467 = vld [vmem:[#allocation4 + $0x7b0] sm:$0xff]
    %v468 = vld [vmem:[#allocation4 + $0x7b8] sm:$0xff]
    %v469 = vld [vmem:[#allocation4 + $0x7c0] sm:$0xff]
    %v470 = vld [vmem:[#allocation4 + $0x7c8] sm:$0xff]
    %v471 = vld [vmem:[#allocation4 + $0x7d0] sm:$0xff]
    %v472 = vld [vmem:[#allocation4 + $0x7d8] sm:$0xff]
    %v473 = vld [vmem:[#allocation4 + $0x7e0] sm:$0xff]
    %v474 = vld [vmem:[#allocation4 + $0x7e8] sm:$0xff]
    %v475 = vld [vmem:[#allocation4 + $0x7f0] sm:$0xff]
    %v476 = vld [vmem:[#allocation4 + $0x7f8] sm:$0xff]
    %v477 = vld [vmem:[#allocation4 + $0x800] sm:$0xff]
    %v478 = vld [vmem:[#allocation4 + $0x808] sm:$0xff]
    %v479 = vld [vmem:[#allocation4 + $0x810] sm:$0xff]
    %v480 = vld [vmem:[#allocation4 + $0x818] sm:$0xff]
    %v481 = vld [vmem:[#allocation4 + $0x820] sm:$0xff]
    %v482 = vld [vmem:[#allocation4 + $0x828] sm:$0xff]
    %v483 = vld [vmem:[#allocation4 + $0x830] sm:$0xff]
    %v484 = vld [vmem:[#allocation4 + $0x838] sm:$0xff]
    %v485 = vld [vmem:[#allocation4 + $0x840] sm:$0xff]
    %v486 = vld [vmem:[#allocation4 + $0x848] sm:$0xff]
    %v487 = vld [vmem:[#allocation4 + $0x850] sm:$0xff]
    %v488 = vld [vmem:[#allocation4 + $0x858] sm:$0xff]
    %v489 = vld [vmem:[#allocation4 + $0x860] sm:$0xff]
    %v490 = vld [vmem:[#allocation4 + $0x868] sm:$0xff]
    %v491 = vld [vmem:[#allocation4 + $0x870] sm:$0xff]
    %v492 = vld [vmem:[#allocation4 + $0x878] sm:$0xff]
    %v493 = vld [vmem:[#allocation4 + $0x880] sm:$0xff]
    %v494 = vld [vmem:[#allocation4 + $0x888] sm:$0xff]
    %v495 = vld [vmem:[#allocation4 + $0x890] sm:$0xff]
    %v496 = vld [vmem:[#allocation4 + $0x898] sm:$0xff]
    %v497 = vld [vmem:[#allocation4 + $0x8a0] sm:$0xff]
    %v498 = vld [vmem:[#allocation4 + $0x8a8] sm:$0xff]
    %v499 = vld [vmem:[#allocation4 + $0x8b0] sm:$0xff]
    %v500 = vld [vmem:[#allocation4 + $0x8b8] sm:$0xff]
    %v501 = vld [vmem:[#allocation4 + $0x8c0] sm:$0xff]
    %v502 = vld [vmem:[#allocation4 + $0x8c8] sm:$0xff]
    %v503 = vld [vmem:[#allocation4 + $0x8d0] sm:$0xff]
    %v504 = vld [vmem:[#allocation4 + $0x8d8] sm:$0xff]
    %v505 = vld [vmem:[#allocation4 + $0x8e0] sm:$0xff]
    %v506 = vld [vmem:[#allocation4 + $0x8e8] sm:$0xff]
    %v507 = vld [vmem:[#allocation4 + $0x8f0] sm:$0xff]
    %v508 = vld [vmem:[#allocation4 + $0x8f8] sm:$0xff]
    %v509 = vld [vmem:[#allocation4 + $0x900] sm:$0xff]
    %v510 = vld [vmem:[#allocation4 + $0x908] sm:$0xff]
    %v511 = vld [vmem:[#allocation4 + $0x910] sm:$0xff]
    %v512 = vld [vmem:[#allocation4 + $0x918] sm:$0xff]
    %v513 = vld [vmem:[#allocation4 + $0x920] sm:$0xff]
    %v514 = vld [vmem:[#allocation4 + $0x928] sm:$0xff]
    %v515 = vld [vmem:[#allocation4 + $0x930] sm:$0xff]
    %v516 = vld [vmem:[#allocation4 + $0x938] sm:$0xff]
    %v517 = vld [vmem:[#allocation4 + $0x940] sm:$0xff]
    %v518 = vld [vmem:[#allocation4 + $0x948] sm:$0xff]
    %v519 = vld [vmem:[#allocation4 + $0x950] sm:$0xff]
    %v520 = vld [vmem:[#allocation4 + $0x958] sm:$0xff]
    %v521 = vld [vmem:[#allocation4 + $0x960] sm:$0xff]
    %v522 = vld [vmem:[#allocation4 + $0x968] sm:$0xff]
    %v523 = vld [vmem:[#allocation4 + $0x970] sm:$0xff]
    %v524 = vld [vmem:[#allocation4 + $0x978] sm:$0xff]
    %v525 = vld [vmem:[#allocation4 + $0x980] sm:$0xff]
    %v526 = vld [vmem:[#allocation4 + $0x988] sm:$0xff]
    %v527 = vld [vmem:[#allocation4 + $0x990] sm:$0xff]
    %v528 = vld [vmem:[#allocation4 + $0x998] sm:$0xff]
    %v529 = vld [vmem:[#allocation4 + $0x9a0] sm:$0xff]
    %v530 = vld [vmem:[#allocation4 + $0x9a8] sm:$0xff]
    %v531 = vld [vmem:[#allocation4 + $0x9b0] sm:$0xff]
    %v532 = vld [vmem:[#allocation4 + $0x9b8] sm:$0xff]
    %v533 = vld [vmem:[#allocation4 + $0x9c0] sm:$0xff]
    %v534 = vld [vmem:[#allocation4 + $0x9c8] sm:$0xff]
    %v535 = vld [vmem:[#allocation4 + $0x9d0] sm:$0xff]
    %v536 = vld [vmem:[#allocation4 + $0x9d8] sm:$0xff]
    %v537 = vld [vmem:[#allocation4 + $0x9e0] sm:$0xff]
    %v538 = vld [vmem:[#allocation4 + $0x9e8] sm:$0xff]
    %v539 = vld [vmem:[#allocation4 + $0x9f0] sm:$0xff]
    %v540 = vld [vmem:[#allocation4 + $0x9f8] sm:$0xff]
    %v541 = vld [vmem:[#allocation4 + $0xa00] sm:$0xff]
    %v542 = vld [vmem:[#allocation4 + $0xa08] sm:$0xff]
    %v543 = vld [vmem:[#allocation4 + $0xa10] sm:$0xff]
    %v544 = vld [vmem:[#allocation4 + $0xa18] sm:$0xff]
    %v545 = vld [vmem:[#allocation4 + $0xa20] sm:$0xff]
    %v546 = vld [vmem:[#allocation4 + $0xa28] sm:$0xff]
    %v547 = vld [vmem:[#allocation4 + $0xa30] sm:$0xff]
    %v548 = vld [vmem:[#allocation4 + $0xa38] sm:$0xff]
    %v549 = vld [vmem:[#allocation4 + $0xa40] sm:$0xff]
    %v550 = vld [vmem:[#allocation4 + $0xa48] sm:$0xff]
    %v551 = vld [vmem:[#allocation4 + $0xa50] sm:$0xff]
    %v552 = vld [vmem:[#allocation4 + $0xa58] sm:$0xff]
    %v553 = vld [vmem:[#allocation4 + $0xa60] sm:$0xff]
    %v554 = vld [vmem:[#allocation4 + $0xa68] sm:$0xff]
    %v555 = vld [vmem:[#allocation4 + $0xa70] sm:$0xff]
    %v556 = vld [vmem:[#allocation4 + $0xa78] sm:$0xff]
    %v557 = vld [vmem:[#allocation4 + $0xa80] sm:$0xff]
    %v558 = vld [vmem:[#allocation4 + $0xa88] sm:$0xff]
    %v559 = vld [vmem:[#allocation4 + $0xa90] sm:$0xff]
    %v560 = vld [vmem:[#allocation4 + $0xa98] sm:$0xff]
    %v561 = vld [vmem:[#allocation4 + $0xaa0] sm:$0xff]
    %v562 = vld [vmem:[#allocation4 + $0xaa8] sm:$0xff]
    %v563 = vld [vmem:[#allocation4 + $0xab0] sm:$0xff]
    %v564 = vld [vmem:[#allocation4 + $0xab8] sm:$0xff]
    %v565 = vld [vmem:[#allocation4 + $0xac0] sm:$0xff]
    %v566 = vld [vmem:[#allocation4 + $0xac8] sm:$0xff]
    %v567 = vld [vmem:[#allocation4 + $0xad0] sm:$0xff]
    %v568 = vld [vmem:[#allocation4 + $0xad8] sm:$0xff]
    %v569 = vld [vmem:[#allocation4 + $0xae0] sm:$0xff]
    %v570 = vld [vmem:[#allocation4 + $0xae8] sm:$0xff]
    %v571 = vld [vmem:[#allocation4 + $0xaf0] sm:$0xff]
    %v572 = vld [vmem:[#allocation4 + $0xaf8] sm:$0xff]
    %v573 = vld [vmem:[#allocation4 + $0xb00] sm:$0xff]
    %v574 = vld [vmem:[#allocation4 + $0xb08] sm:$0xff]
    %v575 = vld [vmem:[#allocation4 + $0xb10] sm:$0xff]
    %v576 = vld [vmem:[#allocation4 + $0xb18] sm:$0xff]
    %v577 = vld [vmem:[#allocation4 + $0xb20] sm:$0xff]
    %v578 = vld [vmem:[#allocation4 + $0xb28] sm:$0xff]
    %v579 = vld [vmem:[#allocation4 + $0xb30] sm:$0xff]
    %v580 = vld [vmem:[#allocation4 + $0xb38] sm:$0xff]
    %v581 = vld [vmem:[#allocation4 + $0xb40] sm:$0xff]
    %v582 = vld [vmem:[#allocation4 + $0xb48] sm:$0xff]
    %v583 = vld [vmem:[#allocation4 + $0xb50] sm:$0xff]
    %v584 = vld [vmem:[#allocation4 + $0xb58] sm:$0xff]
    %v585 = vld [vmem:[#allocation4 + $0xb60] sm:$0xff]
    %v586 = vld [vmem:[#allocation4 + $0xb68] sm:$0xff]
    %v587 = vld [vmem:[#allocation4 + $0xb70] sm:$0xff]
    %v588 = vld [vmem:[#allocation4 + $0xb78] sm:$0xff]
    %v589 = vld [vmem:[#allocation4 + $0xb80] sm:$0xff]
    %v590 = vld [vmem:[#allocation4 + $0xb88] sm:$0xff]
    %v591 = vld [vmem:[#allocation4 + $0xb90] sm:$0xff]
    %v592 = vld [vmem:[#allocation4 + $0xb98] sm:$0xff]
    %v593 = vld [vmem:[#allocation4 + $0xba0] sm:$0xff]
    %v594 = vld [vmem:[#allocation4 + $0xba8] sm:$0xff]
    %v595 = vld [vmem:[#allocation4 + $0xbb0] sm:$0xff]
    %v596 = vld [vmem:[#allocation4 + $0xbb8] sm:$0xff]
    %v597 = vld [vmem:[#allocation4 + $0xbc0] sm:$0xff]
    %v598 = vld [vmem:[#allocation4 + $0xbc8] sm:$0xff]
    %v599 = vld [vmem:[#allocation4 + $0xbd0] sm:$0xff]
    %v600 = vld [vmem:[#allocation4 + $0xbd8] sm:$0xff]
    %v601 = vld [vmem:[#allocation4 + $0xbe0] sm:$0xff]
    %v602 = vld [vmem:[#allocation4 + $0xbe8] sm:$0xff]
    %v603 = vld [vmem:[#allocation4 + $0xbf0] sm:$0xff]
    %v604 = vld [vmem:[#allocation4 + $0xbf8] sm:$0xff]
    %v605 = vld [vmem:[#allocation4 + $0xc00] sm:$0xff]
    %v606 = vld [vmem:[#allocation4 + $0xc08] sm:$0xff]
    %v607 = vld [vmem:[#allocation4 + $0xc10] sm:$0xff]
    %v608 = vld [vmem:[#allocation4 + $0xc18] sm:$0xff]
    %v609 = vld [vmem:[#allocation4 + $0xc20] sm:$0xff]
    %v610 = vld [vmem:[#allocation4 + $0xc28] sm:$0xff]
    %v611 = vld [vmem:[#allocation4 + $0xc30] sm:$0xff]
    %v612 = vld [vmem:[#allocation4 + $0xc38] sm:$0xff]
    %v613 = vld [vmem:[#allocation4 + $0xc40] sm:$0xff]
    %v614 = vld [vmem:[#allocation4 + $0xc48] sm:$0xff]
    %v615 = vld [vmem:[#allocation4 + $0xc50] sm:$0xff]
    %v616 = vld [vmem:[#allocation4 + $0xc58] sm:$0xff]
    %v617 = vld [vmem:[#allocation4 + $0xc60] sm:$0xff]
    %v618 = vld [vmem:[#allocation4 + $0xc68] sm:$0xff]
    %v619 = vld [vmem:[#allocation4 + $0xc70] sm:$0xff]
    %v620 = vld [vmem:[#allocation4 + $0xc78] sm:$0xff]
    %v621 = vld [vmem:[#allocation4 + $0xc80] sm:$0xff]
    %v622 = vld [vmem:[#allocation4 + $0xc88] sm:$0xff]
    %v623 = vld [vmem:[#allocation4 + $0xc90] sm:$0xff]
    %v624 = vld [vmem:[#allocation4 + $0xc98] sm:$0xff]
    %v625 = vld [vmem:[#allocation4 + $0xca0] sm:$0xff]
    %v626 = vld [vmem:[#allocation4 + $0xca8] sm:$0xff]
    %v627 = vld [vmem:[#allocation4 + $0xcb0] sm:$0xff]
    %v628 = vld [vmem:[#allocation4 + $0xcb8] sm:$0xff]
    %v629 = vld [vmem:[#allocation4 + $0xcc0] sm:$0xff]
    %v630 = vld [vmem:[#allocation4 + $0xcc8] sm:$0xff]
    %v631 = vld [vmem:[#allocation4 + $0xcd0] sm:$0xff]
    %v632 = vld [vmem:[#allocation4 + $0xcd8] sm:$0xff]
    %v633 = vld [vmem:[#allocation4 + $0xce0] sm:$0xff]
    %v634 = vld [vmem:[#allocation4 + $0xce8] sm:$0xff]
    %v635 = vld [vmem:[#allocation4 + $0xcf0] sm:$0xff]
    %v636 = vld [vmem:[#allocation4 + $0xcf8] sm:$0xff]
    %v637 = vld [vmem:[#allocation4 + $0xd00] sm:$0xff]
    %v638 = vld [vmem:[#allocation4 + $0xd08] sm:$0xff]
    %v639 = vld [vmem:[#allocation4 + $0xd10] sm:$0xff]
    %v640 = vld [vmem:[#allocation4 + $0xd18] sm:$0xff]
    %v641 = vld [vmem:[#allocation4 + $0xd20] sm:$0xff]
    %v642 = vld [vmem:[#allocation4 + $0xd28] sm:$0xff]
    %v643 = vld [vmem:[#allocation4 + $0xd30] sm:$0xff]
    %v644 = vld [vmem:[#allocation4 + $0xd38] sm:$0xff]
    %v645 = vld [vmem:[#allocation4 + $0xd40] sm:$0xff]
    %v646 = vld [vmem:[#allocation4 + $0xd48] sm:$0xff]
    %v647 = vld [vmem:[#allocation4 + $0xd50] sm:$0xff]
    %v648 = vld [vmem:[#allocation4 + $0xd58] sm:$0xff]
    %v649 = vld [vmem:[#allocation4 + $0xd60] sm:$0xff]
    %v650 = vld [vmem:[#allocation4 + $0xd68] sm:$0xff]
    %v651 = vld [vmem:[#allocation4 + $0xd70] sm:$0xff]
    %v652 = vld [vmem:[#allocation4 + $0xd78] sm:$0xff]
    %v653 = vld [vmem:[#allocation4 + $0xd80] sm:$0xff]
    %v654 = vld [vmem:[#allocation4 + $0xd88] sm:$0xff]
    %v655 = vld [vmem:[#allocation4 + $0xd90] sm:$0xff]
    %v656 = vld [vmem:[#allocation4 + $0xd98] sm:$0xff]
    %v657 = vld [vmem:[#allocation4 + $0xda0] sm:$0xff]
    %v658 = vld [vmem:[#allocation4 + $0xda8] sm:$0xff]
    %v659 = vld [vmem:[#allocation4 + $0xdb0] sm:$0xff]
    %v660 = vld [vmem:[#allocation4 + $0xdb8] sm:$0xff]
    %v661 = vld [vmem:[#allocation4 + $0xdc0] sm:$0xff]
    %v662 = vld [vmem:[#allocation4 + $0xdc8] sm:$0xff]
    %v663 = vld [vmem:[#allocation4 + $0xdd0] sm:$0xff]
    %v664 = vld [vmem:[#allocation4 + $0xdd8] sm:$0xff]
    %v665 = vld [vmem:[#allocation4 + $0xde0] sm:$0xff]
    %v666 = vld [vmem:[#allocation4 + $0xde8] sm:$0xff]
    %v667 = vld [vmem:[#allocation4 + $0xdf0] sm:$0xff]
    %v668 = vld [vmem:[#allocation4 + $0xdf8] sm:$0xff]
    %v669 = vld [vmem:[#allocation4 + $0xe00] sm:$0xff]
    %v670 = vld [vmem:[#allocation4 + $0xe08] sm:$0xff]
    %v671 = vld [vmem:[#allocation4 + $0xe10] sm:$0xff]
    %v672 = vld [vmem:[#allocation4 + $0xe18] sm:$0xff]
    %v673 = vld [vmem:[#allocation4 + $0xe20] sm:$0xff]
    %v674 = vld [vmem:[#allocation4 + $0xe28] sm:$0xff]
    %v675 = vld [vmem:[#allocation4 + $0xe30] sm:$0xff]
    %v676 = vld [vmem:[#allocation4 + $0xe38] sm:$0xff]
    %v677 = vld [vmem:[#allocation4 + $0xe40] sm:$0xff]
    %v678 = vld [vmem:[#allocation4 + $0xe48] sm:$0xff]
    %v679 = vld [vmem:[#allocation4 + $0xe50] sm:$0xff]
    %v680 = vld [vmem:[#allocation4 + $0xe58] sm:$0xff]
    %v681 = vld [vmem:[#allocation4 + $0xe60] sm:$0xff]
    %v682 = vld [vmem:[#allocation4 + $0xe68] sm:$0xff]
    %v683 = vld [vmem:[#allocation4 + $0xe70] sm:$0xff]
    %v684 = vld [vmem:[#allocation4 + $0xe78] sm:$0xff]
    %v685 = vld [vmem:[#allocation4 + $0xe80] sm:$0xff]
    %v686 = vld [vmem:[#allocation4 + $0xe88] sm:$0xff]
    %v687 = vld [vmem:[#allocation4 + $0xe90] sm:$0xff]
    %v688 = vld [vmem:[#allocation4 + $0xe98] sm:$0xff]
    %v689 = vld [vmem:[#allocation4 + $0xea0] sm:$0xff]
    %v690 = vld [vmem:[#allocation4 + $0xea8] sm:$0xff]
    %v691 = vld [vmem:[#allocation4 + $0xeb0] sm:$0xff]
    %v692 = vld [vmem:[#allocation4 + $0xeb8] sm:$0xff]
    %v693 = vld [vmem:[#allocation4 + $0xec0] sm:$0xff]
    %v694 = vld [vmem:[#allocation4 + $0xec8] sm:$0xff]
    %v695 = vld [vmem:[#allocation4 + $0xed0] sm:$0xff]
    %v696 = vld [vmem:[#allocation4 + $0xed8] sm:$0xff]
    %v697 = vld [vmem:[#allocation4 + $0xee0] sm:$0xff]
    %v698 = vld [vmem:[#allocation4 + $0xee8] sm:$0xff]
    %v699 = vld [vmem:[#allocation4 + $0xef0] sm:$0xff]
    %v700 = vld [vmem:[#allocation4 + $0xef8] sm:$0xff]
    %v701 = vld [vmem:[#allocation4 + $0xf00] sm:$0xff]
    %v702 = vld [vmem:[#allocation4 + $0xf08] sm:$0xff]
    %v703 = vld [vmem:[#allocation4 + $0xf10] sm:$0xff]
    %v704 = vld [vmem:[#allocation4 + $0xf18] sm:$0xff]
    %v705 = vld [vmem:[#allocation4 + $0xf20] sm:$0xff]
    %v706 = vld [vmem:[#allocation4 + $0xf28] sm:$0xff]
    %v707 = vld [vmem:[#allocation4 + $0xf30] sm:$0xff]
    %v708 = vld [vmem:[#allocation4 + $0xf38] sm:$0xff]
    %v709 = vld [vmem:[#allocation4 + $0xf40] sm:$0xff]
    %v710 = vld [vmem:[#allocation4 + $0xf48] sm:$0xff]
    %v711 = vld [vmem:[#allocation4 + $0xf50] sm:$0xff]
    %v712 = vld [vmem:[#allocation4 + $0xf58] sm:$0xff]
    %v713 = vld [vmem:[#allocation4 + $0xf60] sm:$0xff]
    %v714 = vld [vmem:[#allocation4 + $0xf68] sm:$0xff]
    %v715 = vld [vmem:[#allocation4 + $0xf70] sm:$0xff]
    %v716 = vld [vmem:[#allocation4 + $0xf78] sm:$0xff]
    %v717 = vld [vmem:[#allocation4 + $0xf80] sm:$0xff]
    %v718 = vld [vmem:[#allocation4 + $0xf88] sm:$0xff]
    %v719 = vld [vmem:[#allocation4 + $0xf90] sm:$0xff]
    %v720 = vld [vmem:[#allocation4 + $0xf98] sm:$0xff]
    %v721 = vld [vmem:[#allocation4 + $0xfa0] sm:$0xff]
    %v722 = vld [vmem:[#allocation4 + $0xfa8] sm:$0xff]
    %v723 = vld [vmem:[#allocation4 + $0xfb0] sm:$0xff]
    %v724 = vld [vmem:[#allocation4 + $0xfb8] sm:$0xff]
    %v725 = vld [vmem:[#allocation4 + $0xfc0] sm:$0xff]
    %v726 = vld [vmem:[#allocation4 + $0xfc8] sm:$0xff]
    %v727 = vld [vmem:[#allocation4 + $0xfd0] sm:$0xff]
    %v728 = vld [vmem:[#allocation4 + $0xfd8] sm:$0xff]
    %v729 = vld [vmem:[#allocation4 + $0xfe0] sm:$0xff]
    %v730 = vld [vmem:[#allocation4 + $0xfe8] sm:$0xff]
    %v731 = vld [vmem:[#allocation4 + $0xff0] sm:$0xff]
    %v732 = vld [vmem:[#allocation4 + $0xff8] sm:$0xff]
    %v733 = vld [vmem:[#allocation4 + $0x1000] sm:$0xff]
    %v734 = vld [vmem:[#allocation4 + $0x1008] sm:$0xff]
    %v735 = vld [vmem:[#allocation4 + $0x1010] sm:$0xff]
    %v736 = vld [vmem:[#allocation4 + $0x1018] sm:$0xff]
    %v737 = vld [vmem:[#allocation4 + $0x1020] sm:$0xff]
    %v738 = vld [vmem:[#allocation4 + $0x1028] sm:$0xff]
    %v739 = vld [vmem:[#allocation4 + $0x1030] sm:$0xff]
    %v740 = vld [vmem:[#allocation4 + $0x1038] sm:$0xff]
    %v741 = vld [vmem:[#allocation4 + $0x1040] sm:$0xff]
    %v742 = vld [vmem:[#allocation4 + $0x1048] sm:$0xff]
    %v743 = vld [vmem:[#allocation4 + $0x1050] sm:$0xff]
    %v744 = vld [vmem:[#allocation4 + $0x1058] sm:$0xff]
    %v745 = vld [vmem:[#allocation4 + $0x1060] sm:$0xff]
    %v746 = vld [vmem:[#allocation4 + $0x1068] sm:$0xff]
    %v747 = vld [vmem:[#allocation4 + $0x1070] sm:$0xff]
    %v748 = vld [vmem:[#allocation4 + $0x1078] sm:$0xff]
    %v749 = vld [vmem:[#allocation4 + $0x1080] sm:$0xff]
    %v750 = vld [vmem:[#allocation4 + $0x1088] sm:$0xff]
    %v751 = vld [vmem:[#allocation4 + $0x1090] sm:$0xff]
    %v752 = vld [vmem:[#allocation4 + $0x1098] sm:$0xff]
    %v753 = vld [vmem:[#allocation4 + $0x10a0] sm:$0xff]
    %v754 = vld [vmem:[#allocation4 + $0x10a8] sm:$0xff]
    %v755 = vld [vmem:[#allocation4 + $0x10b0] sm:$0xff]
    %v756 = vld [vmem:[#allocation4 + $0x10b8] sm:$0xff]
    %v757 = vld [vmem:[#allocation4 + $0x10c0] sm:$0xff]
    %v758 = vld [vmem:[#allocation4 + $0x10c8] sm:$0xff]
    %v759 = vld [vmem:[#allocation4 + $0x10d0] sm:$0xff]
    %v760 = vld [vmem:[#allocation4 + $0x10d8] sm:$0xff]
    %v761 = vld [vmem:[#allocation4 + $0x10e0] sm:$0xff]
    %v762 = vld [vmem:[#allocation4 + $0x10e8] sm:$0xff]
    %v763 = vld [vmem:[#allocation4 + $0x10f0] sm:$0xff]
    %v764 = vld [vmem:[#allocation4 + $0x10f8] sm:$0xff]
    %v765 = vld [vmem:[#allocation4 + $0x1100] sm:$0xff]
    %v766 = vld [vmem:[#allocation4 + $0x1108] sm:$0xff]
    %v767 = vld [vmem:[#allocation4 + $0x1110] sm:$0xff]
    %v768 = vld [vmem:[#allocation4 + $0x1118] sm:$0xff]
    %v769 = vld [vmem:[#allocation4 + $0x1120] sm:$0xff]
    %v770 = vld [vmem:[#allocation4 + $0x1128] sm:$0xff]
    %v771 = vld [vmem:[#allocation4 + $0x1130] sm:$0xff]
    %v772 = vld [vmem:[#allocation4 + $0x1138] sm:$0xff]
    %v773 = vld [vmem:[#allocation4 + $0x1140] sm:$0xff]
    %v774 = vld [vmem:[#allocation4 + $0x1148] sm:$0xff]
    %v775 = vld [vmem:[#allocation4 + $0x1150] sm:$0xff]
    %v776 = vld [vmem:[#allocation4 + $0x1158] sm:$0xff]
    %v777 = vld [vmem:[#allocation4 + $0x1160] sm:$0xff]
    %v778 = vld [vmem:[#allocation4 + $0x1168] sm:$0xff]
    %v779 = vld [vmem:[#allocation4 + $0x1170] sm:$0xff]
    %v780 = vld [vmem:[#allocation4 + $0x1178] sm:$0xff]
    %v781 = vld [vmem:[#allocation4 + $0x1180] sm:$0xff]
    %v782 = vld [vmem:[#allocation4 + $0x1188] sm:$0xff]
    %v783 = vld [vmem:[#allocation4 + $0x1190] sm:$0xff]
    %v784 = vld [vmem:[#allocation4 + $0x1198] sm:$0xff]
    %v785 = vld [vmem:[#allocation4 + $0x11a0] sm:$0xff]
    %v786 = vld [vmem:[#allocation4 + $0x11a8] sm:$0xff]
    %v787 = vld [vmem:[#allocation4 + $0x11b0] sm:$0xff]
    %v788 = vld [vmem:[#allocation4 + $0x11b8] sm:$0xff]
    %v789 = vld [vmem:[#allocation4 + $0x11c0] sm:$0xff]
    %v790 = vld [vmem:[#allocation4 + $0x11c8] sm:$0xff]
    %v791 = vld [vmem:[#allocation4 + $0x11d0] sm:$0xff]
    %v792 = vld [vmem:[#allocation4 + $0x11d8] sm:$0xff]
    %v793 = vld [vmem:[#allocation4 + $0x11e0] sm:$0xff]
    %v794 = vld [vmem:[#allocation4 + $0x11e8] sm:$0xff]
    %v795 = vld [vmem:[#allocation4 + $0x11f0] sm:$0xff]
    %v796 = vld [vmem:[#allocation4 + $0x11f8] sm:$0xff]
    %v797 = vld [vmem:[#allocation4 + $0x1200] sm:$0xff]
    %v798 = vld [vmem:[#allocation4 + $0x1208] sm:$0xff]
    %v799 = vld [vmem:[#allocation4 + $0x1210] sm:$0xff]
    %v800 = vld [vmem:[#allocation4 + $0x1218] sm:$0xff]
    %v801 = vld [vmem:[#allocation4 + $0x1220] sm:$0xff]
    %v802 = vld [vmem:[#allocation4 + $0x1228] sm:$0xff]
    %v803 = vld [vmem:[#allocation4 + $0x1230] sm:$0xff]
    %v804 = vld [vmem:[#allocation4 + $0x1238] sm:$0xff]
    %v805 = vld [vmem:[#allocation4 + $0x1240] sm:$0xff]
    %v806 = vld [vmem:[#allocation4 + $0x1248] sm:$0xff]
    %v807 = vld [vmem:[#allocation4 + $0x1250] sm:$0xff]
    %v808 = vld [vmem:[#allocation4 + $0x1258] sm:$0xff]
    %v809 = vld [vmem:[#allocation4 + $0x1260] sm:$0xff]
    %v810 = vld [vmem:[#allocation4 + $0x1268] sm:$0xff]
    %v811 = vld [vmem:[#allocation4 + $0x1270] sm:$0xff]
    %v812 = vld [vmem:[#allocation4 + $0x1278] sm:$0xff]
    %v813 = vld [vmem:[#allocation4 + $0x1280] sm:$0xff]
    %v814 = vld [vmem:[#allocation4 + $0x1288] sm:$0xff]
    %v815 = vld [vmem:[#allocation4 + $0x1290] sm:$0xff]
    %v816 = vld [vmem:[#allocation4 + $0x1298] sm:$0xff]
    %v817 = vld [vmem:[#allocation4 + $0x12a0] sm:$0xff]
    %v818 = vld [vmem:[#allocation4 + $0x12a8] sm:$0xff]
    %v819 = vld [vmem:[#allocation4 + $0x12b0] sm:$0xff]
    %v820 = vld [vmem:[#allocation4 + $0x12b8] sm:$0xff]
    %v821 = vld [vmem:[#allocation4 + $0x12c0] sm:$0xff]
    %v822 = vld [vmem:[#allocation4 + $0x12c8] sm:$0xff]
    %v823 = vld [vmem:[#allocation4 + $0x12d0] sm:$0xff]
    %v824 = vld [vmem:[#allocation4 + $0x12d8] sm:$0xff]
    %v825 = vld [vmem:[#allocation4 + $0x12e0] sm:$0xff]
    %v826 = vld [vmem:[#allocation4 + $0x12e8] sm:$0xff]
    %v827 = vld [vmem:[#allocation4 + $0x12f0] sm:$0xff]
    %v828 = vld [vmem:[#allocation4 + $0x12f8] sm:$0xff]
    %v829 = vld [vmem:[#allocation4 + $0x1300] sm:$0xff]
    %v830 = vld [vmem:[#allocation4 + $0x1308] sm:$0xff]
    %v831 = vld [vmem:[#allocation4 + $0x1310] sm:$0xff]
    %v832 = vld [vmem:[#allocation4 + $0x1318] sm:$0xff]
    %v833 = vld [vmem:[#allocation4 + $0x1320] sm:$0xff]
    %v834 = vld [vmem:[#allocation4 + $0x1328] sm:$0xff]
    %v835 = vld [vmem:[#allocation4 + $0x1330] sm:$0xff]
    %v836 = vld [vmem:[#allocation4 + $0x1338] sm:$0xff]
    %v837 = vld [vmem:[#allocation4 + $0x1340] sm:$0xff]
    %v838 = vld [vmem:[#allocation4 + $0x1348] sm:$0xff]
    %v839 = vld [vmem:[#allocation4 + $0x1350] sm:$0xff]
    %v840 = vld [vmem:[#allocation4 + $0x1358] sm:$0xff]
    %v841 = vld [vmem:[#allocation4 + $0x1360] sm:$0xff]
    %v842 = vld [vmem:[#allocation4 + $0x1368] sm:$0xff]
    %v843 = vld [vmem:[#allocation4 + $0x1370] sm:$0xff]
    %v844 = vld [vmem:[#allocation4 + $0x1378] sm:$0xff]
    %v845 = vld [vmem:[#allocation4 + $0x1380] sm:$0xff]
    %v846 = vld [vmem:[#allocation4 + $0x1388] sm:$0xff]
    %v847 = vld [vmem:[#allocation4 + $0x1390] sm:$0xff]
    %v848 = vld [vmem:[#allocation4 + $0x1398] sm:$0xff]
    %v849 = vld [vmem:[#allocation4 + $0x13a0] sm:$0xff]
    %v850 = vld [vmem:[#allocation4 + $0x13a8] sm:$0xff]
    %v851 = vld [vmem:[#allocation4 + $0x13b0] sm:$0xff]
    %v852 = vld [vmem:[#allocation4 + $0x13b8] sm:$0xff]
    %v853 = vld [vmem:[#allocation4 + $0x13c0] sm:$0xff]
    %v854 = vld [vmem:[#allocation4 + $0x13c8] sm:$0xff]
    %v855 = vld [vmem:[#allocation4 + $0x13d0] sm:$0xff]
    %v856 = vld [vmem:[#allocation4 + $0x13d8] sm:$0xff]
    %v857 = vld [vmem:[#allocation4 + $0x13e0] sm:$0xff]
    %v858 = vld [vmem:[#allocation4 + $0x13e8] sm:$0xff]
    %v859 = vld [vmem:[#allocation4 + $0x13f0] sm:$0xff]
    %v860 = vld [vmem:[#allocation4 + $0x13f8] sm:$0xff]
    %v861 = vld [vmem:[#allocation4 + $0x1400] sm:$0xff]
    %v862 = vld [vmem:[#allocation4 + $0x1408] sm:$0xff]
    %v863 = vld [vmem:[#allocation4 + $0x1410] sm:$0xff]
    %v864 = vld [vmem:[#allocation4 + $0x1418] sm:$0xff]
    %v865 = vld [vmem:[#allocation4 + $0x1420] sm:$0xff]
    %v866 = vld [vmem:[#allocation4 + $0x1428] sm:$0xff]
    %v867 = vld [vmem:[#allocation4 + $0x1430] sm:$0xff]
    %v868 = vld [vmem:[#allocation4 + $0x1438] sm:$0xff]
    %v869 = vld [vmem:[#allocation4 + $0x1440] sm:$0xff]
    %v870 = vld [vmem:[#allocation4 + $0x1448] sm:$0xff]
    %v871 = vld [vmem:[#allocation4 + $0x1450] sm:$0xff]
    %v872 = vld [vmem:[#allocation4 + $0x1458] sm:$0xff]
    %v873 = vld [vmem:[#allocation4 + $0x1460] sm:$0xff]
    %v874 = vld [vmem:[#allocation4 + $0x1468] sm:$0xff]
    %v875 = vld [vmem:[#allocation4 + $0x1470] sm:$0xff]
    %v876 = vld [vmem:[#allocation4 + $0x1478] sm:$0xff]
    %v877 = vld [vmem:[#allocation4 + $0x1480] sm:$0xff]
    %v878 = vld [vmem:[#allocation4 + $0x1488] sm:$0xff]
    %v879 = vld [vmem:[#allocation4 + $0x1490] sm:$0xff]
    %v880 = vld [vmem:[#allocation4 + $0x1498] sm:$0xff]
    %v881 = vld [vmem:[#allocation4 + $0x14a0] sm:$0xff]
    %v882 = vld [vmem:[#allocation4 + $0x14a8] sm:$0xff]
    %v883 = vld [vmem:[#allocation4 + $0x14b0] sm:$0xff]
    %v884 = vld [vmem:[#allocation4 + $0x14b8] sm:$0xff]
    %v885 = vld [vmem:[#allocation4 + $0x14c0] sm:$0xff]
    %v886 = vld [vmem:[#allocation4 + $0x14c8] sm:$0xff]
    %v887 = vld [vmem:[#allocation4 + $0x14d0] sm:$0xff]
    %v888 = vld [vmem:[#allocation4 + $0x14d8] sm:$0xff]
    %v889 = vld [vmem:[#allocation4 + $0x14e0] sm:$0xff]
    %v890 = vld [vmem:[#allocation4 + $0x14e8] sm:$0xff]
    %v891 = vld [vmem:[#allocation4 + $0x14f0] sm:$0xff]
    %v892 = vld [vmem:[#allocation4 + $0x14f8] sm:$0xff]
    %v893 = vld [vmem:[#allocation4 + $0x1500] sm:$0xff]
    %v894 = vld [vmem:[#allocation4 + $0x1508] sm:$0xff]
    %v895 = vld [vmem:[#allocation4 + $0x1510] sm:$0xff]
    %v896 = vld [vmem:[#allocation4 + $0x1518] sm:$0xff]
    %v897 = vld [vmem:[#allocation4 + $0x1520] sm:$0xff]
    %v898 = vld [vmem:[#allocation4 + $0x1528] sm:$0xff]
    %v899 = vld [vmem:[#allocation4 + $0x1530] sm:$0xff]
    %v900 = vld [vmem:[#allocation4 + $0x1538] sm:$0xff]
    %v901 = vld [vmem:[#allocation4 + $0x1540] sm:$0xff]
    %v902 = vld [vmem:[#allocation4 + $0x1548] sm:$0xff]
    %v903 = vld [vmem:[#allocation4 + $0x1550] sm:$0xff]
    %v904 = vld [vmem:[#allocation4 + $0x1558] sm:$0xff]
    %v905 = vld [vmem:[#allocation4 + $0x1560] sm:$0xff]
    %v906 = vld [vmem:[#allocation4 + $0x1568] sm:$0xff]
    %v907 = vld [vmem:[#allocation4 + $0x1570] sm:$0xff]
    %v908 = vld [vmem:[#allocation4 + $0x1578] sm:$0xff]
    %v909 = vld [vmem:[#allocation4 + $0x1580] sm:$0xff]
    %v910 = vld [vmem:[#allocation4 + $0x1588] sm:$0xff]
    %v911 = vld [vmem:[#allocation4 + $0x1590] sm:$0xff]
    %v912 = vld [vmem:[#allocation4 + $0x1598] sm:$0xff]
    %v913 = vld [vmem:[#allocation4 + $0x15a0] sm:$0xff]
    %v914 = vld [vmem:[#allocation4 + $0x15a8] sm:$0xff]
    %v915 = vld [vmem:[#allocation4 + $0x15b0] sm:$0xff]
    %v916 = vld [vmem:[#allocation4 + $0x15b8] sm:$0xff]
    %v917 = vld [vmem:[#allocation4 + $0x15c0] sm:$0xff]
    %v918 = vld [vmem:[#allocation4 + $0x15c8] sm:$0xff]
    %v919 = vld [vmem:[#allocation4 + $0x15d0] sm:$0xff]
    %v920 = vld [vmem:[#allocation4 + $0x15d8] sm:$0xff]
    %v921 = vld [vmem:[#allocation4 + $0x15e0] sm:$0xff]
    %v922 = vld [vmem:[#allocation4 + $0x15e8] sm:$0xff]
    %v923 = vld [vmem:[#allocation4 + $0x15f0] sm:$0xff]
    %v924 = vld [vmem:[#allocation4 + $0x15f8] sm:$0xff]
    %v925 = vld [vmem:[#allocation4 + $0x1600] sm:$0xff]
    %v926 = vld [vmem:[#allocation4 + $0x1608] sm:$0xff]
    %v927 = vld [vmem:[#allocation4 + $0x1610] sm:$0xff]
    %v928 = vld [vmem:[#allocation4 + $0x1618] sm:$0xff]
    %v929 = vld [vmem:[#allocation4 + $0x1620] sm:$0xff]
    %v930 = vld [vmem:[#allocation4 + $0x1628] sm:$0xff]
    %v931 = vld [vmem:[#allocation4 + $0x1630] sm:$0xff]
    %v932 = vld [vmem:[#allocation4 + $0x1638] sm:$0xff]
    %v933 = vld [vmem:[#allocation4 + $0x1640] sm:$0xff]
    %v934 = vld [vmem:[#allocation4 + $0x1648] sm:$0xff]
    %v935 = vld [vmem:[#allocation4 + $0x1650] sm:$0xff]
    %v936 = vld [vmem:[#allocation4 + $0x1658] sm:$0xff]
    %v937 = vld [vmem:[#allocation4 + $0x1660] sm:$0xff]
    %v938 = vld [vmem:[#allocation4 + $0x1668] sm:$0xff]
    %v939 = vld [vmem:[#allocation4 + $0x1670] sm:$0xff]
    %v940 = vld [vmem:[#allocation4 + $0x1678] sm:$0xff]
    %v941 = vld [vmem:[#allocation4 + $0x1680] sm:$0xff]
    %v942 = vld [vmem:[#allocation4 + $0x1688] sm:$0xff]
    %v943 = vld [vmem:[#allocation4 + $0x1690] sm:$0xff]
    %v944 = vld [vmem:[#allocation4 + $0x1698] sm:$0xff]
    %v945 = vld [vmem:[#allocation4 + $0x16a0] sm:$0xff]
    %v946 = vld [vmem:[#allocation4 + $0x16a8] sm:$0xff]
    %v947 = vld [vmem:[#allocation4 + $0x16b0] sm:$0xff]
    %v948 = vld [vmem:[#allocation4 + $0x16b8] sm:$0xff]
    %v949 = vld [vmem:[#allocation4 + $0x16c0] sm:$0xff]
    %v950 = vld [vmem:[#allocation4 + $0x16c8] sm:$0xff]
    %v951 = vld [vmem:[#allocation4 + $0x16d0] sm:$0xff]
    %v952 = vld [vmem:[#allocation4 + $0x16d8] sm:$0xff]
    %v953 = vld [vmem:[#allocation4 + $0x16e0] sm:$0xff]
    %v954 = vld [vmem:[#allocation4 + $0x16e8] sm:$0xff]
    %v955 = vld [vmem:[#allocation4 + $0x16f0] sm:$0xff]
    %v956 = vld [vmem:[#allocation4 + $0x16f8] sm:$0xff]
    %v957 = vld [vmem:[#allocation4 + $0x1700] sm:$0xff]
    %v958 = vld [vmem:[#allocation4 + $0x1708] sm:$0xff]
    %v959 = vld [vmem:[#allocation4 + $0x1710] sm:$0xff]
    %v960 = vld [vmem:[#allocation4 + $0x1718] sm:$0xff]
    %v961 = vld [vmem:[#allocation4 + $0x1720] sm:$0xff]
    %v962 = vld [vmem:[#allocation4 + $0x1728] sm:$0xff]
    %v963 = vld [vmem:[#allocation4 + $0x1730] sm:$0xff]
    %v964 = vld [vmem:[#allocation4 + $0x1738] sm:$0xff]
    %v965 = vld [vmem:[#allocation4 + $0x1740] sm:$0xff]
    %v966 = vld [vmem:[#allocation4 + $0x1748] sm:$0xff]
    %v967 = vld [vmem:[#allocation4 + $0x1750] sm:$0xff]
    %v968 = vld [vmem:[#allocation4 + $0x1758] sm:$0xff]
    %v969 = vld [vmem:[#allocation4 + $0x1760] sm:$0xff]
    %v970 = vld [vmem:[#allocation4 + $0x1768] sm:$0xff]
    %v971 = vld [vmem:[#allocation4 + $0x1770] sm:$0xff]
    %v972 = vld [vmem:[#allocation4 + $0x1778] sm:$0xff]
    %v973 = vld [vmem:[#allocation4 + $0x1780] sm:$0xff]
    %v974 = vld [vmem:[#allocation4 + $0x1788] sm:$0xff]
    %v975 = vld [vmem:[#allocation4 + $0x1790] sm:$0xff]
    %v976 = vld [vmem:[#allocation4 + $0x1798] sm:$0xff]
    %v977 = vld [vmem:[#allocation4 + $0x17a0] sm:$0xff]
    %v978 = vld [vmem:[#allocation4 + $0x17a8] sm:$0xff]
    %v979 = vld [vmem:[#allocation4 + $0x17b0] sm:$0xff]
    %v980 = vld [vmem:[#allocation4 + $0x17b8] sm:$0xff]
    %v981 = vld [vmem:[#allocation4 + $0x17c0] sm:$0xff]
    %v982 = vld [vmem:[#allocation4 + $0x17c8] sm:$0xff]
    %v983 = vld [vmem:[#allocation4 + $0x17d0] sm:$0xff]
    %v984 = vld [vmem:[#allocation4 + $0x17d8] sm:$0xff]
    %v985 = vld [vmem:[#allocation4 + $0x17e0] sm:$0xff]
    %v986 = vld [vmem:[#allocation4 + $0x17e8] sm:$0xff]
    %v987 = vld [vmem:[#allocation4 + $0x17f0] sm:$0xff]
    %v988 = vld [vmem:[#allocation4 + $0x17f8] sm:$0xff]
    %v989 = vld [vmem:[#allocation4 + $0x1800] sm:$0xff]
    %v990 = vld [vmem:[#allocation4 + $0x1808] sm:$0xff]
    %v991 = vld [vmem:[#allocation4 + $0x1810] sm:$0xff]
    %v992 = vld [vmem:[#allocation4 + $0x1818] sm:$0xff]
    %v993 = vld [vmem:[#allocation4 + $0x1820] sm:$0xff]
    %v994 = vld [vmem:[#allocation4 + $0x1828] sm:$0xff]
    %v995 = vld [vmem:[#allocation4 + $0x1830] sm:$0xff]
    %v996 = vld [vmem:[#allocation4 + $0x1838] sm:$0xff]
    %v997 = vld [vmem:[#allocation4 + $0x1840] sm:$0xff]
    %v998 = vld [vmem:[#allocation4 + $0x1848] sm:$0xff]
    %v999 = vld [vmem:[#allocation4 + $0x1850] sm:$0xff]
    %v1000 = vld [vmem:[#allocation4 + $0x1858] sm:$0xff]
    %v1001 = vld [vmem:[#allocation4 + $0x1860] sm:$0xff]
    %v1002 = vld [vmem:[#allocation4 + $0x1868] sm:$0xff]
    %v1003 = vld [vmem:[#allocation4 + $0x1870] sm:$0xff]
    %v1004 = vld [vmem:[#allocation4 + $0x1878] sm:$0xff]
    %v1005 = vld [vmem:[#allocation4 + $0x1880] sm:$0xff]
    %v1006 = vld [vmem:[#allocation4 + $0x1888] sm:$0xff]
    %v1007 = vld [vmem:[#allocation4 + $0x1890] sm:$0xff]
    %v1008 = vld [vmem:[#allocation4 + $0x1898] sm:$0xff]
    %v1009 = vld [vmem:[#allocation4 + $0x18a0] sm:$0xff]
    %v1010 = vld [vmem:[#allocation4 + $0x18a8] sm:$0xff]
    %v1011 = vld [vmem:[#allocation4 + $0x18b0] sm:$0xff]
    %v1012 = vld [vmem:[#allocation4 + $0x18b8] sm:$0xff]
    %v1013 = vld [vmem:[#allocation4 + $0x18c0] sm:$0xff]
    %v1014 = vld [vmem:[#allocation4 + $0x18c8] sm:$0xff]
    %v1015 = vld [vmem:[#allocation4 + $0x18d0] sm:$0xff]
    %v1016 = vld [vmem:[#allocation4 + $0x18d8] sm:$0xff]
    %v1017 = vld [vmem:[#allocation4 + $0x18e0] sm:$0xff]
    %v1018 = vld [vmem:[#allocation4 + $0x18e8] sm:$0xff]
    %v1019 = vld [vmem:[#allocation4 + $0x18f0] sm:$0xff]
    %v1020 = vld [vmem:[#allocation4 + $0x18f8] sm:$0xff]
    %v1021 = vld [vmem:[#allocation4 + $0x1900] sm:$0xff]
    %v1022 = vld [vmem:[#allocation4 + $0x1908] sm:$0xff]
    %v1023 = vld [vmem:[#allocation4 + $0x1910] sm:$0xff]
    %v1024 = vld [vmem:[#allocation4 + $0x1918] sm:$0xff]
    %v1025 = vld [vmem:[#allocation4 + $0x1920] sm:$0xff]
    %v1026 = vld [vmem:[#allocation4 + $0x1928] sm:$0xff]
    %v1027 = vld [vmem:[#allocation4 + $0x1930] sm:$0xff]
    %v1028 = vld [vmem:[#allocation4 + $0x1938] sm:$0xff]
    %v1029 = vld [vmem:[#allocation4 + $0x1940] sm:$0xff]
    %v1030 = vld [vmem:[#allocation4 + $0x1948] sm:$0xff]
    %v1031 = vld [vmem:[#allocation4 + $0x1950] sm:$0xff]
    %v1032 = vld [vmem:[#allocation4 + $0x1958] sm:$0xff]
    %v1033 = vld [vmem:[#allocation4 + $0x1960] sm:$0xff]
    %v1034 = vld [vmem:[#allocation4 + $0x1968] sm:$0xff]
    %v1035 = vld [vmem:[#allocation4 + $0x1970] sm:$0xff]
    %v1036 = vld [vmem:[#allocation4 + $0x1978] sm:$0xff]
    %v1037 = vld [vmem:[#allocation4 + $0x1980] sm:$0xff]
    %v1038 = vld [vmem:[#allocation4 + $0x1988] sm:$0xff]
    %v1039 = vld [vmem:[#allocation4 + $0x1990] sm:$0xff]
    %v1040 = vld [vmem:[#allocation4 + $0x1998] sm:$0xff]
    %v1041 = vld [vmem:[#allocation4 + $0x19a0] sm:$0xff]
    %v1042 = vld [vmem:[#allocation4 + $0x19a8] sm:$0xff]
    %v1043 = vld [vmem:[#allocation4 + $0x19b0] sm:$0xff]
    %v1044 = vld [vmem:[#allocation4 + $0x19b8] sm:$0xff]
    %v1045 = vld [vmem:[#allocation4 + $0x19c0] sm:$0xff]
    %v1046 = vld [vmem:[#allocation4 + $0x19c8] sm:$0xff]
    %v1047 = vld [vmem:[#allocation4 + $0x19d0] sm:$0xff]
    %v1048 = vld [vmem:[#allocation4 + $0x19d8] sm:$0xff]
    %v1049 = vld [vmem:[#allocation4 + $0x19e0] sm:$0xff]
    %v1050 = vld [vmem:[#allocation4 + $0x19e8] sm:$0xff]
    %v1051 = vld [vmem:[#allocation4 + $0x19f0] sm:$0xff]
    %v1052 = vld [vmem:[#allocation4 + $0x19f8] sm:$0xff]
    %v1053 = vld [vmem:[#allocation4 + $0x1a00] sm:$0xff]
    %v1054 = vld [vmem:[#allocation4 + $0x1a08] sm:$0xff]
    %v1055 = vld [vmem:[#allocation4 + $0x1a10] sm:$0xff]
    %v1056 = vld [vmem:[#allocation4 + $0x1a18] sm:$0xff]
    %v1057 = vld [vmem:[#allocation4 + $0x1a20] sm:$0xff]
    %v1058 = vld [vmem:[#allocation4 + $0x1a28] sm:$0xff]
    %v1059 = vld [vmem:[#allocation4 + $0x1a30] sm:$0xff]
    %v1060 = vld [vmem:[#allocation4 + $0x1a38] sm:$0xff]
    %v1061 = vld [vmem:[#allocation4 + $0x1a40] sm:$0xff]
    %v1062 = vld [vmem:[#allocation4 + $0x1a48] sm:$0xff]
    %v1063 = vld [vmem:[#allocation4 + $0x1a50] sm:$0xff]
    %v1064 = vld [vmem:[#allocation4 + $0x1a58] sm:$0xff]
    %v1065 = vld [vmem:[#allocation4 + $0x1a60] sm:$0xff]
    %v1066 = vld [vmem:[#allocation4 + $0x1a68] sm:$0xff]
    %v1067 = vld [vmem:[#allocation4 + $0x1a70] sm:$0xff]
    %v1068 = vld [vmem:[#allocation4 + $0x1a78] sm:$0xff]
    %v1069 = vld [vmem:[#allocation4 + $0x1a80] sm:$0xff]
    %v1070 = vld [vmem:[#allocation4 + $0x1a88] sm:$0xff]
    %v1071 = vld [vmem:[#allocation4 + $0x1a90] sm:$0xff]
    %v1072 = vld [vmem:[#allocation4 + $0x1a98] sm:$0xff]
    %v1073 = vld [vmem:[#allocation4 + $0x1aa0] sm:$0xff]
    %v1074 = vld [vmem:[#allocation4 + $0x1aa8] sm:$0xff]
    %v1075 = vld [vmem:[#allocation4 + $0x1ab0] sm:$0xff]
    %v1076 = vld [vmem:[#allocation4 + $0x1ab8] sm:$0xff]
    %v1077 = vld [vmem:[#allocation4 + $0x1ac0] sm:$0xff]
    %v1078 = vld [vmem:[#allocation4 + $0x1ac8] sm:$0xff]
    %v1079 = vld [vmem:[#allocation4 + $0x1ad0] sm:$0xff]
    %v1080 = vld [vmem:[#allocation4 + $0x1ad8] sm:$0xff]
    %v1081 = vld [vmem:[#allocation4 + $0x1ae0] sm:$0xff]
    %v1082 = vld [vmem:[#allocation4 + $0x1ae8] sm:$0xff]
    %v1083 = vld [vmem:[#allocation4 + $0x1af0] sm:$0xff]
    %v1084 = vld [vmem:[#allocation4 + $0x1af8] sm:$0xff]
    %v1085 = vld [vmem:[#allocation4 + $0x1b00] sm:$0xff]
    %v1086 = vld [vmem:[#allocation4 + $0x1b08] sm:$0xff]
    %v1087 = vld [vmem:[#allocation4 + $0x1b10] sm:$0xff]
    %v1088 = vld [vmem:[#allocation4 + $0x1b18] sm:$0xff]
    %v1089 = vld [vmem:[#allocation4 + $0x1b20] sm:$0xff]
    %v1090 = vld [vmem:[#allocation4 + $0x1b28] sm:$0xff]
    %v1091 = vld [vmem:[#allocation4 + $0x1b30] sm:$0xff]
    %v1092 = vld [vmem:[#allocation4 + $0x1b38] sm:$0xff]
    %v1093 = vld [vmem:[#allocation4 + $0x1b40] sm:$0xff]
    %v1094 = vld [vmem:[#allocation4 + $0x1b48] sm:$0xff]
    %v1095 = vld [vmem:[#allocation4 + $0x1b50] sm:$0xff]
    %v1096 = vld [vmem:[#allocation4 + $0x1b58] sm:$0xff]
    %v1097 = vld [vmem:[#allocation4 + $0x1b60] sm:$0xff]
    %v1098 = vld [vmem:[#allocation4 + $0x1b68] sm:$0xff]
    %v1099 = vld [vmem:[#allocation4 + $0x1b70] sm:$0xff]
    %v1100 = vld [vmem:[#allocation4 + $0x1b78] sm:$0xff]
    %v1101 = vld [vmem:[#allocation4 + $0x1b80] sm:$0xff]
    %v1102 = vld [vmem:[#allocation4 + $0x1b88] sm:$0xff]
    %v1103 = vld [vmem:[#allocation4 + $0x1b90] sm:$0xff]
    %v1104 = vld [vmem:[#allocation4 + $0x1b98] sm:$0xff]
    %v1105 = vld [vmem:[#allocation4 + $0x1ba0] sm:$0xff]
    %v1106 = vld [vmem:[#allocation4 + $0x1ba8] sm:$0xff]
    %v1107 = vld [vmem:[#allocation4 + $0x1bb0] sm:$0xff]
    %v1108 = vld [vmem:[#allocation4 + $0x1bb8] sm:$0xff]
    %v1109 = vld [vmem:[#allocation4 + $0x1bc0] sm:$0xff]
    %v1110 = vld [vmem:[#allocation4 + $0x1bc8] sm:$0xff]
    %v1111 = vld [vmem:[#allocation4 + $0x1bd0] sm:$0xff]
    %v1112 = vld [vmem:[#allocation4 + $0x1bd8] sm:$0xff]
    %v1113 = vld [vmem:[#allocation4 + $0x1be0] sm:$0xff]
    %v1114 = vld [vmem:[#allocation4 + $0x1be8] sm:$0xff]
    %v1115 = vld [vmem:[#allocation4 + $0x1bf0] sm:$0xff]
    %v1116 = vld [vmem:[#allocation4 + $0x1bf8] sm:$0xff]
    %v1117 = vld [vmem:[#allocation4 + $0x1c00] sm:$0xff]
    %v1118 = vld [vmem:[#allocation4 + $0x1c08] sm:$0xff]
    %v1119 = vld [vmem:[#allocation4 + $0x1c10] sm:$0xff]
    %v1120 = vld [vmem:[#allocation4 + $0x1c18] sm:$0xff]
    %v1121 = vld [vmem:[#allocation4 + $0x1c20] sm:$0xff]
    %v1122 = vld [vmem:[#allocation4 + $0x1c28] sm:$0xff]
    %v1123 = vld [vmem:[#allocation4 + $0x1c30] sm:$0xff]
    %v1124 = vld [vmem:[#allocation4 + $0x1c38] sm:$0xff]
    %v1125 = vld [vmem:[#allocation4 + $0x1c40] sm:$0xff]
    %v1126 = vld [vmem:[#allocation4 + $0x1c48] sm:$0xff]
    %v1127 = vld [vmem:[#allocation4 + $0x1c50] sm:$0xff]
    %v1128 = vld [vmem:[#allocation4 + $0x1c58] sm:$0xff]
    %v1129 = vld [vmem:[#allocation4 + $0x1c60] sm:$0xff]
    %v1130 = vld [vmem:[#allocation4 + $0x1c68] sm:$0xff]
    %v1131 = vld [vmem:[#allocation4 + $0x1c70] sm:$0xff]
    %v1132 = vld [vmem:[#allocation4 + $0x1c78] sm:$0xff]
    %v1133 = vld [vmem:[#allocation4 + $0x1c80] sm:$0xff]
    %v1134 = vld [vmem:[#allocation4 + $0x1c88] sm:$0xff]
    %v1135 = vld [vmem:[#allocation4 + $0x1c90] sm:$0xff]
    %v1136 = vld [vmem:[#allocation4 + $0x1c98] sm:$0xff]
    %v1137 = vld [vmem:[#allocation4 + $0x1ca0] sm:$0xff]
    %v1138 = vld [vmem:[#allocation4 + $0x1ca8] sm:$0xff]
    %v1139 = vld [vmem:[#allocation4 + $0x1cb0] sm:$0xff]
    %v1140 = vld [vmem:[#allocation4 + $0x1cb8] sm:$0xff]
    %v1141 = vld [vmem:[#allocation4 + $0x1cc0] sm:$0xff]
    %v1142 = vld [vmem:[#allocation4 + $0x1cc8] sm:$0xff]
    %v1143 = vld [vmem:[#allocation4 + $0x1cd0] sm:$0xff]
    %v1144 = vld [vmem:[#allocation4 + $0x1cd8] sm:$0xff]
    %v1145 = vld [vmem:[#allocation4 + $0x1ce0] sm:$0xff]
    %v1146 = vld [vmem:[#allocation4 + $0x1ce8] sm:$0xff]
    %v1147 = vld [vmem:[#allocation4 + $0x1cf0] sm:$0xff]
    %v1148 = vld [vmem:[#allocation4 + $0x1cf8] sm:$0xff]
    %v1149 = vld [vmem:[#allocation4 + $0x1d00] sm:$0xff]
    %v1150 = vld [vmem:[#allocation4 + $0x1d08] sm:$0xff]
    %v1151 = vld [vmem:[#allocation4 + $0x1d10] sm:$0xff]
    %v1152 = vld [vmem:[#allocation4 + $0x1d18] sm:$0xff]
    %v1153 = vld [vmem:[#allocation4 + $0x1d20] sm:$0xff]
    %v1154 = vld [vmem:[#allocation4 + $0x1d28] sm:$0xff]
    %v1155 = vld [vmem:[#allocation4 + $0x1d30] sm:$0xff]
    %v1156 = vld [vmem:[#allocation4 + $0x1d38] sm:$0xff]
    %v1157 = vld [vmem:[#allocation4 + $0x1d40] sm:$0xff]
    %v1158 = vld [vmem:[#allocation4 + $0x1d48] sm:$0xff]
    %v1159 = vld [vmem:[#allocation4 + $0x1d50] sm:$0xff]
    %v1160 = vld [vmem:[#allocation4 + $0x1d58] sm:$0xff]
    %v1161 = vld [vmem:[#allocation4 + $0x1d60] sm:$0xff]
    %v1162 = vld [vmem:[#allocation4 + $0x1d68] sm:$0xff]
    %v1163 = vld [vmem:[#allocation4 + $0x1d70] sm:$0xff]
    %v1164 = vld [vmem:[#allocation4 + $0x1d78] sm:$0xff]
    %v1165 = vld [vmem:[#allocation4 + $0x1d80] sm:$0xff]
    %v1166 = vld [vmem:[#allocation4 + $0x1d88] sm:$0xff]
    %v1167 = vld [vmem:[#allocation4 + $0x1d90] sm:$0xff]
    %v1168 = vld [vmem:[#allocation4 + $0x1d98] sm:$0xff]
    %v1169 = vld [vmem:[#allocation4 + $0x1da0] sm:$0xff]
    %v1170 = vld [vmem:[#allocation4 + $0x1da8] sm:$0xff]
    %v1171 = vld [vmem:[#allocation4 + $0x1db0] sm:$0xff]
    %v1172 = vld [vmem:[#allocation4 + $0x1db8] sm:$0xff]
    %v1173 = vld [vmem:[#allocation4 + $0x1dc0] sm:$0xff]
    %v1174 = vld [vmem:[#allocation4 + $0x1dc8] sm:$0xff]
    %v1175 = vld [vmem:[#allocation4 + $0x1dd0] sm:$0xff]
    %v1176 = vld [vmem:[#allocation4 + $0x1dd8] sm:$0xff]
    %v1177 = vld [vmem:[#allocation4 + $0x1de0] sm:$0xff]
    %v1178 = vld [vmem:[#allocation4 + $0x1de8] sm:$0xff]
    %v1179 = vld [vmem:[#allocation4 + $0x1df0] sm:$0xff]
    %v1180 = vld [vmem:[#allocation4 + $0x1df8] sm:$0xff]
    %v1181 = vld [vmem:[#allocation4 + $0x1e00] sm:$0xff]
    %v1182 = vld [vmem:[#allocation4 + $0x1e08] sm:$0xff]
    %v1183 = vld [vmem:[#allocation4 + $0x1e10] sm:$0xff]
    %v1184 = vld [vmem:[#allocation4 + $0x1e18] sm:$0xff]
    %v1185 = vld [vmem:[#allocation4 + $0x1e20] sm:$0xff]
    %v1186 = vld [vmem:[#allocation4 + $0x1e28] sm:$0xff]
    %v1187 = vld [vmem:[#allocation4 + $0x1e30] sm:$0xff]
    %v1188 = vld [vmem:[#allocation4 + $0x1e38] sm:$0xff]
    %v1189 = vld [vmem:[#allocation4 + $0x1e40] sm:$0xff]
    %v1190 = vld [vmem:[#allocation4 + $0x1e48] sm:$0xff]
    %v1191 = vld [vmem:[#allocation4 + $0x1e50] sm:$0xff]
    %v1192 = vld [vmem:[#allocation4 + $0x1e58] sm:$0xff]
    %v1193 = vld [vmem:[#allocation4 + $0x1e60] sm:$0xff]
    %v1194 = vld [vmem:[#allocation4 + $0x1e68] sm:$0xff]
    %v1195 = vld [vmem:[#allocation4 + $0x1e70] sm:$0xff]
    %v1196 = vld [vmem:[#allocation4 + $0x1e78] sm:$0xff]
    %v1197 = vld [vmem:[#allocation4 + $0x1e80] sm:$0xff]
    %v1198 = vld [vmem:[#allocation4 + $0x1e88] sm:$0xff]
    %v1199 = vld [vmem:[#allocation4 + $0x1e90] sm:$0xff]
    %v1200 = vld [vmem:[#allocation4 + $0x1e98] sm:$0xff]
    %v1201 = vld [vmem:[#allocation4 + $0x1ea0] sm:$0xff]
    %v1202 = vld [vmem:[#allocation4 + $0x1ea8] sm:$0xff]
    %v1203 = vld [vmem:[#allocation4 + $0x1eb0] sm:$0xff]
    %v1204 = vld [vmem:[#allocation4 + $0x1eb8] sm:$0xff]
    %v1205 = vld [vmem:[#allocation4 + $0x1ec0] sm:$0xff]
    %v1206 = vld [vmem:[#allocation4 + $0x1ec8] sm:$0xff]
    %v1207 = vld [vmem:[#allocation4 + $0x1ed0] sm:$0xff]
    %v1208 = vld [vmem:[#allocation4 + $0x1ed8] sm:$0xff]
    %v1209 = vld [vmem:[#allocation4 + $0x1ee0] sm:$0xff]
    %v1210 = vld [vmem:[#allocation4 + $0x1ee8] sm:$0xff]
    %v1211 = vld [vmem:[#allocation4 + $0x1ef0] sm:$0xff]
    %v1212 = vld [vmem:[#allocation4 + $0x1ef8] sm:$0xff]
    %v1213 = vld [vmem:[#allocation4 + $0x1f00] sm:$0xff]
    %v1214 = vld [vmem:[#allocation4 + $0x1f08] sm:$0xff]
    %v1215 = vld [vmem:[#allocation4 + $0x1f10] sm:$0xff]
    %v1216 = vld [vmem:[#allocation4 + $0x1f18] sm:$0xff]
    %v1217 = vld [vmem:[#allocation4 + $0x1f20] sm:$0xff]
    %v1218 = vld [vmem:[#allocation4 + $0x1f28] sm:$0xff]
    %v1219 = vld [vmem:[#allocation4 + $0x1f30] sm:$0xff]
    %v1220 = vld [vmem:[#allocation4 + $0x1f38] sm:$0xff]
    %v1221 = vld [vmem:[#allocation4 + $0x1f40] sm:$0xff]
    %v1222 = vld [vmem:[#allocation4 + $0x1f48] sm:$0xff]
    %v1223 = vld [vmem:[#allocation4 + $0x1f50] sm:$0xff]
    %v1224 = vld [vmem:[#allocation4 + $0x1f58] sm:$0xff]
    %v1225 = vld [vmem:[#allocation4 + $0x1f60] sm:$0xff]
    %v1226 = vld [vmem:[#allocation4 + $0x1f68] sm:$0xff]
    %v1227 = vld [vmem:[#allocation4 + $0x1f70] sm:$0xff]
    %v1228 = vld [vmem:[#allocation4 + $0x1f78] sm:$0xff]
    %v1229 = vld [vmem:[#allocation4 + $0x1f80] sm:$0xff]
    %v1230 = vld [vmem:[#allocation4 + $0x1f88] sm:$0xff]
    %v1231 = vld [vmem:[#allocation4 + $0x1f90] sm:$0xff]
    %v1232 = vld [vmem:[#allocation4 + $0x1f98] sm:$0xff]
    %v1233 = vld [vmem:[#allocation4 + $0x1fa0] sm:$0xff]
    %v1234 = vld [vmem:[#allocation4 + $0x1fa8] sm:$0xff]
    %v1235 = vld [vmem:[#allocation4 + $0x1fb0] sm:$0xff]
    %v1236 = vld [vmem:[#allocation4 + $0x1fb8] sm:$0xff]
    %v1237 = vld [vmem:[#allocation4 + $0x1fc0] sm:$0xff]
    %v1238 = vld [vmem:[#allocation4 + $0x1fc8] sm:$0xff]
    %v1239 = vld [vmem:[#allocation4 + $0x1fd0] sm:$0xff]
    %v1240 = vld [vmem:[#allocation4 + $0x1fd8] sm:$0xff]
    %v1241 = vld [vmem:[#allocation4 + $0x1fe0] sm:$0xff]
    %v1242 = vld [vmem:[#allocation4 + $0x1fe8] sm:$0xff]
    %v1243 = vld [vmem:[#allocation4 + $0x1ff0] sm:$0xff]
    %v1244 = vld [vmem:[#allocation4 + $0x1ff8] sm:$0xff]
    %v1245 = vld [vmem:[#allocation4 + $0x2000] sm:$0xff]
    %v1246 = vld [vmem:[#allocation4 + $0x2008] sm:$0xff]
    %v1247 = vld [vmem:[#allocation4 + $0x2010] sm:$0xff]
    %v1248 = vld [vmem:[#allocation4 + $0x2018] sm:$0xff]
    %v1249 = vld [vmem:[#allocation4 + $0x2020] sm:$0xff]
    %v1250 = vld [vmem:[#allocation4 + $0x2028] sm:$0xff]
    %v1251 = vld [vmem:[#allocation4 + $0x2030] sm:$0xff]
    %v1252 = vld [vmem:[#allocation4 + $0x2038] sm:$0xff]
    %v1253 = vld [vmem:[#allocation4 + $0x2040] sm:$0xff]
    %v1254 = vld [vmem:[#allocation4 + $0x2048] sm:$0xff]
    %v1255 = vld [vmem:[#allocation4 + $0x2050] sm:$0xff]
    %v1256 = vld [vmem:[#allocation4 + $0x2058] sm:$0xff]
    %v1257 = vld [vmem:[#allocation4 + $0x2060] sm:$0xff]
    %v1258 = vld [vmem:[#allocation4 + $0x2068] sm:$0xff]
    %v1259 = vld [vmem:[#allocation4 + $0x2070] sm:$0xff]
    %v1260 = vld [vmem:[#allocation4 + $0x2078] sm:$0xff]
    %v1261 = vld [vmem:[#allocation4 + $0x2080] sm:$0xff]
    %v1262 = vld [vmem:[#allocation4 + $0x2088] sm:$0xff]
    %v1263 = vld [vmem:[#allocation4 + $0x2090] sm:$0xff]
    %v1264 = vld [vmem:[#allocation4 + $0x2098] sm:$0xff]
    %v1265 = vld [vmem:[#allocation4 + $0x20a0] sm:$0xff]
    %v1266 = vld [vmem:[#allocation4 + $0x20a8] sm:$0xff]
    %v1267 = vld [vmem:[#allocation4 + $0x20b0] sm:$0xff]
    %v1268 = vld [vmem:[#allocation4 + $0x20b8] sm:$0xff]
    %v1269 = vld [vmem:[#allocation4 + $0x20c0] sm:$0xff]
    %v1270 = vld [vmem:[#allocation4 + $0x20c8] sm:$0xff]
    %v1271 = vld [vmem:[#allocation4 + $0x20d0] sm:$0xff]
    %v1272 = vld [vmem:[#allocation4 + $0x20d8] sm:$0xff]
    %v1273 = vld [vmem:[#allocation4 + $0x20e0] sm:$0xff]
    %v1274 = vld [vmem:[#allocation4 + $0x20e8] sm:$0xff]
    %v1275 = vld [vmem:[#allocation4 + $0x20f0] sm:$0xff]
    %v1276 = vld [vmem:[#allocation4 + $0x20f8] sm:$0xff]
    %v1277 = vld [vmem:[#allocation4 + $0x2100] sm:$0xff]
    %v1278 = vld [vmem:[#allocation4 + $0x2108] sm:$0xff]
    %v1279 = vld [vmem:[#allocation4 + $0x2110] sm:$0xff]
    %v1280 = vld [vmem:[#allocation4 + $0x2118] sm:$0xff]
    %v1281 = vld [vmem:[#allocation4 + $0x2120] sm:$0xff]
    %v1282 = vld [vmem:[#allocation4 + $0x2128] sm:$0xff]
    %v1283 = vld [vmem:[#allocation4 + $0x2130] sm:$0xff]
    %v1284 = vld [vmem:[#allocation4 + $0x2138] sm:$0xff]
    %v1285 = vld [vmem:[#allocation4 + $0x2140] sm:$0xff]
    %v1286 = vld [vmem:[#allocation4 + $0x2148] sm:$0xff]
    %v1287 = vld [vmem:[#allocation4 + $0x2150] sm:$0xff]
    %v1288 = vld [vmem:[#allocation4 + $0x2158] sm:$0xff]
    %v1289 = vld [vmem:[#allocation4 + $0x2160] sm:$0xff]
    %v1290 = vld [vmem:[#allocation4 + $0x2168] sm:$0xff]
    %v1291 = vld [vmem:[#allocation4 + $0x2170] sm:$0xff]
    %v1292 = vld [vmem:[#allocation4 + $0x2178] sm:$0xff]
    %v1293 = vld [vmem:[#allocation4 + $0x2180] sm:$0xff]
    %v1294 = vld [vmem:[#allocation4 + $0x2188] sm:$0xff]
    %v1295 = vld [vmem:[#allocation4 + $0x2190] sm:$0xff]
    %v1296 = vld [vmem:[#allocation4 + $0x2198] sm:$0xff]
    %v1297 = vld [vmem:[#allocation4 + $0x21a0] sm:$0xff]
    %v1298 = vld [vmem:[#allocation4 + $0x21a8] sm:$0xff]
    %v1299 = vld [vmem:[#allocation4 + $0x21b0] sm:$0xff]
    %v1300 = vld [vmem:[#allocation4 + $0x21b8] sm:$0xff]
    %v1301 = vld [vmem:[#allocation4 + $0x21c0] sm:$0xff]
    %v1302 = vld [vmem:[#allocation4 + $0x21c8] sm:$0xff]
    %v1303 = vld [vmem:[#allocation4 + $0x21d0] sm:$0xff]
    %v1304 = vld [vmem:[#allocation4 + $0x21d8] sm:$0xff]
    %v1305 = vld [vmem:[#allocation4 + $0x21e0] sm:$0xff]
    %v1306 = vld [vmem:[#allocation4 + $0x21e8] sm:$0xff]
    %v1307 = vld [vmem:[#allocation4 + $0x21f0] sm:$0xff]
    %v1308 = vld [vmem:[#allocation4 + $0x21f8] sm:$0xff]
    %v1309 = vld [vmem:[#allocation4 + $0x2200] sm:$0xff]
    %v1310 = vld [vmem:[#allocation4 + $0x2208] sm:$0xff]
    %v1311 = vld [vmem:[#allocation4 + $0x2210] sm:$0xff]
    %v1312 = vld [vmem:[#allocation4 + $0x2218] sm:$0xff]
    %v1313 = vld [vmem:[#allocation4 + $0x2220] sm:$0xff]
    %v1314 = vld [vmem:[#allocation4 + $0x2228] sm:$0xff]
    %v1315 = vld [vmem:[#allocation4 + $0x2230] sm:$0xff]
    %v1316 = vld [vmem:[#allocation4 + $0x2238] sm:$0xff]
    %v1317 = vld [vmem:[#allocation4 + $0x2240] sm:$0xff]
    %v1318 = vld [vmem:[#allocation4 + $0x2248] sm:$0xff]
    %v1319 = vld [vmem:[#allocation4 + $0x2250] sm:$0xff]
    %v1320 = vld [vmem:[#allocation4 + $0x2258] sm:$0xff]
    %v1321 = vld [vmem:[#allocation4 + $0x2260] sm:$0xff]
    %v1322 = vld [vmem:[#allocation4 + $0x2268] sm:$0xff]
    %v1323 = vld [vmem:[#allocation4 + $0x2270] sm:$0xff]
    %v1324 = vld [vmem:[#allocation4 + $0x2278] sm:$0xff]
    %v1325 = vld [vmem:[#allocation4 + $0x2280] sm:$0xff]
    %v1326 = vld [vmem:[#allocation4 + $0x2288] sm:$0xff]
    %v1327 = vld [vmem:[#allocation4 + $0x2290] sm:$0xff]
    %v1328 = vld [vmem:[#allocation4 + $0x2298] sm:$0xff]
    %v1329 = vld [vmem:[#allocation4 + $0x22a0] sm:$0xff]
    %v1330 = vld [vmem:[#allocation4 + $0x22a8] sm:$0xff]
    %v1331 = vld [vmem:[#allocation4 + $0x22b0] sm:$0xff]
    %v1332 = vld [vmem:[#allocation4 + $0x22b8] sm:$0xff]
    %v1333 = vld [vmem:[#allocation4 + $0x22c0] sm:$0xff]
    %v1334 = vld [vmem:[#allocation4 + $0x22c8] sm:$0xff]
    %v1335 = vld [vmem:[#allocation4 + $0x22d0] sm:$0xff]
    %v1336 = vld [vmem:[#allocation4 + $0x22d8] sm:$0xff]
    %v1337 = vld [vmem:[#allocation4 + $0x22e0] sm:$0xff]
    %v1338 = vld [vmem:[#allocation4 + $0x22e8] sm:$0xff]
    %v1339 = vld [vmem:[#allocation4 + $0x22f0] sm:$0xff]
    %v1340 = vld [vmem:[#allocation4 + $0x22f8] sm:$0xff]
    %v1341 = vld [vmem:[#allocation4 + $0x2300] sm:$0xff]
    %v1342 = vld [vmem:[#allocation4 + $0x2308] sm:$0xff]
    %v1343 = vld [vmem:[#allocation4 + $0x2310] sm:$0xff]
    %v1344 = vld [vmem:[#allocation4 + $0x2318] sm:$0xff]
    %v1345 = vld [vmem:[#allocation4 + $0x2320] sm:$0xff]
    %v1346 = vld [vmem:[#allocation4 + $0x2328] sm:$0xff]
    %v1347 = vld [vmem:[#allocation4 + $0x2330] sm:$0xff]
    %v1348 = vld [vmem:[#allocation4 + $0x2338] sm:$0xff]
    %v1349 = vld [vmem:[#allocation4 + $0x2340] sm:$0xff]
    %v1350 = vld [vmem:[#allocation4 + $0x2348] sm:$0xff]
    %v1351 = vld [vmem:[#allocation4 + $0x2350] sm:$0xff]
    %v1352 = vld [vmem:[#allocation4 + $0x2358] sm:$0xff]
    %v1353 = vld [vmem:[#allocation4 + $0x2360] sm:$0xff]
    %v1354 = vld [vmem:[#allocation4 + $0x2368] sm:$0xff]
    %v1355 = vld [vmem:[#allocation4 + $0x2370] sm:$0xff]
    %v1356 = vld [vmem:[#allocation4 + $0x2378] sm:$0xff]
    %v1357 = vld [vmem:[#allocation4 + $0x2380] sm:$0xff]
    %v1358 = vld [vmem:[#allocation4 + $0x2388] sm:$0xff]
    %v1359 = vld [vmem:[#allocation4 + $0x2390] sm:$0xff]
    %v1360 = vld [vmem:[#allocation4 + $0x2398] sm:$0xff]
    %v1361 = vld [vmem:[#allocation4 + $0x23a0] sm:$0xff]
    %v1362 = vld [vmem:[#allocation4 + $0x23a8] sm:$0xff]
    %v1363 = vld [vmem:[#allocation4 + $0x23b0] sm:$0xff]
    %v1364 = vld [vmem:[#allocation4 + $0x23b8] sm:$0xff]
    %v1365 = vld [vmem:[#allocation4 + $0x23c0] sm:$0xff]
    %v1366 = vld [vmem:[#allocation4 + $0x23c8] sm:$0xff]
    %v1367 = vld [vmem:[#allocation4 + $0x23d0] sm:$0xff]
    %v1368 = vld [vmem:[#allocation4 + $0x23d8] sm:$0xff]
    %v1369 = vld [vmem:[#allocation4 + $0x23e0] sm:$0xff]
    %v1370 = vld [vmem:[#allocation4 + $0x23e8] sm:$0xff]
    %v1371 = vld [vmem:[#allocation4 + $0x23f0] sm:$0xff]
    %v1372 = vld [vmem:[#allocation4 + $0x23f8] sm:$0xff]
    %v1373 = vld [vmem:[#allocation4 + $0x2400] sm:$0xff]
    %v1374 = vld [vmem:[#allocation4 + $0x2408] sm:$0xff]
    %v1375 = vld [vmem:[#allocation4 + $0x2410] sm:$0xff]
    %v1376 = vld [vmem:[#allocation4 + $0x2418] sm:$0xff]
    %v1377 = vld [vmem:[#allocation4 + $0x2420] sm:$0xff]
    %v1378 = vld [vmem:[#allocation4 + $0x2428] sm:$0xff]
    %v1379 = vld [vmem:[#allocation4 + $0x2430] sm:$0xff]
    %v1380 = vld [vmem:[#allocation4 + $0x2438] sm:$0xff]
    %v1381 = vld [vmem:[#allocation4 + $0x2440] sm:$0xff]
    %v1382 = vld [vmem:[#allocation4 + $0x2448] sm:$0xff]
    %v1383 = vld [vmem:[#allocation4 + $0x2450] sm:$0xff]
    %v1384 = vld [vmem:[#allocation4 + $0x2458] sm:$0xff]
    %v1385 = vld [vmem:[#allocation4 + $0x2460] sm:$0xff]
    %v1386 = vld [vmem:[#allocation4 + $0x2468] sm:$0xff]
    %v1387 = vld [vmem:[#allocation4 + $0x2470] sm:$0xff]
    %v1388 = vld [vmem:[#allocation4 + $0x2478] sm:$0xff]
    %v1389 = vld [vmem:[#allocation4 + $0x2480] sm:$0xff]
    %v1390 = vld [vmem:[#allocation4 + $0x2488] sm:$0xff]
    %v1391 = vld [vmem:[#allocation4 + $0x2490] sm:$0xff]
    %v1392 = vld [vmem:[#allocation4 + $0x2498] sm:$0xff]
    %v1393 = vld [vmem:[#allocation4 + $0x24a0] sm:$0xff]
    %v1394 = vld [vmem:[#allocation4 + $0x24a8] sm:$0xff]
    %v1395 = vld [vmem:[#allocation4 + $0x24b0] sm:$0xff]
    %v1396 = vld [vmem:[#allocation4 + $0x24b8] sm:$0xff]
    %v1397 = vld [vmem:[#allocation4 + $0x24c0] sm:$0xff]
    %v1398 = vld [vmem:[#allocation4 + $0x24c8] sm:$0xff]
    %v1399 = vld [vmem:[#allocation4 + $0x24d0] sm:$0xff]
    %v1400 = vld [vmem:[#allocation4 + $0x24d8] sm:$0xff]
    %v1401 = vld [vmem:[#allocation4 + $0x24e0] sm:$0xff]
    %v1402 = vld [vmem:[#allocation4 + $0x24e8] sm:$0xff]
    %v1403 = vld [vmem:[#allocation4 + $0x24f0] sm:$0xff]
    %v1404 = vld [vmem:[#allocation4 + $0x24f8] sm:$0xff]
    %v1405 = vld [vmem:[#allocation4 + $0x2500] sm:$0xff]
    %v1406 = vld [vmem:[#allocation4 + $0x2508] sm:$0xff]
    %v1407 = vld [vmem:[#allocation4 + $0x2510] sm:$0xff]
    %v1408 = vld [vmem:[#allocation4 + $0x2518] sm:$0xff]
    %v1409 = vld [vmem:[#allocation4 + $0x2520] sm:$0xff]
    %v1410 = vld [vmem:[#allocation4 + $0x2528] sm:$0xff]
    %v1411 = vld [vmem:[#allocation4 + $0x2530] sm:$0xff]
    %v1412 = vld [vmem:[#allocation4 + $0x2538] sm:$0xff]
    %v1413 = vld [vmem:[#allocation4 + $0x2540] sm:$0xff]
    %v1414 = vld [vmem:[#allocation4 + $0x2548] sm:$0xff]
    %v1415 = vld [vmem:[#allocation4 + $0x2550] sm:$0xff]
    %v1416 = vld [vmem:[#allocation4 + $0x2558] sm:$0xff]
    %v1417 = vld [vmem:[#allocation4 + $0x2560] sm:$0xff]
    %v1418 = vld [vmem:[#allocation4 + $0x2568] sm:$0xff]
    %v1419 = vld [vmem:[#allocation4 + $0x2570] sm:$0xff]
    %v1420 = vld [vmem:[#allocation4 + $0x2578] sm:$0xff]
    %v1421 = vld [vmem:[#allocation4 + $0x2580] sm:$0xff]
    %v1422 = vld [vmem:[#allocation4 + $0x2588] sm:$0xff]
    %v1423 = vld [vmem:[#allocation4 + $0x2590] sm:$0xff]
    %v1424 = vld [vmem:[#allocation4 + $0x2598] sm:$0xff]
    %v1425 = vld [vmem:[#allocation4 + $0x25a0] sm:$0xff]
    %v1426 = vld [vmem:[#allocation4 + $0x25a8] sm:$0xff]
    %v1427 = vld [vmem:[#allocation4 + $0x25b0] sm:$0xff]
    %v1428 = vld [vmem:[#allocation4 + $0x25b8] sm:$0xff]
    %v1429 = vld [vmem:[#allocation4 + $0x25c0] sm:$0xff]
    %v1430 = vld [vmem:[#allocation4 + $0x25c8] sm:$0xff]
    %v1431 = vld [vmem:[#allocation4 + $0x25d0] sm:$0xff]
    %v1432 = vld [vmem:[#allocation4 + $0x25d8] sm:$0xff]
    %v1433 = vld [vmem:[#allocation4 + $0x25e0] sm:$0xff]
    %v1434 = vld [vmem:[#allocation4 + $0x25e8] sm:$0xff]
    %v1435 = vld [vmem:[#allocation4 + $0x25f0] sm:$0xff]
    %v1436 = vld [vmem:[#allocation4 + $0x25f8] sm:$0xff]
    %v1437 = vld [vmem:[#allocation4 + $0x2600] sm:$0xff]
    %v1438 = vld [vmem:[#allocation4 + $0x2608] sm:$0xff]
    %v1439 = vld [vmem:[#allocation4 + $0x2610] sm:$0xff]
    %v1440 = vld [vmem:[#allocation4 + $0x2618] sm:$0xff]
    %v1441 = vld [vmem:[#allocation4 + $0x2620] sm:$0xff]
    %v1442 = vld [vmem:[#allocation4 + $0x2628] sm:$0xff]
    %v1443 = vld [vmem:[#allocation4 + $0x2630] sm:$0xff]
    %v1444 = vld [vmem:[#allocation4 + $0x2638] sm:$0xff]
    %v1445 = vld [vmem:[#allocation4 + $0x2640] sm:$0xff]
    %v1446 = vld [vmem:[#allocation4 + $0x2648] sm:$0xff]
    %v1447 = vld [vmem:[#allocation4 + $0x2650] sm:$0xff]
    %v1448 = vld [vmem:[#allocation4 + $0x2658] sm:$0xff]
    %v1449 = vld [vmem:[#allocation4 + $0x2660] sm:$0xff]
    %v1450 = vld [vmem:[#allocation4 + $0x2668] sm:$0xff]
    %v1451 = vld [vmem:[#allocation4 + $0x2670] sm:$0xff]
    %v1452 = vld [vmem:[#allocation4 + $0x2678] sm:$0xff]
    %v1453 = vld [vmem:[#allocation4 + $0x2680] sm:$0xff]
    %v1454 = vld [vmem:[#allocation4 + $0x2688] sm:$0xff]
    %v1455 = vld [vmem:[#allocation4 + $0x2690] sm:$0xff]
    %v1456 = vld [vmem:[#allocation4 + $0x2698] sm:$0xff]
    %v1457 = vld [vmem:[#allocation4 + $0x26a0] sm:$0xff]
    %v1458 = vld [vmem:[#allocation4 + $0x26a8] sm:$0xff]
    %v1459 = vld [vmem:[#allocation4 + $0x26b0] sm:$0xff]
    %v1460 = vld [vmem:[#allocation4 + $0x26b8] sm:$0xff]
    %v1461 = vld [vmem:[#allocation4 + $0x26c0] sm:$0xff]
    %v1462 = vld [vmem:[#allocation4 + $0x26c8] sm:$0xff]
    %v1463 = vld [vmem:[#allocation4 + $0x26d0] sm:$0xff]
    %v1464 = vld [vmem:[#allocation4 + $0x26d8] sm:$0xff]
    %v1465 = vld [vmem:[#allocation4 + $0x26e0] sm:$0xff]
    %v1466 = vld [vmem:[#allocation4 + $0x26e8] sm:$0xff]
    %v1467 = vld [vmem:[#allocation4 + $0x26f0] sm:$0xff]
    %v1468 = vld [vmem:[#allocation4 + $0x26f8] sm:$0xff]
    %v1469 = vld [vmem:[#allocation4 + $0x2700] sm:$0xff]
    %v1470 = vld [vmem:[#allocation4 + $0x2708] sm:$0xff]
    %v1471 = vld [vmem:[#allocation4 + $0x2710] sm:$0xff]
    %v1472 = vld [vmem:[#allocation4 + $0x2718] sm:$0xff]
    %v1473 = vld [vmem:[#allocation4 + $0x2720] sm:$0xff]
    %v1474 = vld [vmem:[#allocation4 + $0x2728] sm:$0xff]
    %v1475 = vld [vmem:[#allocation4 + $0x2730] sm:$0xff]
    %v1476 = vld [vmem:[#allocation4 + $0x2738] sm:$0xff]
    %v1477 = vld [vmem:[#allocation4 + $0x2740] sm:$0xff]
    %v1478 = vld [vmem:[#allocation4 + $0x2748] sm:$0xff]
    %v1479 = vld [vmem:[#allocation4 + $0x2750] sm:$0xff]
    %v1480 = vld [vmem:[#allocation4 + $0x2758] sm:$0xff]
    %v1481 = vld [vmem:[#allocation4 + $0x2760] sm:$0xff]
    %v1482 = vld [vmem:[#allocation4 + $0x2768] sm:$0xff]
    %v1483 = vld [vmem:[#allocation4 + $0x2770] sm:$0xff]
    %v1484 = vld [vmem:[#allocation4 + $0x2778] sm:$0xff]
    %v1485 = vld [vmem:[#allocation4 + $0x2780] sm:$0xff]
    %v1486 = vld [vmem:[#allocation4 + $0x2788] sm:$0xff]
    %v1487 = vld [vmem:[#allocation4 + $0x2790] sm:$0xff]
    %v1488 = vld [vmem:[#allocation4 + $0x2798] sm:$0xff]
    %v1489 = vld [vmem:[#allocation4 + $0x27a0] sm:$0xff]
    %v1490 = vld [vmem:[#allocation4 + $0x27a8] sm:$0xff]
    %v1491 = vld [vmem:[#allocation4 + $0x27b0] sm:$0xff]
    %v1492 = vld [vmem:[#allocation4 + $0x27b8] sm:$0xff]
    %v1493 = vld [vmem:[#allocation4 + $0x27c0] sm:$0xff]
    %v1494 = vld [vmem:[#allocation4 + $0x27c8] sm:$0xff]
    %v1495 = vld [vmem:[#allocation4 + $0x27d0] sm:$0xff]
    %v1496 = vld [vmem:[#allocation4 + $0x27d8] sm:$0xff]
    %v1497 = vld [vmem:[#allocation4 + $0x27e0] sm:$0xff]
    %v1498 = vld [vmem:[#allocation4 + $0x27e8] sm:$0xff]
    %v1499 = vld [vmem:[#allocation4 + $0x27f0] sm:$0xff]
    %v1500 = vld [vmem:[#allocation4 + $0x27f8] sm:$0xff]
    %v1501 = vld [vmem:[#allocation4 + $0x2800] sm:$0xff]
    %v1502 = vld [vmem:[#allocation4 + $0x2808] sm:$0xff]
    %v1503 = vld [vmem:[#allocation4 + $0x2810] sm:$0xff]
    %v1504 = vld [vmem:[#allocation4 + $0x2818] sm:$0xff]
    %v1505 = vld [vmem:[#allocation4 + $0x2820] sm:$0xff]
    %v1506 = vld [vmem:[#allocation4 + $0x2828] sm:$0xff]
    %v1507 = vld [vmem:[#allocation4 + $0x2830] sm:$0xff]
    %v1508 = vld [vmem:[#allocation4 + $0x2838] sm:$0xff]
    %v1509 = vld [vmem:[#allocation4 + $0x2840] sm:$0xff]
    %v1510 = vld [vmem:[#allocation4 + $0x2848] sm:$0xff]
    %v1511 = vld [vmem:[#allocation4 + $0x2850] sm:$0xff]
    %v1512 = vld [vmem:[#allocation4 + $0x2858] sm:$0xff]
    %v1513 = vld [vmem:[#allocation4 + $0x2860] sm:$0xff]
    %v1514 = vld [vmem:[#allocation4 + $0x2868] sm:$0xff]
    %v1515 = vld [vmem:[#allocation4 + $0x2870] sm:$0xff]
    %v1516 = vld [vmem:[#allocation4 + $0x2878] sm:$0xff]
    %v1517 = vld [vmem:[#allocation4 + $0x2880] sm:$0xff]
    %v1518 = vld [vmem:[#allocation4 + $0x2888] sm:$0xff]
    %v1519 = vld [vmem:[#allocation4 + $0x2890] sm:$0xff]
    %v1520 = vld [vmem:[#allocation4 + $0x2898] sm:$0xff]
    %v1521 = vld [vmem:[#allocation4 + $0x28a0] sm:$0xff]
    %v1522 = vld [vmem:[#allocation4 + $0x28a8] sm:$0xff]
    %v1523 = vld [vmem:[#allocation4 + $0x28b0] sm:$0xff]
    %v1524 = vld [vmem:[#allocation4 + $0x28b8] sm:$0xff]
    %v1525 = vld [vmem:[#allocation4 + $0x28c0] sm:$0xff]
    %v1526 = vld [vmem:[#allocation4 + $0x28c8] sm:$0xff]
    %v1527 = vld [vmem:[#allocation4 + $0x28d0] sm:$0xff]
    %v1528 = vld [vmem:[#allocation4 + $0x28d8] sm:$0xff]
    %v1529 = vld [vmem:[#allocation4 + $0x28e0] sm:$0xff]
    %v1530 = vld [vmem:[#allocation4 + $0x28e8] sm:$0xff]
    %v1531 = vld [vmem:[#allocation4 + $0x28f0] sm:$0xff]
    %v1532 = vld [vmem:[#allocation4 + $0x28f8] sm:$0xff]
    %v1533 = vld [vmem:[#allocation4 + $0x2900] sm:$0xff]
    %v1534 = vld [vmem:[#allocation4 + $0x2908] sm:$0xff]
    %v1535 = vld [vmem:[#allocation4 + $0x2910] sm:$0xff]
    %v1536 = vld [vmem:[#allocation4 + $0x2918] sm:$0xff]
    %v1537 = vld [vmem:[#allocation4 + $0x2920] sm:$0xff]
    %v1538 = vld [vmem:[#allocation4 + $0x2928] sm:$0xff]
    %v1539 = vld [vmem:[#allocation4 + $0x2930] sm:$0xff]
    %v1540 = vld [vmem:[#allocation4 + $0x2938] sm:$0xff]
    %v1541 = vld [vmem:[#allocation4 + $0x2940] sm:$0xff]
    %v1542 = vld [vmem:[#allocation4 + $0x2948] sm:$0xff]
    %v1543 = vld [vmem:[#allocation4 + $0x2950] sm:$0xff]
    %v1544 = vld [vmem:[#allocation4 + $0x2958] sm:$0xff]
    %v1545 = vld [vmem:[#allocation4 + $0x2960] sm:$0xff]
    %v1546 = vld [vmem:[#allocation4 + $0x2968] sm:$0xff]
    %v1547 = vld [vmem:[#allocation4 + $0x2970] sm:$0xff]
    %v1548 = vld [vmem:[#allocation4 + $0x2978] sm:$0xff]
    %v1549 = vld [vmem:[#allocation4 + $0x2980] sm:$0xff]
    %v1550 = vld [vmem:[#allocation4 + $0x2988] sm:$0xff]
    %v1551 = vld [vmem:[#allocation4 + $0x2990] sm:$0xff]
    %v1552 = vld [vmem:[#allocation4 + $0x2998] sm:$0xff]
    %v1553 = vld [vmem:[#allocation4 + $0x29a0] sm:$0xff]
    %v1554 = vld [vmem:[#allocation4 + $0x29a8] sm:$0xff]
    %v1555 = vld [vmem:[#allocation4 + $0x29b0] sm:$0xff]
    %v1556 = vld [vmem:[#allocation4 + $0x29b8] sm:$0xff]
    %v1557 = vld [vmem:[#allocation4 + $0x29c0] sm:$0xff]
    %v1558 = vld [vmem:[#allocation4 + $0x29c8] sm:$0xff]
    %v1559 = vld [vmem:[#allocation4 + $0x29d0] sm:$0xff]
    %v1560 = vld [vmem:[#allocation4 + $0x29d8] sm:$0xff]
    %v1561 = vld [vmem:[#allocation4 + $0x29e0] sm:$0xff]
    %v1562 = vld [vmem:[#allocation4 + $0x29e8] sm:$0xff]
    %v1563 = vld [vmem:[#allocation4 + $0x29f0] sm:$0xff]
    %v1564 = vld [vmem:[#allocation4 + $0x29f8] sm:$0xff]
    %v1565 = vld [vmem:[#allocation4 + $0x2a00] sm:$0xff]
    %v1566 = vld [vmem:[#allocation4 + $0x2a08] sm:$0xff]
    %v1567 = vld [vmem:[#allocation4 + $0x2a10] sm:$0xff]
    %v1568 = vld [vmem:[#allocation4 + $0x2a18] sm:$0xff]
    %v1569 = vld [vmem:[#allocation4 + $0x2a20] sm:$0xff]
    %v1570 = vld [vmem:[#allocation4 + $0x2a28] sm:$0xff]
    %v1571 = vld [vmem:[#allocation4 + $0x2a30] sm:$0xff]
    %v1572 = vld [vmem:[#allocation4 + $0x2a38] sm:$0xff]
    %v1573 = vld [vmem:[#allocation4 + $0x2a40] sm:$0xff]
    %v1574 = vld [vmem:[#allocation4 + $0x2a48] sm:$0xff]
    %v1575 = vld [vmem:[#allocation4 + $0x2a50] sm:$0xff]
    %v1576 = vld [vmem:[#allocation4 + $0x2a58] sm:$0xff]
    %v1577 = vld [vmem:[#allocation4 + $0x2a60] sm:$0xff]
    %v1578 = vld [vmem:[#allocation4 + $0x2a68] sm:$0xff]
    %v1579 = vld [vmem:[#allocation4 + $0x2a70] sm:$0xff]
    %v1580 = vld [vmem:[#allocation4 + $0x2a78] sm:$0xff]
    %v1581 = vld [vmem:[#allocation4 + $0x2a80] sm:$0xff]
    %v1582 = vld [vmem:[#allocation4 + $0x2a88] sm:$0xff]
    %v1583 = vld [vmem:[#allocation4 + $0x2a90] sm:$0xff]
    %v1584 = vld [vmem:[#allocation4 + $0x2a98] sm:$0xff]
    %v1585 = vld [vmem:[#allocation4 + $0x2aa0] sm:$0xff]
    %v1586 = vld [vmem:[#allocation4 + $0x2aa8] sm:$0xff]
    %v1587 = vld [vmem:[#allocation4 + $0x2ab0] sm:$0xff]
    %v1588 = vld [vmem:[#allocation4 + $0x2ab8] sm:$0xff]
    %v1589 = vld [vmem:[#allocation4 + $0x2ac0] sm:$0xff]
    %v1590 = vld [vmem:[#allocation4 + $0x2ac8] sm:$0xff]
    %v1591 = vld [vmem:[#allocation4 + $0x2ad0] sm:$0xff]
    %v1592 = vld [vmem:[#allocation4 + $0x2ad8] sm:$0xff]
    %v1593 = vld [vmem:[#allocation4 + $0x2ae0] sm:$0xff]
    %v1594 = vld [vmem:[#allocation4 + $0x2ae8] sm:$0xff]
    %v1595 = vld [vmem:[#allocation4 + $0x2af0] sm:$0xff]
    %v1596 = vld [vmem:[#allocation4 + $0x2af8] sm:$0xff]
    %v1597 = vld [vmem:[#allocation4 + $0x2b00] sm:$0xff]
    %v1598 = vld [vmem:[#allocation4 + $0x2b08] sm:$0xff]
    %v1599 = vld [vmem:[#allocation4 + $0x2b10] sm:$0xff]
    %v1600 = vld [vmem:[#allocation4 + $0x2b18] sm:$0xff]
    %v1601 = vld [vmem:[#allocation4 + $0x2b20] sm:$0xff]
    %v1602 = vld [vmem:[#allocation4 + $0x2b28] sm:$0xff]
    %v1603 = vld [vmem:[#allocation4 + $0x2b30] sm:$0xff]
    %v1604 = vld [vmem:[#allocation4 + $0x2b38] sm:$0xff]
    %v1605 = vld [vmem:[#allocation4 + $0x2b40] sm:$0xff]
    %v1606 = vld [vmem:[#allocation4 + $0x2b48] sm:$0xff]
    %v1607 = vld [vmem:[#allocation4 + $0x2b50] sm:$0xff]
    %v1608 = vld [vmem:[#allocation4 + $0x2b58] sm:$0xff]
    %v1609 = vld [vmem:[#allocation4 + $0x2b60] sm:$0xff]
    %v1610 = vld [vmem:[#allocation4 + $0x2b68] sm:$0xff]
    %v1611 = vld [vmem:[#allocation4 + $0x2b70] sm:$0xff]
    %v1612 = vld [vmem:[#allocation4 + $0x2b78] sm:$0xff]
    %v1613 = vld [vmem:[#allocation4 + $0x2b80] sm:$0xff]
    %v1614 = vld [vmem:[#allocation4 + $0x2b88] sm:$0xff]
    %v1615 = vld [vmem:[#allocation4 + $0x2b90] sm:$0xff]
    %v1616 = vld [vmem:[#allocation4 + $0x2b98] sm:$0xff]
    %v1617 = vld [vmem:[#allocation4 + $0x2ba0] sm:$0xff]
    %v1618 = vld [vmem:[#allocation4 + $0x2ba8] sm:$0xff]
    %v1619 = vld [vmem:[#allocation4 + $0x2bb0] sm:$0xff]
    %v1620 = vld [vmem:[#allocation4 + $0x2bb8] sm:$0xff]
    %v1621 = vld [vmem:[#allocation4 + $0x2bc0] sm:$0xff]
    %v1622 = vld [vmem:[#allocation4 + $0x2bc8] sm:$0xff]
    %v1623 = vld [vmem:[#allocation4 + $0x2bd0] sm:$0xff]
    %v1624 = vld [vmem:[#allocation4 + $0x2bd8] sm:$0xff]
    %v1625 = vld [vmem:[#allocation4 + $0x2be0] sm:$0xff]
    %v1626 = vld [vmem:[#allocation4 + $0x2be8] sm:$0xff]
    %v1627 = vld [vmem:[#allocation4 + $0x2bf0] sm:$0xff]
    %v1628 = vld [vmem:[#allocation4 + $0x2bf8] sm:$0xff]
    %v1629 = vld [vmem:[#allocation4 + $0x2c00] sm:$0xff]
    %v1630 = vld [vmem:[#allocation4 + $0x2c08] sm:$0xff]
    %v1631 = vld [vmem:[#allocation4 + $0x2c10] sm:$0xff]
    %v1632 = vld [vmem:[#allocation4 + $0x2c18] sm:$0xff]
    %v1633 = vld [vmem:[#allocation4 + $0x2c20] sm:$0xff]
    %v1634 = vld [vmem:[#allocation4 + $0x2c28] sm:$0xff]
    %v1635 = vld [vmem:[#allocation4 + $0x2c30] sm:$0xff]
    %v1636 = vld [vmem:[#allocation4 + $0x2c38] sm:$0xff]
    %v1637 = vld [vmem:[#allocation4 + $0x2c40] sm:$0xff]
    %v1638 = vld [vmem:[#allocation4 + $0x2c48] sm:$0xff]
    %v1639 = vld [vmem:[#allocation4 + $0x2c50] sm:$0xff]
    %v1640 = vld [vmem:[#allocation4 + $0x2c58] sm:$0xff]
    %v1641 = vld [vmem:[#allocation4 + $0x2c60] sm:$0xff]
    %v1642 = vld [vmem:[#allocation4 + $0x2c68] sm:$0xff]
    %v1643 = vld [vmem:[#allocation4 + $0x2c70] sm:$0xff]
    %v1644 = vld [vmem:[#allocation4 + $0x2c78] sm:$0xff]
    %v1645 = vld [vmem:[#allocation4 + $0x2c80] sm:$0xff]
    %v1646 = vld [vmem:[#allocation4 + $0x2c88] sm:$0xff]
    %v1647 = vld [vmem:[#allocation4 + $0x2c90] sm:$0xff]
    %v1648 = vld [vmem:[#allocation4 + $0x2c98] sm:$0xff]
    %v1649 = vld [vmem:[#allocation4 + $0x2ca0] sm:$0xff]
    %v1650 = vld [vmem:[#allocation4 + $0x2ca8] sm:$0xff]
    %v1651 = vld [vmem:[#allocation4 + $0x2cb0] sm:$0xff]
    %v1652 = vld [vmem:[#allocation4 + $0x2cb8] sm:$0xff]
    %v1653 = vld [vmem:[#allocation4 + $0x2cc0] sm:$0xff]
    %v1654 = vld [vmem:[#allocation4 + $0x2cc8] sm:$0xff]
    %v1655 = vld [vmem:[#allocation4 + $0x2cd0] sm:$0xff]
    %v1656 = vld [vmem:[#allocation4 + $0x2cd8] sm:$0xff]
    %v1657 = vld [vmem:[#allocation4 + $0x2ce0] sm:$0xff]
    %v1658 = vld [vmem:[#allocation4 + $0x2ce8] sm:$0xff]
    %v1659 = vld [vmem:[#allocation4 + $0x2cf0] sm:$0xff]
    %v1660 = vld [vmem:[#allocation4 + $0x2cf8] sm:$0xff]
    %v1661 = vld [vmem:[#allocation4 + $0x2d00] sm:$0xff]
    %v1662 = vld [vmem:[#allocation4 + $0x2d08] sm:$0xff]
    %v1663 = vld [vmem:[#allocation4 + $0x2d10] sm:$0xff]
    %v1664 = vld [vmem:[#allocation4 + $0x2d18] sm:$0xff]
    %v1665 = vld [vmem:[#allocation4 + $0x2d20] sm:$0xff]
    %v1666 = vld [vmem:[#allocation4 + $0x2d28] sm:$0xff]
    %v1667 = vld [vmem:[#allocation4 + $0x2d30] sm:$0xff]
    %v1668 = vld [vmem:[#allocation4 + $0x2d38] sm:$0xff]
    %v1669 = vld [vmem:[#allocation4 + $0x2d40] sm:$0xff]
    %v1670 = vld [vmem:[#allocation4 + $0x2d48] sm:$0xff]
    %v1671 = vld [vmem:[#allocation4 + $0x2d50] sm:$0xff]
    %v1672 = vld [vmem:[#allocation4 + $0x2d58] sm:$0xff]
    %v1673 = vld [vmem:[#allocation4 + $0x2d60] sm:$0xff]
    %v1674 = vld [vmem:[#allocation4 + $0x2d68] sm:$0xff]
    %v1675 = vld [vmem:[#allocation4 + $0x2d70] sm:$0xff]
    %v1676 = vld [vmem:[#allocation4 + $0x2d78] sm:$0xff]
    %v1677 = vld [vmem:[#allocation4 + $0x2d80] sm:$0xff]
    %v1678 = vld [vmem:[#allocation4 + $0x2d88] sm:$0xff]
    %v1679 = vld [vmem:[#allocation4 + $0x2d90] sm:$0xff]
    %v1680 = vld [vmem:[#allocation4 + $0x2d98] sm:$0xff]
    %v1681 = vld [vmem:[#allocation4 + $0x2da0] sm:$0xff]
    %v1682 = vld [vmem:[#allocation4 + $0x2da8] sm:$0xff]
    %v1683 = vld [vmem:[#allocation4 + $0x2db0] sm:$0xff]
    %v1684 = vld [vmem:[#allocation4 + $0x2db8] sm:$0xff]
    %v1685 = vld [vmem:[#allocation4 + $0x2dc0] sm:$0xff]
    %v1686 = vld [vmem:[#allocation4 + $0x2dc8] sm:$0xff]
    %v1687 = vld [vmem:[#allocation4 + $0x2dd0] sm:$0xff]
    %v1688 = vld [vmem:[#allocation4 + $0x2dd8] sm:$0xff]
    %v1689 = vld [vmem:[#allocation4 + $0x2de0] sm:$0xff]
    %v1690 = vld [vmem:[#allocation4 + $0x2de8] sm:$0xff]
    %v1691 = vld [vmem:[#allocation4 + $0x2df0] sm:$0xff]
    %v1692 = vld [vmem:[#allocation4 + $0x2df8] sm:$0xff]
    %v1693 = vld [vmem:[#allocation4 + $0x2e00] sm:$0xff]
    %v1694 = vld [vmem:[#allocation4 + $0x2e08] sm:$0xff]
    %v1695 = vld [vmem:[#allocation4 + $0x2e10] sm:$0xff]
    %v1696 = vld [vmem:[#allocation4 + $0x2e18] sm:$0xff]
    %v1697 = vld [vmem:[#allocation4 + $0x2e20] sm:$0xff]
    %v1698 = vld [vmem:[#allocation4 + $0x2e28] sm:$0xff]
    %v1699 = vld [vmem:[#allocation4 + $0x2e30] sm:$0xff]
    %v1700 = vld [vmem:[#allocation4 + $0x2e38] sm:$0xff]
    %v1701 = vld [vmem:[#allocation4 + $0x2e40] sm:$0xff]
    %v1702 = vld [vmem:[#allocation4 + $0x2e48] sm:$0xff]
    %v1703 = vld [vmem:[#allocation4 + $0x2e50] sm:$0xff]
    %v1704 = vld [vmem:[#allocation4 + $0x2e58] sm:$0xff]
    %v1705 = vld [vmem:[#allocation4 + $0x2e60] sm:$0xff]
    %v1706 = vld [vmem:[#allocation4 + $0x2e68] sm:$0xff]
    %v1707 = vld [vmem:[#allocation4 + $0x2e70] sm:$0xff]
    %v1708 = vld [vmem:[#allocation4 + $0x2e78] sm:$0xff]
    %v1709 = vld [vmem:[#allocation4 + $0x2e80] sm:$0xff]
    %v1710 = vld [vmem:[#allocation4 + $0x2e88] sm:$0xff]
    %v1711 = vld [vmem:[#allocation4 + $0x2e90] sm:$0xff]
    %v1712 = vld [vmem:[#allocation4 + $0x2e98] sm:$0xff]
    %v1713 = vld [vmem:[#allocation4 + $0x2ea0] sm:$0xff]
    %v1714 = vld [vmem:[#allocation4 + $0x2ea8] sm:$0xff]
    %v1715 = vld [vmem:[#allocation4 + $0x2eb0] sm:$0xff]
    %v1716 = vld [vmem:[#allocation4 + $0x2eb8] sm:$0xff]
    %v1717 = vld [vmem:[#allocation4 + $0x2ec0] sm:$0xff]
    %v1718 = vld [vmem:[#allocation4 + $0x2ec8] sm:$0xff]
    %v1719 = vld [vmem:[#allocation4 + $0x2ed0] sm:$0xff]
    %v1720 = vld [vmem:[#allocation4 + $0x2ed8] sm:$0xff]
    %v1721 = vld [vmem:[#allocation4 + $0x2ee0] sm:$0xff]
    %v1722 = vld [vmem:[#allocation4 + $0x2ee8] sm:$0xff]
    %v1723 = vld [vmem:[#allocation4 + $0x2ef0] sm:$0xff]
    %v1724 = vld [vmem:[#allocation4 + $0x2ef8] sm:$0xff]
    %v1725 = vld [vmem:[#allocation4 + $0x2f00] sm:$0xff]
    %v1726 = vld [vmem:[#allocation4 + $0x2f08] sm:$0xff]
    %v1727 = vld [vmem:[#allocation4 + $0x2f10] sm:$0xff]
    %v1728 = vld [vmem:[#allocation4 + $0x2f18] sm:$0xff]
    %v1729 = vld [vmem:[#allocation4 + $0x2f20] sm:$0xff]
    %v1730 = vld [vmem:[#allocation4 + $0x2f28] sm:$0xff]
    %v1731 = vld [vmem:[#allocation4 + $0x2f30] sm:$0xff]
    %v1732 = vld [vmem:[#allocation4 + $0x2f38] sm:$0xff]
    %v1733 = vld [vmem:[#allocation4 + $0x2f40] sm:$0xff]
    %v1734 = vld [vmem:[#allocation4 + $0x2f48] sm:$0xff]
    %v1735 = vld [vmem:[#allocation4 + $0x2f50] sm:$0xff]
    %v1736 = vld [vmem:[#allocation4 + $0x2f58] sm:$0xff]
    %v1737 = vld [vmem:[#allocation4 + $0x2f60] sm:$0xff]
    %v1738 = vld [vmem:[#allocation4 + $0x2f68] sm:$0xff]
    %v1739 = vld [vmem:[#allocation4 + $0x2f70] sm:$0xff]
    %v1740 = vld [vmem:[#allocation4 + $0x2f78] sm:$0xff]
    %v1741 = vld [vmem:[#allocation4 + $0x2f80] sm:$0xff]
    %v1742 = vld [vmem:[#allocation4 + $0x2f88] sm:$0xff]
    %v1743 = vld [vmem:[#allocation4 + $0x2f90] sm:$0xff]
    %v1744 = vld [vmem:[#allocation4 + $0x2f98] sm:$0xff]
    %v1745 = vld [vmem:[#allocation4 + $0x2fa0] sm:$0xff]
    %v1746 = vld [vmem:[#allocation4 + $0x2fa8] sm:$0xff]
    %v1747 = vld [vmem:[#allocation4 + $0x2fb0] sm:$0xff]
    %v1748 = vld [vmem:[#allocation4 + $0x2fb8] sm:$0xff]
    %v1749 = vld [vmem:[#allocation4 + $0x2fc0] sm:$0xff]
    %v1750 = vld [vmem:[#allocation4 + $0x2fc8] sm:$0xff]
    %v1751 = vld [vmem:[#allocation4 + $0x2fd0] sm:$0xff]
    %v1752 = vld [vmem:[#allocation4 + $0x2fd8] sm:$0xff]
    %v1753 = vld [vmem:[#allocation4 + $0x2fe0] sm:$0xff]
    %v1754 = vld [vmem:[#allocation4 + $0x2fe8] sm:$0xff]
    %v1755 = vld [vmem:[#allocation4 + $0x2ff0] sm:$0xff]
    %v1756 = vld [vmem:[#allocation4 + $0x2ff8] sm:$0xff]
    %v1757 = vld [vmem:[#allocation6] sm:$0xff]
    %v1759 = vlaneseq
    %v1760 = vshrl.u32 %v1759, 7
    %v1761 = vsub.s32 0, %v1760
    %v1762 = vrot.slane %v1757, %v1761
    %v1763 = vlaneseq
    %v1764 = vshrl.u32 %v1763, 7
    %v1765 = vsub.s32 1, %v1764
    %v1766 = vrot.slane %v1757, %v1765
    %v1767 = vlaneseq
    %v1768 = vshrl.u32 %v1767, 7
    %v1769 = vsub.s32 2, %v1768
    %v1770 = vrot.slane %v1757, %v1769
    %v1771 = vlaneseq
    %v1772 = vshrl.u32 %v1771, 7
    %v1773 = vsub.s32 3, %v1772
    %v1774 = vrot.slane %v1757, %v1773
    %v1775 = vlaneseq
    %v1776 = vshrl.u32 %v1775, 7
    %v1777 = vsub.s32 4, %v1776
    %v1778 = vrot.slane %v1757, %v1777
    %v1779 = vlaneseq
    %v1780 = vshrl.u32 %v1779, 7
    %v1781 = vsub.s32 5, %v1780
    %v1782 = vrot.slane %v1757, %v1781
    %v1783 = vlaneseq
    %v1784 = vshrl.u32 %v1783, 7
    %v1785 = vsub.s32 6, %v1784
    %v1786 = vrot.slane %v1757, %v1785
    %v1787 = vlaneseq
    %v1788 = vshrl.u32 %v1787, 7
    %v1789 = vsub.s32 7, %v1788
    %v1790 = vrot.slane %v1757, %v1789
    %v3335 = vunpack.c.l.b16 %v221
    %v3336 = vunpack.c.h.b16 %v221
    %v3337 = vunpack.c.l.b16 %v222
    %v3338 = vunpack.c.h.b16 %v222
    %v3339 = vunpack.c.l.b16 %v223
    %v3340 = vunpack.c.h.b16 %v223
    %v3341 = vunpack.c.l.b16 %v224
    %v3342 = vunpack.c.h.b16 %v224
    %v3343 = vunpack.c.l.b16 %v225
    %v3344 = vunpack.c.h.b16 %v225
    %v3345 = vunpack.c.l.b16 %v226
    %v3346 = vunpack.c.h.b16 %v226
    %v3347 = vunpack.c.l.b16 %v227
    %v3348 = vunpack.c.h.b16 %v227
    %v3349 = vunpack.c.l.b16 %v228
    %v3350 = vunpack.c.h.b16 %v228
    %v3351 = vunpack.c.l.b16 %v229
    %v3352 = vunpack.c.h.b16 %v229
    %v3353 = vunpack.c.l.b16 %v230
    %v3354 = vunpack.c.h.b16 %v230
    %v3355 = vunpack.c.l.b16 %v231
    %v3356 = vunpack.c.h.b16 %v231
    %v3357 = vunpack.c.l.b16 %v232
    %v3358 = vunpack.c.h.b16 %v232
    %v3359 = vunpack.c.l.b16 %v233
    %v3360 = vunpack.c.h.b16 %v233
    %v3361 = vunpack.c.l.b16 %v234
    %v3362 = vunpack.c.h.b16 %v234
    %v3363 = vunpack.c.l.b16 %v235
    %v3364 = vunpack.c.h.b16 %v235
    %v3365 = vunpack.c.l.b16 %v236
    %v3366 = vunpack.c.h.b16 %v236
    %v3367 = vunpack.c.l.b16 %v237
    %v3368 = vunpack.c.h.b16 %v237
    %v3369 = vunpack.c.l.b16 %v238
    %v3370 = vunpack.c.h.b16 %v238
    %v3371 = vunpack.c.l.b16 %v239
    %v3372 = vunpack.c.h.b16 %v239
    %v3373 = vunpack.c.l.b16 %v240
    %v3374 = vunpack.c.h.b16 %v240
    %v3375 = vunpack.c.l.b16 %v241
    %v3376 = vunpack.c.h.b16 %v241
    %v3377 = vunpack.c.l.b16 %v242
    %v3378 = vunpack.c.h.b16 %v242
    %v3379 = vunpack.c.l.b16 %v243
    %v3380 = vunpack.c.h.b16 %v243
    %v3381 = vunpack.c.l.b16 %v244
    %v3382 = vunpack.c.h.b16 %v244
    %v3383 = vunpack.c.l.b16 %v245
    %v3384 = vunpack.c.h.b16 %v245
    %v3385 = vunpack.c.l.b16 %v246
    %v3386 = vunpack.c.h.b16 %v246
    %v3387 = vunpack.c.l.b16 %v247
    %v3388 = vunpack.c.h.b16 %v247
    %v3389 = vunpack.c.l.b16 %v248
    %v3390 = vunpack.c.h.b16 %v248
    %v3391 = vunpack.c.l.b16 %v249
    %v3392 = vunpack.c.h.b16 %v249
    %v3393 = vunpack.c.l.b16 %v250
    %v3394 = vunpack.c.h.b16 %v250
    %v3395 = vunpack.c.l.b16 %v251
    %v3396 = vunpack.c.h.b16 %v251
    %v3397 = vunpack.c.l.b16 %v252
    %v3398 = vunpack.c.h.b16 %v252
    %v3399 = vunpack.c.l.b16 %v253
    %v3400 = vunpack.c.h.b16 %v253
    %v3401 = vunpack.c.l.b16 %v254
    %v3402 = vunpack.c.h.b16 %v254
    %v3403 = vunpack.c.l.b16 %v255
    %v3404 = vunpack.c.h.b16 %v255
    %v3405 = vunpack.c.l.b16 %v256
    %v3406 = vunpack.c.h.b16 %v256
    %v3407 = vunpack.c.l.b16 %v257
    %v3408 = vunpack.c.h.b16 %v257
    %v3409 = vunpack.c.l.b16 %v258
    %v3410 = vunpack.c.h.b16 %v258
    %v3411 = vunpack.c.l.b16 %v259
    %v3412 = vunpack.c.h.b16 %v259
    %v3413 = vunpack.c.l.b16 %v260
    %v3414 = vunpack.c.h.b16 %v260
    %v3415 = vunpack.c.l.b16 %v261
    %v3416 = vunpack.c.h.b16 %v261
    %v3417 = vunpack.c.l.b16 %v262
    %v3418 = vunpack.c.h.b16 %v262
    %v3419 = vunpack.c.l.b16 %v263
    %v3420 = vunpack.c.h.b16 %v263
    %v3421 = vunpack.c.l.b16 %v264
    %v3422 = vunpack.c.h.b16 %v264
    %v3423 = vunpack.c.l.b16 %v265
    %v3424 = vunpack.c.h.b16 %v265
    %v3425 = vunpack.c.l.b16 %v266
    %v3426 = vunpack.c.h.b16 %v266
    %v3427 = vunpack.c.l.b16 %v267
    %v3428 = vunpack.c.h.b16 %v267
    %v3429 = vunpack.c.l.b16 %v268
    %v3430 = vunpack.c.h.b16 %v268
    %v3431 = vunpack.c.l.b16 %v269
    %v3432 = vunpack.c.h.b16 %v269
    %v3433 = vunpack.c.l.b16 %v270
    %v3434 = vunpack.c.h.b16 %v270
    %v3435 = vunpack.c.l.b16 %v271
    %v3436 = vunpack.c.h.b16 %v271
    %v3437 = vunpack.c.l.b16 %v272
    %v3438 = vunpack.c.h.b16 %v272
    %v3439 = vunpack.c.l.b16 %v273
    %v3440 = vunpack.c.h.b16 %v273
    %v3441 = vunpack.c.l.b16 %v274
    %v3442 = vunpack.c.h.b16 %v274
    %v3443 = vunpack.c.l.b16 %v275
    %v3444 = vunpack.c.h.b16 %v275
    %v3445 = vunpack.c.l.b16 %v276
    %v3446 = vunpack.c.h.b16 %v276
    %v3447 = vunpack.c.l.b16 %v277
    %v3448 = vunpack.c.h.b16 %v277
    %v3449 = vunpack.c.l.b16 %v278
    %v3450 = vunpack.c.h.b16 %v278
    %v3451 = vunpack.c.l.b16 %v279
    %v3452 = vunpack.c.h.b16 %v279
    %v3453 = vunpack.c.l.b16 %v280
    %v3454 = vunpack.c.h.b16 %v280
    %v3455 = vunpack.c.l.b16 %v281
    %v3456 = vunpack.c.h.b16 %v281
    %v3457 = vunpack.c.l.b16 %v282
    %v3458 = vunpack.c.h.b16 %v282
    %v3459 = vunpack.c.l.b16 %v283
    %v3460 = vunpack.c.h.b16 %v283
    %v3461 = vunpack.c.l.b16 %v284
    %v3462 = vunpack.c.h.b16 %v284
    %v3463 = vunpack.c.l.b16 %v285
    %v3464 = vunpack.c.h.b16 %v285
    %v3465 = vunpack.c.l.b16 %v286
    %v3466 = vunpack.c.h.b16 %v286
    %v3467 = vunpack.c.l.b16 %v287
    %v3468 = vunpack.c.h.b16 %v287
    %v3469 = vunpack.c.l.b16 %v288
    %v3470 = vunpack.c.h.b16 %v288
    %v3471 = vunpack.c.l.b16 %v289
    %v3472 = vunpack.c.h.b16 %v289
    %v3473 = vunpack.c.l.b16 %v290
    %v3474 = vunpack.c.h.b16 %v290
    %v3475 = vunpack.c.l.b16 %v291
    %v3476 = vunpack.c.h.b16 %v291
    %v3477 = vunpack.c.l.b16 %v292
    %v3478 = vunpack.c.h.b16 %v292
    %v3479 = vunpack.c.l.b16 %v293
    %v3480 = vunpack.c.h.b16 %v293
    %v3481 = vunpack.c.l.b16 %v294
    %v3482 = vunpack.c.h.b16 %v294
    %v3483 = vunpack.c.l.b16 %v295
    %v3484 = vunpack.c.h.b16 %v295
    %v3485 = vunpack.c.l.b16 %v296
    %v3486 = vunpack.c.h.b16 %v296
    %v3487 = vunpack.c.l.b16 %v297
    %v3488 = vunpack.c.h.b16 %v297
    %v3489 = vunpack.c.l.b16 %v298
    %v3490 = vunpack.c.h.b16 %v298
    %v3491 = vunpack.c.l.b16 %v299
    %v3492 = vunpack.c.h.b16 %v299
    %v3493 = vunpack.c.l.b16 %v300
    %v3494 = vunpack.c.h.b16 %v300
    %v3495 = vunpack.c.l.b16 %v301
    %v3496 = vunpack.c.h.b16 %v301
    %v3497 = vunpack.c.l.b16 %v302
    %v3498 = vunpack.c.h.b16 %v302
    %v3499 = vunpack.c.l.b16 %v303
    %v3500 = vunpack.c.h.b16 %v303
    %v3501 = vunpack.c.l.b16 %v304
    %v3502 = vunpack.c.h.b16 %v304
    %v3503 = vunpack.c.l.b16 %v305
    %v3504 = vunpack.c.h.b16 %v305
    %v3505 = vunpack.c.l.b16 %v306
    %v3506 = vunpack.c.h.b16 %v306
    %v3507 = vunpack.c.l.b16 %v307
    %v3508 = vunpack.c.h.b16 %v307
    %v3509 = vunpack.c.l.b16 %v308
    %v3510 = vunpack.c.h.b16 %v308
    %v3511 = vunpack.c.l.b16 %v309
    %v3512 = vunpack.c.h.b16 %v309
    %v3513 = vunpack.c.l.b16 %v310
    %v3514 = vunpack.c.h.b16 %v310
    %v3515 = vunpack.c.l.b16 %v311
    %v3516 = vunpack.c.h.b16 %v311
    %v3517 = vunpack.c.l.b16 %v312
    %v3518 = vunpack.c.h.b16 %v312
    %v3519 = vunpack.c.l.b16 %v313
    %v3520 = vunpack.c.h.b16 %v313
    %v3521 = vunpack.c.l.b16 %v314
    %v3522 = vunpack.c.h.b16 %v314
    %v3523 = vunpack.c.l.b16 %v315
    %v3524 = vunpack.c.h.b16 %v315
    %v3525 = vunpack.c.l.b16 %v316
    %v3526 = vunpack.c.h.b16 %v316
    %v3527 = vunpack.c.l.b16 %v317
    %v3528 = vunpack.c.h.b16 %v317
    %v3529 = vunpack.c.l.b16 %v318
    %v3530 = vunpack.c.h.b16 %v318
    %v3531 = vunpack.c.l.b16 %v319
    %v3532 = vunpack.c.h.b16 %v319
    %v3533 = vunpack.c.l.b16 %v320
    %v3534 = vunpack.c.h.b16 %v320
    %v3535 = vunpack.c.l.b16 %v321
    %v3536 = vunpack.c.h.b16 %v321
    %v3537 = vunpack.c.l.b16 %v322
    %v3538 = vunpack.c.h.b16 %v322
    %v3539 = vunpack.c.l.b16 %v323
    %v3540 = vunpack.c.h.b16 %v323
    %v3541 = vunpack.c.l.b16 %v324
    %v3542 = vunpack.c.h.b16 %v324
    %v3543 = vunpack.c.l.b16 %v325
    %v3544 = vunpack.c.h.b16 %v325
    %v3545 = vunpack.c.l.b16 %v326
    %v3546 = vunpack.c.h.b16 %v326
    %v3547 = vunpack.c.l.b16 %v327
    %v3548 = vunpack.c.h.b16 %v327
    %v3549 = vunpack.c.l.b16 %v328
    %v3550 = vunpack.c.h.b16 %v328
    %v3551 = vunpack.c.l.b16 %v329
    %v3552 = vunpack.c.h.b16 %v329
    %v3553 = vunpack.c.l.b16 %v330
    %v3554 = vunpack.c.h.b16 %v330
    %v3555 = vunpack.c.l.b16 %v331
    %v3556 = vunpack.c.h.b16 %v331
    %v3557 = vunpack.c.l.b16 %v332
    %v3558 = vunpack.c.h.b16 %v332
    %v3559 = vunpack.c.l.b16 %v333
    %v3560 = vunpack.c.h.b16 %v333
    %v3561 = vunpack.c.l.b16 %v334
    %v3562 = vunpack.c.h.b16 %v334
    %v3563 = vunpack.c.l.b16 %v335
    %v3564 = vunpack.c.h.b16 %v335
    %v3565 = vunpack.c.l.b16 %v336
    %v3566 = vunpack.c.h.b16 %v336
    %v3567 = vunpack.c.l.b16 %v337
    %v3568 = vunpack.c.h.b16 %v337
    %v3569 = vunpack.c.l.b16 %v338
    %v3570 = vunpack.c.h.b16 %v338
    %v3571 = vunpack.c.l.b16 %v339
    %v3572 = vunpack.c.h.b16 %v339
    %v3573 = vunpack.c.l.b16 %v340
    %v3574 = vunpack.c.h.b16 %v340
    %v3575 = vunpack.c.l.b16 %v341
    %v3576 = vunpack.c.h.b16 %v341
    %v3577 = vunpack.c.l.b16 %v342
    %v3578 = vunpack.c.h.b16 %v342
    %v3579 = vunpack.c.l.b16 %v343
    %v3580 = vunpack.c.h.b16 %v343
    %v3581 = vunpack.c.l.b16 %v344
    %v3582 = vunpack.c.h.b16 %v344
    %v3583 = vunpack.c.l.b16 %v345
    %v3584 = vunpack.c.h.b16 %v345
    %v3585 = vunpack.c.l.b16 %v346
    %v3586 = vunpack.c.h.b16 %v346
    %v3587 = vunpack.c.l.b16 %v347
    %v3588 = vunpack.c.h.b16 %v347
    %v3589 = vunpack.c.l.b16 %v348
    %v3590 = vunpack.c.h.b16 %v348
    %v3591 = vunpack.c.l.b16 %v349
    %v3592 = vunpack.c.h.b16 %v349
    %v3593 = vunpack.c.l.b16 %v350
    %v3594 = vunpack.c.h.b16 %v350
    %v3595 = vunpack.c.l.b16 %v351
    %v3596 = vunpack.c.h.b16 %v351
    %v3597 = vunpack.c.l.b16 %v352
    %v3598 = vunpack.c.h.b16 %v352
    %v3599 = vunpack.c.l.b16 %v353
    %v3600 = vunpack.c.h.b16 %v353
    %v3601 = vunpack.c.l.b16 %v354
    %v3602 = vunpack.c.h.b16 %v354
    %v3603 = vunpack.c.l.b16 %v355
    %v3604 = vunpack.c.h.b16 %v355
    %v3605 = vunpack.c.l.b16 %v356
    %v3606 = vunpack.c.h.b16 %v356
    %v3607 = vunpack.c.l.b16 %v357
    %v3608 = vunpack.c.h.b16 %v357
    %v3609 = vunpack.c.l.b16 %v358
    %v3610 = vunpack.c.h.b16 %v358
    %v3611 = vunpack.c.l.b16 %v359
    %v3612 = vunpack.c.h.b16 %v359
    %v3613 = vunpack.c.l.b16 %v360
    %v3614 = vunpack.c.h.b16 %v360
    %v3615 = vunpack.c.l.b16 %v361
    %v3616 = vunpack.c.h.b16 %v361
    %v3617 = vunpack.c.l.b16 %v362
    %v3618 = vunpack.c.h.b16 %v362
    %v3619 = vunpack.c.l.b16 %v363
    %v3620 = vunpack.c.h.b16 %v363
    %v3621 = vunpack.c.l.b16 %v364
    %v3622 = vunpack.c.h.b16 %v364
    %v3623 = vunpack.c.l.b16 %v365
    %v3624 = vunpack.c.h.b16 %v365
    %v3625 = vunpack.c.l.b16 %v366
    %v3626 = vunpack.c.h.b16 %v366
    %v3627 = vunpack.c.l.b16 %v367
    %v3628 = vunpack.c.h.b16 %v367
    %v3629 = vunpack.c.l.b16 %v368
    %v3630 = vunpack.c.h.b16 %v368
    %v3631 = vunpack.c.l.b16 %v369
    %v3632 = vunpack.c.h.b16 %v369
    %v3633 = vunpack.c.l.b16 %v370
    %v3634 = vunpack.c.h.b16 %v370
    %v3635 = vunpack.c.l.b16 %v371
    %v3636 = vunpack.c.h.b16 %v371
    %v3637 = vunpack.c.l.b16 %v372
    %v3638 = vunpack.c.h.b16 %v372
    %v3639 = vunpack.c.l.b16 %v373
    %v3640 = vunpack.c.h.b16 %v373
    %v3641 = vunpack.c.l.b16 %v374
    %v3642 = vunpack.c.h.b16 %v374
    %v3643 = vunpack.c.l.b16 %v375
    %v3644 = vunpack.c.h.b16 %v375
    %v3645 = vunpack.c.l.b16 %v376
    %v3646 = vunpack.c.h.b16 %v376
    %v3647 = vunpack.c.l.b16 %v377
    %v3648 = vunpack.c.h.b16 %v377
    %v3649 = vunpack.c.l.b16 %v378
    %v3650 = vunpack.c.h.b16 %v378
    %v3651 = vunpack.c.l.b16 %v379
    %v3652 = vunpack.c.h.b16 %v379
    %v3653 = vunpack.c.l.b16 %v380
    %v3654 = vunpack.c.h.b16 %v380
    %v3655 = vunpack.c.l.b16 %v381
    %v3656 = vunpack.c.h.b16 %v381
    %v3657 = vunpack.c.l.b16 %v382
    %v3658 = vunpack.c.h.b16 %v382
    %v3659 = vunpack.c.l.b16 %v383
    %v3660 = vunpack.c.h.b16 %v383
    %v3661 = vunpack.c.l.b16 %v384
    %v3662 = vunpack.c.h.b16 %v384
    %v3663 = vunpack.c.l.b16 %v385
    %v3664 = vunpack.c.h.b16 %v385
    %v3665 = vunpack.c.l.b16 %v386
    %v3666 = vunpack.c.h.b16 %v386
    %v3667 = vunpack.c.l.b16 %v387
    %v3668 = vunpack.c.h.b16 %v387
    %v3669 = vunpack.c.l.b16 %v388
    %v3670 = vunpack.c.h.b16 %v388
    %v3671 = vunpack.c.l.b16 %v389
    %v3672 = vunpack.c.h.b16 %v389
    %v3673 = vunpack.c.l.b16 %v390
    %v3674 = vunpack.c.h.b16 %v390
    %v3675 = vunpack.c.l.b16 %v391
    %v3676 = vunpack.c.h.b16 %v391
    %v3677 = vunpack.c.l.b16 %v392
    %v3678 = vunpack.c.h.b16 %v392
    %v3679 = vunpack.c.l.b16 %v393
    %v3680 = vunpack.c.h.b16 %v393
    %v3681 = vunpack.c.l.b16 %v394
    %v3682 = vunpack.c.h.b16 %v394
    %v3683 = vunpack.c.l.b16 %v395
    %v3684 = vunpack.c.h.b16 %v395
    %v3685 = vunpack.c.l.b16 %v396
    %v3686 = vunpack.c.h.b16 %v396
    %v3687 = vunpack.c.l.b16 %v397
    %v3688 = vunpack.c.h.b16 %v397
    %v3689 = vunpack.c.l.b16 %v398
    %v3690 = vunpack.c.h.b16 %v398
    %v3691 = vunpack.c.l.b16 %v399
    %v3692 = vunpack.c.h.b16 %v399
    %v3693 = vunpack.c.l.b16 %v400
    %v3694 = vunpack.c.h.b16 %v400
    %v3695 = vunpack.c.l.b16 %v401
    %v3696 = vunpack.c.h.b16 %v401
    %v3697 = vunpack.c.l.b16 %v402
    %v3698 = vunpack.c.h.b16 %v402
    %v3699 = vunpack.c.l.b16 %v403
    %v3700 = vunpack.c.h.b16 %v403
    %v3701 = vunpack.c.l.b16 %v404
    %v3702 = vunpack.c.h.b16 %v404
    %v3703 = vunpack.c.l.b16 %v405
    %v3704 = vunpack.c.h.b16 %v405
    %v3705 = vunpack.c.l.b16 %v406
    %v3706 = vunpack.c.h.b16 %v406
    %v3707 = vunpack.c.l.b16 %v407
    %v3708 = vunpack.c.h.b16 %v407
    %v3709 = vunpack.c.l.b16 %v408
    %v3710 = vunpack.c.h.b16 %v408
    %v3711 = vunpack.c.l.b16 %v409
    %v3712 = vunpack.c.h.b16 %v409
    %v3713 = vunpack.c.l.b16 %v410
    %v3714 = vunpack.c.h.b16 %v410
    %v3715 = vunpack.c.l.b16 %v411
    %v3716 = vunpack.c.h.b16 %v411
    %v3717 = vunpack.c.l.b16 %v412
    %v3718 = vunpack.c.h.b16 %v412
    %v3719 = vunpack.c.l.b16 %v413
    %v3720 = vunpack.c.h.b16 %v413
    %v3721 = vunpack.c.l.b16 %v414
    %v3722 = vunpack.c.h.b16 %v414
    %v3723 = vunpack.c.l.b16 %v415
    %v3724 = vunpack.c.h.b16 %v415
    %v3725 = vunpack.c.l.b16 %v416
    %v3726 = vunpack.c.h.b16 %v416
    %v3727 = vunpack.c.l.b16 %v417
    %v3728 = vunpack.c.h.b16 %v417
    %v3729 = vunpack.c.l.b16 %v418
    %v3730 = vunpack.c.h.b16 %v418
    %v3731 = vunpack.c.l.b16 %v419
    %v3732 = vunpack.c.h.b16 %v419
    %v3733 = vunpack.c.l.b16 %v420
    %v3734 = vunpack.c.h.b16 %v420
    %v3735 = vunpack.c.l.b16 %v421
    %v3736 = vunpack.c.h.b16 %v421
    %v3737 = vunpack.c.l.b16 %v422
    %v3738 = vunpack.c.h.b16 %v422
    %v3739 = vunpack.c.l.b16 %v423
    %v3740 = vunpack.c.h.b16 %v423
    %v3741 = vunpack.c.l.b16 %v424
    %v3742 = vunpack.c.h.b16 %v424
    %v3743 = vunpack.c.l.b16 %v425
    %v3744 = vunpack.c.h.b16 %v425
    %v3745 = vunpack.c.l.b16 %v426
    %v3746 = vunpack.c.h.b16 %v426
    %v3747 = vunpack.c.l.b16 %v427
    %v3748 = vunpack.c.h.b16 %v427
    %v3749 = vunpack.c.l.b16 %v428
    %v3750 = vunpack.c.h.b16 %v428
    %v3751 = vunpack.c.l.b16 %v429
    %v3752 = vunpack.c.h.b16 %v429
    %v3753 = vunpack.c.l.b16 %v430
    %v3754 = vunpack.c.h.b16 %v430
    %v3755 = vunpack.c.l.b16 %v431
    %v3756 = vunpack.c.h.b16 %v431
    %v3757 = vunpack.c.l.b16 %v432
    %v3758 = vunpack.c.h.b16 %v432
    %v3759 = vunpack.c.l.b16 %v433
    %v3760 = vunpack.c.h.b16 %v433
    %v3761 = vunpack.c.l.b16 %v434
    %v3762 = vunpack.c.h.b16 %v434
    %v3763 = vunpack.c.l.b16 %v435
    %v3764 = vunpack.c.h.b16 %v435
    %v3765 = vunpack.c.l.b16 %v436
    %v3766 = vunpack.c.h.b16 %v436
    %v3767 = vunpack.c.l.b16 %v437
    %v3768 = vunpack.c.h.b16 %v437
    %v3769 = vunpack.c.l.b16 %v438
    %v3770 = vunpack.c.h.b16 %v438
    %v3771 = vunpack.c.l.b16 %v439
    %v3772 = vunpack.c.h.b16 %v439
    %v3773 = vunpack.c.l.b16 %v440
    %v3774 = vunpack.c.h.b16 %v440
    %v3775 = vunpack.c.l.b16 %v441
    %v3776 = vunpack.c.h.b16 %v441
    %v3777 = vunpack.c.l.b16 %v442
    %v3778 = vunpack.c.h.b16 %v442
    %v3779 = vunpack.c.l.b16 %v443
    %v3780 = vunpack.c.h.b16 %v443
    %v3781 = vunpack.c.l.b16 %v444
    %v3782 = vunpack.c.h.b16 %v444
    %v3783 = vunpack.c.l.b16 %v445
    %v3784 = vunpack.c.h.b16 %v445
    %v3785 = vunpack.c.l.b16 %v446
    %v3786 = vunpack.c.h.b16 %v446
    %v3787 = vunpack.c.l.b16 %v447
    %v3788 = vunpack.c.h.b16 %v447
    %v3789 = vunpack.c.l.b16 %v448
    %v3790 = vunpack.c.h.b16 %v448
    %v3791 = vunpack.c.l.b16 %v449
    %v3792 = vunpack.c.h.b16 %v449
    %v3793 = vunpack.c.l.b16 %v450
    %v3794 = vunpack.c.h.b16 %v450
    %v3795 = vunpack.c.l.b16 %v451
    %v3796 = vunpack.c.h.b16 %v451
    %v3797 = vunpack.c.l.b16 %v452
    %v3798 = vunpack.c.h.b16 %v452
    %v3799 = vunpack.c.l.b16 %v453
    %v3800 = vunpack.c.h.b16 %v453
    %v3801 = vunpack.c.l.b16 %v454
    %v3802 = vunpack.c.h.b16 %v454
    %v3803 = vunpack.c.l.b16 %v455
    %v3804 = vunpack.c.h.b16 %v455
    %v3805 = vunpack.c.l.b16 %v456
    %v3806 = vunpack.c.h.b16 %v456
    %v3807 = vunpack.c.l.b16 %v457
    %v3808 = vunpack.c.h.b16 %v457
    %v3809 = vunpack.c.l.b16 %v458
    %v3810 = vunpack.c.h.b16 %v458
    %v3811 = vunpack.c.l.b16 %v459
    %v3812 = vunpack.c.h.b16 %v459
    %v3813 = vunpack.c.l.b16 %v460
    %v3814 = vunpack.c.h.b16 %v460
    %v3815 = vunpack.c.l.b16 %v461
    %v3816 = vunpack.c.h.b16 %v461
    %v3817 = vunpack.c.l.b16 %v462
    %v3818 = vunpack.c.h.b16 %v462
    %v3819 = vunpack.c.l.b16 %v463
    %v3820 = vunpack.c.h.b16 %v463
    %v3821 = vunpack.c.l.b16 %v464
    %v3822 = vunpack.c.h.b16 %v464
    %v3823 = vunpack.c.l.b16 %v465
    %v3824 = vunpack.c.h.b16 %v465
    %v3825 = vunpack.c.l.b16 %v466
    %v3826 = vunpack.c.h.b16 %v466
    %v3827 = vunpack.c.l.b16 %v467
    %v3828 = vunpack.c.h.b16 %v467
    %v3829 = vunpack.c.l.b16 %v468
    %v3830 = vunpack.c.h.b16 %v468
    %v3831 = vunpack.c.l.b16 %v469
    %v3832 = vunpack.c.h.b16 %v469
    %v3833 = vunpack.c.l.b16 %v470
    %v3834 = vunpack.c.h.b16 %v470
    %v3835 = vunpack.c.l.b16 %v471
    %v3836 = vunpack.c.h.b16 %v471
    %v3837 = vunpack.c.l.b16 %v472
    %v3838 = vunpack.c.h.b16 %v472
    %v3839 = vunpack.c.l.b16 %v473
    %v3840 = vunpack.c.h.b16 %v473
    %v3841 = vunpack.c.l.b16 %v474
    %v3842 = vunpack.c.h.b16 %v474
    %v3843 = vunpack.c.l.b16 %v475
    %v3844 = vunpack.c.h.b16 %v475
    %v3845 = vunpack.c.l.b16 %v476
    %v3846 = vunpack.c.h.b16 %v476
    %v3847 = vunpack.c.l.b16 %v477
    %v3848 = vunpack.c.h.b16 %v477
    %v3849 = vunpack.c.l.b16 %v478
    %v3850 = vunpack.c.h.b16 %v478
    %v3851 = vunpack.c.l.b16 %v479
    %v3852 = vunpack.c.h.b16 %v479
    %v3853 = vunpack.c.l.b16 %v480
    %v3854 = vunpack.c.h.b16 %v480
    %v3855 = vunpack.c.l.b16 %v481
    %v3856 = vunpack.c.h.b16 %v481
    %v3857 = vunpack.c.l.b16 %v482
    %v3858 = vunpack.c.h.b16 %v482
    %v3859 = vunpack.c.l.b16 %v483
    %v3860 = vunpack.c.h.b16 %v483
    %v3861 = vunpack.c.l.b16 %v484
    %v3862 = vunpack.c.h.b16 %v484
    %v3863 = vunpack.c.l.b16 %v485
    %v3864 = vunpack.c.h.b16 %v485
    %v3865 = vunpack.c.l.b16 %v486
    %v3866 = vunpack.c.h.b16 %v486
    %v3867 = vunpack.c.l.b16 %v487
    %v3868 = vunpack.c.h.b16 %v487
    %v3869 = vunpack.c.l.b16 %v488
    %v3870 = vunpack.c.h.b16 %v488
    %v3871 = vunpack.c.l.b16 %v489
    %v3872 = vunpack.c.h.b16 %v489
    %v3873 = vunpack.c.l.b16 %v490
    %v3874 = vunpack.c.h.b16 %v490
    %v3875 = vunpack.c.l.b16 %v491
    %v3876 = vunpack.c.h.b16 %v491
    %v3877 = vunpack.c.l.b16 %v492
    %v3878 = vunpack.c.h.b16 %v492
    %v3879 = vunpack.c.l.b16 %v493
    %v3880 = vunpack.c.h.b16 %v493
    %v3881 = vunpack.c.l.b16 %v494
    %v3882 = vunpack.c.h.b16 %v494
    %v3883 = vunpack.c.l.b16 %v495
    %v3884 = vunpack.c.h.b16 %v495
    %v3885 = vunpack.c.l.b16 %v496
    %v3886 = vunpack.c.h.b16 %v496
    %v3887 = vunpack.c.l.b16 %v497
    %v3888 = vunpack.c.h.b16 %v497
    %v3889 = vunpack.c.l.b16 %v498
    %v3890 = vunpack.c.h.b16 %v498
    %v3891 = vunpack.c.l.b16 %v499
    %v3892 = vunpack.c.h.b16 %v499
    %v3893 = vunpack.c.l.b16 %v500
    %v3894 = vunpack.c.h.b16 %v500
    %v3895 = vunpack.c.l.b16 %v501
    %v3896 = vunpack.c.h.b16 %v501
    %v3897 = vunpack.c.l.b16 %v502
    %v3898 = vunpack.c.h.b16 %v502
    %v3899 = vunpack.c.l.b16 %v503
    %v3900 = vunpack.c.h.b16 %v503
    %v3901 = vunpack.c.l.b16 %v504
    %v3902 = vunpack.c.h.b16 %v504
    %v3903 = vunpack.c.l.b16 %v505
    %v3904 = vunpack.c.h.b16 %v505
    %v3905 = vunpack.c.l.b16 %v506
    %v3906 = vunpack.c.h.b16 %v506
    %v3907 = vunpack.c.l.b16 %v507
    %v3908 = vunpack.c.h.b16 %v507
    %v3909 = vunpack.c.l.b16 %v508
    %v3910 = vunpack.c.h.b16 %v508
    %v3911 = vunpack.c.l.b16 %v509
    %v3912 = vunpack.c.h.b16 %v509
    %v3913 = vunpack.c.l.b16 %v510
    %v3914 = vunpack.c.h.b16 %v510
    %v3915 = vunpack.c.l.b16 %v511
    %v3916 = vunpack.c.h.b16 %v511
    %v3917 = vunpack.c.l.b16 %v512
    %v3918 = vunpack.c.h.b16 %v512
    %v3919 = vunpack.c.l.b16 %v513
    %v3920 = vunpack.c.h.b16 %v513
    %v3921 = vunpack.c.l.b16 %v514
    %v3922 = vunpack.c.h.b16 %v514
    %v3923 = vunpack.c.l.b16 %v515
    %v3924 = vunpack.c.h.b16 %v515
    %v3925 = vunpack.c.l.b16 %v516
    %v3926 = vunpack.c.h.b16 %v516
    %v3927 = vunpack.c.l.b16 %v517
    %v3928 = vunpack.c.h.b16 %v517
    %v3929 = vunpack.c.l.b16 %v518
    %v3930 = vunpack.c.h.b16 %v518
    %v3931 = vunpack.c.l.b16 %v519
    %v3932 = vunpack.c.h.b16 %v519
    %v3933 = vunpack.c.l.b16 %v520
    %v3934 = vunpack.c.h.b16 %v520
    %v3935 = vunpack.c.l.b16 %v521
    %v3936 = vunpack.c.h.b16 %v521
    %v3937 = vunpack.c.l.b16 %v522
    %v3938 = vunpack.c.h.b16 %v522
    %v3939 = vunpack.c.l.b16 %v523
    %v3940 = vunpack.c.h.b16 %v523
    %v3941 = vunpack.c.l.b16 %v524
    %v3942 = vunpack.c.h.b16 %v524
    %v3943 = vunpack.c.l.b16 %v525
    %v3944 = vunpack.c.h.b16 %v525
    %v3945 = vunpack.c.l.b16 %v526
    %v3946 = vunpack.c.h.b16 %v526
    %v3947 = vunpack.c.l.b16 %v527
    %v3948 = vunpack.c.h.b16 %v527
    %v3949 = vunpack.c.l.b16 %v528
    %v3950 = vunpack.c.h.b16 %v528
    %v3951 = vunpack.c.l.b16 %v529
    %v3952 = vunpack.c.h.b16 %v529
    %v3953 = vunpack.c.l.b16 %v530
    %v3954 = vunpack.c.h.b16 %v530
    %v3955 = vunpack.c.l.b16 %v531
    %v3956 = vunpack.c.h.b16 %v531
    %v3957 = vunpack.c.l.b16 %v532
    %v3958 = vunpack.c.h.b16 %v532
    %v3959 = vunpack.c.l.b16 %v533
    %v3960 = vunpack.c.h.b16 %v533
    %v3961 = vunpack.c.l.b16 %v534
    %v3962 = vunpack.c.h.b16 %v534
    %v3963 = vunpack.c.l.b16 %v535
    %v3964 = vunpack.c.h.b16 %v535
    %v3965 = vunpack.c.l.b16 %v536
    %v3966 = vunpack.c.h.b16 %v536
    %v3967 = vunpack.c.l.b16 %v537
    %v3968 = vunpack.c.h.b16 %v537
    %v3969 = vunpack.c.l.b16 %v538
    %v3970 = vunpack.c.h.b16 %v538
    %v3971 = vunpack.c.l.b16 %v539
    %v3972 = vunpack.c.h.b16 %v539
    %v3973 = vunpack.c.l.b16 %v540
    %v3974 = vunpack.c.h.b16 %v540
    %v3975 = vunpack.c.l.b16 %v541
    %v3976 = vunpack.c.h.b16 %v541
    %v3977 = vunpack.c.l.b16 %v542
    %v3978 = vunpack.c.h.b16 %v542
    %v3979 = vunpack.c.l.b16 %v543
    %v3980 = vunpack.c.h.b16 %v543
    %v3981 = vunpack.c.l.b16 %v544
    %v3982 = vunpack.c.h.b16 %v544
    %v3983 = vunpack.c.l.b16 %v545
    %v3984 = vunpack.c.h.b16 %v545
    %v3985 = vunpack.c.l.b16 %v546
    %v3986 = vunpack.c.h.b16 %v546
    %v3987 = vunpack.c.l.b16 %v547
    %v3988 = vunpack.c.h.b16 %v547
    %v3989 = vunpack.c.l.b16 %v548
    %v3990 = vunpack.c.h.b16 %v548
    %v3991 = vunpack.c.l.b16 %v549
    %v3992 = vunpack.c.h.b16 %v549
    %v3993 = vunpack.c.l.b16 %v550
    %v3994 = vunpack.c.h.b16 %v550
    %v3995 = vunpack.c.l.b16 %v551
    %v3996 = vunpack.c.h.b16 %v551
    %v3997 = vunpack.c.l.b16 %v552
    %v3998 = vunpack.c.h.b16 %v552
    %v3999 = vunpack.c.l.b16 %v553
    %v4000 = vunpack.c.h.b16 %v553
    %v4001 = vunpack.c.l.b16 %v554
    %v4002 = vunpack.c.h.b16 %v554
    %v4003 = vunpack.c.l.b16 %v555
    %v4004 = vunpack.c.h.b16 %v555
    %v4005 = vunpack.c.l.b16 %v556
    %v4006 = vunpack.c.h.b16 %v556
    %v4007 = vunpack.c.l.b16 %v557
    %v4008 = vunpack.c.h.b16 %v557
    %v4009 = vunpack.c.l.b16 %v558
    %v4010 = vunpack.c.h.b16 %v558
    %v4011 = vunpack.c.l.b16 %v559
    %v4012 = vunpack.c.h.b16 %v559
    %v4013 = vunpack.c.l.b16 %v560
    %v4014 = vunpack.c.h.b16 %v560
    %v4015 = vunpack.c.l.b16 %v561
    %v4016 = vunpack.c.h.b16 %v561
    %v4017 = vunpack.c.l.b16 %v562
    %v4018 = vunpack.c.h.b16 %v562
    %v4019 = vunpack.c.l.b16 %v563
    %v4020 = vunpack.c.h.b16 %v563
    %v4021 = vunpack.c.l.b16 %v564
    %v4022 = vunpack.c.h.b16 %v564
    %v4023 = vunpack.c.l.b16 %v565
    %v4024 = vunpack.c.h.b16 %v565
    %v4025 = vunpack.c.l.b16 %v566
    %v4026 = vunpack.c.h.b16 %v566
    %v4027 = vunpack.c.l.b16 %v567
    %v4028 = vunpack.c.h.b16 %v567
    %v4029 = vunpack.c.l.b16 %v568
    %v4030 = vunpack.c.h.b16 %v568
    %v4031 = vunpack.c.l.b16 %v569
    %v4032 = vunpack.c.h.b16 %v569
    %v4033 = vunpack.c.l.b16 %v570
    %v4034 = vunpack.c.h.b16 %v570
    %v4035 = vunpack.c.l.b16 %v571
    %v4036 = vunpack.c.h.b16 %v571
    %v4037 = vunpack.c.l.b16 %v572
    %v4038 = vunpack.c.h.b16 %v572
    %v4039 = vunpack.c.l.b16 %v573
    %v4040 = vunpack.c.h.b16 %v573
    %v4041 = vunpack.c.l.b16 %v574
    %v4042 = vunpack.c.h.b16 %v574
    %v4043 = vunpack.c.l.b16 %v575
    %v4044 = vunpack.c.h.b16 %v575
    %v4045 = vunpack.c.l.b16 %v576
    %v4046 = vunpack.c.h.b16 %v576
    %v4047 = vunpack.c.l.b16 %v577
    %v4048 = vunpack.c.h.b16 %v577
    %v4049 = vunpack.c.l.b16 %v578
    %v4050 = vunpack.c.h.b16 %v578
    %v4051 = vunpack.c.l.b16 %v579
    %v4052 = vunpack.c.h.b16 %v579
    %v4053 = vunpack.c.l.b16 %v580
    %v4054 = vunpack.c.h.b16 %v580
    %v4055 = vunpack.c.l.b16 %v581
    %v4056 = vunpack.c.h.b16 %v581
    %v4057 = vunpack.c.l.b16 %v582
    %v4058 = vunpack.c.h.b16 %v582
    %v4059 = vunpack.c.l.b16 %v583
    %v4060 = vunpack.c.h.b16 %v583
    %v4061 = vunpack.c.l.b16 %v584
    %v4062 = vunpack.c.h.b16 %v584
    %v4063 = vunpack.c.l.b16 %v585
    %v4064 = vunpack.c.h.b16 %v585
    %v4065 = vunpack.c.l.b16 %v586
    %v4066 = vunpack.c.h.b16 %v586
    %v4067 = vunpack.c.l.b16 %v587
    %v4068 = vunpack.c.h.b16 %v587
    %v4069 = vunpack.c.l.b16 %v588
    %v4070 = vunpack.c.h.b16 %v588
    %v4071 = vunpack.c.l.b16 %v589
    %v4072 = vunpack.c.h.b16 %v589
    %v4073 = vunpack.c.l.b16 %v590
    %v4074 = vunpack.c.h.b16 %v590
    %v4075 = vunpack.c.l.b16 %v591
    %v4076 = vunpack.c.h.b16 %v591
    %v4077 = vunpack.c.l.b16 %v592
    %v4078 = vunpack.c.h.b16 %v592
    %v4079 = vunpack.c.l.b16 %v593
    %v4080 = vunpack.c.h.b16 %v593
    %v4081 = vunpack.c.l.b16 %v594
    %v4082 = vunpack.c.h.b16 %v594
    %v4083 = vunpack.c.l.b16 %v595
    %v4084 = vunpack.c.h.b16 %v595
    %v4085 = vunpack.c.l.b16 %v596
    %v4086 = vunpack.c.h.b16 %v596
    %v4087 = vunpack.c.l.b16 %v597
    %v4088 = vunpack.c.h.b16 %v597
    %v4089 = vunpack.c.l.b16 %v598
    %v4090 = vunpack.c.h.b16 %v598
    %v4091 = vunpack.c.l.b16 %v599
    %v4092 = vunpack.c.h.b16 %v599
    %v4093 = vunpack.c.l.b16 %v600
    %v4094 = vunpack.c.h.b16 %v600
    %v4095 = vunpack.c.l.b16 %v601
    %v4096 = vunpack.c.h.b16 %v601
    %v4097 = vunpack.c.l.b16 %v602
    %v4098 = vunpack.c.h.b16 %v602
    %v4099 = vunpack.c.l.b16 %v603
    %v4100 = vunpack.c.h.b16 %v603
    %v4101 = vunpack.c.l.b16 %v604
    %v4102 = vunpack.c.h.b16 %v604
    %v4103 = vunpack.c.l.b16 %v605
    %v4104 = vunpack.c.h.b16 %v605
    %v4105 = vunpack.c.l.b16 %v606
    %v4106 = vunpack.c.h.b16 %v606
    %v4107 = vunpack.c.l.b16 %v607
    %v4108 = vunpack.c.h.b16 %v607
    %v4109 = vunpack.c.l.b16 %v608
    %v4110 = vunpack.c.h.b16 %v608
    %v4111 = vunpack.c.l.b16 %v609
    %v4112 = vunpack.c.h.b16 %v609
    %v4113 = vunpack.c.l.b16 %v610
    %v4114 = vunpack.c.h.b16 %v610
    %v4115 = vunpack.c.l.b16 %v611
    %v4116 = vunpack.c.h.b16 %v611
    %v4117 = vunpack.c.l.b16 %v612
    %v4118 = vunpack.c.h.b16 %v612
    %v4119 = vunpack.c.l.b16 %v613
    %v4120 = vunpack.c.h.b16 %v613
    %v4121 = vunpack.c.l.b16 %v614
    %v4122 = vunpack.c.h.b16 %v614
    %v4123 = vunpack.c.l.b16 %v615
    %v4124 = vunpack.c.h.b16 %v615
    %v4125 = vunpack.c.l.b16 %v616
    %v4126 = vunpack.c.h.b16 %v616
    %v4127 = vunpack.c.l.b16 %v617
    %v4128 = vunpack.c.h.b16 %v617
    %v4129 = vunpack.c.l.b16 %v618
    %v4130 = vunpack.c.h.b16 %v618
    %v4131 = vunpack.c.l.b16 %v619
    %v4132 = vunpack.c.h.b16 %v619
    %v4133 = vunpack.c.l.b16 %v620
    %v4134 = vunpack.c.h.b16 %v620
    %v4135 = vunpack.c.l.b16 %v621
    %v4136 = vunpack.c.h.b16 %v621
    %v4137 = vunpack.c.l.b16 %v622
    %v4138 = vunpack.c.h.b16 %v622
    %v4139 = vunpack.c.l.b16 %v623
    %v4140 = vunpack.c.h.b16 %v623
    %v4141 = vunpack.c.l.b16 %v624
    %v4142 = vunpack.c.h.b16 %v624
    %v4143 = vunpack.c.l.b16 %v625
    %v4144 = vunpack.c.h.b16 %v625
    %v4145 = vunpack.c.l.b16 %v626
    %v4146 = vunpack.c.h.b16 %v626
    %v4147 = vunpack.c.l.b16 %v627
    %v4148 = vunpack.c.h.b16 %v627
    %v4149 = vunpack.c.l.b16 %v628
    %v4150 = vunpack.c.h.b16 %v628
    %v4151 = vunpack.c.l.b16 %v629
    %v4152 = vunpack.c.h.b16 %v629
    %v4153 = vunpack.c.l.b16 %v630
    %v4154 = vunpack.c.h.b16 %v630
    %v4155 = vunpack.c.l.b16 %v631
    %v4156 = vunpack.c.h.b16 %v631
    %v4157 = vunpack.c.l.b16 %v632
    %v4158 = vunpack.c.h.b16 %v632
    %v4159 = vunpack.c.l.b16 %v633
    %v4160 = vunpack.c.h.b16 %v633
    %v4161 = vunpack.c.l.b16 %v634
    %v4162 = vunpack.c.h.b16 %v634
    %v4163 = vunpack.c.l.b16 %v635
    %v4164 = vunpack.c.h.b16 %v635
    %v4165 = vunpack.c.l.b16 %v636
    %v4166 = vunpack.c.h.b16 %v636
    %v4167 = vunpack.c.l.b16 %v637
    %v4168 = vunpack.c.h.b16 %v637
    %v4169 = vunpack.c.l.b16 %v638
    %v4170 = vunpack.c.h.b16 %v638
    %v4171 = vunpack.c.l.b16 %v639
    %v4172 = vunpack.c.h.b16 %v639
    %v4173 = vunpack.c.l.b16 %v640
    %v4174 = vunpack.c.h.b16 %v640
    %v4175 = vunpack.c.l.b16 %v641
    %v4176 = vunpack.c.h.b16 %v641
    %v4177 = vunpack.c.l.b16 %v642
    %v4178 = vunpack.c.h.b16 %v642
    %v4179 = vunpack.c.l.b16 %v643
    %v4180 = vunpack.c.h.b16 %v643
    %v4181 = vunpack.c.l.b16 %v644
    %v4182 = vunpack.c.h.b16 %v644
    %v4183 = vunpack.c.l.b16 %v645
    %v4184 = vunpack.c.h.b16 %v645
    %v4185 = vunpack.c.l.b16 %v646
    %v4186 = vunpack.c.h.b16 %v646
    %v4187 = vunpack.c.l.b16 %v647
    %v4188 = vunpack.c.h.b16 %v647
    %v4189 = vunpack.c.l.b16 %v648
    %v4190 = vunpack.c.h.b16 %v648
    %v4191 = vunpack.c.l.b16 %v649
    %v4192 = vunpack.c.h.b16 %v649
    %v4193 = vunpack.c.l.b16 %v650
    %v4194 = vunpack.c.h.b16 %v650
    %v4195 = vunpack.c.l.b16 %v651
    %v4196 = vunpack.c.h.b16 %v651
    %v4197 = vunpack.c.l.b16 %v652
    %v4198 = vunpack.c.h.b16 %v652
    %v4199 = vunpack.c.l.b16 %v653
    %v4200 = vunpack.c.h.b16 %v653
    %v4201 = vunpack.c.l.b16 %v654
    %v4202 = vunpack.c.h.b16 %v654
    %v4203 = vunpack.c.l.b16 %v655
    %v4204 = vunpack.c.h.b16 %v655
    %v4205 = vunpack.c.l.b16 %v656
    %v4206 = vunpack.c.h.b16 %v656
    %v4207 = vunpack.c.l.b16 %v657
    %v4208 = vunpack.c.h.b16 %v657
    %v4209 = vunpack.c.l.b16 %v658
    %v4210 = vunpack.c.h.b16 %v658
    %v4211 = vunpack.c.l.b16 %v659
    %v4212 = vunpack.c.h.b16 %v659
    %v4213 = vunpack.c.l.b16 %v660
    %v4214 = vunpack.c.h.b16 %v660
    %v4215 = vunpack.c.l.b16 %v661
    %v4216 = vunpack.c.h.b16 %v661
    %v4217 = vunpack.c.l.b16 %v662
    %v4218 = vunpack.c.h.b16 %v662
    %v4219 = vunpack.c.l.b16 %v663
    %v4220 = vunpack.c.h.b16 %v663
    %v4221 = vunpack.c.l.b16 %v664
    %v4222 = vunpack.c.h.b16 %v664
    %v4223 = vunpack.c.l.b16 %v665
    %v4224 = vunpack.c.h.b16 %v665
    %v4225 = vunpack.c.l.b16 %v666
    %v4226 = vunpack.c.h.b16 %v666
    %v4227 = vunpack.c.l.b16 %v667
    %v4228 = vunpack.c.h.b16 %v667
    %v4229 = vunpack.c.l.b16 %v668
    %v4230 = vunpack.c.h.b16 %v668
    %v4231 = vunpack.c.l.b16 %v669
    %v4232 = vunpack.c.h.b16 %v669
    %v4233 = vunpack.c.l.b16 %v670
    %v4234 = vunpack.c.h.b16 %v670
    %v4235 = vunpack.c.l.b16 %v671
    %v4236 = vunpack.c.h.b16 %v671
    %v4237 = vunpack.c.l.b16 %v672
    %v4238 = vunpack.c.h.b16 %v672
    %v4239 = vunpack.c.l.b16 %v673
    %v4240 = vunpack.c.h.b16 %v673
    %v4241 = vunpack.c.l.b16 %v674
    %v4242 = vunpack.c.h.b16 %v674
    %v4243 = vunpack.c.l.b16 %v675
    %v4244 = vunpack.c.h.b16 %v675
    %v4245 = vunpack.c.l.b16 %v676
    %v4246 = vunpack.c.h.b16 %v676
    %v4247 = vunpack.c.l.b16 %v677
    %v4248 = vunpack.c.h.b16 %v677
    %v4249 = vunpack.c.l.b16 %v678
    %v4250 = vunpack.c.h.b16 %v678
    %v4251 = vunpack.c.l.b16 %v679
    %v4252 = vunpack.c.h.b16 %v679
    %v4253 = vunpack.c.l.b16 %v680
    %v4254 = vunpack.c.h.b16 %v680
    %v4255 = vunpack.c.l.b16 %v681
    %v4256 = vunpack.c.h.b16 %v681
    %v4257 = vunpack.c.l.b16 %v682
    %v4258 = vunpack.c.h.b16 %v682
    %v4259 = vunpack.c.l.b16 %v683
    %v4260 = vunpack.c.h.b16 %v683
    %v4261 = vunpack.c.l.b16 %v684
    %v4262 = vunpack.c.h.b16 %v684
    %v4263 = vunpack.c.l.b16 %v685
    %v4264 = vunpack.c.h.b16 %v685
    %v4265 = vunpack.c.l.b16 %v686
    %v4266 = vunpack.c.h.b16 %v686
    %v4267 = vunpack.c.l.b16 %v687
    %v4268 = vunpack.c.h.b16 %v687
    %v4269 = vunpack.c.l.b16 %v688
    %v4270 = vunpack.c.h.b16 %v688
    %v4271 = vunpack.c.l.b16 %v689
    %v4272 = vunpack.c.h.b16 %v689
    %v4273 = vunpack.c.l.b16 %v690
    %v4274 = vunpack.c.h.b16 %v690
    %v4275 = vunpack.c.l.b16 %v691
    %v4276 = vunpack.c.h.b16 %v691
    %v4277 = vunpack.c.l.b16 %v692
    %v4278 = vunpack.c.h.b16 %v692
    %v4279 = vunpack.c.l.b16 %v693
    %v4280 = vunpack.c.h.b16 %v693
    %v4281 = vunpack.c.l.b16 %v694
    %v4282 = vunpack.c.h.b16 %v694
    %v4283 = vunpack.c.l.b16 %v695
    %v4284 = vunpack.c.h.b16 %v695
    %v4285 = vunpack.c.l.b16 %v696
    %v4286 = vunpack.c.h.b16 %v696
    %v4287 = vunpack.c.l.b16 %v697
    %v4288 = vunpack.c.h.b16 %v697
    %v4289 = vunpack.c.l.b16 %v698
    %v4290 = vunpack.c.h.b16 %v698
    %v4291 = vunpack.c.l.b16 %v699
    %v4292 = vunpack.c.h.b16 %v699
    %v4293 = vunpack.c.l.b16 %v700
    %v4294 = vunpack.c.h.b16 %v700
    %v4295 = vunpack.c.l.b16 %v701
    %v4296 = vunpack.c.h.b16 %v701
    %v4297 = vunpack.c.l.b16 %v702
    %v4298 = vunpack.c.h.b16 %v702
    %v4299 = vunpack.c.l.b16 %v703
    %v4300 = vunpack.c.h.b16 %v703
    %v4301 = vunpack.c.l.b16 %v704
    %v4302 = vunpack.c.h.b16 %v704
    %v4303 = vunpack.c.l.b16 %v705
    %v4304 = vunpack.c.h.b16 %v705
    %v4305 = vunpack.c.l.b16 %v706
    %v4306 = vunpack.c.h.b16 %v706
    %v4307 = vunpack.c.l.b16 %v707
    %v4308 = vunpack.c.h.b16 %v707
    %v4309 = vunpack.c.l.b16 %v708
    %v4310 = vunpack.c.h.b16 %v708
    %v4311 = vunpack.c.l.b16 %v709
    %v4312 = vunpack.c.h.b16 %v709
    %v4313 = vunpack.c.l.b16 %v710
    %v4314 = vunpack.c.h.b16 %v710
    %v4315 = vunpack.c.l.b16 %v711
    %v4316 = vunpack.c.h.b16 %v711
    %v4317 = vunpack.c.l.b16 %v712
    %v4318 = vunpack.c.h.b16 %v712
    %v4319 = vunpack.c.l.b16 %v713
    %v4320 = vunpack.c.h.b16 %v713
    %v4321 = vunpack.c.l.b16 %v714
    %v4322 = vunpack.c.h.b16 %v714
    %v4323 = vunpack.c.l.b16 %v715
    %v4324 = vunpack.c.h.b16 %v715
    %v4325 = vunpack.c.l.b16 %v716
    %v4326 = vunpack.c.h.b16 %v716
    %v4327 = vunpack.c.l.b16 %v717
    %v4328 = vunpack.c.h.b16 %v717
    %v4329 = vunpack.c.l.b16 %v718
    %v4330 = vunpack.c.h.b16 %v718
    %v4331 = vunpack.c.l.b16 %v719
    %v4332 = vunpack.c.h.b16 %v719
    %v4333 = vunpack.c.l.b16 %v720
    %v4334 = vunpack.c.h.b16 %v720
    %v4335 = vunpack.c.l.b16 %v721
    %v4336 = vunpack.c.h.b16 %v721
    %v4337 = vunpack.c.l.b16 %v722
    %v4338 = vunpack.c.h.b16 %v722
    %v4339 = vunpack.c.l.b16 %v723
    %v4340 = vunpack.c.h.b16 %v723
    %v4341 = vunpack.c.l.b16 %v724
    %v4342 = vunpack.c.h.b16 %v724
    %v4343 = vunpack.c.l.b16 %v725
    %v4344 = vunpack.c.h.b16 %v725
    %v4345 = vunpack.c.l.b16 %v726
    %v4346 = vunpack.c.h.b16 %v726
    %v4347 = vunpack.c.l.b16 %v727
    %v4348 = vunpack.c.h.b16 %v727
    %v4349 = vunpack.c.l.b16 %v728
    %v4350 = vunpack.c.h.b16 %v728
    %v4351 = vunpack.c.l.b16 %v729
    %v4352 = vunpack.c.h.b16 %v729
    %v4353 = vunpack.c.l.b16 %v730
    %v4354 = vunpack.c.h.b16 %v730
    %v4355 = vunpack.c.l.b16 %v731
    %v4356 = vunpack.c.h.b16 %v731
    %v4357 = vunpack.c.l.b16 %v732
    %v4358 = vunpack.c.h.b16 %v732
    %v4359 = vunpack.c.l.b16 %v733
    %v4360 = vunpack.c.h.b16 %v733
    %v4361 = vunpack.c.l.b16 %v734
    %v4362 = vunpack.c.h.b16 %v734
    %v4363 = vunpack.c.l.b16 %v735
    %v4364 = vunpack.c.h.b16 %v735
    %v4365 = vunpack.c.l.b16 %v736
    %v4366 = vunpack.c.h.b16 %v736
    %v4367 = vunpack.c.l.b16 %v737
    %v4368 = vunpack.c.h.b16 %v737
    %v4369 = vunpack.c.l.b16 %v738
    %v4370 = vunpack.c.h.b16 %v738
    %v4371 = vunpack.c.l.b16 %v739
    %v4372 = vunpack.c.h.b16 %v739
    %v4373 = vunpack.c.l.b16 %v740
    %v4374 = vunpack.c.h.b16 %v740
    %v4375 = vunpack.c.l.b16 %v741
    %v4376 = vunpack.c.h.b16 %v741
    %v4377 = vunpack.c.l.b16 %v742
    %v4378 = vunpack.c.h.b16 %v742
    %v4379 = vunpack.c.l.b16 %v743
    %v4380 = vunpack.c.h.b16 %v743
    %v4381 = vunpack.c.l.b16 %v744
    %v4382 = vunpack.c.h.b16 %v744
    %v4383 = vunpack.c.l.b16 %v745
    %v4384 = vunpack.c.h.b16 %v745
    %v4385 = vunpack.c.l.b16 %v746
    %v4386 = vunpack.c.h.b16 %v746
    %v4387 = vunpack.c.l.b16 %v747
    %v4388 = vunpack.c.h.b16 %v747
    %v4389 = vunpack.c.l.b16 %v748
    %v4390 = vunpack.c.h.b16 %v748
    %v4391 = vunpack.c.l.b16 %v749
    %v4392 = vunpack.c.h.b16 %v749
    %v4393 = vunpack.c.l.b16 %v750
    %v4394 = vunpack.c.h.b16 %v750
    %v4395 = vunpack.c.l.b16 %v751
    %v4396 = vunpack.c.h.b16 %v751
    %v4397 = vunpack.c.l.b16 %v752
    %v4398 = vunpack.c.h.b16 %v752
    %v4399 = vunpack.c.l.b16 %v753
    %v4400 = vunpack.c.h.b16 %v753
    %v4401 = vunpack.c.l.b16 %v754
    %v4402 = vunpack.c.h.b16 %v754
    %v4403 = vunpack.c.l.b16 %v755
    %v4404 = vunpack.c.h.b16 %v755
    %v4405 = vunpack.c.l.b16 %v756
    %v4406 = vunpack.c.h.b16 %v756
    %v4407 = vunpack.c.l.b16 %v757
    %v4408 = vunpack.c.h.b16 %v757
    %v4409 = vunpack.c.l.b16 %v758
    %v4410 = vunpack.c.h.b16 %v758
    %v4411 = vunpack.c.l.b16 %v759
    %v4412 = vunpack.c.h.b16 %v759
    %v4413 = vunpack.c.l.b16 %v760
    %v4414 = vunpack.c.h.b16 %v760
    %v4415 = vunpack.c.l.b16 %v761
    %v4416 = vunpack.c.h.b16 %v761
    %v4417 = vunpack.c.l.b16 %v762
    %v4418 = vunpack.c.h.b16 %v762
    %v4419 = vunpack.c.l.b16 %v763
    %v4420 = vunpack.c.h.b16 %v763
    %v4421 = vunpack.c.l.b16 %v764
    %v4422 = vunpack.c.h.b16 %v764
    %v4423 = vunpack.c.l.b16 %v765
    %v4424 = vunpack.c.h.b16 %v765
    %v4425 = vunpack.c.l.b16 %v766
    %v4426 = vunpack.c.h.b16 %v766
    %v4427 = vunpack.c.l.b16 %v767
    %v4428 = vunpack.c.h.b16 %v767
    %v4429 = vunpack.c.l.b16 %v768
    %v4430 = vunpack.c.h.b16 %v768
    %v4431 = vunpack.c.l.b16 %v769
    %v4432 = vunpack.c.h.b16 %v769
    %v4433 = vunpack.c.l.b16 %v770
    %v4434 = vunpack.c.h.b16 %v770
    %v4435 = vunpack.c.l.b16 %v771
    %v4436 = vunpack.c.h.b16 %v771
    %v4437 = vunpack.c.l.b16 %v772
    %v4438 = vunpack.c.h.b16 %v772
    %v4439 = vunpack.c.l.b16 %v773
    %v4440 = vunpack.c.h.b16 %v773
    %v4441 = vunpack.c.l.b16 %v774
    %v4442 = vunpack.c.h.b16 %v774
    %v4443 = vunpack.c.l.b16 %v775
    %v4444 = vunpack.c.h.b16 %v775
    %v4445 = vunpack.c.l.b16 %v776
    %v4446 = vunpack.c.h.b16 %v776
    %v4447 = vunpack.c.l.b16 %v777
    %v4448 = vunpack.c.h.b16 %v777
    %v4449 = vunpack.c.l.b16 %v778
    %v4450 = vunpack.c.h.b16 %v778
    %v4451 = vunpack.c.l.b16 %v779
    %v4452 = vunpack.c.h.b16 %v779
    %v4453 = vunpack.c.l.b16 %v780
    %v4454 = vunpack.c.h.b16 %v780
    %v4455 = vunpack.c.l.b16 %v781
    %v4456 = vunpack.c.h.b16 %v781
    %v4457 = vunpack.c.l.b16 %v782
    %v4458 = vunpack.c.h.b16 %v782
    %v4459 = vunpack.c.l.b16 %v783
    %v4460 = vunpack.c.h.b16 %v783
    %v4461 = vunpack.c.l.b16 %v784
    %v4462 = vunpack.c.h.b16 %v784
    %v4463 = vunpack.c.l.b16 %v785
    %v4464 = vunpack.c.h.b16 %v785
    %v4465 = vunpack.c.l.b16 %v786
    %v4466 = vunpack.c.h.b16 %v786
    %v4467 = vunpack.c.l.b16 %v787
    %v4468 = vunpack.c.h.b16 %v787
    %v4469 = vunpack.c.l.b16 %v788
    %v4470 = vunpack.c.h.b16 %v788
    %v4471 = vunpack.c.l.b16 %v789
    %v4472 = vunpack.c.h.b16 %v789
    %v4473 = vunpack.c.l.b16 %v790
    %v4474 = vunpack.c.h.b16 %v790
    %v4475 = vunpack.c.l.b16 %v791
    %v4476 = vunpack.c.h.b16 %v791
    %v4477 = vunpack.c.l.b16 %v792
    %v4478 = vunpack.c.h.b16 %v792
    %v4479 = vunpack.c.l.b16 %v793
    %v4480 = vunpack.c.h.b16 %v793
    %v4481 = vunpack.c.l.b16 %v794
    %v4482 = vunpack.c.h.b16 %v794
    %v4483 = vunpack.c.l.b16 %v795
    %v4484 = vunpack.c.h.b16 %v795
    %v4485 = vunpack.c.l.b16 %v796
    %v4486 = vunpack.c.h.b16 %v796
    %v4487 = vunpack.c.l.b16 %v797
    %v4488 = vunpack.c.h.b16 %v797
    %v4489 = vunpack.c.l.b16 %v798
    %v4490 = vunpack.c.h.b16 %v798
    %v4491 = vunpack.c.l.b16 %v799
    %v4492 = vunpack.c.h.b16 %v799
    %v4493 = vunpack.c.l.b16 %v800
    %v4494 = vunpack.c.h.b16 %v800
    %v4495 = vunpack.c.l.b16 %v801
    %v4496 = vunpack.c.h.b16 %v801
    %v4497 = vunpack.c.l.b16 %v802
    %v4498 = vunpack.c.h.b16 %v802
    %v4499 = vunpack.c.l.b16 %v803
    %v4500 = vunpack.c.h.b16 %v803
    %v4501 = vunpack.c.l.b16 %v804
    %v4502 = vunpack.c.h.b16 %v804
    %v4503 = vunpack.c.l.b16 %v805
    %v4504 = vunpack.c.h.b16 %v805
    %v4505 = vunpack.c.l.b16 %v806
    %v4506 = vunpack.c.h.b16 %v806
    %v4507 = vunpack.c.l.b16 %v807
    %v4508 = vunpack.c.h.b16 %v807
    %v4509 = vunpack.c.l.b16 %v808
    %v4510 = vunpack.c.h.b16 %v808
    %v4511 = vunpack.c.l.b16 %v809
    %v4512 = vunpack.c.h.b16 %v809
    %v4513 = vunpack.c.l.b16 %v810
    %v4514 = vunpack.c.h.b16 %v810
    %v4515 = vunpack.c.l.b16 %v811
    %v4516 = vunpack.c.h.b16 %v811
    %v4517 = vunpack.c.l.b16 %v812
    %v4518 = vunpack.c.h.b16 %v812
    %v4519 = vunpack.c.l.b16 %v813
    %v4520 = vunpack.c.h.b16 %v813
    %v4521 = vunpack.c.l.b16 %v814
    %v4522 = vunpack.c.h.b16 %v814
    %v4523 = vunpack.c.l.b16 %v815
    %v4524 = vunpack.c.h.b16 %v815
    %v4525 = vunpack.c.l.b16 %v816
    %v4526 = vunpack.c.h.b16 %v816
    %v4527 = vunpack.c.l.b16 %v817
    %v4528 = vunpack.c.h.b16 %v817
    %v4529 = vunpack.c.l.b16 %v818
    %v4530 = vunpack.c.h.b16 %v818
    %v4531 = vunpack.c.l.b16 %v819
    %v4532 = vunpack.c.h.b16 %v819
    %v4533 = vunpack.c.l.b16 %v820
    %v4534 = vunpack.c.h.b16 %v820
    %v4535 = vunpack.c.l.b16 %v821
    %v4536 = vunpack.c.h.b16 %v821
    %v4537 = vunpack.c.l.b16 %v822
    %v4538 = vunpack.c.h.b16 %v822
    %v4539 = vunpack.c.l.b16 %v823
    %v4540 = vunpack.c.h.b16 %v823
    %v4541 = vunpack.c.l.b16 %v824
    %v4542 = vunpack.c.h.b16 %v824
    %v4543 = vunpack.c.l.b16 %v825
    %v4544 = vunpack.c.h.b16 %v825
    %v4545 = vunpack.c.l.b16 %v826
    %v4546 = vunpack.c.h.b16 %v826
    %v4547 = vunpack.c.l.b16 %v827
    %v4548 = vunpack.c.h.b16 %v827
    %v4549 = vunpack.c.l.b16 %v828
    %v4550 = vunpack.c.h.b16 %v828
    %v4551 = vunpack.c.l.b16 %v829
    %v4552 = vunpack.c.h.b16 %v829
    %v4553 = vunpack.c.l.b16 %v830
    %v4554 = vunpack.c.h.b16 %v830
    %v4555 = vunpack.c.l.b16 %v831
    %v4556 = vunpack.c.h.b16 %v831
    %v4557 = vunpack.c.l.b16 %v832
    %v4558 = vunpack.c.h.b16 %v832
    %v4559 = vunpack.c.l.b16 %v833
    %v4560 = vunpack.c.h.b16 %v833
    %v4561 = vunpack.c.l.b16 %v834
    %v4562 = vunpack.c.h.b16 %v834
    %v4563 = vunpack.c.l.b16 %v835
    %v4564 = vunpack.c.h.b16 %v835
    %v4565 = vunpack.c.l.b16 %v836
    %v4566 = vunpack.c.h.b16 %v836
    %v4567 = vunpack.c.l.b16 %v837
    %v4568 = vunpack.c.h.b16 %v837
    %v4569 = vunpack.c.l.b16 %v838
    %v4570 = vunpack.c.h.b16 %v838
    %v4571 = vunpack.c.l.b16 %v839
    %v4572 = vunpack.c.h.b16 %v839
    %v4573 = vunpack.c.l.b16 %v840
    %v4574 = vunpack.c.h.b16 %v840
    %v4575 = vunpack.c.l.b16 %v841
    %v4576 = vunpack.c.h.b16 %v841
    %v4577 = vunpack.c.l.b16 %v842
    %v4578 = vunpack.c.h.b16 %v842
    %v4579 = vunpack.c.l.b16 %v843
    %v4580 = vunpack.c.h.b16 %v843
    %v4581 = vunpack.c.l.b16 %v844
    %v4582 = vunpack.c.h.b16 %v844
    %v4583 = vunpack.c.l.b16 %v845
    %v4584 = vunpack.c.h.b16 %v845
    %v4585 = vunpack.c.l.b16 %v846
    %v4586 = vunpack.c.h.b16 %v846
    %v4587 = vunpack.c.l.b16 %v847
    %v4588 = vunpack.c.h.b16 %v847
    %v4589 = vunpack.c.l.b16 %v848
    %v4590 = vunpack.c.h.b16 %v848
    %v4591 = vunpack.c.l.b16 %v849
    %v4592 = vunpack.c.h.b16 %v849
    %v4593 = vunpack.c.l.b16 %v850
    %v4594 = vunpack.c.h.b16 %v850
    %v4595 = vunpack.c.l.b16 %v851
    %v4596 = vunpack.c.h.b16 %v851
    %v4597 = vunpack.c.l.b16 %v852
    %v4598 = vunpack.c.h.b16 %v852
    %v4599 = vunpack.c.l.b16 %v853
    %v4600 = vunpack.c.h.b16 %v853
    %v4601 = vunpack.c.l.b16 %v854
    %v4602 = vunpack.c.h.b16 %v854
    %v4603 = vunpack.c.l.b16 %v855
    %v4604 = vunpack.c.h.b16 %v855
    %v4605 = vunpack.c.l.b16 %v856
    %v4606 = vunpack.c.h.b16 %v856
    %v4607 = vunpack.c.l.b16 %v857
    %v4608 = vunpack.c.h.b16 %v857
    %v4609 = vunpack.c.l.b16 %v858
    %v4610 = vunpack.c.h.b16 %v858
    %v4611 = vunpack.c.l.b16 %v859
    %v4612 = vunpack.c.h.b16 %v859
    %v4613 = vunpack.c.l.b16 %v860
    %v4614 = vunpack.c.h.b16 %v860
    %v4615 = vunpack.c.l.b16 %v861
    %v4616 = vunpack.c.h.b16 %v861
    %v4617 = vunpack.c.l.b16 %v862
    %v4618 = vunpack.c.h.b16 %v862
    %v4619 = vunpack.c.l.b16 %v863
    %v4620 = vunpack.c.h.b16 %v863
    %v4621 = vunpack.c.l.b16 %v864
    %v4622 = vunpack.c.h.b16 %v864
    %v4623 = vunpack.c.l.b16 %v865
    %v4624 = vunpack.c.h.b16 %v865
    %v4625 = vunpack.c.l.b16 %v866
    %v4626 = vunpack.c.h.b16 %v866
    %v4627 = vunpack.c.l.b16 %v867
    %v4628 = vunpack.c.h.b16 %v867
    %v4629 = vunpack.c.l.b16 %v868
    %v4630 = vunpack.c.h.b16 %v868
    %v4631 = vunpack.c.l.b16 %v869
    %v4632 = vunpack.c.h.b16 %v869
    %v4633 = vunpack.c.l.b16 %v870
    %v4634 = vunpack.c.h.b16 %v870
    %v4635 = vunpack.c.l.b16 %v871
    %v4636 = vunpack.c.h.b16 %v871
    %v4637 = vunpack.c.l.b16 %v872
    %v4638 = vunpack.c.h.b16 %v872
    %v4639 = vunpack.c.l.b16 %v873
    %v4640 = vunpack.c.h.b16 %v873
    %v4641 = vunpack.c.l.b16 %v874
    %v4642 = vunpack.c.h.b16 %v874
    %v4643 = vunpack.c.l.b16 %v875
    %v4644 = vunpack.c.h.b16 %v875
    %v4645 = vunpack.c.l.b16 %v876
    %v4646 = vunpack.c.h.b16 %v876
    %v4647 = vunpack.c.l.b16 %v877
    %v4648 = vunpack.c.h.b16 %v877
    %v4649 = vunpack.c.l.b16 %v878
    %v4650 = vunpack.c.h.b16 %v878
    %v4651 = vunpack.c.l.b16 %v879
    %v4652 = vunpack.c.h.b16 %v879
    %v4653 = vunpack.c.l.b16 %v880
    %v4654 = vunpack.c.h.b16 %v880
    %v4655 = vunpack.c.l.b16 %v881
    %v4656 = vunpack.c.h.b16 %v881
    %v4657 = vunpack.c.l.b16 %v882
    %v4658 = vunpack.c.h.b16 %v882
    %v4659 = vunpack.c.l.b16 %v883
    %v4660 = vunpack.c.h.b16 %v883
    %v4661 = vunpack.c.l.b16 %v884
    %v4662 = vunpack.c.h.b16 %v884
    %v4663 = vunpack.c.l.b16 %v885
    %v4664 = vunpack.c.h.b16 %v885
    %v4665 = vunpack.c.l.b16 %v886
    %v4666 = vunpack.c.h.b16 %v886
    %v4667 = vunpack.c.l.b16 %v887
    %v4668 = vunpack.c.h.b16 %v887
    %v4669 = vunpack.c.l.b16 %v888
    %v4670 = vunpack.c.h.b16 %v888
    %v4671 = vunpack.c.l.b16 %v889
    %v4672 = vunpack.c.h.b16 %v889
    %v4673 = vunpack.c.l.b16 %v890
    %v4674 = vunpack.c.h.b16 %v890
    %v4675 = vunpack.c.l.b16 %v891
    %v4676 = vunpack.c.h.b16 %v891
    %v4677 = vunpack.c.l.b16 %v892
    %v4678 = vunpack.c.h.b16 %v892
    %v4679 = vunpack.c.l.b16 %v893
    %v4680 = vunpack.c.h.b16 %v893
    %v4681 = vunpack.c.l.b16 %v894
    %v4682 = vunpack.c.h.b16 %v894
    %v4683 = vunpack.c.l.b16 %v895
    %v4684 = vunpack.c.h.b16 %v895
    %v4685 = vunpack.c.l.b16 %v896
    %v4686 = vunpack.c.h.b16 %v896
    %v4687 = vunpack.c.l.b16 %v897
    %v4688 = vunpack.c.h.b16 %v897
    %v4689 = vunpack.c.l.b16 %v898
    %v4690 = vunpack.c.h.b16 %v898
    %v4691 = vunpack.c.l.b16 %v899
    %v4692 = vunpack.c.h.b16 %v899
    %v4693 = vunpack.c.l.b16 %v900
    %v4694 = vunpack.c.h.b16 %v900
    %v4695 = vunpack.c.l.b16 %v901
    %v4696 = vunpack.c.h.b16 %v901
    %v4697 = vunpack.c.l.b16 %v902
    %v4698 = vunpack.c.h.b16 %v902
    %v4699 = vunpack.c.l.b16 %v903
    %v4700 = vunpack.c.h.b16 %v903
    %v4701 = vunpack.c.l.b16 %v904
    %v4702 = vunpack.c.h.b16 %v904
    %v4703 = vunpack.c.l.b16 %v905
    %v4704 = vunpack.c.h.b16 %v905
    %v4705 = vunpack.c.l.b16 %v906
    %v4706 = vunpack.c.h.b16 %v906
    %v4707 = vunpack.c.l.b16 %v907
    %v4708 = vunpack.c.h.b16 %v907
    %v4709 = vunpack.c.l.b16 %v908
    %v4710 = vunpack.c.h.b16 %v908
    %v4711 = vunpack.c.l.b16 %v909
    %v4712 = vunpack.c.h.b16 %v909
    %v4713 = vunpack.c.l.b16 %v910
    %v4714 = vunpack.c.h.b16 %v910
    %v4715 = vunpack.c.l.b16 %v911
    %v4716 = vunpack.c.h.b16 %v911
    %v4717 = vunpack.c.l.b16 %v912
    %v4718 = vunpack.c.h.b16 %v912
    %v4719 = vunpack.c.l.b16 %v913
    %v4720 = vunpack.c.h.b16 %v913
    %v4721 = vunpack.c.l.b16 %v914
    %v4722 = vunpack.c.h.b16 %v914
    %v4723 = vunpack.c.l.b16 %v915
    %v4724 = vunpack.c.h.b16 %v915
    %v4725 = vunpack.c.l.b16 %v916
    %v4726 = vunpack.c.h.b16 %v916
    %v4727 = vunpack.c.l.b16 %v917
    %v4728 = vunpack.c.h.b16 %v917
    %v4729 = vunpack.c.l.b16 %v918
    %v4730 = vunpack.c.h.b16 %v918
    %v4731 = vunpack.c.l.b16 %v919
    %v4732 = vunpack.c.h.b16 %v919
    %v4733 = vunpack.c.l.b16 %v920
    %v4734 = vunpack.c.h.b16 %v920
    %v4735 = vunpack.c.l.b16 %v921
    %v4736 = vunpack.c.h.b16 %v921
    %v4737 = vunpack.c.l.b16 %v922
    %v4738 = vunpack.c.h.b16 %v922
    %v4739 = vunpack.c.l.b16 %v923
    %v4740 = vunpack.c.h.b16 %v923
    %v4741 = vunpack.c.l.b16 %v924
    %v4742 = vunpack.c.h.b16 %v924
    %v4743 = vunpack.c.l.b16 %v925
    %v4744 = vunpack.c.h.b16 %v925
    %v4745 = vunpack.c.l.b16 %v926
    %v4746 = vunpack.c.h.b16 %v926
    %v4747 = vunpack.c.l.b16 %v927
    %v4748 = vunpack.c.h.b16 %v927
    %v4749 = vunpack.c.l.b16 %v928
    %v4750 = vunpack.c.h.b16 %v928
    %v4751 = vunpack.c.l.b16 %v929
    %v4752 = vunpack.c.h.b16 %v929
    %v4753 = vunpack.c.l.b16 %v930
    %v4754 = vunpack.c.h.b16 %v930
    %v4755 = vunpack.c.l.b16 %v931
    %v4756 = vunpack.c.h.b16 %v931
    %v4757 = vunpack.c.l.b16 %v932
    %v4758 = vunpack.c.h.b16 %v932
    %v4759 = vunpack.c.l.b16 %v933
    %v4760 = vunpack.c.h.b16 %v933
    %v4761 = vunpack.c.l.b16 %v934
    %v4762 = vunpack.c.h.b16 %v934
    %v4763 = vunpack.c.l.b16 %v935
    %v4764 = vunpack.c.h.b16 %v935
    %v4765 = vunpack.c.l.b16 %v936
    %v4766 = vunpack.c.h.b16 %v936
    %v4767 = vunpack.c.l.b16 %v937
    %v4768 = vunpack.c.h.b16 %v937
    %v4769 = vunpack.c.l.b16 %v938
    %v4770 = vunpack.c.h.b16 %v938
    %v4771 = vunpack.c.l.b16 %v939
    %v4772 = vunpack.c.h.b16 %v939
    %v4773 = vunpack.c.l.b16 %v940
    %v4774 = vunpack.c.h.b16 %v940
    %v4775 = vunpack.c.l.b16 %v941
    %v4776 = vunpack.c.h.b16 %v941
    %v4777 = vunpack.c.l.b16 %v942
    %v4778 = vunpack.c.h.b16 %v942
    %v4779 = vunpack.c.l.b16 %v943
    %v4780 = vunpack.c.h.b16 %v943
    %v4781 = vunpack.c.l.b16 %v944
    %v4782 = vunpack.c.h.b16 %v944
    %v4783 = vunpack.c.l.b16 %v945
    %v4784 = vunpack.c.h.b16 %v945
    %v4785 = vunpack.c.l.b16 %v946
    %v4786 = vunpack.c.h.b16 %v946
    %v4787 = vunpack.c.l.b16 %v947
    %v4788 = vunpack.c.h.b16 %v947
    %v4789 = vunpack.c.l.b16 %v948
    %v4790 = vunpack.c.h.b16 %v948
    %v4791 = vunpack.c.l.b16 %v949
    %v4792 = vunpack.c.h.b16 %v949
    %v4793 = vunpack.c.l.b16 %v950
    %v4794 = vunpack.c.h.b16 %v950
    %v4795 = vunpack.c.l.b16 %v951
    %v4796 = vunpack.c.h.b16 %v951
    %v4797 = vunpack.c.l.b16 %v952
    %v4798 = vunpack.c.h.b16 %v952
    %v4799 = vunpack.c.l.b16 %v953
    %v4800 = vunpack.c.h.b16 %v953
    %v4801 = vunpack.c.l.b16 %v954
    %v4802 = vunpack.c.h.b16 %v954
    %v4803 = vunpack.c.l.b16 %v955
    %v4804 = vunpack.c.h.b16 %v955
    %v4805 = vunpack.c.l.b16 %v956
    %v4806 = vunpack.c.h.b16 %v956
    %v4807 = vunpack.c.l.b16 %v957
    %v4808 = vunpack.c.h.b16 %v957
    %v4809 = vunpack.c.l.b16 %v958
    %v4810 = vunpack.c.h.b16 %v958
    %v4811 = vunpack.c.l.b16 %v959
    %v4812 = vunpack.c.h.b16 %v959
    %v4813 = vunpack.c.l.b16 %v960
    %v4814 = vunpack.c.h.b16 %v960
    %v4815 = vunpack.c.l.b16 %v961
    %v4816 = vunpack.c.h.b16 %v961
    %v4817 = vunpack.c.l.b16 %v962
    %v4818 = vunpack.c.h.b16 %v962
    %v4819 = vunpack.c.l.b16 %v963
    %v4820 = vunpack.c.h.b16 %v963
    %v4821 = vunpack.c.l.b16 %v964
    %v4822 = vunpack.c.h.b16 %v964
    %v4823 = vunpack.c.l.b16 %v965
    %v4824 = vunpack.c.h.b16 %v965
    %v4825 = vunpack.c.l.b16 %v966
    %v4826 = vunpack.c.h.b16 %v966
    %v4827 = vunpack.c.l.b16 %v967
    %v4828 = vunpack.c.h.b16 %v967
    %v4829 = vunpack.c.l.b16 %v968
    %v4830 = vunpack.c.h.b16 %v968
    %v4831 = vunpack.c.l.b16 %v969
    %v4832 = vunpack.c.h.b16 %v969
    %v4833 = vunpack.c.l.b16 %v970
    %v4834 = vunpack.c.h.b16 %v970
    %v4835 = vunpack.c.l.b16 %v971
    %v4836 = vunpack.c.h.b16 %v971
    %v4837 = vunpack.c.l.b16 %v972
    %v4838 = vunpack.c.h.b16 %v972
    %v4839 = vunpack.c.l.b16 %v973
    %v4840 = vunpack.c.h.b16 %v973
    %v4841 = vunpack.c.l.b16 %v974
    %v4842 = vunpack.c.h.b16 %v974
    %v4843 = vunpack.c.l.b16 %v975
    %v4844 = vunpack.c.h.b16 %v975
    %v4845 = vunpack.c.l.b16 %v976
    %v4846 = vunpack.c.h.b16 %v976
    %v4847 = vunpack.c.l.b16 %v977
    %v4848 = vunpack.c.h.b16 %v977
    %v4849 = vunpack.c.l.b16 %v978
    %v4850 = vunpack.c.h.b16 %v978
    %v4851 = vunpack.c.l.b16 %v979
    %v4852 = vunpack.c.h.b16 %v979
    %v4853 = vunpack.c.l.b16 %v980
    %v4854 = vunpack.c.h.b16 %v980
    %v4855 = vunpack.c.l.b16 %v981
    %v4856 = vunpack.c.h.b16 %v981
    %v4857 = vunpack.c.l.b16 %v982
    %v4858 = vunpack.c.h.b16 %v982
    %v4859 = vunpack.c.l.b16 %v983
    %v4860 = vunpack.c.h.b16 %v983
    %v4861 = vunpack.c.l.b16 %v984
    %v4862 = vunpack.c.h.b16 %v984
    %v4863 = vunpack.c.l.b16 %v985
    %v4864 = vunpack.c.h.b16 %v985
    %v4865 = vunpack.c.l.b16 %v986
    %v4866 = vunpack.c.h.b16 %v986
    %v4867 = vunpack.c.l.b16 %v987
    %v4868 = vunpack.c.h.b16 %v987
    %v4869 = vunpack.c.l.b16 %v988
    %v4870 = vunpack.c.h.b16 %v988
    %v4871 = vunpack.c.l.b16 %v989
    %v4872 = vunpack.c.h.b16 %v989
    %v4873 = vunpack.c.l.b16 %v990
    %v4874 = vunpack.c.h.b16 %v990
    %v4875 = vunpack.c.l.b16 %v991
    %v4876 = vunpack.c.h.b16 %v991
    %v4877 = vunpack.c.l.b16 %v992
    %v4878 = vunpack.c.h.b16 %v992
    %v4879 = vunpack.c.l.b16 %v993
    %v4880 = vunpack.c.h.b16 %v993
    %v4881 = vunpack.c.l.b16 %v994
    %v4882 = vunpack.c.h.b16 %v994
    %v4883 = vunpack.c.l.b16 %v995
    %v4884 = vunpack.c.h.b16 %v995
    %v4885 = vunpack.c.l.b16 %v996
    %v4886 = vunpack.c.h.b16 %v996
    %v4887 = vunpack.c.l.b16 %v997
    %v4888 = vunpack.c.h.b16 %v997
    %v4889 = vunpack.c.l.b16 %v998
    %v4890 = vunpack.c.h.b16 %v998
    %v4891 = vunpack.c.l.b16 %v999
    %v4892 = vunpack.c.h.b16 %v999
    %v4893 = vunpack.c.l.b16 %v1000
    %v4894 = vunpack.c.h.b16 %v1000
    %v4895 = vunpack.c.l.b16 %v1001
    %v4896 = vunpack.c.h.b16 %v1001
    %v4897 = vunpack.c.l.b16 %v1002
    %v4898 = vunpack.c.h.b16 %v1002
    %v4899 = vunpack.c.l.b16 %v1003
    %v4900 = vunpack.c.h.b16 %v1003
    %v4901 = vunpack.c.l.b16 %v1004
    %v4902 = vunpack.c.h.b16 %v1004
    %v4903 = vunpack.c.l.b16 %v1005
    %v4904 = vunpack.c.h.b16 %v1005
    %v4905 = vunpack.c.l.b16 %v1006
    %v4906 = vunpack.c.h.b16 %v1006
    %v4907 = vunpack.c.l.b16 %v1007
    %v4908 = vunpack.c.h.b16 %v1007
    %v4909 = vunpack.c.l.b16 %v1008
    %v4910 = vunpack.c.h.b16 %v1008
    %v4911 = vunpack.c.l.b16 %v1009
    %v4912 = vunpack.c.h.b16 %v1009
    %v4913 = vunpack.c.l.b16 %v1010
    %v4914 = vunpack.c.h.b16 %v1010
    %v4915 = vunpack.c.l.b16 %v1011
    %v4916 = vunpack.c.h.b16 %v1011
    %v4917 = vunpack.c.l.b16 %v1012
    %v4918 = vunpack.c.h.b16 %v1012
    %v4919 = vunpack.c.l.b16 %v1013
    %v4920 = vunpack.c.h.b16 %v1013
    %v4921 = vunpack.c.l.b16 %v1014
    %v4922 = vunpack.c.h.b16 %v1014
    %v4923 = vunpack.c.l.b16 %v1015
    %v4924 = vunpack.c.h.b16 %v1015
    %v4925 = vunpack.c.l.b16 %v1016
    %v4926 = vunpack.c.h.b16 %v1016
    %v4927 = vunpack.c.l.b16 %v1017
    %v4928 = vunpack.c.h.b16 %v1017
    %v4929 = vunpack.c.l.b16 %v1018
    %v4930 = vunpack.c.h.b16 %v1018
    %v4931 = vunpack.c.l.b16 %v1019
    %v4932 = vunpack.c.h.b16 %v1019
    %v4933 = vunpack.c.l.b16 %v1020
    %v4934 = vunpack.c.h.b16 %v1020
    %v4935 = vunpack.c.l.b16 %v1021
    %v4936 = vunpack.c.h.b16 %v1021
    %v4937 = vunpack.c.l.b16 %v1022
    %v4938 = vunpack.c.h.b16 %v1022
    %v4939 = vunpack.c.l.b16 %v1023
    %v4940 = vunpack.c.h.b16 %v1023
    %v4941 = vunpack.c.l.b16 %v1024
    %v4942 = vunpack.c.h.b16 %v1024
    %v4943 = vunpack.c.l.b16 %v1025
    %v4944 = vunpack.c.h.b16 %v1025
    %v4945 = vunpack.c.l.b16 %v1026
    %v4946 = vunpack.c.h.b16 %v1026
    %v4947 = vunpack.c.l.b16 %v1027
    %v4948 = vunpack.c.h.b16 %v1027
    %v4949 = vunpack.c.l.b16 %v1028
    %v4950 = vunpack.c.h.b16 %v1028
    %v4951 = vunpack.c.l.b16 %v1029
    %v4952 = vunpack.c.h.b16 %v1029
    %v4953 = vunpack.c.l.b16 %v1030
    %v4954 = vunpack.c.h.b16 %v1030
    %v4955 = vunpack.c.l.b16 %v1031
    %v4956 = vunpack.c.h.b16 %v1031
    %v4957 = vunpack.c.l.b16 %v1032
    %v4958 = vunpack.c.h.b16 %v1032
    %v4959 = vunpack.c.l.b16 %v1033
    %v4960 = vunpack.c.h.b16 %v1033
    %v4961 = vunpack.c.l.b16 %v1034
    %v4962 = vunpack.c.h.b16 %v1034
    %v4963 = vunpack.c.l.b16 %v1035
    %v4964 = vunpack.c.h.b16 %v1035
    %v4965 = vunpack.c.l.b16 %v1036
    %v4966 = vunpack.c.h.b16 %v1036
    %v4967 = vunpack.c.l.b16 %v1037
    %v4968 = vunpack.c.h.b16 %v1037
    %v4969 = vunpack.c.l.b16 %v1038
    %v4970 = vunpack.c.h.b16 %v1038
    %v4971 = vunpack.c.l.b16 %v1039
    %v4972 = vunpack.c.h.b16 %v1039
    %v4973 = vunpack.c.l.b16 %v1040
    %v4974 = vunpack.c.h.b16 %v1040
    %v4975 = vunpack.c.l.b16 %v1041
    %v4976 = vunpack.c.h.b16 %v1041
    %v4977 = vunpack.c.l.b16 %v1042
    %v4978 = vunpack.c.h.b16 %v1042
    %v4979 = vunpack.c.l.b16 %v1043
    %v4980 = vunpack.c.h.b16 %v1043
    %v4981 = vunpack.c.l.b16 %v1044
    %v4982 = vunpack.c.h.b16 %v1044
    %v4983 = vunpack.c.l.b16 %v1045
    %v4984 = vunpack.c.h.b16 %v1045
    %v4985 = vunpack.c.l.b16 %v1046
    %v4986 = vunpack.c.h.b16 %v1046
    %v4987 = vunpack.c.l.b16 %v1047
    %v4988 = vunpack.c.h.b16 %v1047
    %v4989 = vunpack.c.l.b16 %v1048
    %v4990 = vunpack.c.h.b16 %v1048
    %v4991 = vunpack.c.l.b16 %v1049
    %v4992 = vunpack.c.h.b16 %v1049
    %v4993 = vunpack.c.l.b16 %v1050
    %v4994 = vunpack.c.h.b16 %v1050
    %v4995 = vunpack.c.l.b16 %v1051
    %v4996 = vunpack.c.h.b16 %v1051
    %v4997 = vunpack.c.l.b16 %v1052
    %v4998 = vunpack.c.h.b16 %v1052
    %v4999 = vunpack.c.l.b16 %v1053
    %v5000 = vunpack.c.h.b16 %v1053
    %v5001 = vunpack.c.l.b16 %v1054
    %v5002 = vunpack.c.h.b16 %v1054
    %v5003 = vunpack.c.l.b16 %v1055
    %v5004 = vunpack.c.h.b16 %v1055
    %v5005 = vunpack.c.l.b16 %v1056
    %v5006 = vunpack.c.h.b16 %v1056
    %v5007 = vunpack.c.l.b16 %v1057
    %v5008 = vunpack.c.h.b16 %v1057
    %v5009 = vunpack.c.l.b16 %v1058
    %v5010 = vunpack.c.h.b16 %v1058
    %v5011 = vunpack.c.l.b16 %v1059
    %v5012 = vunpack.c.h.b16 %v1059
    %v5013 = vunpack.c.l.b16 %v1060
    %v5014 = vunpack.c.h.b16 %v1060
    %v5015 = vunpack.c.l.b16 %v1061
    %v5016 = vunpack.c.h.b16 %v1061
    %v5017 = vunpack.c.l.b16 %v1062
    %v5018 = vunpack.c.h.b16 %v1062
    %v5019 = vunpack.c.l.b16 %v1063
    %v5020 = vunpack.c.h.b16 %v1063
    %v5021 = vunpack.c.l.b16 %v1064
    %v5022 = vunpack.c.h.b16 %v1064
    %v5023 = vunpack.c.l.b16 %v1065
    %v5024 = vunpack.c.h.b16 %v1065
    %v5025 = vunpack.c.l.b16 %v1066
    %v5026 = vunpack.c.h.b16 %v1066
    %v5027 = vunpack.c.l.b16 %v1067
    %v5028 = vunpack.c.h.b16 %v1067
    %v5029 = vunpack.c.l.b16 %v1068
    %v5030 = vunpack.c.h.b16 %v1068
    %v5031 = vunpack.c.l.b16 %v1069
    %v5032 = vunpack.c.h.b16 %v1069
    %v5033 = vunpack.c.l.b16 %v1070
    %v5034 = vunpack.c.h.b16 %v1070
    %v5035 = vunpack.c.l.b16 %v1071
    %v5036 = vunpack.c.h.b16 %v1071
    %v5037 = vunpack.c.l.b16 %v1072
    %v5038 = vunpack.c.h.b16 %v1072
    %v5039 = vunpack.c.l.b16 %v1073
    %v5040 = vunpack.c.h.b16 %v1073
    %v5041 = vunpack.c.l.b16 %v1074
    %v5042 = vunpack.c.h.b16 %v1074
    %v5043 = vunpack.c.l.b16 %v1075
    %v5044 = vunpack.c.h.b16 %v1075
    %v5045 = vunpack.c.l.b16 %v1076
    %v5046 = vunpack.c.h.b16 %v1076
    %v5047 = vunpack.c.l.b16 %v1077
    %v5048 = vunpack.c.h.b16 %v1077
    %v5049 = vunpack.c.l.b16 %v1078
    %v5050 = vunpack.c.h.b16 %v1078
    %v5051 = vunpack.c.l.b16 %v1079
    %v5052 = vunpack.c.h.b16 %v1079
    %v5053 = vunpack.c.l.b16 %v1080
    %v5054 = vunpack.c.h.b16 %v1080
    %v5055 = vunpack.c.l.b16 %v1081
    %v5056 = vunpack.c.h.b16 %v1081
    %v5057 = vunpack.c.l.b16 %v1082
    %v5058 = vunpack.c.h.b16 %v1082
    %v5059 = vunpack.c.l.b16 %v1083
    %v5060 = vunpack.c.h.b16 %v1083
    %v5061 = vunpack.c.l.b16 %v1084
    %v5062 = vunpack.c.h.b16 %v1084
    %v5063 = vunpack.c.l.b16 %v1085
    %v5064 = vunpack.c.h.b16 %v1085
    %v5065 = vunpack.c.l.b16 %v1086
    %v5066 = vunpack.c.h.b16 %v1086
    %v5067 = vunpack.c.l.b16 %v1087
    %v5068 = vunpack.c.h.b16 %v1087
    %v5069 = vunpack.c.l.b16 %v1088
    %v5070 = vunpack.c.h.b16 %v1088
    %v5071 = vunpack.c.l.b16 %v1089
    %v5072 = vunpack.c.h.b16 %v1089
    %v5073 = vunpack.c.l.b16 %v1090
    %v5074 = vunpack.c.h.b16 %v1090
    %v5075 = vunpack.c.l.b16 %v1091
    %v5076 = vunpack.c.h.b16 %v1091
    %v5077 = vunpack.c.l.b16 %v1092
    %v5078 = vunpack.c.h.b16 %v1092
    %v5079 = vunpack.c.l.b16 %v1093
    %v5080 = vunpack.c.h.b16 %v1093
    %v5081 = vunpack.c.l.b16 %v1094
    %v5082 = vunpack.c.h.b16 %v1094
    %v5083 = vunpack.c.l.b16 %v1095
    %v5084 = vunpack.c.h.b16 %v1095
    %v5085 = vunpack.c.l.b16 %v1096
    %v5086 = vunpack.c.h.b16 %v1096
    %v5087 = vunpack.c.l.b16 %v1097
    %v5088 = vunpack.c.h.b16 %v1097
    %v5089 = vunpack.c.l.b16 %v1098
    %v5090 = vunpack.c.h.b16 %v1098
    %v5091 = vunpack.c.l.b16 %v1099
    %v5092 = vunpack.c.h.b16 %v1099
    %v5093 = vunpack.c.l.b16 %v1100
    %v5094 = vunpack.c.h.b16 %v1100
    %v5095 = vunpack.c.l.b16 %v1101
    %v5096 = vunpack.c.h.b16 %v1101
    %v5097 = vunpack.c.l.b16 %v1102
    %v5098 = vunpack.c.h.b16 %v1102
    %v5099 = vunpack.c.l.b16 %v1103
    %v5100 = vunpack.c.h.b16 %v1103
    %v5101 = vunpack.c.l.b16 %v1104
    %v5102 = vunpack.c.h.b16 %v1104
    %v5103 = vunpack.c.l.b16 %v1105
    %v5104 = vunpack.c.h.b16 %v1105
    %v5105 = vunpack.c.l.b16 %v1106
    %v5106 = vunpack.c.h.b16 %v1106
    %v5107 = vunpack.c.l.b16 %v1107
    %v5108 = vunpack.c.h.b16 %v1107
    %v5109 = vunpack.c.l.b16 %v1108
    %v5110 = vunpack.c.h.b16 %v1108
    %v5111 = vunpack.c.l.b16 %v1109
    %v5112 = vunpack.c.h.b16 %v1109
    %v5113 = vunpack.c.l.b16 %v1110
    %v5114 = vunpack.c.h.b16 %v1110
    %v5115 = vunpack.c.l.b16 %v1111
    %v5116 = vunpack.c.h.b16 %v1111
    %v5117 = vunpack.c.l.b16 %v1112
    %v5118 = vunpack.c.h.b16 %v1112
    %v5119 = vunpack.c.l.b16 %v1113
    %v5120 = vunpack.c.h.b16 %v1113
    %v5121 = vunpack.c.l.b16 %v1114
    %v5122 = vunpack.c.h.b16 %v1114
    %v5123 = vunpack.c.l.b16 %v1115
    %v5124 = vunpack.c.h.b16 %v1115
    %v5125 = vunpack.c.l.b16 %v1116
    %v5126 = vunpack.c.h.b16 %v1116
    %v5127 = vunpack.c.l.b16 %v1117
    %v5128 = vunpack.c.h.b16 %v1117
    %v5129 = vunpack.c.l.b16 %v1118
    %v5130 = vunpack.c.h.b16 %v1118
    %v5131 = vunpack.c.l.b16 %v1119
    %v5132 = vunpack.c.h.b16 %v1119
    %v5133 = vunpack.c.l.b16 %v1120
    %v5134 = vunpack.c.h.b16 %v1120
    %v5135 = vunpack.c.l.b16 %v1121
    %v5136 = vunpack.c.h.b16 %v1121
    %v5137 = vunpack.c.l.b16 %v1122
    %v5138 = vunpack.c.h.b16 %v1122
    %v5139 = vunpack.c.l.b16 %v1123
    %v5140 = vunpack.c.h.b16 %v1123
    %v5141 = vunpack.c.l.b16 %v1124
    %v5142 = vunpack.c.h.b16 %v1124
    %v5143 = vunpack.c.l.b16 %v1125
    %v5144 = vunpack.c.h.b16 %v1125
    %v5145 = vunpack.c.l.b16 %v1126
    %v5146 = vunpack.c.h.b16 %v1126
    %v5147 = vunpack.c.l.b16 %v1127
    %v5148 = vunpack.c.h.b16 %v1127
    %v5149 = vunpack.c.l.b16 %v1128
    %v5150 = vunpack.c.h.b16 %v1128
    %v5151 = vunpack.c.l.b16 %v1129
    %v5152 = vunpack.c.h.b16 %v1129
    %v5153 = vunpack.c.l.b16 %v1130
    %v5154 = vunpack.c.h.b16 %v1130
    %v5155 = vunpack.c.l.b16 %v1131
    %v5156 = vunpack.c.h.b16 %v1131
    %v5157 = vunpack.c.l.b16 %v1132
    %v5158 = vunpack.c.h.b16 %v1132
    %v5159 = vunpack.c.l.b16 %v1133
    %v5160 = vunpack.c.h.b16 %v1133
    %v5161 = vunpack.c.l.b16 %v1134
    %v5162 = vunpack.c.h.b16 %v1134
    %v5163 = vunpack.c.l.b16 %v1135
    %v5164 = vunpack.c.h.b16 %v1135
    %v5165 = vunpack.c.l.b16 %v1136
    %v5166 = vunpack.c.h.b16 %v1136
    %v5167 = vunpack.c.l.b16 %v1137
    %v5168 = vunpack.c.h.b16 %v1137
    %v5169 = vunpack.c.l.b16 %v1138
    %v5170 = vunpack.c.h.b16 %v1138
    %v5171 = vunpack.c.l.b16 %v1139
    %v5172 = vunpack.c.h.b16 %v1139
    %v5173 = vunpack.c.l.b16 %v1140
    %v5174 = vunpack.c.h.b16 %v1140
    %v5175 = vunpack.c.l.b16 %v1141
    %v5176 = vunpack.c.h.b16 %v1141
    %v5177 = vunpack.c.l.b16 %v1142
    %v5178 = vunpack.c.h.b16 %v1142
    %v5179 = vunpack.c.l.b16 %v1143
    %v5180 = vunpack.c.h.b16 %v1143
    %v5181 = vunpack.c.l.b16 %v1144
    %v5182 = vunpack.c.h.b16 %v1144
    %v5183 = vunpack.c.l.b16 %v1145
    %v5184 = vunpack.c.h.b16 %v1145
    %v5185 = vunpack.c.l.b16 %v1146
    %v5186 = vunpack.c.h.b16 %v1146
    %v5187 = vunpack.c.l.b16 %v1147
    %v5188 = vunpack.c.h.b16 %v1147
    %v5189 = vunpack.c.l.b16 %v1148
    %v5190 = vunpack.c.h.b16 %v1148
    %v5191 = vunpack.c.l.b16 %v1149
    %v5192 = vunpack.c.h.b16 %v1149
    %v5193 = vunpack.c.l.b16 %v1150
    %v5194 = vunpack.c.h.b16 %v1150
    %v5195 = vunpack.c.l.b16 %v1151
    %v5196 = vunpack.c.h.b16 %v1151
    %v5197 = vunpack.c.l.b16 %v1152
    %v5198 = vunpack.c.h.b16 %v1152
    %v5199 = vunpack.c.l.b16 %v1153
    %v5200 = vunpack.c.h.b16 %v1153
    %v5201 = vunpack.c.l.b16 %v1154
    %v5202 = vunpack.c.h.b16 %v1154
    %v5203 = vunpack.c.l.b16 %v1155
    %v5204 = vunpack.c.h.b16 %v1155
    %v5205 = vunpack.c.l.b16 %v1156
    %v5206 = vunpack.c.h.b16 %v1156
    %v5207 = vunpack.c.l.b16 %v1157
    %v5208 = vunpack.c.h.b16 %v1157
    %v5209 = vunpack.c.l.b16 %v1158
    %v5210 = vunpack.c.h.b16 %v1158
    %v5211 = vunpack.c.l.b16 %v1159
    %v5212 = vunpack.c.h.b16 %v1159
    %v5213 = vunpack.c.l.b16 %v1160
    %v5214 = vunpack.c.h.b16 %v1160
    %v5215 = vunpack.c.l.b16 %v1161
    %v5216 = vunpack.c.h.b16 %v1161
    %v5217 = vunpack.c.l.b16 %v1162
    %v5218 = vunpack.c.h.b16 %v1162
    %v5219 = vunpack.c.l.b16 %v1163
    %v5220 = vunpack.c.h.b16 %v1163
    %v5221 = vunpack.c.l.b16 %v1164
    %v5222 = vunpack.c.h.b16 %v1164
    %v5223 = vunpack.c.l.b16 %v1165
    %v5224 = vunpack.c.h.b16 %v1165
    %v5225 = vunpack.c.l.b16 %v1166
    %v5226 = vunpack.c.h.b16 %v1166
    %v5227 = vunpack.c.l.b16 %v1167
    %v5228 = vunpack.c.h.b16 %v1167
    %v5229 = vunpack.c.l.b16 %v1168
    %v5230 = vunpack.c.h.b16 %v1168
    %v5231 = vunpack.c.l.b16 %v1169
    %v5232 = vunpack.c.h.b16 %v1169
    %v5233 = vunpack.c.l.b16 %v1170
    %v5234 = vunpack.c.h.b16 %v1170
    %v5235 = vunpack.c.l.b16 %v1171
    %v5236 = vunpack.c.h.b16 %v1171
    %v5237 = vunpack.c.l.b16 %v1172
    %v5238 = vunpack.c.h.b16 %v1172
    %v5239 = vunpack.c.l.b16 %v1173
    %v5240 = vunpack.c.h.b16 %v1173
    %v5241 = vunpack.c.l.b16 %v1174
    %v5242 = vunpack.c.h.b16 %v1174
    %v5243 = vunpack.c.l.b16 %v1175
    %v5244 = vunpack.c.h.b16 %v1175
    %v5245 = vunpack.c.l.b16 %v1176
    %v5246 = vunpack.c.h.b16 %v1176
    %v5247 = vunpack.c.l.b16 %v1177
    %v5248 = vunpack.c.h.b16 %v1177
    %v5249 = vunpack.c.l.b16 %v1178
    %v5250 = vunpack.c.h.b16 %v1178
    %v5251 = vunpack.c.l.b16 %v1179
    %v5252 = vunpack.c.h.b16 %v1179
    %v5253 = vunpack.c.l.b16 %v1180
    %v5254 = vunpack.c.h.b16 %v1180
    %v5255 = vunpack.c.l.b16 %v1181
    %v5256 = vunpack.c.h.b16 %v1181
    %v5257 = vunpack.c.l.b16 %v1182
    %v5258 = vunpack.c.h.b16 %v1182
    %v5259 = vunpack.c.l.b16 %v1183
    %v5260 = vunpack.c.h.b16 %v1183
    %v5261 = vunpack.c.l.b16 %v1184
    %v5262 = vunpack.c.h.b16 %v1184
    %v5263 = vunpack.c.l.b16 %v1185
    %v5264 = vunpack.c.h.b16 %v1185
    %v5265 = vunpack.c.l.b16 %v1186
    %v5266 = vunpack.c.h.b16 %v1186
    %v5267 = vunpack.c.l.b16 %v1187
    %v5268 = vunpack.c.h.b16 %v1187
    %v5269 = vunpack.c.l.b16 %v1188
    %v5270 = vunpack.c.h.b16 %v1188
    %v5271 = vunpack.c.l.b16 %v1189
    %v5272 = vunpack.c.h.b16 %v1189
    %v5273 = vunpack.c.l.b16 %v1190
    %v5274 = vunpack.c.h.b16 %v1190
    %v5275 = vunpack.c.l.b16 %v1191
    %v5276 = vunpack.c.h.b16 %v1191
    %v5277 = vunpack.c.l.b16 %v1192
    %v5278 = vunpack.c.h.b16 %v1192
    %v5279 = vunpack.c.l.b16 %v1193
    %v5280 = vunpack.c.h.b16 %v1193
    %v5281 = vunpack.c.l.b16 %v1194
    %v5282 = vunpack.c.h.b16 %v1194
    %v5283 = vunpack.c.l.b16 %v1195
    %v5284 = vunpack.c.h.b16 %v1195
    %v5285 = vunpack.c.l.b16 %v1196
    %v5286 = vunpack.c.h.b16 %v1196
    %v5287 = vunpack.c.l.b16 %v1197
    %v5288 = vunpack.c.h.b16 %v1197
    %v5289 = vunpack.c.l.b16 %v1198
    %v5290 = vunpack.c.h.b16 %v1198
    %v5291 = vunpack.c.l.b16 %v1199
    %v5292 = vunpack.c.h.b16 %v1199
    %v5293 = vunpack.c.l.b16 %v1200
    %v5294 = vunpack.c.h.b16 %v1200
    %v5295 = vunpack.c.l.b16 %v1201
    %v5296 = vunpack.c.h.b16 %v1201
    %v5297 = vunpack.c.l.b16 %v1202
    %v5298 = vunpack.c.h.b16 %v1202
    %v5299 = vunpack.c.l.b16 %v1203
    %v5300 = vunpack.c.h.b16 %v1203
    %v5301 = vunpack.c.l.b16 %v1204
    %v5302 = vunpack.c.h.b16 %v1204
    %v5303 = vunpack.c.l.b16 %v1205
    %v5304 = vunpack.c.h.b16 %v1205
    %v5305 = vunpack.c.l.b16 %v1206
    %v5306 = vunpack.c.h.b16 %v1206
    %v5307 = vunpack.c.l.b16 %v1207
    %v5308 = vunpack.c.h.b16 %v1207
    %v5309 = vunpack.c.l.b16 %v1208
    %v5310 = vunpack.c.h.b16 %v1208
    %v5311 = vunpack.c.l.b16 %v1209
    %v5312 = vunpack.c.h.b16 %v1209
    %v5313 = vunpack.c.l.b16 %v1210
    %v5314 = vunpack.c.h.b16 %v1210
    %v5315 = vunpack.c.l.b16 %v1211
    %v5316 = vunpack.c.h.b16 %v1211
    %v5317 = vunpack.c.l.b16 %v1212
    %v5318 = vunpack.c.h.b16 %v1212
    %v5319 = vunpack.c.l.b16 %v1213
    %v5320 = vunpack.c.h.b16 %v1213
    %v5321 = vunpack.c.l.b16 %v1214
    %v5322 = vunpack.c.h.b16 %v1214
    %v5323 = vunpack.c.l.b16 %v1215
    %v5324 = vunpack.c.h.b16 %v1215
    %v5325 = vunpack.c.l.b16 %v1216
    %v5326 = vunpack.c.h.b16 %v1216
    %v5327 = vunpack.c.l.b16 %v1217
    %v5328 = vunpack.c.h.b16 %v1217
    %v5329 = vunpack.c.l.b16 %v1218
    %v5330 = vunpack.c.h.b16 %v1218
    %v5331 = vunpack.c.l.b16 %v1219
    %v5332 = vunpack.c.h.b16 %v1219
    %v5333 = vunpack.c.l.b16 %v1220
    %v5334 = vunpack.c.h.b16 %v1220
    %v5335 = vunpack.c.l.b16 %v1221
    %v5336 = vunpack.c.h.b16 %v1221
    %v5337 = vunpack.c.l.b16 %v1222
    %v5338 = vunpack.c.h.b16 %v1222
    %v5339 = vunpack.c.l.b16 %v1223
    %v5340 = vunpack.c.h.b16 %v1223
    %v5341 = vunpack.c.l.b16 %v1224
    %v5342 = vunpack.c.h.b16 %v1224
    %v5343 = vunpack.c.l.b16 %v1225
    %v5344 = vunpack.c.h.b16 %v1225
    %v5345 = vunpack.c.l.b16 %v1226
    %v5346 = vunpack.c.h.b16 %v1226
    %v5347 = vunpack.c.l.b16 %v1227
    %v5348 = vunpack.c.h.b16 %v1227
    %v5349 = vunpack.c.l.b16 %v1228
    %v5350 = vunpack.c.h.b16 %v1228
    %v5351 = vunpack.c.l.b16 %v1229
    %v5352 = vunpack.c.h.b16 %v1229
    %v5353 = vunpack.c.l.b16 %v1230
    %v5354 = vunpack.c.h.b16 %v1230
    %v5355 = vunpack.c.l.b16 %v1231
    %v5356 = vunpack.c.h.b16 %v1231
    %v5357 = vunpack.c.l.b16 %v1232
    %v5358 = vunpack.c.h.b16 %v1232
    %v5359 = vunpack.c.l.b16 %v1233
    %v5360 = vunpack.c.h.b16 %v1233
    %v5361 = vunpack.c.l.b16 %v1234
    %v5362 = vunpack.c.h.b16 %v1234
    %v5363 = vunpack.c.l.b16 %v1235
    %v5364 = vunpack.c.h.b16 %v1235
    %v5365 = vunpack.c.l.b16 %v1236
    %v5366 = vunpack.c.h.b16 %v1236
    %v5367 = vunpack.c.l.b16 %v1237
    %v5368 = vunpack.c.h.b16 %v1237
    %v5369 = vunpack.c.l.b16 %v1238
    %v5370 = vunpack.c.h.b16 %v1238
    %v5371 = vunpack.c.l.b16 %v1239
    %v5372 = vunpack.c.h.b16 %v1239
    %v5373 = vunpack.c.l.b16 %v1240
    %v5374 = vunpack.c.h.b16 %v1240
    %v5375 = vunpack.c.l.b16 %v1241
    %v5376 = vunpack.c.h.b16 %v1241
    %v5377 = vunpack.c.l.b16 %v1242
    %v5378 = vunpack.c.h.b16 %v1242
    %v5379 = vunpack.c.l.b16 %v1243
    %v5380 = vunpack.c.h.b16 %v1243
    %v5381 = vunpack.c.l.b16 %v1244
    %v5382 = vunpack.c.h.b16 %v1244
    %v5383 = vunpack.c.l.b16 %v1245
    %v5384 = vunpack.c.h.b16 %v1245
    %v5385 = vunpack.c.l.b16 %v1246
    %v5386 = vunpack.c.h.b16 %v1246
    %v5387 = vunpack.c.l.b16 %v1247
    %v5388 = vunpack.c.h.b16 %v1247
    %v5389 = vunpack.c.l.b16 %v1248
    %v5390 = vunpack.c.h.b16 %v1248
    %v5391 = vunpack.c.l.b16 %v1249
    %v5392 = vunpack.c.h.b16 %v1249
    %v5393 = vunpack.c.l.b16 %v1250
    %v5394 = vunpack.c.h.b16 %v1250
    %v5395 = vunpack.c.l.b16 %v1251
    %v5396 = vunpack.c.h.b16 %v1251
    %v5397 = vunpack.c.l.b16 %v1252
    %v5398 = vunpack.c.h.b16 %v1252
    %v5399 = vunpack.c.l.b16 %v1253
    %v5400 = vunpack.c.h.b16 %v1253
    %v5401 = vunpack.c.l.b16 %v1254
    %v5402 = vunpack.c.h.b16 %v1254
    %v5403 = vunpack.c.l.b16 %v1255
    %v5404 = vunpack.c.h.b16 %v1255
    %v5405 = vunpack.c.l.b16 %v1256
    %v5406 = vunpack.c.h.b16 %v1256
    %v5407 = vunpack.c.l.b16 %v1257
    %v5408 = vunpack.c.h.b16 %v1257
    %v5409 = vunpack.c.l.b16 %v1258
    %v5410 = vunpack.c.h.b16 %v1258
    %v5411 = vunpack.c.l.b16 %v1259
    %v5412 = vunpack.c.h.b16 %v1259
    %v5413 = vunpack.c.l.b16 %v1260
    %v5414 = vunpack.c.h.b16 %v1260
    %v5415 = vunpack.c.l.b16 %v1261
    %v5416 = vunpack.c.h.b16 %v1261
    %v5417 = vunpack.c.l.b16 %v1262
    %v5418 = vunpack.c.h.b16 %v1262
    %v5419 = vunpack.c.l.b16 %v1263
    %v5420 = vunpack.c.h.b16 %v1263
    %v5421 = vunpack.c.l.b16 %v1264
    %v5422 = vunpack.c.h.b16 %v1264
    %v5423 = vunpack.c.l.b16 %v1265
    %v5424 = vunpack.c.h.b16 %v1265
    %v5425 = vunpack.c.l.b16 %v1266
    %v5426 = vunpack.c.h.b16 %v1266
    %v5427 = vunpack.c.l.b16 %v1267
    %v5428 = vunpack.c.h.b16 %v1267
    %v5429 = vunpack.c.l.b16 %v1268
    %v5430 = vunpack.c.h.b16 %v1268
    %v5431 = vunpack.c.l.b16 %v1269
    %v5432 = vunpack.c.h.b16 %v1269
    %v5433 = vunpack.c.l.b16 %v1270
    %v5434 = vunpack.c.h.b16 %v1270
    %v5435 = vunpack.c.l.b16 %v1271
    %v5436 = vunpack.c.h.b16 %v1271
    %v5437 = vunpack.c.l.b16 %v1272
    %v5438 = vunpack.c.h.b16 %v1272
    %v5439 = vunpack.c.l.b16 %v1273
    %v5440 = vunpack.c.h.b16 %v1273
    %v5441 = vunpack.c.l.b16 %v1274
    %v5442 = vunpack.c.h.b16 %v1274
    %v5443 = vunpack.c.l.b16 %v1275
    %v5444 = vunpack.c.h.b16 %v1275
    %v5445 = vunpack.c.l.b16 %v1276
    %v5446 = vunpack.c.h.b16 %v1276
    %v5447 = vunpack.c.l.b16 %v1277
    %v5448 = vunpack.c.h.b16 %v1277
    %v5449 = vunpack.c.l.b16 %v1278
    %v5450 = vunpack.c.h.b16 %v1278
    %v5451 = vunpack.c.l.b16 %v1279
    %v5452 = vunpack.c.h.b16 %v1279
    %v5453 = vunpack.c.l.b16 %v1280
    %v5454 = vunpack.c.h.b16 %v1280
    %v5455 = vunpack.c.l.b16 %v1281
    %v5456 = vunpack.c.h.b16 %v1281
    %v5457 = vunpack.c.l.b16 %v1282
    %v5458 = vunpack.c.h.b16 %v1282
    %v5459 = vunpack.c.l.b16 %v1283
    %v5460 = vunpack.c.h.b16 %v1283
    %v5461 = vunpack.c.l.b16 %v1284
    %v5462 = vunpack.c.h.b16 %v1284
    %v5463 = vunpack.c.l.b16 %v1285
    %v5464 = vunpack.c.h.b16 %v1285
    %v5465 = vunpack.c.l.b16 %v1286
    %v5466 = vunpack.c.h.b16 %v1286
    %v5467 = vunpack.c.l.b16 %v1287
    %v5468 = vunpack.c.h.b16 %v1287
    %v5469 = vunpack.c.l.b16 %v1288
    %v5470 = vunpack.c.h.b16 %v1288
    %v5471 = vunpack.c.l.b16 %v1289
    %v5472 = vunpack.c.h.b16 %v1289
    %v5473 = vunpack.c.l.b16 %v1290
    %v5474 = vunpack.c.h.b16 %v1290
    %v5475 = vunpack.c.l.b16 %v1291
    %v5476 = vunpack.c.h.b16 %v1291
    %v5477 = vunpack.c.l.b16 %v1292
    %v5478 = vunpack.c.h.b16 %v1292
    %v5479 = vunpack.c.l.b16 %v1293
    %v5480 = vunpack.c.h.b16 %v1293
    %v5481 = vunpack.c.l.b16 %v1294
    %v5482 = vunpack.c.h.b16 %v1294
    %v5483 = vunpack.c.l.b16 %v1295
    %v5484 = vunpack.c.h.b16 %v1295
    %v5485 = vunpack.c.l.b16 %v1296
    %v5486 = vunpack.c.h.b16 %v1296
    %v5487 = vunpack.c.l.b16 %v1297
    %v5488 = vunpack.c.h.b16 %v1297
    %v5489 = vunpack.c.l.b16 %v1298
    %v5490 = vunpack.c.h.b16 %v1298
    %v5491 = vunpack.c.l.b16 %v1299
    %v5492 = vunpack.c.h.b16 %v1299
    %v5493 = vunpack.c.l.b16 %v1300
    %v5494 = vunpack.c.h.b16 %v1300
    %v5495 = vunpack.c.l.b16 %v1301
    %v5496 = vunpack.c.h.b16 %v1301
    %v5497 = vunpack.c.l.b16 %v1302
    %v5498 = vunpack.c.h.b16 %v1302
    %v5499 = vunpack.c.l.b16 %v1303
    %v5500 = vunpack.c.h.b16 %v1303
    %v5501 = vunpack.c.l.b16 %v1304
    %v5502 = vunpack.c.h.b16 %v1304
    %v5503 = vunpack.c.l.b16 %v1305
    %v5504 = vunpack.c.h.b16 %v1305
    %v5505 = vunpack.c.l.b16 %v1306
    %v5506 = vunpack.c.h.b16 %v1306
    %v5507 = vunpack.c.l.b16 %v1307
    %v5508 = vunpack.c.h.b16 %v1307
    %v5509 = vunpack.c.l.b16 %v1308
    %v5510 = vunpack.c.h.b16 %v1308
    %v5511 = vunpack.c.l.b16 %v1309
    %v5512 = vunpack.c.h.b16 %v1309
    %v5513 = vunpack.c.l.b16 %v1310
    %v5514 = vunpack.c.h.b16 %v1310
    %v5515 = vunpack.c.l.b16 %v1311
    %v5516 = vunpack.c.h.b16 %v1311
    %v5517 = vunpack.c.l.b16 %v1312
    %v5518 = vunpack.c.h.b16 %v1312
    %v5519 = vunpack.c.l.b16 %v1313
    %v5520 = vunpack.c.h.b16 %v1313
    %v5521 = vunpack.c.l.b16 %v1314
    %v5522 = vunpack.c.h.b16 %v1314
    %v5523 = vunpack.c.l.b16 %v1315
    %v5524 = vunpack.c.h.b16 %v1315
    %v5525 = vunpack.c.l.b16 %v1316
    %v5526 = vunpack.c.h.b16 %v1316
    %v5527 = vunpack.c.l.b16 %v1317
    %v5528 = vunpack.c.h.b16 %v1317
    %v5529 = vunpack.c.l.b16 %v1318
    %v5530 = vunpack.c.h.b16 %v1318
    %v5531 = vunpack.c.l.b16 %v1319
    %v5532 = vunpack.c.h.b16 %v1319
    %v5533 = vunpack.c.l.b16 %v1320
    %v5534 = vunpack.c.h.b16 %v1320
    %v5535 = vunpack.c.l.b16 %v1321
    %v5536 = vunpack.c.h.b16 %v1321
    %v5537 = vunpack.c.l.b16 %v1322
    %v5538 = vunpack.c.h.b16 %v1322
    %v5539 = vunpack.c.l.b16 %v1323
    %v5540 = vunpack.c.h.b16 %v1323
    %v5541 = vunpack.c.l.b16 %v1324
    %v5542 = vunpack.c.h.b16 %v1324
    %v5543 = vunpack.c.l.b16 %v1325
    %v5544 = vunpack.c.h.b16 %v1325
    %v5545 = vunpack.c.l.b16 %v1326
    %v5546 = vunpack.c.h.b16 %v1326
    %v5547 = vunpack.c.l.b16 %v1327
    %v5548 = vunpack.c.h.b16 %v1327
    %v5549 = vunpack.c.l.b16 %v1328
    %v5550 = vunpack.c.h.b16 %v1328
    %v5551 = vunpack.c.l.b16 %v1329
    %v5552 = vunpack.c.h.b16 %v1329
    %v5553 = vunpack.c.l.b16 %v1330
    %v5554 = vunpack.c.h.b16 %v1330
    %v5555 = vunpack.c.l.b16 %v1331
    %v5556 = vunpack.c.h.b16 %v1331
    %v5557 = vunpack.c.l.b16 %v1332
    %v5558 = vunpack.c.h.b16 %v1332
    %v5559 = vunpack.c.l.b16 %v1333
    %v5560 = vunpack.c.h.b16 %v1333
    %v5561 = vunpack.c.l.b16 %v1334
    %v5562 = vunpack.c.h.b16 %v1334
    %v5563 = vunpack.c.l.b16 %v1335
    %v5564 = vunpack.c.h.b16 %v1335
    %v5565 = vunpack.c.l.b16 %v1336
    %v5566 = vunpack.c.h.b16 %v1336
    %v5567 = vunpack.c.l.b16 %v1337
    %v5568 = vunpack.c.h.b16 %v1337
    %v5569 = vunpack.c.l.b16 %v1338
    %v5570 = vunpack.c.h.b16 %v1338
    %v5571 = vunpack.c.l.b16 %v1339
    %v5572 = vunpack.c.h.b16 %v1339
    %v5573 = vunpack.c.l.b16 %v1340
    %v5574 = vunpack.c.h.b16 %v1340
    %v5575 = vunpack.c.l.b16 %v1341
    %v5576 = vunpack.c.h.b16 %v1341
    %v5577 = vunpack.c.l.b16 %v1342
    %v5578 = vunpack.c.h.b16 %v1342
    %v5579 = vunpack.c.l.b16 %v1343
    %v5580 = vunpack.c.h.b16 %v1343
    %v5581 = vunpack.c.l.b16 %v1344
    %v5582 = vunpack.c.h.b16 %v1344
    %v5583 = vunpack.c.l.b16 %v1345
    %v5584 = vunpack.c.h.b16 %v1345
    %v5585 = vunpack.c.l.b16 %v1346
    %v5586 = vunpack.c.h.b16 %v1346
    %v5587 = vunpack.c.l.b16 %v1347
    %v5588 = vunpack.c.h.b16 %v1347
    %v5589 = vunpack.c.l.b16 %v1348
    %v5590 = vunpack.c.h.b16 %v1348
    %v5591 = vunpack.c.l.b16 %v1349
    %v5592 = vunpack.c.h.b16 %v1349
    %v5593 = vunpack.c.l.b16 %v1350
    %v5594 = vunpack.c.h.b16 %v1350
    %v5595 = vunpack.c.l.b16 %v1351
    %v5596 = vunpack.c.h.b16 %v1351
    %v5597 = vunpack.c.l.b16 %v1352
    %v5598 = vunpack.c.h.b16 %v1352
    %v5599 = vunpack.c.l.b16 %v1353
    %v5600 = vunpack.c.h.b16 %v1353
    %v5601 = vunpack.c.l.b16 %v1354
    %v5602 = vunpack.c.h.b16 %v1354
    %v5603 = vunpack.c.l.b16 %v1355
    %v5604 = vunpack.c.h.b16 %v1355
    %v5605 = vunpack.c.l.b16 %v1356
    %v5606 = vunpack.c.h.b16 %v1356
    %v5607 = vunpack.c.l.b16 %v1357
    %v5608 = vunpack.c.h.b16 %v1357
    %v5609 = vunpack.c.l.b16 %v1358
    %v5610 = vunpack.c.h.b16 %v1358
    %v5611 = vunpack.c.l.b16 %v1359
    %v5612 = vunpack.c.h.b16 %v1359
    %v5613 = vunpack.c.l.b16 %v1360
    %v5614 = vunpack.c.h.b16 %v1360
    %v5615 = vunpack.c.l.b16 %v1361
    %v5616 = vunpack.c.h.b16 %v1361
    %v5617 = vunpack.c.l.b16 %v1362
    %v5618 = vunpack.c.h.b16 %v1362
    %v5619 = vunpack.c.l.b16 %v1363
    %v5620 = vunpack.c.h.b16 %v1363
    %v5621 = vunpack.c.l.b16 %v1364
    %v5622 = vunpack.c.h.b16 %v1364
    %v5623 = vunpack.c.l.b16 %v1365
    %v5624 = vunpack.c.h.b16 %v1365
    %v5625 = vunpack.c.l.b16 %v1366
    %v5626 = vunpack.c.h.b16 %v1366
    %v5627 = vunpack.c.l.b16 %v1367
    %v5628 = vunpack.c.h.b16 %v1367
    %v5629 = vunpack.c.l.b16 %v1368
    %v5630 = vunpack.c.h.b16 %v1368
    %v5631 = vunpack.c.l.b16 %v1369
    %v5632 = vunpack.c.h.b16 %v1369
    %v5633 = vunpack.c.l.b16 %v1370
    %v5634 = vunpack.c.h.b16 %v1370
    %v5635 = vunpack.c.l.b16 %v1371
    %v5636 = vunpack.c.h.b16 %v1371
    %v5637 = vunpack.c.l.b16 %v1372
    %v5638 = vunpack.c.h.b16 %v1372
    %v5639 = vunpack.c.l.b16 %v1373
    %v5640 = vunpack.c.h.b16 %v1373
    %v5641 = vunpack.c.l.b16 %v1374
    %v5642 = vunpack.c.h.b16 %v1374
    %v5643 = vunpack.c.l.b16 %v1375
    %v5644 = vunpack.c.h.b16 %v1375
    %v5645 = vunpack.c.l.b16 %v1376
    %v5646 = vunpack.c.h.b16 %v1376
    %v5647 = vunpack.c.l.b16 %v1377
    %v5648 = vunpack.c.h.b16 %v1377
    %v5649 = vunpack.c.l.b16 %v1378
    %v5650 = vunpack.c.h.b16 %v1378
    %v5651 = vunpack.c.l.b16 %v1379
    %v5652 = vunpack.c.h.b16 %v1379
    %v5653 = vunpack.c.l.b16 %v1380
    %v5654 = vunpack.c.h.b16 %v1380
    %v5655 = vunpack.c.l.b16 %v1381
    %v5656 = vunpack.c.h.b16 %v1381
    %v5657 = vunpack.c.l.b16 %v1382
    %v5658 = vunpack.c.h.b16 %v1382
    %v5659 = vunpack.c.l.b16 %v1383
    %v5660 = vunpack.c.h.b16 %v1383
    %v5661 = vunpack.c.l.b16 %v1384
    %v5662 = vunpack.c.h.b16 %v1384
    %v5663 = vunpack.c.l.b16 %v1385
    %v5664 = vunpack.c.h.b16 %v1385
    %v5665 = vunpack.c.l.b16 %v1386
    %v5666 = vunpack.c.h.b16 %v1386
    %v5667 = vunpack.c.l.b16 %v1387
    %v5668 = vunpack.c.h.b16 %v1387
    %v5669 = vunpack.c.l.b16 %v1388
    %v5670 = vunpack.c.h.b16 %v1388
    %v5671 = vunpack.c.l.b16 %v1389
    %v5672 = vunpack.c.h.b16 %v1389
    %v5673 = vunpack.c.l.b16 %v1390
    %v5674 = vunpack.c.h.b16 %v1390
    %v5675 = vunpack.c.l.b16 %v1391
    %v5676 = vunpack.c.h.b16 %v1391
    %v5677 = vunpack.c.l.b16 %v1392
    %v5678 = vunpack.c.h.b16 %v1392
    %v5679 = vunpack.c.l.b16 %v1393
    %v5680 = vunpack.c.h.b16 %v1393
    %v5681 = vunpack.c.l.b16 %v1394
    %v5682 = vunpack.c.h.b16 %v1394
    %v5683 = vunpack.c.l.b16 %v1395
    %v5684 = vunpack.c.h.b16 %v1395
    %v5685 = vunpack.c.l.b16 %v1396
    %v5686 = vunpack.c.h.b16 %v1396
    %v5687 = vunpack.c.l.b16 %v1397
    %v5688 = vunpack.c.h.b16 %v1397
    %v5689 = vunpack.c.l.b16 %v1398
    %v5690 = vunpack.c.h.b16 %v1398
    %v5691 = vunpack.c.l.b16 %v1399
    %v5692 = vunpack.c.h.b16 %v1399
    %v5693 = vunpack.c.l.b16 %v1400
    %v5694 = vunpack.c.h.b16 %v1400
    %v5695 = vunpack.c.l.b16 %v1401
    %v5696 = vunpack.c.h.b16 %v1401
    %v5697 = vunpack.c.l.b16 %v1402
    %v5698 = vunpack.c.h.b16 %v1402
    %v5699 = vunpack.c.l.b16 %v1403
    %v5700 = vunpack.c.h.b16 %v1403
    %v5701 = vunpack.c.l.b16 %v1404
    %v5702 = vunpack.c.h.b16 %v1404
    %v5703 = vunpack.c.l.b16 %v1405
    %v5704 = vunpack.c.h.b16 %v1405
    %v5705 = vunpack.c.l.b16 %v1406
    %v5706 = vunpack.c.h.b16 %v1406
    %v5707 = vunpack.c.l.b16 %v1407
    %v5708 = vunpack.c.h.b16 %v1407
    %v5709 = vunpack.c.l.b16 %v1408
    %v5710 = vunpack.c.h.b16 %v1408
    %v5711 = vunpack.c.l.b16 %v1409
    %v5712 = vunpack.c.h.b16 %v1409
    %v5713 = vunpack.c.l.b16 %v1410
    %v5714 = vunpack.c.h.b16 %v1410
    %v5715 = vunpack.c.l.b16 %v1411
    %v5716 = vunpack.c.h.b16 %v1411
    %v5717 = vunpack.c.l.b16 %v1412
    %v5718 = vunpack.c.h.b16 %v1412
    %v5719 = vunpack.c.l.b16 %v1413
    %v5720 = vunpack.c.h.b16 %v1413
    %v5721 = vunpack.c.l.b16 %v1414
    %v5722 = vunpack.c.h.b16 %v1414
    %v5723 = vunpack.c.l.b16 %v1415
    %v5724 = vunpack.c.h.b16 %v1415
    %v5725 = vunpack.c.l.b16 %v1416
    %v5726 = vunpack.c.h.b16 %v1416
    %v5727 = vunpack.c.l.b16 %v1417
    %v5728 = vunpack.c.h.b16 %v1417
    %v5729 = vunpack.c.l.b16 %v1418
    %v5730 = vunpack.c.h.b16 %v1418
    %v5731 = vunpack.c.l.b16 %v1419
    %v5732 = vunpack.c.h.b16 %v1419
    %v5733 = vunpack.c.l.b16 %v1420
    %v5734 = vunpack.c.h.b16 %v1420
    %v5735 = vunpack.c.l.b16 %v1421
    %v5736 = vunpack.c.h.b16 %v1421
    %v5737 = vunpack.c.l.b16 %v1422
    %v5738 = vunpack.c.h.b16 %v1422
    %v5739 = vunpack.c.l.b16 %v1423
    %v5740 = vunpack.c.h.b16 %v1423
    %v5741 = vunpack.c.l.b16 %v1424
    %v5742 = vunpack.c.h.b16 %v1424
    %v5743 = vunpack.c.l.b16 %v1425
    %v5744 = vunpack.c.h.b16 %v1425
    %v5745 = vunpack.c.l.b16 %v1426
    %v5746 = vunpack.c.h.b16 %v1426
    %v5747 = vunpack.c.l.b16 %v1427
    %v5748 = vunpack.c.h.b16 %v1427
    %v5749 = vunpack.c.l.b16 %v1428
    %v5750 = vunpack.c.h.b16 %v1428
    %v5751 = vunpack.c.l.b16 %v1429
    %v5752 = vunpack.c.h.b16 %v1429
    %v5753 = vunpack.c.l.b16 %v1430
    %v5754 = vunpack.c.h.b16 %v1430
    %v5755 = vunpack.c.l.b16 %v1431
    %v5756 = vunpack.c.h.b16 %v1431
    %v5757 = vunpack.c.l.b16 %v1432
    %v5758 = vunpack.c.h.b16 %v1432
    %v5759 = vunpack.c.l.b16 %v1433
    %v5760 = vunpack.c.h.b16 %v1433
    %v5761 = vunpack.c.l.b16 %v1434
    %v5762 = vunpack.c.h.b16 %v1434
    %v5763 = vunpack.c.l.b16 %v1435
    %v5764 = vunpack.c.h.b16 %v1435
    %v5765 = vunpack.c.l.b16 %v1436
    %v5766 = vunpack.c.h.b16 %v1436
    %v5767 = vunpack.c.l.b16 %v1437
    %v5768 = vunpack.c.h.b16 %v1437
    %v5769 = vunpack.c.l.b16 %v1438
    %v5770 = vunpack.c.h.b16 %v1438
    %v5771 = vunpack.c.l.b16 %v1439
    %v5772 = vunpack.c.h.b16 %v1439
    %v5773 = vunpack.c.l.b16 %v1440
    %v5774 = vunpack.c.h.b16 %v1440
    %v5775 = vunpack.c.l.b16 %v1441
    %v5776 = vunpack.c.h.b16 %v1441
    %v5777 = vunpack.c.l.b16 %v1442
    %v5778 = vunpack.c.h.b16 %v1442
    %v5779 = vunpack.c.l.b16 %v1443
    %v5780 = vunpack.c.h.b16 %v1443
    %v5781 = vunpack.c.l.b16 %v1444
    %v5782 = vunpack.c.h.b16 %v1444
    %v5783 = vunpack.c.l.b16 %v1445
    %v5784 = vunpack.c.h.b16 %v1445
    %v5785 = vunpack.c.l.b16 %v1446
    %v5786 = vunpack.c.h.b16 %v1446
    %v5787 = vunpack.c.l.b16 %v1447
    %v5788 = vunpack.c.h.b16 %v1447
    %v5789 = vunpack.c.l.b16 %v1448
    %v5790 = vunpack.c.h.b16 %v1448
    %v5791 = vunpack.c.l.b16 %v1449
    %v5792 = vunpack.c.h.b16 %v1449
    %v5793 = vunpack.c.l.b16 %v1450
    %v5794 = vunpack.c.h.b16 %v1450
    %v5795 = vunpack.c.l.b16 %v1451
    %v5796 = vunpack.c.h.b16 %v1451
    %v5797 = vunpack.c.l.b16 %v1452
    %v5798 = vunpack.c.h.b16 %v1452
    %v5799 = vunpack.c.l.b16 %v1453
    %v5800 = vunpack.c.h.b16 %v1453
    %v5801 = vunpack.c.l.b16 %v1454
    %v5802 = vunpack.c.h.b16 %v1454
    %v5803 = vunpack.c.l.b16 %v1455
    %v5804 = vunpack.c.h.b16 %v1455
    %v5805 = vunpack.c.l.b16 %v1456
    %v5806 = vunpack.c.h.b16 %v1456
    %v5807 = vunpack.c.l.b16 %v1457
    %v5808 = vunpack.c.h.b16 %v1457
    %v5809 = vunpack.c.l.b16 %v1458
    %v5810 = vunpack.c.h.b16 %v1458
    %v5811 = vunpack.c.l.b16 %v1459
    %v5812 = vunpack.c.h.b16 %v1459
    %v5813 = vunpack.c.l.b16 %v1460
    %v5814 = vunpack.c.h.b16 %v1460
    %v5815 = vunpack.c.l.b16 %v1461
    %v5816 = vunpack.c.h.b16 %v1461
    %v5817 = vunpack.c.l.b16 %v1462
    %v5818 = vunpack.c.h.b16 %v1462
    %v5819 = vunpack.c.l.b16 %v1463
    %v5820 = vunpack.c.h.b16 %v1463
    %v5821 = vunpack.c.l.b16 %v1464
    %v5822 = vunpack.c.h.b16 %v1464
    %v5823 = vunpack.c.l.b16 %v1465
    %v5824 = vunpack.c.h.b16 %v1465
    %v5825 = vunpack.c.l.b16 %v1466
    %v5826 = vunpack.c.h.b16 %v1466
    %v5827 = vunpack.c.l.b16 %v1467
    %v5828 = vunpack.c.h.b16 %v1467
    %v5829 = vunpack.c.l.b16 %v1468
    %v5830 = vunpack.c.h.b16 %v1468
    %v5831 = vunpack.c.l.b16 %v1469
    %v5832 = vunpack.c.h.b16 %v1469
    %v5833 = vunpack.c.l.b16 %v1470
    %v5834 = vunpack.c.h.b16 %v1470
    %v5835 = vunpack.c.l.b16 %v1471
    %v5836 = vunpack.c.h.b16 %v1471
    %v5837 = vunpack.c.l.b16 %v1472
    %v5838 = vunpack.c.h.b16 %v1472
    %v5839 = vunpack.c.l.b16 %v1473
    %v5840 = vunpack.c.h.b16 %v1473
    %v5841 = vunpack.c.l.b16 %v1474
    %v5842 = vunpack.c.h.b16 %v1474
    %v5843 = vunpack.c.l.b16 %v1475
    %v5844 = vunpack.c.h.b16 %v1475
    %v5845 = vunpack.c.l.b16 %v1476
    %v5846 = vunpack.c.h.b16 %v1476
    %v5847 = vunpack.c.l.b16 %v1477
    %v5848 = vunpack.c.h.b16 %v1477
    %v5849 = vunpack.c.l.b16 %v1478
    %v5850 = vunpack.c.h.b16 %v1478
    %v5851 = vunpack.c.l.b16 %v1479
    %v5852 = vunpack.c.h.b16 %v1479
    %v5853 = vunpack.c.l.b16 %v1480
    %v5854 = vunpack.c.h.b16 %v1480
    %v5855 = vunpack.c.l.b16 %v1481
    %v5856 = vunpack.c.h.b16 %v1481
    %v5857 = vunpack.c.l.b16 %v1482
    %v5858 = vunpack.c.h.b16 %v1482
    %v5859 = vunpack.c.l.b16 %v1483
    %v5860 = vunpack.c.h.b16 %v1483
    %v5861 = vunpack.c.l.b16 %v1484
    %v5862 = vunpack.c.h.b16 %v1484
    %v5863 = vunpack.c.l.b16 %v1485
    %v5864 = vunpack.c.h.b16 %v1485
    %v5865 = vunpack.c.l.b16 %v1486
    %v5866 = vunpack.c.h.b16 %v1486
    %v5867 = vunpack.c.l.b16 %v1487
    %v5868 = vunpack.c.h.b16 %v1487
    %v5869 = vunpack.c.l.b16 %v1488
    %v5870 = vunpack.c.h.b16 %v1488
    %v5871 = vunpack.c.l.b16 %v1489
    %v5872 = vunpack.c.h.b16 %v1489
    %v5873 = vunpack.c.l.b16 %v1490
    %v5874 = vunpack.c.h.b16 %v1490
    %v5875 = vunpack.c.l.b16 %v1491
    %v5876 = vunpack.c.h.b16 %v1491
    %v5877 = vunpack.c.l.b16 %v1492
    %v5878 = vunpack.c.h.b16 %v1492
    %v5879 = vunpack.c.l.b16 %v1493
    %v5880 = vunpack.c.h.b16 %v1493
    %v5881 = vunpack.c.l.b16 %v1494
    %v5882 = vunpack.c.h.b16 %v1494
    %v5883 = vunpack.c.l.b16 %v1495
    %v5884 = vunpack.c.h.b16 %v1495
    %v5885 = vunpack.c.l.b16 %v1496
    %v5886 = vunpack.c.h.b16 %v1496
    %v5887 = vunpack.c.l.b16 %v1497
    %v5888 = vunpack.c.h.b16 %v1497
    %v5889 = vunpack.c.l.b16 %v1498
    %v5890 = vunpack.c.h.b16 %v1498
    %v5891 = vunpack.c.l.b16 %v1499
    %v5892 = vunpack.c.h.b16 %v1499
    %v5893 = vunpack.c.l.b16 %v1500
    %v5894 = vunpack.c.h.b16 %v1500
    %v5895 = vunpack.c.l.b16 %v1501
    %v5896 = vunpack.c.h.b16 %v1501
    %v5897 = vunpack.c.l.b16 %v1502
    %v5898 = vunpack.c.h.b16 %v1502
    %v5899 = vunpack.c.l.b16 %v1503
    %v5900 = vunpack.c.h.b16 %v1503
    %v5901 = vunpack.c.l.b16 %v1504
    %v5902 = vunpack.c.h.b16 %v1504
    %v5903 = vunpack.c.l.b16 %v1505
    %v5904 = vunpack.c.h.b16 %v1505
    %v5905 = vunpack.c.l.b16 %v1506
    %v5906 = vunpack.c.h.b16 %v1506
    %v5907 = vunpack.c.l.b16 %v1507
    %v5908 = vunpack.c.h.b16 %v1507
    %v5909 = vunpack.c.l.b16 %v1508
    %v5910 = vunpack.c.h.b16 %v1508
    %v5911 = vunpack.c.l.b16 %v1509
    %v5912 = vunpack.c.h.b16 %v1509
    %v5913 = vunpack.c.l.b16 %v1510
    %v5914 = vunpack.c.h.b16 %v1510
    %v5915 = vunpack.c.l.b16 %v1511
    %v5916 = vunpack.c.h.b16 %v1511
    %v5917 = vunpack.c.l.b16 %v1512
    %v5918 = vunpack.c.h.b16 %v1512
    %v5919 = vunpack.c.l.b16 %v1513
    %v5920 = vunpack.c.h.b16 %v1513
    %v5921 = vunpack.c.l.b16 %v1514
    %v5922 = vunpack.c.h.b16 %v1514
    %v5923 = vunpack.c.l.b16 %v1515
    %v5924 = vunpack.c.h.b16 %v1515
    %v5925 = vunpack.c.l.b16 %v1516
    %v5926 = vunpack.c.h.b16 %v1516
    %v5927 = vunpack.c.l.b16 %v1517
    %v5928 = vunpack.c.h.b16 %v1517
    %v5929 = vunpack.c.l.b16 %v1518
    %v5930 = vunpack.c.h.b16 %v1518
    %v5931 = vunpack.c.l.b16 %v1519
    %v5932 = vunpack.c.h.b16 %v1519
    %v5933 = vunpack.c.l.b16 %v1520
    %v5934 = vunpack.c.h.b16 %v1520
    %v5935 = vunpack.c.l.b16 %v1521
    %v5936 = vunpack.c.h.b16 %v1521
    %v5937 = vunpack.c.l.b16 %v1522
    %v5938 = vunpack.c.h.b16 %v1522
    %v5939 = vunpack.c.l.b16 %v1523
    %v5940 = vunpack.c.h.b16 %v1523
    %v5941 = vunpack.c.l.b16 %v1524
    %v5942 = vunpack.c.h.b16 %v1524
    %v5943 = vunpack.c.l.b16 %v1525
    %v5944 = vunpack.c.h.b16 %v1525
    %v5945 = vunpack.c.l.b16 %v1526
    %v5946 = vunpack.c.h.b16 %v1526
    %v5947 = vunpack.c.l.b16 %v1527
    %v5948 = vunpack.c.h.b16 %v1527
    %v5949 = vunpack.c.l.b16 %v1528
    %v5950 = vunpack.c.h.b16 %v1528
    %v5951 = vunpack.c.l.b16 %v1529
    %v5952 = vunpack.c.h.b16 %v1529
    %v5953 = vunpack.c.l.b16 %v1530
    %v5954 = vunpack.c.h.b16 %v1530
    %v5955 = vunpack.c.l.b16 %v1531
    %v5956 = vunpack.c.h.b16 %v1531
    %v5957 = vunpack.c.l.b16 %v1532
    %v5958 = vunpack.c.h.b16 %v1532
    %v5959 = vunpack.c.l.b16 %v1533
    %v5960 = vunpack.c.h.b16 %v1533
    %v5961 = vunpack.c.l.b16 %v1534
    %v5962 = vunpack.c.h.b16 %v1534
    %v5963 = vunpack.c.l.b16 %v1535
    %v5964 = vunpack.c.h.b16 %v1535
    %v5965 = vunpack.c.l.b16 %v1536
    %v5966 = vunpack.c.h.b16 %v1536
    %v5967 = vunpack.c.l.b16 %v1537
    %v5968 = vunpack.c.h.b16 %v1537
    %v5969 = vunpack.c.l.b16 %v1538
    %v5970 = vunpack.c.h.b16 %v1538
    %v5971 = vunpack.c.l.b16 %v1539
    %v5972 = vunpack.c.h.b16 %v1539
    %v5973 = vunpack.c.l.b16 %v1540
    %v5974 = vunpack.c.h.b16 %v1540
    %v5975 = vunpack.c.l.b16 %v1541
    %v5976 = vunpack.c.h.b16 %v1541
    %v5977 = vunpack.c.l.b16 %v1542
    %v5978 = vunpack.c.h.b16 %v1542
    %v5979 = vunpack.c.l.b16 %v1543
    %v5980 = vunpack.c.h.b16 %v1543
    %v5981 = vunpack.c.l.b16 %v1544
    %v5982 = vunpack.c.h.b16 %v1544
    %v5983 = vunpack.c.l.b16 %v1545
    %v5984 = vunpack.c.h.b16 %v1545
    %v5985 = vunpack.c.l.b16 %v1546
    %v5986 = vunpack.c.h.b16 %v1546
    %v5987 = vunpack.c.l.b16 %v1547
    %v5988 = vunpack.c.h.b16 %v1547
    %v5989 = vunpack.c.l.b16 %v1548
    %v5990 = vunpack.c.h.b16 %v1548
    %v5991 = vunpack.c.l.b16 %v1549
    %v5992 = vunpack.c.h.b16 %v1549
    %v5993 = vunpack.c.l.b16 %v1550
    %v5994 = vunpack.c.h.b16 %v1550
    %v5995 = vunpack.c.l.b16 %v1551
    %v5996 = vunpack.c.h.b16 %v1551
    %v5997 = vunpack.c.l.b16 %v1552
    %v5998 = vunpack.c.h.b16 %v1552
    %v5999 = vunpack.c.l.b16 %v1553
    %v6000 = vunpack.c.h.b16 %v1553
    %v6001 = vunpack.c.l.b16 %v1554
    %v6002 = vunpack.c.h.b16 %v1554
    %v6003 = vunpack.c.l.b16 %v1555
    %v6004 = vunpack.c.h.b16 %v1555
    %v6005 = vunpack.c.l.b16 %v1556
    %v6006 = vunpack.c.h.b16 %v1556
    %v6007 = vunpack.c.l.b16 %v1557
    %v6008 = vunpack.c.h.b16 %v1557
    %v6009 = vunpack.c.l.b16 %v1558
    %v6010 = vunpack.c.h.b16 %v1558
    %v6011 = vunpack.c.l.b16 %v1559
    %v6012 = vunpack.c.h.b16 %v1559
    %v6013 = vunpack.c.l.b16 %v1560
    %v6014 = vunpack.c.h.b16 %v1560
    %v6015 = vunpack.c.l.b16 %v1561
    %v6016 = vunpack.c.h.b16 %v1561
    %v6017 = vunpack.c.l.b16 %v1562
    %v6018 = vunpack.c.h.b16 %v1562
    %v6019 = vunpack.c.l.b16 %v1563
    %v6020 = vunpack.c.h.b16 %v1563
    %v6021 = vunpack.c.l.b16 %v1564
    %v6022 = vunpack.c.h.b16 %v1564
    %v6023 = vunpack.c.l.b16 %v1565
    %v6024 = vunpack.c.h.b16 %v1565
    %v6025 = vunpack.c.l.b16 %v1566
    %v6026 = vunpack.c.h.b16 %v1566
    %v6027 = vunpack.c.l.b16 %v1567
    %v6028 = vunpack.c.h.b16 %v1567
    %v6029 = vunpack.c.l.b16 %v1568
    %v6030 = vunpack.c.h.b16 %v1568
    %v6031 = vunpack.c.l.b16 %v1569
    %v6032 = vunpack.c.h.b16 %v1569
    %v6033 = vunpack.c.l.b16 %v1570
    %v6034 = vunpack.c.h.b16 %v1570
    %v6035 = vunpack.c.l.b16 %v1571
    %v6036 = vunpack.c.h.b16 %v1571
    %v6037 = vunpack.c.l.b16 %v1572
    %v6038 = vunpack.c.h.b16 %v1572
    %v6039 = vunpack.c.l.b16 %v1573
    %v6040 = vunpack.c.h.b16 %v1573
    %v6041 = vunpack.c.l.b16 %v1574
    %v6042 = vunpack.c.h.b16 %v1574
    %v6043 = vunpack.c.l.b16 %v1575
    %v6044 = vunpack.c.h.b16 %v1575
    %v6045 = vunpack.c.l.b16 %v1576
    %v6046 = vunpack.c.h.b16 %v1576
    %v6047 = vunpack.c.l.b16 %v1577
    %v6048 = vunpack.c.h.b16 %v1577
    %v6049 = vunpack.c.l.b16 %v1578
    %v6050 = vunpack.c.h.b16 %v1578
    %v6051 = vunpack.c.l.b16 %v1579
    %v6052 = vunpack.c.h.b16 %v1579
    %v6053 = vunpack.c.l.b16 %v1580
    %v6054 = vunpack.c.h.b16 %v1580
    %v6055 = vunpack.c.l.b16 %v1581
    %v6056 = vunpack.c.h.b16 %v1581
    %v6057 = vunpack.c.l.b16 %v1582
    %v6058 = vunpack.c.h.b16 %v1582
    %v6059 = vunpack.c.l.b16 %v1583
    %v6060 = vunpack.c.h.b16 %v1583
    %v6061 = vunpack.c.l.b16 %v1584
    %v6062 = vunpack.c.h.b16 %v1584
    %v6063 = vunpack.c.l.b16 %v1585
    %v6064 = vunpack.c.h.b16 %v1585
    %v6065 = vunpack.c.l.b16 %v1586
    %v6066 = vunpack.c.h.b16 %v1586
    %v6067 = vunpack.c.l.b16 %v1587
    %v6068 = vunpack.c.h.b16 %v1587
    %v6069 = vunpack.c.l.b16 %v1588
    %v6070 = vunpack.c.h.b16 %v1588
    %v6071 = vunpack.c.l.b16 %v1589
    %v6072 = vunpack.c.h.b16 %v1589
    %v6073 = vunpack.c.l.b16 %v1590
    %v6074 = vunpack.c.h.b16 %v1590
    %v6075 = vunpack.c.l.b16 %v1591
    %v6076 = vunpack.c.h.b16 %v1591
    %v6077 = vunpack.c.l.b16 %v1592
    %v6078 = vunpack.c.h.b16 %v1592
    %v6079 = vunpack.c.l.b16 %v1593
    %v6080 = vunpack.c.h.b16 %v1593
    %v6081 = vunpack.c.l.b16 %v1594
    %v6082 = vunpack.c.h.b16 %v1594
    %v6083 = vunpack.c.l.b16 %v1595
    %v6084 = vunpack.c.h.b16 %v1595
    %v6085 = vunpack.c.l.b16 %v1596
    %v6086 = vunpack.c.h.b16 %v1596
    %v6087 = vunpack.c.l.b16 %v1597
    %v6088 = vunpack.c.h.b16 %v1597
    %v6089 = vunpack.c.l.b16 %v1598
    %v6090 = vunpack.c.h.b16 %v1598
    %v6091 = vunpack.c.l.b16 %v1599
    %v6092 = vunpack.c.h.b16 %v1599
    %v6093 = vunpack.c.l.b16 %v1600
    %v6094 = vunpack.c.h.b16 %v1600
    %v6095 = vunpack.c.l.b16 %v1601
    %v6096 = vunpack.c.h.b16 %v1601
    %v6097 = vunpack.c.l.b16 %v1602
    %v6098 = vunpack.c.h.b16 %v1602
    %v6099 = vunpack.c.l.b16 %v1603
    %v6100 = vunpack.c.h.b16 %v1603
    %v6101 = vunpack.c.l.b16 %v1604
    %v6102 = vunpack.c.h.b16 %v1604
    %v6103 = vunpack.c.l.b16 %v1605
    %v6104 = vunpack.c.h.b16 %v1605
    %v6105 = vunpack.c.l.b16 %v1606
    %v6106 = vunpack.c.h.b16 %v1606
    %v6107 = vunpack.c.l.b16 %v1607
    %v6108 = vunpack.c.h.b16 %v1607
    %v6109 = vunpack.c.l.b16 %v1608
    %v6110 = vunpack.c.h.b16 %v1608
    %v6111 = vunpack.c.l.b16 %v1609
    %v6112 = vunpack.c.h.b16 %v1609
    %v6113 = vunpack.c.l.b16 %v1610
    %v6114 = vunpack.c.h.b16 %v1610
    %v6115 = vunpack.c.l.b16 %v1611
    %v6116 = vunpack.c.h.b16 %v1611
    %v6117 = vunpack.c.l.b16 %v1612
    %v6118 = vunpack.c.h.b16 %v1612
    %v6119 = vunpack.c.l.b16 %v1613
    %v6120 = vunpack.c.h.b16 %v1613
    %v6121 = vunpack.c.l.b16 %v1614
    %v6122 = vunpack.c.h.b16 %v1614
    %v6123 = vunpack.c.l.b16 %v1615
    %v6124 = vunpack.c.h.b16 %v1615
    %v6125 = vunpack.c.l.b16 %v1616
    %v6126 = vunpack.c.h.b16 %v1616
    %v6127 = vunpack.c.l.b16 %v1617
    %v6128 = vunpack.c.h.b16 %v1617
    %v6129 = vunpack.c.l.b16 %v1618
    %v6130 = vunpack.c.h.b16 %v1618
    %v6131 = vunpack.c.l.b16 %v1619
    %v6132 = vunpack.c.h.b16 %v1619
    %v6133 = vunpack.c.l.b16 %v1620
    %v6134 = vunpack.c.h.b16 %v1620
    %v6135 = vunpack.c.l.b16 %v1621
    %v6136 = vunpack.c.h.b16 %v1621
    %v6137 = vunpack.c.l.b16 %v1622
    %v6138 = vunpack.c.h.b16 %v1622
    %v6139 = vunpack.c.l.b16 %v1623
    %v6140 = vunpack.c.h.b16 %v1623
    %v6141 = vunpack.c.l.b16 %v1624
    %v6142 = vunpack.c.h.b16 %v1624
    %v6143 = vunpack.c.l.b16 %v1625
    %v6144 = vunpack.c.h.b16 %v1625
    %v6145 = vunpack.c.l.b16 %v1626
    %v6146 = vunpack.c.h.b16 %v1626
    %v6147 = vunpack.c.l.b16 %v1627
    %v6148 = vunpack.c.h.b16 %v1627
    %v6149 = vunpack.c.l.b16 %v1628
    %v6150 = vunpack.c.h.b16 %v1628
    %v6151 = vunpack.c.l.b16 %v1629
    %v6152 = vunpack.c.h.b16 %v1629
    %v6153 = vunpack.c.l.b16 %v1630
    %v6154 = vunpack.c.h.b16 %v1630
    %v6155 = vunpack.c.l.b16 %v1631
    %v6156 = vunpack.c.h.b16 %v1631
    %v6157 = vunpack.c.l.b16 %v1632
    %v6158 = vunpack.c.h.b16 %v1632
    %v6159 = vunpack.c.l.b16 %v1633
    %v6160 = vunpack.c.h.b16 %v1633
    %v6161 = vunpack.c.l.b16 %v1634
    %v6162 = vunpack.c.h.b16 %v1634
    %v6163 = vunpack.c.l.b16 %v1635
    %v6164 = vunpack.c.h.b16 %v1635
    %v6165 = vunpack.c.l.b16 %v1636
    %v6166 = vunpack.c.h.b16 %v1636
    %v6167 = vunpack.c.l.b16 %v1637
    %v6168 = vunpack.c.h.b16 %v1637
    %v6169 = vunpack.c.l.b16 %v1638
    %v6170 = vunpack.c.h.b16 %v1638
    %v6171 = vunpack.c.l.b16 %v1639
    %v6172 = vunpack.c.h.b16 %v1639
    %v6173 = vunpack.c.l.b16 %v1640
    %v6174 = vunpack.c.h.b16 %v1640
    %v6175 = vunpack.c.l.b16 %v1641
    %v6176 = vunpack.c.h.b16 %v1641
    %v6177 = vunpack.c.l.b16 %v1642
    %v6178 = vunpack.c.h.b16 %v1642
    %v6179 = vunpack.c.l.b16 %v1643
    %v6180 = vunpack.c.h.b16 %v1643
    %v6181 = vunpack.c.l.b16 %v1644
    %v6182 = vunpack.c.h.b16 %v1644
    %v6183 = vunpack.c.l.b16 %v1645
    %v6184 = vunpack.c.h.b16 %v1645
    %v6185 = vunpack.c.l.b16 %v1646
    %v6186 = vunpack.c.h.b16 %v1646
    %v6187 = vunpack.c.l.b16 %v1647
    %v6188 = vunpack.c.h.b16 %v1647
    %v6189 = vunpack.c.l.b16 %v1648
    %v6190 = vunpack.c.h.b16 %v1648
    %v6191 = vunpack.c.l.b16 %v1649
    %v6192 = vunpack.c.h.b16 %v1649
    %v6193 = vunpack.c.l.b16 %v1650
    %v6194 = vunpack.c.h.b16 %v1650
    %v6195 = vunpack.c.l.b16 %v1651
    %v6196 = vunpack.c.h.b16 %v1651
    %v6197 = vunpack.c.l.b16 %v1652
    %v6198 = vunpack.c.h.b16 %v1652
    %v6199 = vunpack.c.l.b16 %v1653
    %v6200 = vunpack.c.h.b16 %v1653
    %v6201 = vunpack.c.l.b16 %v1654
    %v6202 = vunpack.c.h.b16 %v1654
    %v6203 = vunpack.c.l.b16 %v1655
    %v6204 = vunpack.c.h.b16 %v1655
    %v6205 = vunpack.c.l.b16 %v1656
    %v6206 = vunpack.c.h.b16 %v1656
    %v6207 = vunpack.c.l.b16 %v1657
    %v6208 = vunpack.c.h.b16 %v1657
    %v6209 = vunpack.c.l.b16 %v1658
    %v6210 = vunpack.c.h.b16 %v1658
    %v6211 = vunpack.c.l.b16 %v1659
    %v6212 = vunpack.c.h.b16 %v1659
    %v6213 = vunpack.c.l.b16 %v1660
    %v6214 = vunpack.c.h.b16 %v1660
    %v6215 = vunpack.c.l.b16 %v1661
    %v6216 = vunpack.c.h.b16 %v1661
    %v6217 = vunpack.c.l.b16 %v1662
    %v6218 = vunpack.c.h.b16 %v1662
    %v6219 = vunpack.c.l.b16 %v1663
    %v6220 = vunpack.c.h.b16 %v1663
    %v6221 = vunpack.c.l.b16 %v1664
    %v6222 = vunpack.c.h.b16 %v1664
    %v6223 = vunpack.c.l.b16 %v1665
    %v6224 = vunpack.c.h.b16 %v1665
    %v6225 = vunpack.c.l.b16 %v1666
    %v6226 = vunpack.c.h.b16 %v1666
    %v6227 = vunpack.c.l.b16 %v1667
    %v6228 = vunpack.c.h.b16 %v1667
    %v6229 = vunpack.c.l.b16 %v1668
    %v6230 = vunpack.c.h.b16 %v1668
    %v6231 = vunpack.c.l.b16 %v1669
    %v6232 = vunpack.c.h.b16 %v1669
    %v6233 = vunpack.c.l.b16 %v1670
    %v6234 = vunpack.c.h.b16 %v1670
    %v6235 = vunpack.c.l.b16 %v1671
    %v6236 = vunpack.c.h.b16 %v1671
    %v6237 = vunpack.c.l.b16 %v1672
    %v6238 = vunpack.c.h.b16 %v1672
    %v6239 = vunpack.c.l.b16 %v1673
    %v6240 = vunpack.c.h.b16 %v1673
    %v6241 = vunpack.c.l.b16 %v1674
    %v6242 = vunpack.c.h.b16 %v1674
    %v6243 = vunpack.c.l.b16 %v1675
    %v6244 = vunpack.c.h.b16 %v1675
    %v6245 = vunpack.c.l.b16 %v1676
    %v6246 = vunpack.c.h.b16 %v1676
    %v6247 = vunpack.c.l.b16 %v1677
    %v6248 = vunpack.c.h.b16 %v1677
    %v6249 = vunpack.c.l.b16 %v1678
    %v6250 = vunpack.c.h.b16 %v1678
    %v6251 = vunpack.c.l.b16 %v1679
    %v6252 = vunpack.c.h.b16 %v1679
    %v6253 = vunpack.c.l.b16 %v1680
    %v6254 = vunpack.c.h.b16 %v1680
    %v6255 = vunpack.c.l.b16 %v1681
    %v6256 = vunpack.c.h.b16 %v1681
    %v6257 = vunpack.c.l.b16 %v1682
    %v6258 = vunpack.c.h.b16 %v1682
    %v6259 = vunpack.c.l.b16 %v1683
    %v6260 = vunpack.c.h.b16 %v1683
    %v6261 = vunpack.c.l.b16 %v1684
    %v6262 = vunpack.c.h.b16 %v1684
    %v6263 = vunpack.c.l.b16 %v1685
    %v6264 = vunpack.c.h.b16 %v1685
    %v6265 = vunpack.c.l.b16 %v1686
    %v6266 = vunpack.c.h.b16 %v1686
    %v6267 = vunpack.c.l.b16 %v1687
    %v6268 = vunpack.c.h.b16 %v1687
    %v6269 = vunpack.c.l.b16 %v1688
    %v6270 = vunpack.c.h.b16 %v1688
    %v6271 = vunpack.c.l.b16 %v1689
    %v6272 = vunpack.c.h.b16 %v1689
    %v6273 = vunpack.c.l.b16 %v1690
    %v6274 = vunpack.c.h.b16 %v1690
    %v6275 = vunpack.c.l.b16 %v1691
    %v6276 = vunpack.c.h.b16 %v1691
    %v6277 = vunpack.c.l.b16 %v1692
    %v6278 = vunpack.c.h.b16 %v1692
    %v6279 = vunpack.c.l.b16 %v1693
    %v6280 = vunpack.c.h.b16 %v1693
    %v6281 = vunpack.c.l.b16 %v1694
    %v6282 = vunpack.c.h.b16 %v1694
    %v6283 = vunpack.c.l.b16 %v1695
    %v6284 = vunpack.c.h.b16 %v1695
    %v6285 = vunpack.c.l.b16 %v1696
    %v6286 = vunpack.c.h.b16 %v1696
    %v6287 = vunpack.c.l.b16 %v1697
    %v6288 = vunpack.c.h.b16 %v1697
    %v6289 = vunpack.c.l.b16 %v1698
    %v6290 = vunpack.c.h.b16 %v1698
    %v6291 = vunpack.c.l.b16 %v1699
    %v6292 = vunpack.c.h.b16 %v1699
    %v6293 = vunpack.c.l.b16 %v1700
    %v6294 = vunpack.c.h.b16 %v1700
    %v6295 = vunpack.c.l.b16 %v1701
    %v6296 = vunpack.c.h.b16 %v1701
    %v6297 = vunpack.c.l.b16 %v1702
    %v6298 = vunpack.c.h.b16 %v1702
    %v6299 = vunpack.c.l.b16 %v1703
    %v6300 = vunpack.c.h.b16 %v1703
    %v6301 = vunpack.c.l.b16 %v1704
    %v6302 = vunpack.c.h.b16 %v1704
    %v6303 = vunpack.c.l.b16 %v1705
    %v6304 = vunpack.c.h.b16 %v1705
    %v6305 = vunpack.c.l.b16 %v1706
    %v6306 = vunpack.c.h.b16 %v1706
    %v6307 = vunpack.c.l.b16 %v1707
    %v6308 = vunpack.c.h.b16 %v1707
    %v6309 = vunpack.c.l.b16 %v1708
    %v6310 = vunpack.c.h.b16 %v1708
    %v6311 = vunpack.c.l.b16 %v1709
    %v6312 = vunpack.c.h.b16 %v1709
    %v6313 = vunpack.c.l.b16 %v1710
    %v6314 = vunpack.c.h.b16 %v1710
    %v6315 = vunpack.c.l.b16 %v1711
    %v6316 = vunpack.c.h.b16 %v1711
    %v6317 = vunpack.c.l.b16 %v1712
    %v6318 = vunpack.c.h.b16 %v1712
    %v6319 = vunpack.c.l.b16 %v1713
    %v6320 = vunpack.c.h.b16 %v1713
    %v6321 = vunpack.c.l.b16 %v1714
    %v6322 = vunpack.c.h.b16 %v1714
    %v6323 = vunpack.c.l.b16 %v1715
    %v6324 = vunpack.c.h.b16 %v1715
    %v6325 = vunpack.c.l.b16 %v1716
    %v6326 = vunpack.c.h.b16 %v1716
    %v6327 = vunpack.c.l.b16 %v1717
    %v6328 = vunpack.c.h.b16 %v1717
    %v6329 = vunpack.c.l.b16 %v1718
    %v6330 = vunpack.c.h.b16 %v1718
    %v6331 = vunpack.c.l.b16 %v1719
    %v6332 = vunpack.c.h.b16 %v1719
    %v6333 = vunpack.c.l.b16 %v1720
    %v6334 = vunpack.c.h.b16 %v1720
    %v6335 = vunpack.c.l.b16 %v1721
    %v6336 = vunpack.c.h.b16 %v1721
    %v6337 = vunpack.c.l.b16 %v1722
    %v6338 = vunpack.c.h.b16 %v1722
    %v6339 = vunpack.c.l.b16 %v1723
    %v6340 = vunpack.c.h.b16 %v1723
    %v6341 = vunpack.c.l.b16 %v1724
    %v6342 = vunpack.c.h.b16 %v1724
    %v6343 = vunpack.c.l.b16 %v1725
    %v6344 = vunpack.c.h.b16 %v1725
    %v6345 = vunpack.c.l.b16 %v1726
    %v6346 = vunpack.c.h.b16 %v1726
    %v6347 = vunpack.c.l.b16 %v1727
    %v6348 = vunpack.c.h.b16 %v1727
    %v6349 = vunpack.c.l.b16 %v1728
    %v6350 = vunpack.c.h.b16 %v1728
    %v6351 = vunpack.c.l.b16 %v1729
    %v6352 = vunpack.c.h.b16 %v1729
    %v6353 = vunpack.c.l.b16 %v1730
    %v6354 = vunpack.c.h.b16 %v1730
    %v6355 = vunpack.c.l.b16 %v1731
    %v6356 = vunpack.c.h.b16 %v1731
    %v6357 = vunpack.c.l.b16 %v1732
    %v6358 = vunpack.c.h.b16 %v1732
    %v6359 = vunpack.c.l.b16 %v1733
    %v6360 = vunpack.c.h.b16 %v1733
    %v6361 = vunpack.c.l.b16 %v1734
    %v6362 = vunpack.c.h.b16 %v1734
    %v6363 = vunpack.c.l.b16 %v1735
    %v6364 = vunpack.c.h.b16 %v1735
    %v6365 = vunpack.c.l.b16 %v1736
    %v6366 = vunpack.c.h.b16 %v1736
    %v6367 = vunpack.c.l.b16 %v1737
    %v6368 = vunpack.c.h.b16 %v1737
    %v6369 = vunpack.c.l.b16 %v1738
    %v6370 = vunpack.c.h.b16 %v1738
    %v6371 = vunpack.c.l.b16 %v1739
    %v6372 = vunpack.c.h.b16 %v1739
    %v6373 = vunpack.c.l.b16 %v1740
    %v6374 = vunpack.c.h.b16 %v1740
    %v6375 = vunpack.c.l.b16 %v1741
    %v6376 = vunpack.c.h.b16 %v1741
    %v6377 = vunpack.c.l.b16 %v1742
    %v6378 = vunpack.c.h.b16 %v1742
    %v6379 = vunpack.c.l.b16 %v1743
    %v6380 = vunpack.c.h.b16 %v1743
    %v6381 = vunpack.c.l.b16 %v1744
    %v6382 = vunpack.c.h.b16 %v1744
    %v6383 = vunpack.c.l.b16 %v1745
    %v6384 = vunpack.c.h.b16 %v1745
    %v6385 = vunpack.c.l.b16 %v1746
    %v6386 = vunpack.c.h.b16 %v1746
    %v6387 = vunpack.c.l.b16 %v1747
    %v6388 = vunpack.c.h.b16 %v1747
    %v6389 = vunpack.c.l.b16 %v1748
    %v6390 = vunpack.c.h.b16 %v1748
    %v6391 = vunpack.c.l.b16 %v1749
    %v6392 = vunpack.c.h.b16 %v1749
    %v6393 = vunpack.c.l.b16 %v1750
    %v6394 = vunpack.c.h.b16 %v1750
    %v6395 = vunpack.c.l.b16 %v1751
    %v6396 = vunpack.c.h.b16 %v1751
    %v6397 = vunpack.c.l.b16 %v1752
    %v6398 = vunpack.c.h.b16 %v1752
    %v6399 = vunpack.c.l.b16 %v1753
    %v6400 = vunpack.c.h.b16 %v1753
    %v6401 = vunpack.c.l.b16 %v1754
    %v6402 = vunpack.c.h.b16 %v1754
    %v6403 = vunpack.c.l.b16 %v1755
    %v6404 = vunpack.c.h.b16 %v1755
    %v6405 = vunpack.c.l.b16 %v1756
    %v6406 = vunpack.c.h.b16 %v1756
    %v6407 = vpack.c.b16 %v3343, %v3335
    %v6408 = vpack.c.b16 %v3344, %v3336
    %v6409 = vpack.c.b16 %v3345, %v3337
    %v6410 = vpack.c.b16 %v3346, %v3338
    %v6411 = vpack.c.b16 %v3347, %v3339
    %v6412 = vpack.c.b16 %v3348, %v3340
    %v6413 = vpack.c.b16 %v3349, %v3341
    %v6414 = vpack.c.b16 %v3350, %v3342
    %v6415 = vpack.c.b16 %v3359, %v3351
    %v6416 = vpack.c.b16 %v3360, %v3352
    %v6417 = vpack.c.b16 %v3361, %v3353
    %v6418 = vpack.c.b16 %v3362, %v3354
    %v6419 = vpack.c.b16 %v3363, %v3355
    %v6420 = vpack.c.b16 %v3364, %v3356
    %v6421 = vpack.c.b16 %v3365, %v3357
    %v6422 = vpack.c.b16 %v3366, %v3358
    %v6423 = vpack.c.b16 %v3375, %v3367
    %v6424 = vpack.c.b16 %v3376, %v3368
    %v6425 = vpack.c.b16 %v3377, %v3369
    %v6426 = vpack.c.b16 %v3378, %v3370
    %v6427 = vpack.c.b16 %v3379, %v3371
    %v6428 = vpack.c.b16 %v3380, %v3372
    %v6429 = vpack.c.b16 %v3381, %v3373
    %v6430 = vpack.c.b16 %v3382, %v3374
    %v6431 = vpack.c.b16 %v3391, %v3383
    %v6432 = vpack.c.b16 %v3392, %v3384
    %v6433 = vpack.c.b16 %v3393, %v3385
    %v6434 = vpack.c.b16 %v3394, %v3386
    %v6435 = vpack.c.b16 %v3395, %v3387
    %v6436 = vpack.c.b16 %v3396, %v3388
    %v6437 = vpack.c.b16 %v3397, %v3389
    %v6438 = vpack.c.b16 %v3398, %v3390
    %v6439 = vpack.c.b16 %v3407, %v3399
    %v6440 = vpack.c.b16 %v3408, %v3400
    %v6441 = vpack.c.b16 %v3409, %v3401
    %v6442 = vpack.c.b16 %v3410, %v3402
    %v6443 = vpack.c.b16 %v3411, %v3403
    %v6444 = vpack.c.b16 %v3412, %v3404
    %v6445 = vpack.c.b16 %v3413, %v3405
    %v6446 = vpack.c.b16 %v3414, %v3406
    %v6447 = vpack.c.b16 %v3423, %v3415
    %v6448 = vpack.c.b16 %v3424, %v3416
    %v6449 = vpack.c.b16 %v3425, %v3417
    %v6450 = vpack.c.b16 %v3426, %v3418
    %v6451 = vpack.c.b16 %v3427, %v3419
    %v6452 = vpack.c.b16 %v3428, %v3420
    %v6453 = vpack.c.b16 %v3429, %v3421
    %v6454 = vpack.c.b16 %v3430, %v3422
    %v6455 = vpack.c.b16 %v3439, %v3431
    %v6456 = vpack.c.b16 %v3440, %v3432
    %v6457 = vpack.c.b16 %v3441, %v3433
    %v6458 = vpack.c.b16 %v3442, %v3434
    %v6459 = vpack.c.b16 %v3443, %v3435
    %v6460 = vpack.c.b16 %v3444, %v3436
    %v6461 = vpack.c.b16 %v3445, %v3437
    %v6462 = vpack.c.b16 %v3446, %v3438
    %v6463 = vpack.c.b16 %v3455, %v3447
    %v6464 = vpack.c.b16 %v3456, %v3448
    %v6465 = vpack.c.b16 %v3457, %v3449
    %v6466 = vpack.c.b16 %v3458, %v3450
    %v6467 = vpack.c.b16 %v3459, %v3451
    %v6468 = vpack.c.b16 %v3460, %v3452
    %v6469 = vpack.c.b16 %v3461, %v3453
    %v6470 = vpack.c.b16 %v3462, %v3454
    %v6471 = vpack.c.b16 %v3471, %v3463
    %v6472 = vpack.c.b16 %v3472, %v3464
    %v6473 = vpack.c.b16 %v3473, %v3465
    %v6474 = vpack.c.b16 %v3474, %v3466
    %v6475 = vpack.c.b16 %v3475, %v3467
    %v6476 = vpack.c.b16 %v3476, %v3468
    %v6477 = vpack.c.b16 %v3477, %v3469
    %v6478 = vpack.c.b16 %v3478, %v3470
    %v6479 = vpack.c.b16 %v3487, %v3479
    %v6480 = vpack.c.b16 %v3488, %v3480
    %v6481 = vpack.c.b16 %v3489, %v3481
    %v6482 = vpack.c.b16 %v3490, %v3482
    %v6483 = vpack.c.b16 %v3491, %v3483
    %v6484 = vpack.c.b16 %v3492, %v3484
    %v6485 = vpack.c.b16 %v3493, %v3485
    %v6486 = vpack.c.b16 %v3494, %v3486
    %v6487 = vpack.c.b16 %v3503, %v3495
    %v6488 = vpack.c.b16 %v3504, %v3496
    %v6489 = vpack.c.b16 %v3505, %v3497
    %v6490 = vpack.c.b16 %v3506, %v3498
    %v6491 = vpack.c.b16 %v3507, %v3499
    %v6492 = vpack.c.b16 %v3508, %v3500
    %v6493 = vpack.c.b16 %v3509, %v3501
    %v6494 = vpack.c.b16 %v3510, %v3502
    %v6495 = vpack.c.b16 %v3519, %v3511
    %v6496 = vpack.c.b16 %v3520, %v3512
    %v6497 = vpack.c.b16 %v3521, %v3513
    %v6498 = vpack.c.b16 %v3522, %v3514
    %v6499 = vpack.c.b16 %v3523, %v3515
    %v6500 = vpack.c.b16 %v3524, %v3516
    %v6501 = vpack.c.b16 %v3525, %v3517
    %v6502 = vpack.c.b16 %v3526, %v3518
    %v6503 = vpack.c.b16 %v3535, %v3527
    %v6504 = vpack.c.b16 %v3536, %v3528
    %v6505 = vpack.c.b16 %v3537, %v3529
    %v6506 = vpack.c.b16 %v3538, %v3530
    %v6507 = vpack.c.b16 %v3539, %v3531
    %v6508 = vpack.c.b16 %v3540, %v3532
    %v6509 = vpack.c.b16 %v3541, %v3533
    %v6510 = vpack.c.b16 %v3542, %v3534
    %v6511 = vpack.c.b16 %v3551, %v3543
    %v6512 = vpack.c.b16 %v3552, %v3544
    %v6513 = vpack.c.b16 %v3553, %v3545
    %v6514 = vpack.c.b16 %v3554, %v3546
    %v6515 = vpack.c.b16 %v3555, %v3547
    %v6516 = vpack.c.b16 %v3556, %v3548
    %v6517 = vpack.c.b16 %v3557, %v3549
    %v6518 = vpack.c.b16 %v3558, %v3550
    %v6519 = vpack.c.b16 %v3567, %v3559
    %v6520 = vpack.c.b16 %v3568, %v3560
    %v6521 = vpack.c.b16 %v3569, %v3561
    %v6522 = vpack.c.b16 %v3570, %v3562
    %v6523 = vpack.c.b16 %v3571, %v3563
    %v6524 = vpack.c.b16 %v3572, %v3564
    %v6525 = vpack.c.b16 %v3573, %v3565
    %v6526 = vpack.c.b16 %v3574, %v3566
    %v6527 = vpack.c.b16 %v3583, %v3575
    %v6528 = vpack.c.b16 %v3584, %v3576
    %v6529 = vpack.c.b16 %v3585, %v3577
    %v6530 = vpack.c.b16 %v3586, %v3578
    %v6531 = vpack.c.b16 %v3587, %v3579
    %v6532 = vpack.c.b16 %v3588, %v3580
    %v6533 = vpack.c.b16 %v3589, %v3581
    %v6534 = vpack.c.b16 %v3590, %v3582
    %v6535 = vpack.c.b16 %v3599, %v3591
    %v6536 = vpack.c.b16 %v3600, %v3592
    %v6537 = vpack.c.b16 %v3601, %v3593
    %v6538 = vpack.c.b16 %v3602, %v3594
    %v6539 = vpack.c.b16 %v3603, %v3595
    %v6540 = vpack.c.b16 %v3604, %v3596
    %v6541 = vpack.c.b16 %v3605, %v3597
    %v6542 = vpack.c.b16 %v3606, %v3598
    %v6543 = vpack.c.b16 %v3615, %v3607
    %v6544 = vpack.c.b16 %v3616, %v3608
    %v6545 = vpack.c.b16 %v3617, %v3609
    %v6546 = vpack.c.b16 %v3618, %v3610
    %v6547 = vpack.c.b16 %v3619, %v3611
    %v6548 = vpack.c.b16 %v3620, %v3612
    %v6549 = vpack.c.b16 %v3621, %v3613
    %v6550 = vpack.c.b16 %v3622, %v3614
    %v6551 = vpack.c.b16 %v3631, %v3623
    %v6552 = vpack.c.b16 %v3632, %v3624
    %v6553 = vpack.c.b16 %v3633, %v3625
    %v6554 = vpack.c.b16 %v3634, %v3626
    %v6555 = vpack.c.b16 %v3635, %v3627
    %v6556 = vpack.c.b16 %v3636, %v3628
    %v6557 = vpack.c.b16 %v3637, %v3629
    %v6558 = vpack.c.b16 %v3638, %v3630
    %v6559 = vpack.c.b16 %v3647, %v3639
    %v6560 = vpack.c.b16 %v3648, %v3640
    %v6561 = vpack.c.b16 %v3649, %v3641
    %v6562 = vpack.c.b16 %v3650, %v3642
    %v6563 = vpack.c.b16 %v3651, %v3643
    %v6564 = vpack.c.b16 %v3652, %v3644
    %v6565 = vpack.c.b16 %v3653, %v3645
    %v6566 = vpack.c.b16 %v3654, %v3646
    %v6567 = vpack.c.b16 %v3663, %v3655
    %v6568 = vpack.c.b16 %v3664, %v3656
    %v6569 = vpack.c.b16 %v3665, %v3657
    %v6570 = vpack.c.b16 %v3666, %v3658
    %v6571 = vpack.c.b16 %v3667, %v3659
    %v6572 = vpack.c.b16 %v3668, %v3660
    %v6573 = vpack.c.b16 %v3669, %v3661
    %v6574 = vpack.c.b16 %v3670, %v3662
    %v6575 = vpack.c.b16 %v3679, %v3671
    %v6576 = vpack.c.b16 %v3680, %v3672
    %v6577 = vpack.c.b16 %v3681, %v3673
    %v6578 = vpack.c.b16 %v3682, %v3674
    %v6579 = vpack.c.b16 %v3683, %v3675
    %v6580 = vpack.c.b16 %v3684, %v3676
    %v6581 = vpack.c.b16 %v3685, %v3677
    %v6582 = vpack.c.b16 %v3686, %v3678
    %v6583 = vpack.c.b16 %v3695, %v3687
    %v6584 = vpack.c.b16 %v3696, %v3688
    %v6585 = vpack.c.b16 %v3697, %v3689
    %v6586 = vpack.c.b16 %v3698, %v3690
    %v6587 = vpack.c.b16 %v3699, %v3691
    %v6588 = vpack.c.b16 %v3700, %v3692
    %v6589 = vpack.c.b16 %v3701, %v3693
    %v6590 = vpack.c.b16 %v3702, %v3694
    %v6591 = vpack.c.b16 %v3711, %v3703
    %v6592 = vpack.c.b16 %v3712, %v3704
    %v6593 = vpack.c.b16 %v3713, %v3705
    %v6594 = vpack.c.b16 %v3714, %v3706
    %v6595 = vpack.c.b16 %v3715, %v3707
    %v6596 = vpack.c.b16 %v3716, %v3708
    %v6597 = vpack.c.b16 %v3717, %v3709
    %v6598 = vpack.c.b16 %v3718, %v3710
    %v6599 = vpack.c.b16 %v3727, %v3719
    %v6600 = vpack.c.b16 %v3728, %v3720
    %v6601 = vpack.c.b16 %v3729, %v3721
    %v6602 = vpack.c.b16 %v3730, %v3722
    %v6603 = vpack.c.b16 %v3731, %v3723
    %v6604 = vpack.c.b16 %v3732, %v3724
    %v6605 = vpack.c.b16 %v3733, %v3725
    %v6606 = vpack.c.b16 %v3734, %v3726
    %v6607 = vpack.c.b16 %v3743, %v3735
    %v6608 = vpack.c.b16 %v3744, %v3736
    %v6609 = vpack.c.b16 %v3745, %v3737
    %v6610 = vpack.c.b16 %v3746, %v3738
    %v6611 = vpack.c.b16 %v3747, %v3739
    %v6612 = vpack.c.b16 %v3748, %v3740
    %v6613 = vpack.c.b16 %v3749, %v3741
    %v6614 = vpack.c.b16 %v3750, %v3742
    %v6615 = vpack.c.b16 %v3759, %v3751
    %v6616 = vpack.c.b16 %v3760, %v3752
    %v6617 = vpack.c.b16 %v3761, %v3753
    %v6618 = vpack.c.b16 %v3762, %v3754
    %v6619 = vpack.c.b16 %v3763, %v3755
    %v6620 = vpack.c.b16 %v3764, %v3756
    %v6621 = vpack.c.b16 %v3765, %v3757
    %v6622 = vpack.c.b16 %v3766, %v3758
    %v6623 = vpack.c.b16 %v3775, %v3767
    %v6624 = vpack.c.b16 %v3776, %v3768
    %v6625 = vpack.c.b16 %v3777, %v3769
    %v6626 = vpack.c.b16 %v3778, %v3770
    %v6627 = vpack.c.b16 %v3779, %v3771
    %v6628 = vpack.c.b16 %v3780, %v3772
    %v6629 = vpack.c.b16 %v3781, %v3773
    %v6630 = vpack.c.b16 %v3782, %v3774
    %v6631 = vpack.c.b16 %v3791, %v3783
    %v6632 = vpack.c.b16 %v3792, %v3784
    %v6633 = vpack.c.b16 %v3793, %v3785
    %v6634 = vpack.c.b16 %v3794, %v3786
    %v6635 = vpack.c.b16 %v3795, %v3787
    %v6636 = vpack.c.b16 %v3796, %v3788
    %v6637 = vpack.c.b16 %v3797, %v3789
    %v6638 = vpack.c.b16 %v3798, %v3790
    %v6639 = vpack.c.b16 %v3807, %v3799
    %v6640 = vpack.c.b16 %v3808, %v3800
    %v6641 = vpack.c.b16 %v3809, %v3801
    %v6642 = vpack.c.b16 %v3810, %v3802
    %v6643 = vpack.c.b16 %v3811, %v3803
    %v6644 = vpack.c.b16 %v3812, %v3804
    %v6645 = vpack.c.b16 %v3813, %v3805
    %v6646 = vpack.c.b16 %v3814, %v3806
    %v6647 = vpack.c.b16 %v3823, %v3815
    %v6648 = vpack.c.b16 %v3824, %v3816
    %v6649 = vpack.c.b16 %v3825, %v3817
    %v6650 = vpack.c.b16 %v3826, %v3818
    %v6651 = vpack.c.b16 %v3827, %v3819
    %v6652 = vpack.c.b16 %v3828, %v3820
    %v6653 = vpack.c.b16 %v3829, %v3821
    %v6654 = vpack.c.b16 %v3830, %v3822
    %v6655 = vpack.c.b16 %v3839, %v3831
    %v6656 = vpack.c.b16 %v3840, %v3832
    %v6657 = vpack.c.b16 %v3841, %v3833
    %v6658 = vpack.c.b16 %v3842, %v3834
    %v6659 = vpack.c.b16 %v3843, %v3835
    %v6660 = vpack.c.b16 %v3844, %v3836
    %v6661 = vpack.c.b16 %v3845, %v3837
    %v6662 = vpack.c.b16 %v3846, %v3838
    %v6663 = vpack.c.b16 %v3855, %v3847
    %v6664 = vpack.c.b16 %v3856, %v3848
    %v6665 = vpack.c.b16 %v3857, %v3849
    %v6666 = vpack.c.b16 %v3858, %v3850
    %v6667 = vpack.c.b16 %v3859, %v3851
    %v6668 = vpack.c.b16 %v3860, %v3852
    %v6669 = vpack.c.b16 %v3861, %v3853
    %v6670 = vpack.c.b16 %v3862, %v3854
    %v6671 = vpack.c.b16 %v3871, %v3863
    %v6672 = vpack.c.b16 %v3872, %v3864
    %v6673 = vpack.c.b16 %v3873, %v3865
    %v6674 = vpack.c.b16 %v3874, %v3866
    %v6675 = vpack.c.b16 %v3875, %v3867
    %v6676 = vpack.c.b16 %v3876, %v3868
    %v6677 = vpack.c.b16 %v3877, %v3869
    %v6678 = vpack.c.b16 %v3878, %v3870
    %v6679 = vpack.c.b16 %v3887, %v3879
    %v6680 = vpack.c.b16 %v3888, %v3880
    %v6681 = vpack.c.b16 %v3889, %v3881
    %v6682 = vpack.c.b16 %v3890, %v3882
    %v6683 = vpack.c.b16 %v3891, %v3883
    %v6684 = vpack.c.b16 %v3892, %v3884
    %v6685 = vpack.c.b16 %v3893, %v3885
    %v6686 = vpack.c.b16 %v3894, %v3886
    %v6687 = vpack.c.b16 %v3903, %v3895
    %v6688 = vpack.c.b16 %v3904, %v3896
    %v6689 = vpack.c.b16 %v3905, %v3897
    %v6690 = vpack.c.b16 %v3906, %v3898
    %v6691 = vpack.c.b16 %v3907, %v3899
    %v6692 = vpack.c.b16 %v3908, %v3900
    %v6693 = vpack.c.b16 %v3909, %v3901
    %v6694 = vpack.c.b16 %v3910, %v3902
    %v6695 = vpack.c.b16 %v3919, %v3911
    %v6696 = vpack.c.b16 %v3920, %v3912
    %v6697 = vpack.c.b16 %v3921, %v3913
    %v6698 = vpack.c.b16 %v3922, %v3914
    %v6699 = vpack.c.b16 %v3923, %v3915
    %v6700 = vpack.c.b16 %v3924, %v3916
    %v6701 = vpack.c.b16 %v3925, %v3917
    %v6702 = vpack.c.b16 %v3926, %v3918
    %v6703 = vpack.c.b16 %v3935, %v3927
    %v6704 = vpack.c.b16 %v3936, %v3928
    %v6705 = vpack.c.b16 %v3937, %v3929
    %v6706 = vpack.c.b16 %v3938, %v3930
    %v6707 = vpack.c.b16 %v3939, %v3931
    %v6708 = vpack.c.b16 %v3940, %v3932
    %v6709 = vpack.c.b16 %v3941, %v3933
    %v6710 = vpack.c.b16 %v3942, %v3934
    %v6711 = vpack.c.b16 %v3951, %v3943
    %v6712 = vpack.c.b16 %v3952, %v3944
    %v6713 = vpack.c.b16 %v3953, %v3945
    %v6714 = vpack.c.b16 %v3954, %v3946
    %v6715 = vpack.c.b16 %v3955, %v3947
    %v6716 = vpack.c.b16 %v3956, %v3948
    %v6717 = vpack.c.b16 %v3957, %v3949
    %v6718 = vpack.c.b16 %v3958, %v3950
    %v6719 = vpack.c.b16 %v3967, %v3959
    %v6720 = vpack.c.b16 %v3968, %v3960
    %v6721 = vpack.c.b16 %v3969, %v3961
    %v6722 = vpack.c.b16 %v3970, %v3962
    %v6723 = vpack.c.b16 %v3971, %v3963
    %v6724 = vpack.c.b16 %v3972, %v3964
    %v6725 = vpack.c.b16 %v3973, %v3965
    %v6726 = vpack.c.b16 %v3974, %v3966
    %v6727 = vpack.c.b16 %v3983, %v3975
    %v6728 = vpack.c.b16 %v3984, %v3976
    %v6729 = vpack.c.b16 %v3985, %v3977
    %v6730 = vpack.c.b16 %v3986, %v3978
    %v6731 = vpack.c.b16 %v3987, %v3979
    %v6732 = vpack.c.b16 %v3988, %v3980
    %v6733 = vpack.c.b16 %v3989, %v3981
    %v6734 = vpack.c.b16 %v3990, %v3982
    %v6735 = vpack.c.b16 %v3999, %v3991
    %v6736 = vpack.c.b16 %v4000, %v3992
    %v6737 = vpack.c.b16 %v4001, %v3993
    %v6738 = vpack.c.b16 %v4002, %v3994
    %v6739 = vpack.c.b16 %v4003, %v3995
    %v6740 = vpack.c.b16 %v4004, %v3996
    %v6741 = vpack.c.b16 %v4005, %v3997
    %v6742 = vpack.c.b16 %v4006, %v3998
    %v6743 = vpack.c.b16 %v4015, %v4007
    %v6744 = vpack.c.b16 %v4016, %v4008
    %v6745 = vpack.c.b16 %v4017, %v4009
    %v6746 = vpack.c.b16 %v4018, %v4010
    %v6747 = vpack.c.b16 %v4019, %v4011
    %v6748 = vpack.c.b16 %v4020, %v4012
    %v6749 = vpack.c.b16 %v4021, %v4013
    %v6750 = vpack.c.b16 %v4022, %v4014
    %v6751 = vpack.c.b16 %v4031, %v4023
    %v6752 = vpack.c.b16 %v4032, %v4024
    %v6753 = vpack.c.b16 %v4033, %v4025
    %v6754 = vpack.c.b16 %v4034, %v4026
    %v6755 = vpack.c.b16 %v4035, %v4027
    %v6756 = vpack.c.b16 %v4036, %v4028
    %v6757 = vpack.c.b16 %v4037, %v4029
    %v6758 = vpack.c.b16 %v4038, %v4030
    %v6759 = vpack.c.b16 %v4047, %v4039
    %v6760 = vpack.c.b16 %v4048, %v4040
    %v6761 = vpack.c.b16 %v4049, %v4041
    %v6762 = vpack.c.b16 %v4050, %v4042
    %v6763 = vpack.c.b16 %v4051, %v4043
    %v6764 = vpack.c.b16 %v4052, %v4044
    %v6765 = vpack.c.b16 %v4053, %v4045
    %v6766 = vpack.c.b16 %v4054, %v4046
    %v6767 = vpack.c.b16 %v4063, %v4055
    %v6768 = vpack.c.b16 %v4064, %v4056
    %v6769 = vpack.c.b16 %v4065, %v4057
    %v6770 = vpack.c.b16 %v4066, %v4058
    %v6771 = vpack.c.b16 %v4067, %v4059
    %v6772 = vpack.c.b16 %v4068, %v4060
    %v6773 = vpack.c.b16 %v4069, %v4061
    %v6774 = vpack.c.b16 %v4070, %v4062
    %v6775 = vpack.c.b16 %v4079, %v4071
    %v6776 = vpack.c.b16 %v4080, %v4072
    %v6777 = vpack.c.b16 %v4081, %v4073
    %v6778 = vpack.c.b16 %v4082, %v4074
    %v6779 = vpack.c.b16 %v4083, %v4075
    %v6780 = vpack.c.b16 %v4084, %v4076
    %v6781 = vpack.c.b16 %v4085, %v4077
    %v6782 = vpack.c.b16 %v4086, %v4078
    %v6783 = vpack.c.b16 %v4095, %v4087
    %v6784 = vpack.c.b16 %v4096, %v4088
    %v6785 = vpack.c.b16 %v4097, %v4089
    %v6786 = vpack.c.b16 %v4098, %v4090
    %v6787 = vpack.c.b16 %v4099, %v4091
    %v6788 = vpack.c.b16 %v4100, %v4092
    %v6789 = vpack.c.b16 %v4101, %v4093
    %v6790 = vpack.c.b16 %v4102, %v4094
    %v6791 = vpack.c.b16 %v4111, %v4103
    %v6792 = vpack.c.b16 %v4112, %v4104
    %v6793 = vpack.c.b16 %v4113, %v4105
    %v6794 = vpack.c.b16 %v4114, %v4106
    %v6795 = vpack.c.b16 %v4115, %v4107
    %v6796 = vpack.c.b16 %v4116, %v4108
    %v6797 = vpack.c.b16 %v4117, %v4109
    %v6798 = vpack.c.b16 %v4118, %v4110
    %v6799 = vpack.c.b16 %v4127, %v4119
    %v6800 = vpack.c.b16 %v4128, %v4120
    %v6801 = vpack.c.b16 %v4129, %v4121
    %v6802 = vpack.c.b16 %v4130, %v4122
    %v6803 = vpack.c.b16 %v4131, %v4123
    %v6804 = vpack.c.b16 %v4132, %v4124
    %v6805 = vpack.c.b16 %v4133, %v4125
    %v6806 = vpack.c.b16 %v4134, %v4126
    %v6807 = vpack.c.b16 %v4143, %v4135
    %v6808 = vpack.c.b16 %v4144, %v4136
    %v6809 = vpack.c.b16 %v4145, %v4137
    %v6810 = vpack.c.b16 %v4146, %v4138
    %v6811 = vpack.c.b16 %v4147, %v4139
    %v6812 = vpack.c.b16 %v4148, %v4140
    %v6813 = vpack.c.b16 %v4149, %v4141
    %v6814 = vpack.c.b16 %v4150, %v4142
    %v6815 = vpack.c.b16 %v4159, %v4151
    %v6816 = vpack.c.b16 %v4160, %v4152
    %v6817 = vpack.c.b16 %v4161, %v4153
    %v6818 = vpack.c.b16 %v4162, %v4154
    %v6819 = vpack.c.b16 %v4163, %v4155
    %v6820 = vpack.c.b16 %v4164, %v4156
    %v6821 = vpack.c.b16 %v4165, %v4157
    %v6822 = vpack.c.b16 %v4166, %v4158
    %v6823 = vpack.c.b16 %v4175, %v4167
    %v6824 = vpack.c.b16 %v4176, %v4168
    %v6825 = vpack.c.b16 %v4177, %v4169
    %v6826 = vpack.c.b16 %v4178, %v4170
    %v6827 = vpack.c.b16 %v4179, %v4171
    %v6828 = vpack.c.b16 %v4180, %v4172
    %v6829 = vpack.c.b16 %v4181, %v4173
    %v6830 = vpack.c.b16 %v4182, %v4174
    %v6831 = vpack.c.b16 %v4191, %v4183
    %v6832 = vpack.c.b16 %v4192, %v4184
    %v6833 = vpack.c.b16 %v4193, %v4185
    %v6834 = vpack.c.b16 %v4194, %v4186
    %v6835 = vpack.c.b16 %v4195, %v4187
    %v6836 = vpack.c.b16 %v4196, %v4188
    %v6837 = vpack.c.b16 %v4197, %v4189
    %v6838 = vpack.c.b16 %v4198, %v4190
    %v6839 = vpack.c.b16 %v4207, %v4199
    %v6840 = vpack.c.b16 %v4208, %v4200
    %v6841 = vpack.c.b16 %v4209, %v4201
    %v6842 = vpack.c.b16 %v4210, %v4202
    %v6843 = vpack.c.b16 %v4211, %v4203
    %v6844 = vpack.c.b16 %v4212, %v4204
    %v6845 = vpack.c.b16 %v4213, %v4205
    %v6846 = vpack.c.b16 %v4214, %v4206
    %v6847 = vpack.c.b16 %v4223, %v4215
    %v6848 = vpack.c.b16 %v4224, %v4216
    %v6849 = vpack.c.b16 %v4225, %v4217
    %v6850 = vpack.c.b16 %v4226, %v4218
    %v6851 = vpack.c.b16 %v4227, %v4219
    %v6852 = vpack.c.b16 %v4228, %v4220
    %v6853 = vpack.c.b16 %v4229, %v4221
    %v6854 = vpack.c.b16 %v4230, %v4222
    %v6855 = vpack.c.b16 %v4239, %v4231
    %v6856 = vpack.c.b16 %v4240, %v4232
    %v6857 = vpack.c.b16 %v4241, %v4233
    %v6858 = vpack.c.b16 %v4242, %v4234
    %v6859 = vpack.c.b16 %v4243, %v4235
    %v6860 = vpack.c.b16 %v4244, %v4236
    %v6861 = vpack.c.b16 %v4245, %v4237
    %v6862 = vpack.c.b16 %v4246, %v4238
    %v6863 = vpack.c.b16 %v4255, %v4247
    %v6864 = vpack.c.b16 %v4256, %v4248
    %v6865 = vpack.c.b16 %v4257, %v4249
    %v6866 = vpack.c.b16 %v4258, %v4250
    %v6867 = vpack.c.b16 %v4259, %v4251
    %v6868 = vpack.c.b16 %v4260, %v4252
    %v6869 = vpack.c.b16 %v4261, %v4253
    %v6870 = vpack.c.b16 %v4262, %v4254
    %v6871 = vpack.c.b16 %v4271, %v4263
    %v6872 = vpack.c.b16 %v4272, %v4264
    %v6873 = vpack.c.b16 %v4273, %v4265
    %v6874 = vpack.c.b16 %v4274, %v4266
    %v6875 = vpack.c.b16 %v4275, %v4267
    %v6876 = vpack.c.b16 %v4276, %v4268
    %v6877 = vpack.c.b16 %v4277, %v4269
    %v6878 = vpack.c.b16 %v4278, %v4270
    %v6879 = vpack.c.b16 %v4287, %v4279
    %v6880 = vpack.c.b16 %v4288, %v4280
    %v6881 = vpack.c.b16 %v4289, %v4281
    %v6882 = vpack.c.b16 %v4290, %v4282
    %v6883 = vpack.c.b16 %v4291, %v4283
    %v6884 = vpack.c.b16 %v4292, %v4284
    %v6885 = vpack.c.b16 %v4293, %v4285
    %v6886 = vpack.c.b16 %v4294, %v4286
    %v6887 = vpack.c.b16 %v4303, %v4295
    %v6888 = vpack.c.b16 %v4304, %v4296
    %v6889 = vpack.c.b16 %v4305, %v4297
    %v6890 = vpack.c.b16 %v4306, %v4298
    %v6891 = vpack.c.b16 %v4307, %v4299
    %v6892 = vpack.c.b16 %v4308, %v4300
    %v6893 = vpack.c.b16 %v4309, %v4301
    %v6894 = vpack.c.b16 %v4310, %v4302
    %v6895 = vpack.c.b16 %v4319, %v4311
    %v6896 = vpack.c.b16 %v4320, %v4312
    %v6897 = vpack.c.b16 %v4321, %v4313
    %v6898 = vpack.c.b16 %v4322, %v4314
    %v6899 = vpack.c.b16 %v4323, %v4315
    %v6900 = vpack.c.b16 %v4324, %v4316
    %v6901 = vpack.c.b16 %v4325, %v4317
    %v6902 = vpack.c.b16 %v4326, %v4318
    %v6903 = vpack.c.b16 %v4335, %v4327
    %v6904 = vpack.c.b16 %v4336, %v4328
    %v6905 = vpack.c.b16 %v4337, %v4329
    %v6906 = vpack.c.b16 %v4338, %v4330
    %v6907 = vpack.c.b16 %v4339, %v4331
    %v6908 = vpack.c.b16 %v4340, %v4332
    %v6909 = vpack.c.b16 %v4341, %v4333
    %v6910 = vpack.c.b16 %v4342, %v4334
    %v6911 = vpack.c.b16 %v4351, %v4343
    %v6912 = vpack.c.b16 %v4352, %v4344
    %v6913 = vpack.c.b16 %v4353, %v4345
    %v6914 = vpack.c.b16 %v4354, %v4346
    %v6915 = vpack.c.b16 %v4355, %v4347
    %v6916 = vpack.c.b16 %v4356, %v4348
    %v6917 = vpack.c.b16 %v4357, %v4349
    %v6918 = vpack.c.b16 %v4358, %v4350
    %v6919 = vpack.c.b16 %v4367, %v4359
    %v6920 = vpack.c.b16 %v4368, %v4360
    %v6921 = vpack.c.b16 %v4369, %v4361
    %v6922 = vpack.c.b16 %v4370, %v4362
    %v6923 = vpack.c.b16 %v4371, %v4363
    %v6924 = vpack.c.b16 %v4372, %v4364
    %v6925 = vpack.c.b16 %v4373, %v4365
    %v6926 = vpack.c.b16 %v4374, %v4366
    %v6927 = vpack.c.b16 %v4383, %v4375
    %v6928 = vpack.c.b16 %v4384, %v4376
    %v6929 = vpack.c.b16 %v4385, %v4377
    %v6930 = vpack.c.b16 %v4386, %v4378
    %v6931 = vpack.c.b16 %v4387, %v4379
    %v6932 = vpack.c.b16 %v4388, %v4380
    %v6933 = vpack.c.b16 %v4389, %v4381
    %v6934 = vpack.c.b16 %v4390, %v4382
    %v6935 = vpack.c.b16 %v4399, %v4391
    %v6936 = vpack.c.b16 %v4400, %v4392
    %v6937 = vpack.c.b16 %v4401, %v4393
    %v6938 = vpack.c.b16 %v4402, %v4394
    %v6939 = vpack.c.b16 %v4403, %v4395
    %v6940 = vpack.c.b16 %v4404, %v4396
    %v6941 = vpack.c.b16 %v4405, %v4397
    %v6942 = vpack.c.b16 %v4406, %v4398
    %v6943 = vpack.c.b16 %v4415, %v4407
    %v6944 = vpack.c.b16 %v4416, %v4408
    %v6945 = vpack.c.b16 %v4417, %v4409
    %v6946 = vpack.c.b16 %v4418, %v4410
    %v6947 = vpack.c.b16 %v4419, %v4411
    %v6948 = vpack.c.b16 %v4420, %v4412
    %v6949 = vpack.c.b16 %v4421, %v4413
    %v6950 = vpack.c.b16 %v4422, %v4414
    %v6951 = vpack.c.b16 %v4431, %v4423
    %v6952 = vpack.c.b16 %v4432, %v4424
    %v6953 = vpack.c.b16 %v4433, %v4425
    %v6954 = vpack.c.b16 %v4434, %v4426
    %v6955 = vpack.c.b16 %v4435, %v4427
    %v6956 = vpack.c.b16 %v4436, %v4428
    %v6957 = vpack.c.b16 %v4437, %v4429
    %v6958 = vpack.c.b16 %v4438, %v4430
    %v6959 = vpack.c.b16 %v4447, %v4439
    %v6960 = vpack.c.b16 %v4448, %v4440
    %v6961 = vpack.c.b16 %v4449, %v4441
    %v6962 = vpack.c.b16 %v4450, %v4442
    %v6963 = vpack.c.b16 %v4451, %v4443
    %v6964 = vpack.c.b16 %v4452, %v4444
    %v6965 = vpack.c.b16 %v4453, %v4445
    %v6966 = vpack.c.b16 %v4454, %v4446
    %v6967 = vpack.c.b16 %v4463, %v4455
    %v6968 = vpack.c.b16 %v4464, %v4456
    %v6969 = vpack.c.b16 %v4465, %v4457
    %v6970 = vpack.c.b16 %v4466, %v4458
    %v6971 = vpack.c.b16 %v4467, %v4459
    %v6972 = vpack.c.b16 %v4468, %v4460
    %v6973 = vpack.c.b16 %v4469, %v4461
    %v6974 = vpack.c.b16 %v4470, %v4462
    %v6975 = vpack.c.b16 %v4479, %v4471
    %v6976 = vpack.c.b16 %v4480, %v4472
    %v6977 = vpack.c.b16 %v4481, %v4473
    %v6978 = vpack.c.b16 %v4482, %v4474
    %v6979 = vpack.c.b16 %v4483, %v4475
    %v6980 = vpack.c.b16 %v4484, %v4476
    %v6981 = vpack.c.b16 %v4485, %v4477
    %v6982 = vpack.c.b16 %v4486, %v4478
    %v6983 = vpack.c.b16 %v4495, %v4487
    %v6984 = vpack.c.b16 %v4496, %v4488
    %v6985 = vpack.c.b16 %v4497, %v4489
    %v6986 = vpack.c.b16 %v4498, %v4490
    %v6987 = vpack.c.b16 %v4499, %v4491
    %v6988 = vpack.c.b16 %v4500, %v4492
    %v6989 = vpack.c.b16 %v4501, %v4493
    %v6990 = vpack.c.b16 %v4502, %v4494
    %v6991 = vpack.c.b16 %v4511, %v4503
    %v6992 = vpack.c.b16 %v4512, %v4504
    %v6993 = vpack.c.b16 %v4513, %v4505
    %v6994 = vpack.c.b16 %v4514, %v4506
    %v6995 = vpack.c.b16 %v4515, %v4507
    %v6996 = vpack.c.b16 %v4516, %v4508
    %v6997 = vpack.c.b16 %v4517, %v4509
    %v6998 = vpack.c.b16 %v4518, %v4510
    %v6999 = vpack.c.b16 %v4527, %v4519
    %v7000 = vpack.c.b16 %v4528, %v4520
    %v7001 = vpack.c.b16 %v4529, %v4521
    %v7002 = vpack.c.b16 %v4530, %v4522
    %v7003 = vpack.c.b16 %v4531, %v4523
    %v7004 = vpack.c.b16 %v4532, %v4524
    %v7005 = vpack.c.b16 %v4533, %v4525
    %v7006 = vpack.c.b16 %v4534, %v4526
    %v7007 = vpack.c.b16 %v4543, %v4535
    %v7008 = vpack.c.b16 %v4544, %v4536
    %v7009 = vpack.c.b16 %v4545, %v4537
    %v7010 = vpack.c.b16 %v4546, %v4538
    %v7011 = vpack.c.b16 %v4547, %v4539
    %v7012 = vpack.c.b16 %v4548, %v4540
    %v7013 = vpack.c.b16 %v4549, %v4541
    %v7014 = vpack.c.b16 %v4550, %v4542
    %v7015 = vpack.c.b16 %v4559, %v4551
    %v7016 = vpack.c.b16 %v4560, %v4552
    %v7017 = vpack.c.b16 %v4561, %v4553
    %v7018 = vpack.c.b16 %v4562, %v4554
    %v7019 = vpack.c.b16 %v4563, %v4555
    %v7020 = vpack.c.b16 %v4564, %v4556
    %v7021 = vpack.c.b16 %v4565, %v4557
    %v7022 = vpack.c.b16 %v4566, %v4558
    %v7023 = vpack.c.b16 %v4575, %v4567
    %v7024 = vpack.c.b16 %v4576, %v4568
    %v7025 = vpack.c.b16 %v4577, %v4569
    %v7026 = vpack.c.b16 %v4578, %v4570
    %v7027 = vpack.c.b16 %v4579, %v4571
    %v7028 = vpack.c.b16 %v4580, %v4572
    %v7029 = vpack.c.b16 %v4581, %v4573
    %v7030 = vpack.c.b16 %v4582, %v4574
    %v7031 = vpack.c.b16 %v4591, %v4583
    %v7032 = vpack.c.b16 %v4592, %v4584
    %v7033 = vpack.c.b16 %v4593, %v4585
    %v7034 = vpack.c.b16 %v4594, %v4586
    %v7035 = vpack.c.b16 %v4595, %v4587
    %v7036 = vpack.c.b16 %v4596, %v4588
    %v7037 = vpack.c.b16 %v4597, %v4589
    %v7038 = vpack.c.b16 %v4598, %v4590
    %v7039 = vpack.c.b16 %v4607, %v4599
    %v7040 = vpack.c.b16 %v4608, %v4600
    %v7041 = vpack.c.b16 %v4609, %v4601
    %v7042 = vpack.c.b16 %v4610, %v4602
    %v7043 = vpack.c.b16 %v4611, %v4603
    %v7044 = vpack.c.b16 %v4612, %v4604
    %v7045 = vpack.c.b16 %v4613, %v4605
    %v7046 = vpack.c.b16 %v4614, %v4606
    %v7047 = vpack.c.b16 %v4623, %v4615
    %v7048 = vpack.c.b16 %v4624, %v4616
    %v7049 = vpack.c.b16 %v4625, %v4617
    %v7050 = vpack.c.b16 %v4626, %v4618
    %v7051 = vpack.c.b16 %v4627, %v4619
    %v7052 = vpack.c.b16 %v4628, %v4620
    %v7053 = vpack.c.b16 %v4629, %v4621
    %v7054 = vpack.c.b16 %v4630, %v4622
    %v7055 = vpack.c.b16 %v4639, %v4631
    %v7056 = vpack.c.b16 %v4640, %v4632
    %v7057 = vpack.c.b16 %v4641, %v4633
    %v7058 = vpack.c.b16 %v4642, %v4634
    %v7059 = vpack.c.b16 %v4643, %v4635
    %v7060 = vpack.c.b16 %v4644, %v4636
    %v7061 = vpack.c.b16 %v4645, %v4637
    %v7062 = vpack.c.b16 %v4646, %v4638
    %v7063 = vpack.c.b16 %v4655, %v4647
    %v7064 = vpack.c.b16 %v4656, %v4648
    %v7065 = vpack.c.b16 %v4657, %v4649
    %v7066 = vpack.c.b16 %v4658, %v4650
    %v7067 = vpack.c.b16 %v4659, %v4651
    %v7068 = vpack.c.b16 %v4660, %v4652
    %v7069 = vpack.c.b16 %v4661, %v4653
    %v7070 = vpack.c.b16 %v4662, %v4654
    %v7071 = vpack.c.b16 %v4671, %v4663
    %v7072 = vpack.c.b16 %v4672, %v4664
    %v7073 = vpack.c.b16 %v4673, %v4665
    %v7074 = vpack.c.b16 %v4674, %v4666
    %v7075 = vpack.c.b16 %v4675, %v4667
    %v7076 = vpack.c.b16 %v4676, %v4668
    %v7077 = vpack.c.b16 %v4677, %v4669
    %v7078 = vpack.c.b16 %v4678, %v4670
    %v7079 = vpack.c.b16 %v4687, %v4679
    %v7080 = vpack.c.b16 %v4688, %v4680
    %v7081 = vpack.c.b16 %v4689, %v4681
    %v7082 = vpack.c.b16 %v4690, %v4682
    %v7083 = vpack.c.b16 %v4691, %v4683
    %v7084 = vpack.c.b16 %v4692, %v4684
    %v7085 = vpack.c.b16 %v4693, %v4685
    %v7086 = vpack.c.b16 %v4694, %v4686
    %v7087 = vpack.c.b16 %v4703, %v4695
    %v7088 = vpack.c.b16 %v4704, %v4696
    %v7089 = vpack.c.b16 %v4705, %v4697
    %v7090 = vpack.c.b16 %v4706, %v4698
    %v7091 = vpack.c.b16 %v4707, %v4699
    %v7092 = vpack.c.b16 %v4708, %v4700
    %v7093 = vpack.c.b16 %v4709, %v4701
    %v7094 = vpack.c.b16 %v4710, %v4702
    %v7095 = vpack.c.b16 %v4719, %v4711
    %v7096 = vpack.c.b16 %v4720, %v4712
    %v7097 = vpack.c.b16 %v4721, %v4713
    %v7098 = vpack.c.b16 %v4722, %v4714
    %v7099 = vpack.c.b16 %v4723, %v4715
    %v7100 = vpack.c.b16 %v4724, %v4716
    %v7101 = vpack.c.b16 %v4725, %v4717
    %v7102 = vpack.c.b16 %v4726, %v4718
    %v7103 = vpack.c.b16 %v4735, %v4727
    %v7104 = vpack.c.b16 %v4736, %v4728
    %v7105 = vpack.c.b16 %v4737, %v4729
    %v7106 = vpack.c.b16 %v4738, %v4730
    %v7107 = vpack.c.b16 %v4739, %v4731
    %v7108 = vpack.c.b16 %v4740, %v4732
    %v7109 = vpack.c.b16 %v4741, %v4733
    %v7110 = vpack.c.b16 %v4742, %v4734
    %v7111 = vpack.c.b16 %v4751, %v4743
    %v7112 = vpack.c.b16 %v4752, %v4744
    %v7113 = vpack.c.b16 %v4753, %v4745
    %v7114 = vpack.c.b16 %v4754, %v4746
    %v7115 = vpack.c.b16 %v4755, %v4747
    %v7116 = vpack.c.b16 %v4756, %v4748
    %v7117 = vpack.c.b16 %v4757, %v4749
    %v7118 = vpack.c.b16 %v4758, %v4750
    %v7119 = vpack.c.b16 %v4767, %v4759
    %v7120 = vpack.c.b16 %v4768, %v4760
    %v7121 = vpack.c.b16 %v4769, %v4761
    %v7122 = vpack.c.b16 %v4770, %v4762
    %v7123 = vpack.c.b16 %v4771, %v4763
    %v7124 = vpack.c.b16 %v4772, %v4764
    %v7125 = vpack.c.b16 %v4773, %v4765
    %v7126 = vpack.c.b16 %v4774, %v4766
    %v7127 = vpack.c.b16 %v4783, %v4775
    %v7128 = vpack.c.b16 %v4784, %v4776
    %v7129 = vpack.c.b16 %v4785, %v4777
    %v7130 = vpack.c.b16 %v4786, %v4778
    %v7131 = vpack.c.b16 %v4787, %v4779
    %v7132 = vpack.c.b16 %v4788, %v4780
    %v7133 = vpack.c.b16 %v4789, %v4781
    %v7134 = vpack.c.b16 %v4790, %v4782
    %v7135 = vpack.c.b16 %v4799, %v4791
    %v7136 = vpack.c.b16 %v4800, %v4792
    %v7137 = vpack.c.b16 %v4801, %v4793
    %v7138 = vpack.c.b16 %v4802, %v4794
    %v7139 = vpack.c.b16 %v4803, %v4795
    %v7140 = vpack.c.b16 %v4804, %v4796
    %v7141 = vpack.c.b16 %v4805, %v4797
    %v7142 = vpack.c.b16 %v4806, %v4798
    %v7143 = vpack.c.b16 %v4815, %v4807
    %v7144 = vpack.c.b16 %v4816, %v4808
    %v7145 = vpack.c.b16 %v4817, %v4809
    %v7146 = vpack.c.b16 %v4818, %v4810
    %v7147 = vpack.c.b16 %v4819, %v4811
    %v7148 = vpack.c.b16 %v4820, %v4812
    %v7149 = vpack.c.b16 %v4821, %v4813
    %v7150 = vpack.c.b16 %v4822, %v4814
    %v7151 = vpack.c.b16 %v4831, %v4823
    %v7152 = vpack.c.b16 %v4832, %v4824
    %v7153 = vpack.c.b16 %v4833, %v4825
    %v7154 = vpack.c.b16 %v4834, %v4826
    %v7155 = vpack.c.b16 %v4835, %v4827
    %v7156 = vpack.c.b16 %v4836, %v4828
    %v7157 = vpack.c.b16 %v4837, %v4829
    %v7158 = vpack.c.b16 %v4838, %v4830
    %v7159 = vpack.c.b16 %v4847, %v4839
    %v7160 = vpack.c.b16 %v4848, %v4840
    %v7161 = vpack.c.b16 %v4849, %v4841
    %v7162 = vpack.c.b16 %v4850, %v4842
    %v7163 = vpack.c.b16 %v4851, %v4843
    %v7164 = vpack.c.b16 %v4852, %v4844
    %v7165 = vpack.c.b16 %v4853, %v4845
    %v7166 = vpack.c.b16 %v4854, %v4846
    %v7167 = vpack.c.b16 %v4863, %v4855
    %v7168 = vpack.c.b16 %v4864, %v4856
    %v7169 = vpack.c.b16 %v4865, %v4857
    %v7170 = vpack.c.b16 %v4866, %v4858
    %v7171 = vpack.c.b16 %v4867, %v4859
    %v7172 = vpack.c.b16 %v4868, %v4860
    %v7173 = vpack.c.b16 %v4869, %v4861
    %v7174 = vpack.c.b16 %v4870, %v4862
    %v7175 = vpack.c.b16 %v4879, %v4871
    %v7176 = vpack.c.b16 %v4880, %v4872
    %v7177 = vpack.c.b16 %v4881, %v4873
    %v7178 = vpack.c.b16 %v4882, %v4874
    %v7179 = vpack.c.b16 %v4883, %v4875
    %v7180 = vpack.c.b16 %v4884, %v4876
    %v7181 = vpack.c.b16 %v4885, %v4877
    %v7182 = vpack.c.b16 %v4886, %v4878
    %v7183 = vpack.c.b16 %v4895, %v4887
    %v7184 = vpack.c.b16 %v4896, %v4888
    %v7185 = vpack.c.b16 %v4897, %v4889
    %v7186 = vpack.c.b16 %v4898, %v4890
    %v7187 = vpack.c.b16 %v4899, %v4891
    %v7188 = vpack.c.b16 %v4900, %v4892
    %v7189 = vpack.c.b16 %v4901, %v4893
    %v7190 = vpack.c.b16 %v4902, %v4894
    %v7191 = vpack.c.b16 %v4911, %v4903
    %v7192 = vpack.c.b16 %v4912, %v4904
    %v7193 = vpack.c.b16 %v4913, %v4905
    %v7194 = vpack.c.b16 %v4914, %v4906
    %v7195 = vpack.c.b16 %v4915, %v4907
    %v7196 = vpack.c.b16 %v4916, %v4908
    %v7197 = vpack.c.b16 %v4917, %v4909
    %v7198 = vpack.c.b16 %v4918, %v4910
    %v7199 = vpack.c.b16 %v4927, %v4919
    %v7200 = vpack.c.b16 %v4928, %v4920
    %v7201 = vpack.c.b16 %v4929, %v4921
    %v7202 = vpack.c.b16 %v4930, %v4922
    %v7203 = vpack.c.b16 %v4931, %v4923
    %v7204 = vpack.c.b16 %v4932, %v4924
    %v7205 = vpack.c.b16 %v4933, %v4925
    %v7206 = vpack.c.b16 %v4934, %v4926
    %v7207 = vpack.c.b16 %v4943, %v4935
    %v7208 = vpack.c.b16 %v4944, %v4936
    %v7209 = vpack.c.b16 %v4945, %v4937
    %v7210 = vpack.c.b16 %v4946, %v4938
    %v7211 = vpack.c.b16 %v4947, %v4939
    %v7212 = vpack.c.b16 %v4948, %v4940
    %v7213 = vpack.c.b16 %v4949, %v4941
    %v7214 = vpack.c.b16 %v4950, %v4942
    %v7215 = vpack.c.b16 %v4959, %v4951
    %v7216 = vpack.c.b16 %v4960, %v4952
    %v7217 = vpack.c.b16 %v4961, %v4953
    %v7218 = vpack.c.b16 %v4962, %v4954
    %v7219 = vpack.c.b16 %v4963, %v4955
    %v7220 = vpack.c.b16 %v4964, %v4956
    %v7221 = vpack.c.b16 %v4965, %v4957
    %v7222 = vpack.c.b16 %v4966, %v4958
    %v7223 = vpack.c.b16 %v4975, %v4967
    %v7224 = vpack.c.b16 %v4976, %v4968
    %v7225 = vpack.c.b16 %v4977, %v4969
    %v7226 = vpack.c.b16 %v4978, %v4970
    %v7227 = vpack.c.b16 %v4979, %v4971
    %v7228 = vpack.c.b16 %v4980, %v4972
    %v7229 = vpack.c.b16 %v4981, %v4973
    %v7230 = vpack.c.b16 %v4982, %v4974
    %v7231 = vpack.c.b16 %v4991, %v4983
    %v7232 = vpack.c.b16 %v4992, %v4984
    %v7233 = vpack.c.b16 %v4993, %v4985
    %v7234 = vpack.c.b16 %v4994, %v4986
    %v7235 = vpack.c.b16 %v4995, %v4987
    %v7236 = vpack.c.b16 %v4996, %v4988
    %v7237 = vpack.c.b16 %v4997, %v4989
    %v7238 = vpack.c.b16 %v4998, %v4990
    %v7239 = vpack.c.b16 %v5007, %v4999
    %v7240 = vpack.c.b16 %v5008, %v5000
    %v7241 = vpack.c.b16 %v5009, %v5001
    %v7242 = vpack.c.b16 %v5010, %v5002
    %v7243 = vpack.c.b16 %v5011, %v5003
    %v7244 = vpack.c.b16 %v5012, %v5004
    %v7245 = vpack.c.b16 %v5013, %v5005
    %v7246 = vpack.c.b16 %v5014, %v5006
    %v7247 = vpack.c.b16 %v5023, %v5015
    %v7248 = vpack.c.b16 %v5024, %v5016
    %v7249 = vpack.c.b16 %v5025, %v5017
    %v7250 = vpack.c.b16 %v5026, %v5018
    %v7251 = vpack.c.b16 %v5027, %v5019
    %v7252 = vpack.c.b16 %v5028, %v5020
    %v7253 = vpack.c.b16 %v5029, %v5021
    %v7254 = vpack.c.b16 %v5030, %v5022
    %v7255 = vpack.c.b16 %v5039, %v5031
    %v7256 = vpack.c.b16 %v5040, %v5032
    %v7257 = vpack.c.b16 %v5041, %v5033
    %v7258 = vpack.c.b16 %v5042, %v5034
    %v7259 = vpack.c.b16 %v5043, %v5035
    %v7260 = vpack.c.b16 %v5044, %v5036
    %v7261 = vpack.c.b16 %v5045, %v5037
    %v7262 = vpack.c.b16 %v5046, %v5038
    %v7263 = vpack.c.b16 %v5055, %v5047
    %v7264 = vpack.c.b16 %v5056, %v5048
    %v7265 = vpack.c.b16 %v5057, %v5049
    %v7266 = vpack.c.b16 %v5058, %v5050
    %v7267 = vpack.c.b16 %v5059, %v5051
    %v7268 = vpack.c.b16 %v5060, %v5052
    %v7269 = vpack.c.b16 %v5061, %v5053
    %v7270 = vpack.c.b16 %v5062, %v5054
    %v7271 = vpack.c.b16 %v5071, %v5063
    %v7272 = vpack.c.b16 %v5072, %v5064
    %v7273 = vpack.c.b16 %v5073, %v5065
    %v7274 = vpack.c.b16 %v5074, %v5066
    %v7275 = vpack.c.b16 %v5075, %v5067
    %v7276 = vpack.c.b16 %v5076, %v5068
    %v7277 = vpack.c.b16 %v5077, %v5069
    %v7278 = vpack.c.b16 %v5078, %v5070
    %v7279 = vpack.c.b16 %v5087, %v5079
    %v7280 = vpack.c.b16 %v5088, %v5080
    %v7281 = vpack.c.b16 %v5089, %v5081
    %v7282 = vpack.c.b16 %v5090, %v5082
    %v7283 = vpack.c.b16 %v5091, %v5083
    %v7284 = vpack.c.b16 %v5092, %v5084
    %v7285 = vpack.c.b16 %v5093, %v5085
    %v7286 = vpack.c.b16 %v5094, %v5086
    %v7287 = vpack.c.b16 %v5103, %v5095
    %v7288 = vpack.c.b16 %v5104, %v5096
    %v7289 = vpack.c.b16 %v5105, %v5097
    %v7290 = vpack.c.b16 %v5106, %v5098
    %v7291 = vpack.c.b16 %v5107, %v5099
    %v7292 = vpack.c.b16 %v5108, %v5100
    %v7293 = vpack.c.b16 %v5109, %v5101
    %v7294 = vpack.c.b16 %v5110, %v5102
    %v7295 = vpack.c.b16 %v5119, %v5111
    %v7296 = vpack.c.b16 %v5120, %v5112
    %v7297 = vpack.c.b16 %v5121, %v5113
    %v7298 = vpack.c.b16 %v5122, %v5114
    %v7299 = vpack.c.b16 %v5123, %v5115
    %v7300 = vpack.c.b16 %v5124, %v5116
    %v7301 = vpack.c.b16 %v5125, %v5117
    %v7302 = vpack.c.b16 %v5126, %v5118
    %v7303 = vpack.c.b16 %v5135, %v5127
    %v7304 = vpack.c.b16 %v5136, %v5128
    %v7305 = vpack.c.b16 %v5137, %v5129
    %v7306 = vpack.c.b16 %v5138, %v5130
    %v7307 = vpack.c.b16 %v5139, %v5131
    %v7308 = vpack.c.b16 %v5140, %v5132
    %v7309 = vpack.c.b16 %v5141, %v5133
    %v7310 = vpack.c.b16 %v5142, %v5134
    %v7311 = vpack.c.b16 %v5151, %v5143
    %v7312 = vpack.c.b16 %v5152, %v5144
    %v7313 = vpack.c.b16 %v5153, %v5145
    %v7314 = vpack.c.b16 %v5154, %v5146
    %v7315 = vpack.c.b16 %v5155, %v5147
    %v7316 = vpack.c.b16 %v5156, %v5148
    %v7317 = vpack.c.b16 %v5157, %v5149
    %v7318 = vpack.c.b16 %v5158, %v5150
    %v7319 = vpack.c.b16 %v5167, %v5159
    %v7320 = vpack.c.b16 %v5168, %v5160
    %v7321 = vpack.c.b16 %v5169, %v5161
    %v7322 = vpack.c.b16 %v5170, %v5162
    %v7323 = vpack.c.b16 %v5171, %v5163
    %v7324 = vpack.c.b16 %v5172, %v5164
    %v7325 = vpack.c.b16 %v5173, %v5165
    %v7326 = vpack.c.b16 %v5174, %v5166
    %v7327 = vpack.c.b16 %v5183, %v5175
    %v7328 = vpack.c.b16 %v5184, %v5176
    %v7329 = vpack.c.b16 %v5185, %v5177
    %v7330 = vpack.c.b16 %v5186, %v5178
    %v7331 = vpack.c.b16 %v5187, %v5179
    %v7332 = vpack.c.b16 %v5188, %v5180
    %v7333 = vpack.c.b16 %v5189, %v5181
    %v7334 = vpack.c.b16 %v5190, %v5182
    %v7335 = vpack.c.b16 %v5199, %v5191
    %v7336 = vpack.c.b16 %v5200, %v5192
    %v7337 = vpack.c.b16 %v5201, %v5193
    %v7338 = vpack.c.b16 %v5202, %v5194
    %v7339 = vpack.c.b16 %v5203, %v5195
    %v7340 = vpack.c.b16 %v5204, %v5196
    %v7341 = vpack.c.b16 %v5205, %v5197
    %v7342 = vpack.c.b16 %v5206, %v5198
    %v7343 = vpack.c.b16 %v5215, %v5207
    %v7344 = vpack.c.b16 %v5216, %v5208
    %v7345 = vpack.c.b16 %v5217, %v5209
    %v7346 = vpack.c.b16 %v5218, %v5210
    %v7347 = vpack.c.b16 %v5219, %v5211
    %v7348 = vpack.c.b16 %v5220, %v5212
    %v7349 = vpack.c.b16 %v5221, %v5213
    %v7350 = vpack.c.b16 %v5222, %v5214
    %v7351 = vpack.c.b16 %v5231, %v5223
    %v7352 = vpack.c.b16 %v5232, %v5224
    %v7353 = vpack.c.b16 %v5233, %v5225
    %v7354 = vpack.c.b16 %v5234, %v5226
    %v7355 = vpack.c.b16 %v5235, %v5227
    %v7356 = vpack.c.b16 %v5236, %v5228
    %v7357 = vpack.c.b16 %v5237, %v5229
    %v7358 = vpack.c.b16 %v5238, %v5230
    %v7359 = vpack.c.b16 %v5247, %v5239
    %v7360 = vpack.c.b16 %v5248, %v5240
    %v7361 = vpack.c.b16 %v5249, %v5241
    %v7362 = vpack.c.b16 %v5250, %v5242
    %v7363 = vpack.c.b16 %v5251, %v5243
    %v7364 = vpack.c.b16 %v5252, %v5244
    %v7365 = vpack.c.b16 %v5253, %v5245
    %v7366 = vpack.c.b16 %v5254, %v5246
    %v7367 = vpack.c.b16 %v5263, %v5255
    %v7368 = vpack.c.b16 %v5264, %v5256
    %v7369 = vpack.c.b16 %v5265, %v5257
    %v7370 = vpack.c.b16 %v5266, %v5258
    %v7371 = vpack.c.b16 %v5267, %v5259
    %v7372 = vpack.c.b16 %v5268, %v5260
    %v7373 = vpack.c.b16 %v5269, %v5261
    %v7374 = vpack.c.b16 %v5270, %v5262
    %v7375 = vpack.c.b16 %v5279, %v5271
    %v7376 = vpack.c.b16 %v5280, %v5272
    %v7377 = vpack.c.b16 %v5281, %v5273
    %v7378 = vpack.c.b16 %v5282, %v5274
    %v7379 = vpack.c.b16 %v5283, %v5275
    %v7380 = vpack.c.b16 %v5284, %v5276
    %v7381 = vpack.c.b16 %v5285, %v5277
    %v7382 = vpack.c.b16 %v5286, %v5278
    %v7383 = vpack.c.b16 %v5295, %v5287
    %v7384 = vpack.c.b16 %v5296, %v5288
    %v7385 = vpack.c.b16 %v5297, %v5289
    %v7386 = vpack.c.b16 %v5298, %v5290
    %v7387 = vpack.c.b16 %v5299, %v5291
    %v7388 = vpack.c.b16 %v5300, %v5292
    %v7389 = vpack.c.b16 %v5301, %v5293
    %v7390 = vpack.c.b16 %v5302, %v5294
    %v7391 = vpack.c.b16 %v5311, %v5303
    %v7392 = vpack.c.b16 %v5312, %v5304
    %v7393 = vpack.c.b16 %v5313, %v5305
    %v7394 = vpack.c.b16 %v5314, %v5306
    %v7395 = vpack.c.b16 %v5315, %v5307
    %v7396 = vpack.c.b16 %v5316, %v5308
    %v7397 = vpack.c.b16 %v5317, %v5309
    %v7398 = vpack.c.b16 %v5318, %v5310
    %v7399 = vpack.c.b16 %v5327, %v5319
    %v7400 = vpack.c.b16 %v5328, %v5320
    %v7401 = vpack.c.b16 %v5329, %v5321
    %v7402 = vpack.c.b16 %v5330, %v5322
    %v7403 = vpack.c.b16 %v5331, %v5323
    %v7404 = vpack.c.b16 %v5332, %v5324
    %v7405 = vpack.c.b16 %v5333, %v5325
    %v7406 = vpack.c.b16 %v5334, %v5326
    %v7407 = vpack.c.b16 %v5343, %v5335
    %v7408 = vpack.c.b16 %v5344, %v5336
    %v7409 = vpack.c.b16 %v5345, %v5337
    %v7410 = vpack.c.b16 %v5346, %v5338
    %v7411 = vpack.c.b16 %v5347, %v5339
    %v7412 = vpack.c.b16 %v5348, %v5340
    %v7413 = vpack.c.b16 %v5349, %v5341
    %v7414 = vpack.c.b16 %v5350, %v5342
    %v7415 = vpack.c.b16 %v5359, %v5351
    %v7416 = vpack.c.b16 %v5360, %v5352
    %v7417 = vpack.c.b16 %v5361, %v5353
    %v7418 = vpack.c.b16 %v5362, %v5354
    %v7419 = vpack.c.b16 %v5363, %v5355
    %v7420 = vpack.c.b16 %v5364, %v5356
    %v7421 = vpack.c.b16 %v5365, %v5357
    %v7422 = vpack.c.b16 %v5366, %v5358
    %v7423 = vpack.c.b16 %v5375, %v5367
    %v7424 = vpack.c.b16 %v5376, %v5368
    %v7425 = vpack.c.b16 %v5377, %v5369
    %v7426 = vpack.c.b16 %v5378, %v5370
    %v7427 = vpack.c.b16 %v5379, %v5371
    %v7428 = vpack.c.b16 %v5380, %v5372
    %v7429 = vpack.c.b16 %v5381, %v5373
    %v7430 = vpack.c.b16 %v5382, %v5374
    %v7431 = vpack.c.b16 %v5391, %v5383
    %v7432 = vpack.c.b16 %v5392, %v5384
    %v7433 = vpack.c.b16 %v5393, %v5385
    %v7434 = vpack.c.b16 %v5394, %v5386
    %v7435 = vpack.c.b16 %v5395, %v5387
    %v7436 = vpack.c.b16 %v5396, %v5388
    %v7437 = vpack.c.b16 %v5397, %v5389
    %v7438 = vpack.c.b16 %v5398, %v5390
    %v7439 = vpack.c.b16 %v5407, %v5399
    %v7440 = vpack.c.b16 %v5408, %v5400
    %v7441 = vpack.c.b16 %v5409, %v5401
    %v7442 = vpack.c.b16 %v5410, %v5402
    %v7443 = vpack.c.b16 %v5411, %v5403
    %v7444 = vpack.c.b16 %v5412, %v5404
    %v7445 = vpack.c.b16 %v5413, %v5405
    %v7446 = vpack.c.b16 %v5414, %v5406
    %v7447 = vpack.c.b16 %v5423, %v5415
    %v7448 = vpack.c.b16 %v5424, %v5416
    %v7449 = vpack.c.b16 %v5425, %v5417
    %v7450 = vpack.c.b16 %v5426, %v5418
    %v7451 = vpack.c.b16 %v5427, %v5419
    %v7452 = vpack.c.b16 %v5428, %v5420
    %v7453 = vpack.c.b16 %v5429, %v5421
    %v7454 = vpack.c.b16 %v5430, %v5422
    %v7455 = vpack.c.b16 %v5439, %v5431
    %v7456 = vpack.c.b16 %v5440, %v5432
    %v7457 = vpack.c.b16 %v5441, %v5433
    %v7458 = vpack.c.b16 %v5442, %v5434
    %v7459 = vpack.c.b16 %v5443, %v5435
    %v7460 = vpack.c.b16 %v5444, %v5436
    %v7461 = vpack.c.b16 %v5445, %v5437
    %v7462 = vpack.c.b16 %v5446, %v5438
    %v7463 = vpack.c.b16 %v5455, %v5447
    %v7464 = vpack.c.b16 %v5456, %v5448
    %v7465 = vpack.c.b16 %v5457, %v5449
    %v7466 = vpack.c.b16 %v5458, %v5450
    %v7467 = vpack.c.b16 %v5459, %v5451
    %v7468 = vpack.c.b16 %v5460, %v5452
    %v7469 = vpack.c.b16 %v5461, %v5453
    %v7470 = vpack.c.b16 %v5462, %v5454
    %v7471 = vpack.c.b16 %v5471, %v5463
    %v7472 = vpack.c.b16 %v5472, %v5464
    %v7473 = vpack.c.b16 %v5473, %v5465
    %v7474 = vpack.c.b16 %v5474, %v5466
    %v7475 = vpack.c.b16 %v5475, %v5467
    %v7476 = vpack.c.b16 %v5476, %v5468
    %v7477 = vpack.c.b16 %v5477, %v5469
    %v7478 = vpack.c.b16 %v5478, %v5470
    %v7479 = vpack.c.b16 %v5487, %v5479
    %v7480 = vpack.c.b16 %v5488, %v5480
    %v7481 = vpack.c.b16 %v5489, %v5481
    %v7482 = vpack.c.b16 %v5490, %v5482
    %v7483 = vpack.c.b16 %v5491, %v5483
    %v7484 = vpack.c.b16 %v5492, %v5484
    %v7485 = vpack.c.b16 %v5493, %v5485
    %v7486 = vpack.c.b16 %v5494, %v5486
    %v7487 = vpack.c.b16 %v5503, %v5495
    %v7488 = vpack.c.b16 %v5504, %v5496
    %v7489 = vpack.c.b16 %v5505, %v5497
    %v7490 = vpack.c.b16 %v5506, %v5498
    %v7491 = vpack.c.b16 %v5507, %v5499
    %v7492 = vpack.c.b16 %v5508, %v5500
    %v7493 = vpack.c.b16 %v5509, %v5501
    %v7494 = vpack.c.b16 %v5510, %v5502
    %v7495 = vpack.c.b16 %v5519, %v5511
    %v7496 = vpack.c.b16 %v5520, %v5512
    %v7497 = vpack.c.b16 %v5521, %v5513
    %v7498 = vpack.c.b16 %v5522, %v5514
    %v7499 = vpack.c.b16 %v5523, %v5515
    %v7500 = vpack.c.b16 %v5524, %v5516
    %v7501 = vpack.c.b16 %v5525, %v5517
    %v7502 = vpack.c.b16 %v5526, %v5518
    %v7503 = vpack.c.b16 %v5535, %v5527
    %v7504 = vpack.c.b16 %v5536, %v5528
    %v7505 = vpack.c.b16 %v5537, %v5529
    %v7506 = vpack.c.b16 %v5538, %v5530
    %v7507 = vpack.c.b16 %v5539, %v5531
    %v7508 = vpack.c.b16 %v5540, %v5532
    %v7509 = vpack.c.b16 %v5541, %v5533
    %v7510 = vpack.c.b16 %v5542, %v5534
    %v7511 = vpack.c.b16 %v5551, %v5543
    %v7512 = vpack.c.b16 %v5552, %v5544
    %v7513 = vpack.c.b16 %v5553, %v5545
    %v7514 = vpack.c.b16 %v5554, %v5546
    %v7515 = vpack.c.b16 %v5555, %v5547
    %v7516 = vpack.c.b16 %v5556, %v5548
    %v7517 = vpack.c.b16 %v5557, %v5549
    %v7518 = vpack.c.b16 %v5558, %v5550
    %v7519 = vpack.c.b16 %v5567, %v5559
    %v7520 = vpack.c.b16 %v5568, %v5560
    %v7521 = vpack.c.b16 %v5569, %v5561
    %v7522 = vpack.c.b16 %v5570, %v5562
    %v7523 = vpack.c.b16 %v5571, %v5563
    %v7524 = vpack.c.b16 %v5572, %v5564
    %v7525 = vpack.c.b16 %v5573, %v5565
    %v7526 = vpack.c.b16 %v5574, %v5566
    %v7527 = vpack.c.b16 %v5583, %v5575
    %v7528 = vpack.c.b16 %v5584, %v5576
    %v7529 = vpack.c.b16 %v5585, %v5577
    %v7530 = vpack.c.b16 %v5586, %v5578
    %v7531 = vpack.c.b16 %v5587, %v5579
    %v7532 = vpack.c.b16 %v5588, %v5580
    %v7533 = vpack.c.b16 %v5589, %v5581
    %v7534 = vpack.c.b16 %v5590, %v5582
    %v7535 = vpack.c.b16 %v5599, %v5591
    %v7536 = vpack.c.b16 %v5600, %v5592
    %v7537 = vpack.c.b16 %v5601, %v5593
    %v7538 = vpack.c.b16 %v5602, %v5594
    %v7539 = vpack.c.b16 %v5603, %v5595
    %v7540 = vpack.c.b16 %v5604, %v5596
    %v7541 = vpack.c.b16 %v5605, %v5597
    %v7542 = vpack.c.b16 %v5606, %v5598
    %v7543 = vpack.c.b16 %v5615, %v5607
    %v7544 = vpack.c.b16 %v5616, %v5608
    %v7545 = vpack.c.b16 %v5617, %v5609
    %v7546 = vpack.c.b16 %v5618, %v5610
    %v7547 = vpack.c.b16 %v5619, %v5611
    %v7548 = vpack.c.b16 %v5620, %v5612
    %v7549 = vpack.c.b16 %v5621, %v5613
    %v7550 = vpack.c.b16 %v5622, %v5614
    %v7551 = vpack.c.b16 %v5631, %v5623
    %v7552 = vpack.c.b16 %v5632, %v5624
    %v7553 = vpack.c.b16 %v5633, %v5625
    %v7554 = vpack.c.b16 %v5634, %v5626
    %v7555 = vpack.c.b16 %v5635, %v5627
    %v7556 = vpack.c.b16 %v5636, %v5628
    %v7557 = vpack.c.b16 %v5637, %v5629
    %v7558 = vpack.c.b16 %v5638, %v5630
    %v7559 = vpack.c.b16 %v5647, %v5639
    %v7560 = vpack.c.b16 %v5648, %v5640
    %v7561 = vpack.c.b16 %v5649, %v5641
    %v7562 = vpack.c.b16 %v5650, %v5642
    %v7563 = vpack.c.b16 %v5651, %v5643
    %v7564 = vpack.c.b16 %v5652, %v5644
    %v7565 = vpack.c.b16 %v5653, %v5645
    %v7566 = vpack.c.b16 %v5654, %v5646
    %v7567 = vpack.c.b16 %v5663, %v5655
    %v7568 = vpack.c.b16 %v5664, %v5656
    %v7569 = vpack.c.b16 %v5665, %v5657
    %v7570 = vpack.c.b16 %v5666, %v5658
    %v7571 = vpack.c.b16 %v5667, %v5659
    %v7572 = vpack.c.b16 %v5668, %v5660
    %v7573 = vpack.c.b16 %v5669, %v5661
    %v7574 = vpack.c.b16 %v5670, %v5662
    %v7575 = vpack.c.b16 %v5679, %v5671
    %v7576 = vpack.c.b16 %v5680, %v5672
    %v7577 = vpack.c.b16 %v5681, %v5673
    %v7578 = vpack.c.b16 %v5682, %v5674
    %v7579 = vpack.c.b16 %v5683, %v5675
    %v7580 = vpack.c.b16 %v5684, %v5676
    %v7581 = vpack.c.b16 %v5685, %v5677
    %v7582 = vpack.c.b16 %v5686, %v5678
    %v7583 = vpack.c.b16 %v5695, %v5687
    %v7584 = vpack.c.b16 %v5696, %v5688
    %v7585 = vpack.c.b16 %v5697, %v5689
    %v7586 = vpack.c.b16 %v5698, %v5690
    %v7587 = vpack.c.b16 %v5699, %v5691
    %v7588 = vpack.c.b16 %v5700, %v5692
    %v7589 = vpack.c.b16 %v5701, %v5693
    %v7590 = vpack.c.b16 %v5702, %v5694
    %v7591 = vpack.c.b16 %v5711, %v5703
    %v7592 = vpack.c.b16 %v5712, %v5704
    %v7593 = vpack.c.b16 %v5713, %v5705
    %v7594 = vpack.c.b16 %v5714, %v5706
    %v7595 = vpack.c.b16 %v5715, %v5707
    %v7596 = vpack.c.b16 %v5716, %v5708
    %v7597 = vpack.c.b16 %v5717, %v5709
    %v7598 = vpack.c.b16 %v5718, %v5710
    %v7599 = vpack.c.b16 %v5727, %v5719
    %v7600 = vpack.c.b16 %v5728, %v5720
    %v7601 = vpack.c.b16 %v5729, %v5721
    %v7602 = vpack.c.b16 %v5730, %v5722
    %v7603 = vpack.c.b16 %v5731, %v5723
    %v7604 = vpack.c.b16 %v5732, %v5724
    %v7605 = vpack.c.b16 %v5733, %v5725
    %v7606 = vpack.c.b16 %v5734, %v5726
    %v7607 = vpack.c.b16 %v5743, %v5735
    %v7608 = vpack.c.b16 %v5744, %v5736
    %v7609 = vpack.c.b16 %v5745, %v5737
    %v7610 = vpack.c.b16 %v5746, %v5738
    %v7611 = vpack.c.b16 %v5747, %v5739
    %v7612 = vpack.c.b16 %v5748, %v5740
    %v7613 = vpack.c.b16 %v5749, %v5741
    %v7614 = vpack.c.b16 %v5750, %v5742
    %v7615 = vpack.c.b16 %v5759, %v5751
    %v7616 = vpack.c.b16 %v5760, %v5752
    %v7617 = vpack.c.b16 %v5761, %v5753
    %v7618 = vpack.c.b16 %v5762, %v5754
    %v7619 = vpack.c.b16 %v5763, %v5755
    %v7620 = vpack.c.b16 %v5764, %v5756
    %v7621 = vpack.c.b16 %v5765, %v5757
    %v7622 = vpack.c.b16 %v5766, %v5758
    %v7623 = vpack.c.b16 %v5775, %v5767
    %v7624 = vpack.c.b16 %v5776, %v5768
    %v7625 = vpack.c.b16 %v5777, %v5769
    %v7626 = vpack.c.b16 %v5778, %v5770
    %v7627 = vpack.c.b16 %v5779, %v5771
    %v7628 = vpack.c.b16 %v5780, %v5772
    %v7629 = vpack.c.b16 %v5781, %v5773
    %v7630 = vpack.c.b16 %v5782, %v5774
    %v7631 = vpack.c.b16 %v5791, %v5783
    %v7632 = vpack.c.b16 %v5792, %v5784
    %v7633 = vpack.c.b16 %v5793, %v5785
    %v7634 = vpack.c.b16 %v5794, %v5786
    %v7635 = vpack.c.b16 %v5795, %v5787
    %v7636 = vpack.c.b16 %v5796, %v5788
    %v7637 = vpack.c.b16 %v5797, %v5789
    %v7638 = vpack.c.b16 %v5798, %v5790
    %v7639 = vpack.c.b16 %v5807, %v5799
    %v7640 = vpack.c.b16 %v5808, %v5800
    %v7641 = vpack.c.b16 %v5809, %v5801
    %v7642 = vpack.c.b16 %v5810, %v5802
    %v7643 = vpack.c.b16 %v5811, %v5803
    %v7644 = vpack.c.b16 %v5812, %v5804
    %v7645 = vpack.c.b16 %v5813, %v5805
    %v7646 = vpack.c.b16 %v5814, %v5806
    %v7647 = vpack.c.b16 %v5823, %v5815
    %v7648 = vpack.c.b16 %v5824, %v5816
    %v7649 = vpack.c.b16 %v5825, %v5817
    %v7650 = vpack.c.b16 %v5826, %v5818
    %v7651 = vpack.c.b16 %v5827, %v5819
    %v7652 = vpack.c.b16 %v5828, %v5820
    %v7653 = vpack.c.b16 %v5829, %v5821
    %v7654 = vpack.c.b16 %v5830, %v5822
    %v7655 = vpack.c.b16 %v5839, %v5831
    %v7656 = vpack.c.b16 %v5840, %v5832
    %v7657 = vpack.c.b16 %v5841, %v5833
    %v7658 = vpack.c.b16 %v5842, %v5834
    %v7659 = vpack.c.b16 %v5843, %v5835
    %v7660 = vpack.c.b16 %v5844, %v5836
    %v7661 = vpack.c.b16 %v5845, %v5837
    %v7662 = vpack.c.b16 %v5846, %v5838
    %v7663 = vpack.c.b16 %v5855, %v5847
    %v7664 = vpack.c.b16 %v5856, %v5848
    %v7665 = vpack.c.b16 %v5857, %v5849
    %v7666 = vpack.c.b16 %v5858, %v5850
    %v7667 = vpack.c.b16 %v5859, %v5851
    %v7668 = vpack.c.b16 %v5860, %v5852
    %v7669 = vpack.c.b16 %v5861, %v5853
    %v7670 = vpack.c.b16 %v5862, %v5854
    %v7671 = vpack.c.b16 %v5871, %v5863
    %v7672 = vpack.c.b16 %v5872, %v5864
    %v7673 = vpack.c.b16 %v5873, %v5865
    %v7674 = vpack.c.b16 %v5874, %v5866
    %v7675 = vpack.c.b16 %v5875, %v5867
    %v7676 = vpack.c.b16 %v5876, %v5868
    %v7677 = vpack.c.b16 %v5877, %v5869
    %v7678 = vpack.c.b16 %v5878, %v5870
    %v7679 = vpack.c.b16 %v5887, %v5879
    %v7680 = vpack.c.b16 %v5888, %v5880
    %v7681 = vpack.c.b16 %v5889, %v5881
    %v7682 = vpack.c.b16 %v5890, %v5882
    %v7683 = vpack.c.b16 %v5891, %v5883
    %v7684 = vpack.c.b16 %v5892, %v5884
    %v7685 = vpack.c.b16 %v5893, %v5885
    %v7686 = vpack.c.b16 %v5894, %v5886
    %v7687 = vpack.c.b16 %v5903, %v5895
    %v7688 = vpack.c.b16 %v5904, %v5896
    %v7689 = vpack.c.b16 %v5905, %v5897
    %v7690 = vpack.c.b16 %v5906, %v5898
    %v7691 = vpack.c.b16 %v5907, %v5899
    %v7692 = vpack.c.b16 %v5908, %v5900
    %v7693 = vpack.c.b16 %v5909, %v5901
    %v7694 = vpack.c.b16 %v5910, %v5902
    %v7695 = vpack.c.b16 %v5919, %v5911
    %v7696 = vpack.c.b16 %v5920, %v5912
    %v7697 = vpack.c.b16 %v5921, %v5913
    %v7698 = vpack.c.b16 %v5922, %v5914
    %v7699 = vpack.c.b16 %v5923, %v5915
    %v7700 = vpack.c.b16 %v5924, %v5916
    %v7701 = vpack.c.b16 %v5925, %v5917
    %v7702 = vpack.c.b16 %v5926, %v5918
    %v7703 = vpack.c.b16 %v5935, %v5927
    %v7704 = vpack.c.b16 %v5936, %v5928
    %v7705 = vpack.c.b16 %v5937, %v5929
    %v7706 = vpack.c.b16 %v5938, %v5930
    %v7707 = vpack.c.b16 %v5939, %v5931
    %v7708 = vpack.c.b16 %v5940, %v5932
    %v7709 = vpack.c.b16 %v5941, %v5933
    %v7710 = vpack.c.b16 %v5942, %v5934
    %v7711 = vpack.c.b16 %v5951, %v5943
    %v7712 = vpack.c.b16 %v5952, %v5944
    %v7713 = vpack.c.b16 %v5953, %v5945
    %v7714 = vpack.c.b16 %v5954, %v5946
    %v7715 = vpack.c.b16 %v5955, %v5947
    %v7716 = vpack.c.b16 %v5956, %v5948
    %v7717 = vpack.c.b16 %v5957, %v5949
    %v7718 = vpack.c.b16 %v5958, %v5950
    %v7719 = vpack.c.b16 %v5967, %v5959
    %v7720 = vpack.c.b16 %v5968, %v5960
    %v7721 = vpack.c.b16 %v5969, %v5961
    %v7722 = vpack.c.b16 %v5970, %v5962
    %v7723 = vpack.c.b16 %v5971, %v5963
    %v7724 = vpack.c.b16 %v5972, %v5964
    %v7725 = vpack.c.b16 %v5973, %v5965
    %v7726 = vpack.c.b16 %v5974, %v5966
    %v7727 = vpack.c.b16 %v5983, %v5975
    %v7728 = vpack.c.b16 %v5984, %v5976
    %v7729 = vpack.c.b16 %v5985, %v5977
    %v7730 = vpack.c.b16 %v5986, %v5978
    %v7731 = vpack.c.b16 %v5987, %v5979
    %v7732 = vpack.c.b16 %v5988, %v5980
    %v7733 = vpack.c.b16 %v5989, %v5981
    %v7734 = vpack.c.b16 %v5990, %v5982
    %v7735 = vpack.c.b16 %v5999, %v5991
    %v7736 = vpack.c.b16 %v6000, %v5992
    %v7737 = vpack.c.b16 %v6001, %v5993
    %v7738 = vpack.c.b16 %v6002, %v5994
    %v7739 = vpack.c.b16 %v6003, %v5995
    %v7740 = vpack.c.b16 %v6004, %v5996
    %v7741 = vpack.c.b16 %v6005, %v5997
    %v7742 = vpack.c.b16 %v6006, %v5998
    %v7743 = vpack.c.b16 %v6015, %v6007
    %v7744 = vpack.c.b16 %v6016, %v6008
    %v7745 = vpack.c.b16 %v6017, %v6009
    %v7746 = vpack.c.b16 %v6018, %v6010
    %v7747 = vpack.c.b16 %v6019, %v6011
    %v7748 = vpack.c.b16 %v6020, %v6012
    %v7749 = vpack.c.b16 %v6021, %v6013
    %v7750 = vpack.c.b16 %v6022, %v6014
    %v7751 = vpack.c.b16 %v6031, %v6023
    %v7752 = vpack.c.b16 %v6032, %v6024
    %v7753 = vpack.c.b16 %v6033, %v6025
    %v7754 = vpack.c.b16 %v6034, %v6026
    %v7755 = vpack.c.b16 %v6035, %v6027
    %v7756 = vpack.c.b16 %v6036, %v6028
    %v7757 = vpack.c.b16 %v6037, %v6029
    %v7758 = vpack.c.b16 %v6038, %v6030
    %v7759 = vpack.c.b16 %v6047, %v6039
    %v7760 = vpack.c.b16 %v6048, %v6040
    %v7761 = vpack.c.b16 %v6049, %v6041
    %v7762 = vpack.c.b16 %v6050, %v6042
    %v7763 = vpack.c.b16 %v6051, %v6043
    %v7764 = vpack.c.b16 %v6052, %v6044
    %v7765 = vpack.c.b16 %v6053, %v6045
    %v7766 = vpack.c.b16 %v6054, %v6046
    %v7767 = vpack.c.b16 %v6063, %v6055
    %v7768 = vpack.c.b16 %v6064, %v6056
    %v7769 = vpack.c.b16 %v6065, %v6057
    %v7770 = vpack.c.b16 %v6066, %v6058
    %v7771 = vpack.c.b16 %v6067, %v6059
    %v7772 = vpack.c.b16 %v6068, %v6060
    %v7773 = vpack.c.b16 %v6069, %v6061
    %v7774 = vpack.c.b16 %v6070, %v6062
    %v7775 = vpack.c.b16 %v6079, %v6071
    %v7776 = vpack.c.b16 %v6080, %v6072
    %v7777 = vpack.c.b16 %v6081, %v6073
    %v7778 = vpack.c.b16 %v6082, %v6074
    %v7779 = vpack.c.b16 %v6083, %v6075
    %v7780 = vpack.c.b16 %v6084, %v6076
    %v7781 = vpack.c.b16 %v6085, %v6077
    %v7782 = vpack.c.b16 %v6086, %v6078
    %v7783 = vpack.c.b16 %v6095, %v6087
    %v7784 = vpack.c.b16 %v6096, %v6088
    %v7785 = vpack.c.b16 %v6097, %v6089
    %v7786 = vpack.c.b16 %v6098, %v6090
    %v7787 = vpack.c.b16 %v6099, %v6091
    %v7788 = vpack.c.b16 %v6100, %v6092
    %v7789 = vpack.c.b16 %v6101, %v6093
    %v7790 = vpack.c.b16 %v6102, %v6094
    %v7791 = vpack.c.b16 %v6111, %v6103
    %v7792 = vpack.c.b16 %v6112, %v6104
    %v7793 = vpack.c.b16 %v6113, %v6105
    %v7794 = vpack.c.b16 %v6114, %v6106
    %v7795 = vpack.c.b16 %v6115, %v6107
    %v7796 = vpack.c.b16 %v6116, %v6108
    %v7797 = vpack.c.b16 %v6117, %v6109
    %v7798 = vpack.c.b16 %v6118, %v6110
    %v7799 = vpack.c.b16 %v6127, %v6119
    %v7800 = vpack.c.b16 %v6128, %v6120
    %v7801 = vpack.c.b16 %v6129, %v6121
    %v7802 = vpack.c.b16 %v6130, %v6122
    %v7803 = vpack.c.b16 %v6131, %v6123
    %v7804 = vpack.c.b16 %v6132, %v6124
    %v7805 = vpack.c.b16 %v6133, %v6125
    %v7806 = vpack.c.b16 %v6134, %v6126
    %v7807 = vpack.c.b16 %v6143, %v6135
    %v7808 = vpack.c.b16 %v6144, %v6136
    %v7809 = vpack.c.b16 %v6145, %v6137
    %v7810 = vpack.c.b16 %v6146, %v6138
    %v7811 = vpack.c.b16 %v6147, %v6139
    %v7812 = vpack.c.b16 %v6148, %v6140
    %v7813 = vpack.c.b16 %v6149, %v6141
    %v7814 = vpack.c.b16 %v6150, %v6142
    %v7815 = vpack.c.b16 %v6159, %v6151
    %v7816 = vpack.c.b16 %v6160, %v6152
    %v7817 = vpack.c.b16 %v6161, %v6153
    %v7818 = vpack.c.b16 %v6162, %v6154
    %v7819 = vpack.c.b16 %v6163, %v6155
    %v7820 = vpack.c.b16 %v6164, %v6156
    %v7821 = vpack.c.b16 %v6165, %v6157
    %v7822 = vpack.c.b16 %v6166, %v6158
    %v7823 = vpack.c.b16 %v6175, %v6167
    %v7824 = vpack.c.b16 %v6176, %v6168
    %v7825 = vpack.c.b16 %v6177, %v6169
    %v7826 = vpack.c.b16 %v6178, %v6170
    %v7827 = vpack.c.b16 %v6179, %v6171
    %v7828 = vpack.c.b16 %v6180, %v6172
    %v7829 = vpack.c.b16 %v6181, %v6173
    %v7830 = vpack.c.b16 %v6182, %v6174
    %v7831 = vpack.c.b16 %v6191, %v6183
    %v7832 = vpack.c.b16 %v6192, %v6184
    %v7833 = vpack.c.b16 %v6193, %v6185
    %v7834 = vpack.c.b16 %v6194, %v6186
    %v7835 = vpack.c.b16 %v6195, %v6187
    %v7836 = vpack.c.b16 %v6196, %v6188
    %v7837 = vpack.c.b16 %v6197, %v6189
    %v7838 = vpack.c.b16 %v6198, %v6190
    %v7839 = vpack.c.b16 %v6207, %v6199
    %v7840 = vpack.c.b16 %v6208, %v6200
    %v7841 = vpack.c.b16 %v6209, %v6201
    %v7842 = vpack.c.b16 %v6210, %v6202
    %v7843 = vpack.c.b16 %v6211, %v6203
    %v7844 = vpack.c.b16 %v6212, %v6204
    %v7845 = vpack.c.b16 %v6213, %v6205
    %v7846 = vpack.c.b16 %v6214, %v6206
    %v7847 = vpack.c.b16 %v6223, %v6215
    %v7848 = vpack.c.b16 %v6224, %v6216
    %v7849 = vpack.c.b16 %v6225, %v6217
    %v7850 = vpack.c.b16 %v6226, %v6218
    %v7851 = vpack.c.b16 %v6227, %v6219
    %v7852 = vpack.c.b16 %v6228, %v6220
    %v7853 = vpack.c.b16 %v6229, %v6221
    %v7854 = vpack.c.b16 %v6230, %v6222
    %v7855 = vpack.c.b16 %v6239, %v6231
    %v7856 = vpack.c.b16 %v6240, %v6232
    %v7857 = vpack.c.b16 %v6241, %v6233
    %v7858 = vpack.c.b16 %v6242, %v6234
    %v7859 = vpack.c.b16 %v6243, %v6235
    %v7860 = vpack.c.b16 %v6244, %v6236
    %v7861 = vpack.c.b16 %v6245, %v6237
    %v7862 = vpack.c.b16 %v6246, %v6238
    %v7863 = vpack.c.b16 %v6255, %v6247
    %v7864 = vpack.c.b16 %v6256, %v6248
    %v7865 = vpack.c.b16 %v6257, %v6249
    %v7866 = vpack.c.b16 %v6258, %v6250
    %v7867 = vpack.c.b16 %v6259, %v6251
    %v7868 = vpack.c.b16 %v6260, %v6252
    %v7869 = vpack.c.b16 %v6261, %v6253
    %v7870 = vpack.c.b16 %v6262, %v6254
    %v7871 = vpack.c.b16 %v6271, %v6263
    %v7872 = vpack.c.b16 %v6272, %v6264
    %v7873 = vpack.c.b16 %v6273, %v6265
    %v7874 = vpack.c.b16 %v6274, %v6266
    %v7875 = vpack.c.b16 %v6275, %v6267
    %v7876 = vpack.c.b16 %v6276, %v6268
    %v7877 = vpack.c.b16 %v6277, %v6269
    %v7878 = vpack.c.b16 %v6278, %v6270
    %v7879 = vpack.c.b16 %v6287, %v6279
    %v7880 = vpack.c.b16 %v6288, %v6280
    %v7881 = vpack.c.b16 %v6289, %v6281
    %v7882 = vpack.c.b16 %v6290, %v6282
    %v7883 = vpack.c.b16 %v6291, %v6283
    %v7884 = vpack.c.b16 %v6292, %v6284
    %v7885 = vpack.c.b16 %v6293, %v6285
    %v7886 = vpack.c.b16 %v6294, %v6286
    %v7887 = vpack.c.b16 %v6303, %v6295
    %v7888 = vpack.c.b16 %v6304, %v6296
    %v7889 = vpack.c.b16 %v6305, %v6297
    %v7890 = vpack.c.b16 %v6306, %v6298
    %v7891 = vpack.c.b16 %v6307, %v6299
    %v7892 = vpack.c.b16 %v6308, %v6300
    %v7893 = vpack.c.b16 %v6309, %v6301
    %v7894 = vpack.c.b16 %v6310, %v6302
    %v7895 = vpack.c.b16 %v6319, %v6311
    %v7896 = vpack.c.b16 %v6320, %v6312
    %v7897 = vpack.c.b16 %v6321, %v6313
    %v7898 = vpack.c.b16 %v6322, %v6314
    %v7899 = vpack.c.b16 %v6323, %v6315
    %v7900 = vpack.c.b16 %v6324, %v6316
    %v7901 = vpack.c.b16 %v6325, %v6317
    %v7902 = vpack.c.b16 %v6326, %v6318
    %v7903 = vpack.c.b16 %v6335, %v6327
    %v7904 = vpack.c.b16 %v6336, %v6328
    %v7905 = vpack.c.b16 %v6337, %v6329
    %v7906 = vpack.c.b16 %v6338, %v6330
    %v7907 = vpack.c.b16 %v6339, %v6331
    %v7908 = vpack.c.b16 %v6340, %v6332
    %v7909 = vpack.c.b16 %v6341, %v6333
    %v7910 = vpack.c.b16 %v6342, %v6334
    %v7911 = vpack.c.b16 %v6351, %v6343
    %v7912 = vpack.c.b16 %v6352, %v6344
    %v7913 = vpack.c.b16 %v6353, %v6345
    %v7914 = vpack.c.b16 %v6354, %v6346
    %v7915 = vpack.c.b16 %v6355, %v6347
    %v7916 = vpack.c.b16 %v6356, %v6348
    %v7917 = vpack.c.b16 %v6357, %v6349
    %v7918 = vpack.c.b16 %v6358, %v6350
    %v7919 = vpack.c.b16 %v6367, %v6359
    %v7920 = vpack.c.b16 %v6368, %v6360
    %v7921 = vpack.c.b16 %v6369, %v6361
    %v7922 = vpack.c.b16 %v6370, %v6362
    %v7923 = vpack.c.b16 %v6371, %v6363
    %v7924 = vpack.c.b16 %v6372, %v6364
    %v7925 = vpack.c.b16 %v6373, %v6365
    %v7926 = vpack.c.b16 %v6374, %v6366
    %v7927 = vpack.c.b16 %v6383, %v6375
    %v7928 = vpack.c.b16 %v6384, %v6376
    %v7929 = vpack.c.b16 %v6385, %v6377
    %v7930 = vpack.c.b16 %v6386, %v6378
    %v7931 = vpack.c.b16 %v6387, %v6379
    %v7932 = vpack.c.b16 %v6388, %v6380
    %v7933 = vpack.c.b16 %v6389, %v6381
    %v7934 = vpack.c.b16 %v6390, %v6382
    %v7935 = vpack.c.b16 %v6399, %v6391
    %v7936 = vpack.c.b16 %v6400, %v6392
    %v7937 = vpack.c.b16 %v6401, %v6393
    %v7938 = vpack.c.b16 %v6402, %v6394
    %v7939 = vpack.c.b16 %v6403, %v6395
    %v7940 = vpack.c.b16 %v6404, %v6396
    %v7941 = vpack.c.b16 %v6405, %v6397
    %v7942 = vpack.c.b16 %v6406, %v6398
    %9479 = vmatprep.subr.bf16.mxu0 %v6408
    %9480 = vmatpush1.bf16.msra.mxu0 %v6407
    %9481 = vmatprep.subr.bf16.mxu0 %v6416
    %9482 = vmatpush1.bf16.msra.mxu0 %v6415
    %9483 = vmatprep.subr.bf16.mxu0 %v6424
    %9484 = vmatpush1.bf16.msra.mxu0 %v6423
    %9485 = vmatprep.subr.bf16.mxu0 %v6432
    %9486 = vmatpush1.bf16.msra.mxu0 %v6431
    %9487 = vmatprep.subr.bf16.mxu0 %v6440
    %9488 = vmatpush1.bf16.msra.mxu0 %v6439
    %9489 = vmatprep.subr.bf16.mxu0 %v6448
    %9490 = vmatpush1.bf16.msra.mxu0 %v6447
    %9491 = vmatprep.subr.bf16.mxu0 %v6456
    %9492 = vmatpush1.bf16.msra.mxu0 %v6455
    %9493 = vmatprep.subr.bf16.mxu0 %v6464
    %9494 = vmatpush1.bf16.msra.mxu0 %v6463
    %9495 = vmatprep.subr.bf16.mxu0 %v6472
    %9496 = vmatpush1.bf16.msra.mxu0 %v6471
    %9497 = vmatprep.subr.bf16.mxu0 %v6480
    %9498 = vmatpush1.bf16.msra.mxu0 %v6479
    %9499 = vmatprep.subr.bf16.mxu0 %v6488
    %9500 = vmatpush1.bf16.msra.mxu0 %v6487
    %9501 = vmatprep.subr.bf16.mxu0 %v6496
    %9502 = vmatpush1.bf16.msra.mxu0 %v6495
    %9503 = vmatprep.subr.bf16.mxu0 %v6504
    %9504 = vmatpush1.bf16.msra.mxu0 %v6503
    %9505 = vmatprep.subr.bf16.mxu0 %v6512
    %9506 = vmatpush1.bf16.msra.mxu0 %v6511
    %9507 = vmatprep.subr.bf16.mxu0 %v6520
    %9508 = vmatpush1.bf16.msra.mxu0 %v6519
    %9509 = vmatprep.subr.bf16.mxu0 %v6528
    %9510 = vmatpush1.bf16.msra.mxu0 %v6527
    %9511 = vmatprep.mubr.bf16.mxu0 %v198
    %9512 = vmatmul.mubr.bf16.gmra.mrb[0].mxu0 %v197
    %v9513 = vpop.f32.mrb[0].mxu0
    %v9514 = vadd.f32 %v1762, %v9513
    %v9515 = vpop.f32.mrb[0].mxu0
    %v9516 = vadd.f32 %v1766, %v9515
    %v9517 = vpop.f32.mrb[0].mxu0
    %v9518 = vadd.f32 %v1762, %v9517
    %v9519 = vpop.f32.mrb[0].mxu0
    %v9520 = vadd.f32 %v1766, %v9519
    %9521 = vdwg.mxu0
    %9522 = vmatprep.subr.bf16.mxu0 %v6536
    %9523 = vmatpush1.bf16.msra.mxu0 %v6535
    %9524 = vmatprep.subr.bf16.mxu0 %v6544
    %9525 = vmatpush1.bf16.msra.mxu0 %v6543
    %9526 = vmatprep.subr.bf16.mxu0 %v6552
    %9527 = vmatpush1.bf16.msra.mxu0 %v6551
    %9528 = vmatprep.subr.bf16.mxu0 %v6560
    %9529 = vmatpush1.bf16.msra.mxu0 %v6559
    %9530 = vmatprep.subr.bf16.mxu0 %v6568
    %9531 = vmatpush1.bf16.msra.mxu0 %v6567
    %9532 = vmatprep.subr.bf16.mxu0 %v6576
    %9533 = vmatpush1.bf16.msra.mxu0 %v6575
    %9534 = vmatprep.subr.bf16.mxu0 %v6584
    %9535 = vmatpush1.bf16.msra.mxu0 %v6583
    %9536 = vmatprep.subr.bf16.mxu0 %v6592
    %9537 = vmatpush1.bf16.msra.mxu0 %v6591
    %9538 = vmatprep.subr.bf16.mxu0 %v6600
    %9539 = vmatpush1.bf16.msra.mxu0 %v6599
    %9540 = vmatprep.subr.bf16.mxu0 %v6608
    %9541 = vmatpush1.bf16.msra.mxu0 %v6607
    %9542 = vmatprep.subr.bf16.mxu0 %v6616
    %9543 = vmatpush1.bf16.msra.mxu0 %v6615
    %9544 = vmatprep.subr.bf16.mxu0 %v6624
    %9545 = vmatpush1.bf16.msra.mxu0 %v6623
    %9546 = vmatprep.subr.bf16.mxu0 %v6632
    %9547 = vmatpush1.bf16.msra.mxu0 %v6631
    %9548 = vmatprep.subr.bf16.mxu0 %v6640
    %9549 = vmatpush1.bf16.msra.mxu0 %v6639
    %9550 = vmatprep.subr.bf16.mxu0 %v6648
    %9551 = vmatpush1.bf16.msra.mxu0 %v6647
    %9552 = vmatprep.subr.bf16.mxu0 %v6656
    %9553 = vmatpush1.bf16.msra.mxu0 %v6655
    %9554 = vmatprep.mubr.bf16.mxu0 %v200
    %9555 = vmatmul.mubr.bf16.gmra.mrb[0].mxu0 %v199
    %v9556 = vpop.f32.mrb[0].mxu0
    %v9557 = vadd.f32 %v9514, %v9556
    %v9558 = vpop.f32.mrb[0].mxu0
    %v9559 = vadd.f32 %v9516, %v9558
    %v9560 = vpop.f32.mrb[0].mxu0
    %v9561 = vadd.f32 %v9518, %v9560
    %v9562 = vpop.f32.mrb[0].mxu0
    %v9563 = vadd.f32 %v9520, %v9562
    %9564 = vdwg.mxu0
    %9565 = vmatprep.subr.bf16.mxu0 %v6664
    %9566 = vmatpush1.bf16.msra.mxu0 %v6663
    %9567 = vmatprep.subr.bf16.mxu0 %v6672
    %9568 = vmatpush1.bf16.msra.mxu0 %v6671
    %9569 = vmatprep.subr.bf16.mxu0 %v6680
    %9570 = vmatpush1.bf16.msra.mxu0 %v6679
    %9571 = vmatprep.subr.bf16.mxu0 %v6688
    %9572 = vmatpush1.bf16.msra.mxu0 %v6687
    %9573 = vmatprep.subr.bf16.mxu0 %v6696
    %9574 = vmatpush1.bf16.msra.mxu0 %v6695
    %9575 = vmatprep.subr.bf16.mxu0 %v6704
    %9576 = vmatpush1.bf16.msra.mxu0 %v6703
    %9577 = vmatprep.subr.bf16.mxu0 %v6712
    %9578 = vmatpush1.bf16.msra.mxu0 %v6711
    %9579 = vmatprep.subr.bf16.mxu0 %v6720
    %9580 = vmatpush1.bf16.msra.mxu0 %v6719
    %9581 = vmatprep.subr.bf16.mxu0 %v6728
    %9582 = vmatpush1.bf16.msra.mxu0 %v6727
    %9583 = vmatprep.subr.bf16.mxu0 %v6736
    %9584 = vmatpush1.bf16.msra.mxu0 %v6735
    %9585 = vmatprep.subr.bf16.mxu0 %v6744
    %9586 = vmatpush1.bf16.msra.mxu0 %v6743
    %9587 = vmatprep.subr.bf16.mxu0 %v6752
    %9588 = vmatpush1.bf16.msra.mxu0 %v6751
    %9589 = vmatprep.subr.bf16.mxu0 %v6760
    %9590 = vmatpush1.bf16.msra.mxu0 %v6759
    %9591 = vmatprep.subr.bf16.mxu0 %v6768
    %9592 = vmatpush1.bf16.msra.mxu0 %v6767
    %9593 = vmatprep.subr.bf16.mxu0 %v6776
    %9594 = vmatpush1.bf16.msra.mxu0 %v6775
    %9595 = vmatprep.subr.bf16.mxu0 %v6784
    %9596 = vmatpush1.bf16.msra.mxu0 %v6783
    %9597 = vmatprep.mubr.bf16.mxu0 %v202
    %9598 = vmatmul.mubr.bf16.gmra.mrb[0].mxu0 %v201
    %v9599 = vpop.f32.mrb[0].mxu0
    %v9600 = vadd.f32 %v9557, %v9599
    %v9601 = vpop.f32.mrb[0].mxu0
    %v9602 = vadd.f32 %v9559, %v9601
    %v9603 = vpop.f32.mrb[0].mxu0
    %v9604 = vadd.f32 %v9561, %v9603
    %v9605 = vpop.f32.mrb[0].mxu0
    %v9606 = vadd.f32 %v9563, %v9605
    %9607 = vdwg.mxu0
    %9608 = vmatprep.subr.bf16.mxu0 %v6792
    %9609 = vmatpush1.bf16.msra.mxu0 %v6791
    %9610 = vmatprep.subr.bf16.mxu0 %v6800
    %9611 = vmatpush1.bf16.msra.mxu0 %v6799
    %9612 = vmatprep.subr.bf16.mxu0 %v6808
    %9613 = vmatpush1.bf16.msra.mxu0 %v6807
    %9614 = vmatprep.subr.bf16.mxu0 %v6816
    %9615 = vmatpush1.bf16.msra.mxu0 %v6815
    %9616 = vmatprep.subr.bf16.mxu0 %v6824
    %9617 = vmatpush1.bf16.msra.mxu0 %v6823
    %9618 = vmatprep.subr.bf16.mxu0 %v6832
    %9619 = vmatpush1.bf16.msra.mxu0 %v6831
    %9620 = vmatprep.subr.bf16.mxu0 %v6840
    %9621 = vmatpush1.bf16.msra.mxu0 %v6839
    %9622 = vmatprep.subr.bf16.mxu0 %v6848
    %9623 = vmatpush1.bf16.msra.mxu0 %v6847
    %9624 = vmatprep.subr.bf16.mxu0 %v6856
    %9625 = vmatpush1.bf16.msra.mxu0 %v6855
    %9626 = vmatprep.subr.bf16.mxu0 %v6864
    %9627 = vmatpush1.bf16.msra.mxu0 %v6863
    %9628 = vmatprep.subr.bf16.mxu0 %v6872
    %9629 = vmatpush1.bf16.msra.mxu0 %v6871
    %9630 = vmatprep.subr.bf16.mxu0 %v6880
    %9631 = vmatpush1.bf16.msra.mxu0 %v6879
    %9632 = vmatprep.subr.bf16.mxu0 %v6888
    %9633 = vmatpush1.bf16.msra.mxu0 %v6887
    %9634 = vmatprep.subr.bf16.mxu0 %v6896
    %9635 = vmatpush1.bf16.msra.mxu0 %v6895
    %9636 = vmatprep.subr.bf16.mxu0 %v6904
    %9637 = vmatpush1.bf16.msra.mxu0 %v6903
    %9638 = vmatprep.subr.bf16.mxu0 %v6912
    %9639 = vmatpush1.bf16.msra.mxu0 %v6911
    %9640 = vmatprep.mubr.bf16.mxu0 %v204
    %9641 = vmatmul.mubr.bf16.gmra.mrb[0].mxu0 %v203
    %v9642 = vpop.f32.mrb[0].mxu0
    %v9643 = vadd.f32 %v9600, %v9642
    %v9644 = vpop.f32.mrb[0].mxu0
    %v9645 = vadd.f32 %v9602, %v9644
    %v9646 = vpop.f32.mrb[0].mxu0
    %v9647 = vadd.f32 %v9604, %v9646
    %v9648 = vpop.f32.mrb[0].mxu0
    %v9649 = vadd.f32 %v9606, %v9648
    %9650 = vdwg.mxu0
    %9651 = vmatprep.subr.bf16.mxu0 %v6920
    %9652 = vmatpush1.bf16.msra.mxu0 %v6919
    %9653 = vmatprep.subr.bf16.mxu0 %v6928
    %9654 = vmatpush1.bf16.msra.mxu0 %v6927
    %9655 = vmatprep.subr.bf16.mxu0 %v6936
    %9656 = vmatpush1.bf16.msra.mxu0 %v6935
    %9657 = vmatprep.subr.bf16.mxu0 %v6944
    %9658 = vmatpush1.bf16.msra.mxu0 %v6943
    %9659 = vmatprep.subr.bf16.mxu0 %v6952
    %9660 = vmatpush1.bf16.msra.mxu0 %v6951
    %9661 = vmatprep.subr.bf16.mxu0 %v6960
    %9662 = vmatpush1.bf16.msra.mxu0 %v6959
    %9663 = vmatprep.subr.bf16.mxu0 %v6968
    %9664 = vmatpush1.bf16.msra.mxu0 %v6967
    %9665 = vmatprep.subr.bf16.mxu0 %v6976
    %9666 = vmatpush1.bf16.msra.mxu0 %v6975
    %9667 = vmatprep.subr.bf16.mxu0 %v6984
    %9668 = vmatpush1.bf16.msra.mxu0 %v6983
    %9669 = vmatprep.subr.bf16.mxu0 %v6992
    %9670 = vmatpush1.bf16.msra.mxu0 %v6991
    %9671 = vmatprep.subr.bf16.mxu0 %v7000
    %9672 = vmatpush1.bf16.msra.mxu0 %v6999
    %9673 = vmatprep.subr.bf16.mxu0 %v7008
    %9674 = vmatpush1.bf16.msra.mxu0 %v7007
    %9675 = vmatprep.subr.bf16.mxu0 %v7016
    %9676 = vmatpush1.bf16.msra.mxu0 %v7015
    %9677 = vmatprep.subr.bf16.mxu0 %v7024
    %9678 = vmatpush1.bf16.msra.mxu0 %v7023
    %9679 = vmatprep.subr.bf16.mxu0 %v7032
    %9680 = vmatpush1.bf16.msra.mxu0 %v7031
    %9681 = vmatprep.subr.bf16.mxu0 %v7040
    %9682 = vmatpush1.bf16.msra.mxu0 %v7039
    %9683 = vmatprep.mubr.bf16.mxu0 %v206
    %9684 = vmatmul.mubr.bf16.gmra.mrb[0].mxu0 %v205
    %v9685 = vpop.f32.mrb[0].mxu0
    %v9686 = vadd.f32 %v9643, %v9685
    %v9687 = vpop.f32.mrb[0].mxu0
    %v9688 = vadd.f32 %v9645, %v9687
    %v9689 = vpop.f32.mrb[0].mxu0
    %v9690 = vadd.f32 %v9647, %v9689
    %v9691 = vpop.f32.mrb[0].mxu0
    %v9692 = vadd.f32 %v9649, %v9691
    %9693 = vdwg.mxu0
    %9694 = vmatprep.subr.bf16.mxu0 %v7048
    %9695 = vmatpush1.bf16.msra.mxu0 %v7047
    %9696 = vmatprep.subr.bf16.mxu0 %v7056
    %9697 = vmatpush1.bf16.msra.mxu0 %v7055
    %9698 = vmatprep.subr.bf16.mxu0 %v7064
    %9699 = vmatpush1.bf16.msra.mxu0 %v7063
    %9700 = vmatprep.subr.bf16.mxu0 %v7072
    %9701 = vmatpush1.bf16.msra.mxu0 %v7071
    %9702 = vmatprep.subr.bf16.mxu0 %v7080
    %9703 = vmatpush1.bf16.msra.mxu0 %v7079
    %9704 = vmatprep.subr.bf16.mxu0 %v7088
    %9705 = vmatpush1.bf16.msra.mxu0 %v7087
    %9706 = vmatprep.subr.bf16.mxu0 %v7096
    %9707 = vmatpush1.bf16.msra.mxu0 %v7095
    %9708 = vmatprep.subr.bf16.mxu0 %v7104
    %9709 = vmatpush1.bf16.msra.mxu0 %v7103
    %9710 = vmatprep.subr.bf16.mxu0 %v7112
    %9711 = vmatpush1.bf16.msra.mxu0 %v7111
    %9712 = vmatprep.subr.bf16.mxu0 %v7120
    %9713 = vmatpush1.bf16.msra.mxu0 %v7119
    %9714 = vmatprep.subr.bf16.mxu0 %v7128
    %9715 = vmatpush1.bf16.msra.mxu0 %v7127
    %9716 = vmatprep.subr.bf16.mxu0 %v7136
    %9717 = vmatpush1.bf16.msra.mxu0 %v7135
    %9718 = vmatprep.subr.bf16.mxu0 %v7144
    %9719 = vmatpush1.bf16.msra.mxu0 %v7143
    %9720 = vmatprep.subr.bf16.mxu0 %v7152
    %9721 = vmatpush1.bf16.msra.mxu0 %v7151
    %9722 = vmatprep.subr.bf16.mxu0 %v7160
    %9723 = vmatpush1.bf16.msra.mxu0 %v7159
    %9724 = vmatprep.subr.bf16.mxu0 %v7168
    %9725 = vmatpush1.bf16.msra.mxu0 %v7167
    %9726 = vmatprep.mubr.bf16.mxu0 %v208
    %9727 = vmatmul.mubr.bf16.gmra.mrb[0].mxu0 %v207
    %v9728 = vpop.f32.mrb[0].mxu0
    %v9729 = vadd.f32 %v9686, %v9728
    %v9730 = vpop.f32.mrb[0].mxu0
    %v9731 = vadd.f32 %v9688, %v9730
    %v9732 = vpop.f32.mrb[0].mxu0
    %v9733 = vadd.f32 %v9690, %v9732
    %v9734 = vpop.f32.mrb[0].mxu0
    %v9735 = vadd.f32 %v9692, %v9734
    %9736 = vdwg.mxu0
    %9737 = vmatprep.subr.bf16.mxu0 %v7176
    %9738 = vmatpush1.bf16.msra.mxu0 %v7175
    %9739 = vmatprep.subr.bf16.mxu0 %v7184
    %9740 = vmatpush1.bf16.msra.mxu0 %v7183
    %9741 = vmatprep.subr.bf16.mxu0 %v7192
    %9742 = vmatpush1.bf16.msra.mxu0 %v7191
    %9743 = vmatprep.subr.bf16.mxu0 %v7200
    %9744 = vmatpush1.bf16.msra.mxu0 %v7199
    %9745 = vmatprep.subr.bf16.mxu0 %v7208
    %9746 = vmatpush1.bf16.msra.mxu0 %v7207
    %9747 = vmatprep.subr.bf16.mxu0 %v7216
    %9748 = vmatpush1.bf16.msra.mxu0 %v7215
    %9749 = vmatprep.subr.bf16.mxu0 %v7224
    %9750 = vmatpush1.bf16.msra.mxu0 %v7223
    %9751 = vmatprep.subr.bf16.mxu0 %v7232
    %9752 = vmatpush1.bf16.msra.mxu0 %v7231
    %9753 = vmatprep.subr.bf16.mxu0 %v7240
    %9754 = vmatpush1.bf16.msra.mxu0 %v7239
    %9755 = vmatprep.subr.bf16.mxu0 %v7248
    %9756 = vmatpush1.bf16.msra.mxu0 %v7247
    %9757 = vmatprep.subr.bf16.mxu0 %v7256
    %9758 = vmatpush1.bf16.msra.mxu0 %v7255
    %9759 = vmatprep.subr.bf16.mxu0 %v7264
    %9760 = vmatpush1.bf16.msra.mxu0 %v7263
    %9761 = vmatprep.subr.bf16.mxu0 %v7272
    %9762 = vmatpush1.bf16.msra.mxu0 %v7271
    %9763 = vmatprep.subr.bf16.mxu0 %v7280
    %9764 = vmatpush1.bf16.msra.mxu0 %v7279
    %9765 = vmatprep.subr.bf16.mxu0 %v7288
    %9766 = vmatpush1.bf16.msra.mxu0 %v7287
    %9767 = vmatprep.subr.bf16.mxu0 %v7296
    %9768 = vmatpush1.bf16.msra.mxu0 %v7295
    %9769 = vmatprep.mubr.bf16.mxu0 %v210
    %9770 = vmatmul.mubr.bf16.gmra.mrb[0].mxu0 %v209
    %v9771 = vpop.f32.mrb[0].mxu0
    %v9772 = vadd.f32 %v9729, %v9771
    %v9773 = vpop.f32.mrb[0].mxu0
    %v9774 = vadd.f32 %v9731, %v9773
    %v9775 = vpop.f32.mrb[0].mxu0
    %v9776 = vadd.f32 %v9733, %v9775
    %v9777 = vpop.f32.mrb[0].mxu0
    %v9778 = vadd.f32 %v9735, %v9777
    %9779 = vdwg.mxu0
    %9780 = vmatprep.subr.bf16.mxu0 %v7304
    %9781 = vmatpush1.bf16.msra.mxu0 %v7303
    %9782 = vmatprep.subr.bf16.mxu0 %v7312
    %9783 = vmatpush1.bf16.msra.mxu0 %v7311
    %9784 = vmatprep.subr.bf16.mxu0 %v7320
    %9785 = vmatpush1.bf16.msra.mxu0 %v7319
    %9786 = vmatprep.subr.bf16.mxu0 %v7328
    %9787 = vmatpush1.bf16.msra.mxu0 %v7327
    %9788 = vmatprep.subr.bf16.mxu0 %v7336
    %9789 = vmatpush1.bf16.msra.mxu0 %v7335
    %9790 = vmatprep.subr.bf16.mxu0 %v7344
    %9791 = vmatpush1.bf16.msra.mxu0 %v7343
    %9792 = vmatprep.subr.bf16.mxu0 %v7352
    %9793 = vmatpush1.bf16.msra.mxu0 %v7351
    %9794 = vmatprep.subr.bf16.mxu0 %v7360
    %9795 = vmatpush1.bf16.msra.mxu0 %v7359
    %9796 = vmatprep.subr.bf16.mxu0 %v7368
    %9797 = vmatpush1.bf16.msra.mxu0 %v7367
    %9798 = vmatprep.subr.bf16.mxu0 %v7376
    %9799 = vmatpush1.bf16.msra.mxu0 %v7375
    %9800 = vmatprep.subr.bf16.mxu0 %v7384
    %9801 = vmatpush1.bf16.msra.mxu0 %v7383
    %9802 = vmatprep.subr.bf16.mxu0 %v7392
    %9803 = vmatpush1.bf16.msra.mxu0 %v7391
    %9804 = vmatprep.subr.bf16.mxu0 %v7400
    %9805 = vmatpush1.bf16.msra.mxu0 %v7399
    %9806 = vmatprep.subr.bf16.mxu0 %v7408
    %9807 = vmatpush1.bf16.msra.mxu0 %v7407
    %9808 = vmatprep.subr.bf16.mxu0 %v7416
    %9809 = vmatpush1.bf16.msra.mxu0 %v7415
    %9810 = vmatprep.subr.bf16.mxu0 %v7424
    %9811 = vmatpush1.bf16.msra.mxu0 %v7423
    %9812 = vmatprep.mubr.bf16.mxu0 %v212
    %9813 = vmatmul.mubr.bf16.gmra.mrb[0].mxu0 %v211
    %v9814 = vpop.f32.mrb[0].mxu0
    %v9815 = vadd.f32 %v9772, %v9814
    %v9816 = vpop.f32.mrb[0].mxu0
    %v9817 = vadd.f32 %v9774, %v9816
    %v9818 = vpop.f32.mrb[0].mxu0
    %v9819 = vadd.f32 %v9776, %v9818
    %v9820 = vpop.f32.mrb[0].mxu0
    %v9821 = vadd.f32 %v9778, %v9820
    %9822 = vdwg.mxu0
    %9823 = vmatprep.subr.bf16.mxu0 %v7432
    %9824 = vmatpush1.bf16.msra.mxu0 %v7431
    %9825 = vmatprep.subr.bf16.mxu0 %v7440
    %9826 = vmatpush1.bf16.msra.mxu0 %v7439
    %9827 = vmatprep.subr.bf16.mxu0 %v7448
    %9828 = vmatpush1.bf16.msra.mxu0 %v7447
    %9829 = vmatprep.subr.bf16.mxu0 %v7456
    %9830 = vmatpush1.bf16.msra.mxu0 %v7455
    %9831 = vmatprep.subr.bf16.mxu0 %v7464
    %9832 = vmatpush1.bf16.msra.mxu0 %v7463
    %9833 = vmatprep.subr.bf16.mxu0 %v7472
    %9834 = vmatpush1.bf16.msra.mxu0 %v7471
    %9835 = vmatprep.subr.bf16.mxu0 %v7480
    %9836 = vmatpush1.bf16.msra.mxu0 %v7479
    %9837 = vmatprep.subr.bf16.mxu0 %v7488
    %9838 = vmatpush1.bf16.msra.mxu0 %v7487
    %9839 = vmatprep.subr.bf16.mxu0 %v7496
    %9840 = vmatpush1.bf16.msra.mxu0 %v7495
    %9841 = vmatprep.subr.bf16.mxu0 %v7504
    %9842 = vmatpush1.bf16.msra.mxu0 %v7503
    %9843 = vmatprep.subr.bf16.mxu0 %v7512
    %9844 = vmatpush1.bf16.msra.mxu0 %v7511
    %9845 = vmatprep.subr.bf16.mxu0 %v7520
    %9846 = vmatpush1.bf16.msra.mxu0 %v7519
    %9847 = vmatprep.subr.bf16.mxu0 %v7528
    %9848 = vmatpush1.bf16.msra.mxu0 %v7527
    %9849 = vmatprep.subr.bf16.mxu0 %v7536
    %9850 = vmatpush1.bf16.msra.mxu0 %v7535
    %9851 = vmatprep.subr.bf16.mxu0 %v7544
    %9852 = vmatpush1.bf16.msra.mxu0 %v7543
    %9853 = vmatprep.subr.bf16.mxu0 %v7552
    %9854 = vmatpush1.bf16.msra.mxu0 %v7551
    %9855 = vmatprep.mubr.bf16.mxu0 %v214
    %9856 = vmatmul.mubr.bf16.gmra.mrb[0].mxu0 %v213
    %v9857 = vpop.f32.mrb[0].mxu0
    %v9858 = vadd.f32 %v9815, %v9857
    %v9859 = vpop.f32.mrb[0].mxu0
    %v9860 = vadd.f32 %v9817, %v9859
    %v9861 = vpop.f32.mrb[0].mxu0
    %v9862 = vadd.f32 %v9819, %v9861
    %v9863 = vpop.f32.mrb[0].mxu0
    %v9864 = vadd.f32 %v9821, %v9863
    %9865 = vdwg.mxu0
    %9866 = vmatprep.subr.bf16.mxu0 %v7560
    %9867 = vmatpush1.bf16.msra.mxu0 %v7559
    %9868 = vmatprep.subr.bf16.mxu0 %v7568
    %9869 = vmatpush1.bf16.msra.mxu0 %v7567
    %9870 = vmatprep.subr.bf16.mxu0 %v7576
    %9871 = vmatpush1.bf16.msra.mxu0 %v7575
    %9872 = vmatprep.subr.bf16.mxu0 %v7584
    %9873 = vmatpush1.bf16.msra.mxu0 %v7583
    %9874 = vmatprep.subr.bf16.mxu0 %v7592
    %9875 = vmatpush1.bf16.msra.mxu0 %v7591
    %9876 = vmatprep.subr.bf16.mxu0 %v7600
    %9877 = vmatpush1.bf16.msra.mxu0 %v7599
    %9878 = vmatprep.subr.bf16.mxu0 %v7608
    %9879 = vmatpush1.bf16.msra.mxu0 %v7607
    %9880 = vmatprep.subr.bf16.mxu0 %v7616
    %9881 = vmatpush1.bf16.msra.mxu0 %v7615
    %9882 = vmatprep.subr.bf16.mxu0 %v7624
    %9883 = vmatpush1.bf16.msra.mxu0 %v7623
    %9884 = vmatprep.subr.bf16.mxu0 %v7632
    %9885 = vmatpush1.bf16.msra.mxu0 %v7631
    %9886 = vmatprep.subr.bf16.mxu0 %v7640
    %9887 = vmatpush1.bf16.msra.mxu0 %v7639
    %9888 = vmatprep.subr.bf16.mxu0 %v7648
    %9889 = vmatpush1.bf16.msra.mxu0 %v7647
    %9890 = vmatprep.subr.bf16.mxu0 %v7656
    %9891 = vmatpush1.bf16.msra.mxu0 %v7655
    %9892 = vmatprep.subr.bf16.mxu0 %v7664
    %9893 = vmatpush1.bf16.msra.mxu0 %v7663
    %9894 = vmatprep.subr.bf16.mxu0 %v7672
    %9895 = vmatpush1.bf16.msra.mxu0 %v7671
    %9896 = vmatprep.subr.bf16.mxu0 %v7680
    %9897 = vmatpush1.bf16.msra.mxu0 %v7679
    %9898 = vmatprep.mubr.bf16.mxu0 %v216
    %9899 = vmatmul.mubr.bf16.gmra.mrb[0].mxu0 %v215
    %v9900 = vpop.f32.mrb[0].mxu0
    %v9901 = vadd.f32 %v9858, %v9900
    %v9902 = vpop.f32.mrb[0].mxu0
    %v9903 = vadd.f32 %v9860, %v9902
    %v9904 = vpop.f32.mrb[0].mxu0
    %v9905 = vadd.f32 %v9862, %v9904
    %v9906 = vpop.f32.mrb[0].mxu0
    %v9907 = vadd.f32 %v9864, %v9906
    %9908 = vdwg.mxu0
    %9909 = vmatprep.subr.bf16.mxu0 %v7688
    %9910 = vmatpush1.bf16.msra.mxu0 %v7687
    %9911 = vmatprep.subr.bf16.mxu0 %v7696
    %9912 = vmatpush1.bf16.msra.mxu0 %v7695
    %9913 = vmatprep.subr.bf16.mxu0 %v7704
    %9914 = vmatpush1.bf16.msra.mxu0 %v7703
    %9915 = vmatprep.subr.bf16.mxu0 %v7712
    %9916 = vmatpush1.bf16.msra.mxu0 %v7711
    %9917 = vmatprep.subr.bf16.mxu0 %v7720
    %9918 = vmatpush1.bf16.msra.mxu0 %v7719
    %9919 = vmatprep.subr.bf16.mxu0 %v7728
    %9920 = vmatpush1.bf16.msra.mxu0 %v7727
    %9921 = vmatprep.subr.bf16.mxu0 %v7736
    %9922 = vmatpush1.bf16.msra.mxu0 %v7735
    %9923 = vmatprep.subr.bf16.mxu0 %v7744
    %9924 = vmatpush1.bf16.msra.mxu0 %v7743
    %9925 = vmatprep.subr.bf16.mxu0 %v7752
    %9926 = vmatpush1.bf16.msra.mxu0 %v7751
    %9927 = vmatprep.subr.bf16.mxu0 %v7760
    %9928 = vmatpush1.bf16.msra.mxu0 %v7759
    %9929 = vmatprep.subr.bf16.mxu0 %v7768
    %9930 = vmatpush1.bf16.msra.mxu0 %v7767
    %9931 = vmatprep.subr.bf16.mxu0 %v7776
    %9932 = vmatpush1.bf16.msra.mxu0 %v7775
    %9933 = vmatprep.subr.bf16.mxu0 %v7784
    %9934 = vmatpush1.bf16.msra.mxu0 %v7783
    %9935 = vmatprep.subr.bf16.mxu0 %v7792
    %9936 = vmatpush1.bf16.msra.mxu0 %v7791
    %9937 = vmatprep.subr.bf16.mxu0 %v7800
    %9938 = vmatpush1.bf16.msra.mxu0 %v7799
    %9939 = vmatprep.subr.bf16.mxu0 %v7808
    %9940 = vmatpush1.bf16.msra.mxu0 %v7807
    %9941 = vmatprep.mubr.bf16.mxu0 %v218
    %9942 = vmatmul.mubr.bf16.gmra.mrb[0].mxu0 %v217
    %v9943 = vpop.f32.mrb[0].mxu0
    %v9944 = vadd.f32 %v9901, %v9943
    %v9945 = vpop.f32.mrb[0].mxu0
    %v9946 = vadd.f32 %v9903, %v9945
    %v9947 = vpop.f32.mrb[0].mxu0
    %v9948 = vadd.f32 %v9905, %v9947
    %v9949 = vpop.f32.mrb[0].mxu0
    %v9950 = vadd.f32 %v9907, %v9949
    %9951 = vdwg.mxu0
    %9952 = vmatprep.subr.bf16.mxu0 %v7816
    %9953 = vmatpush1.bf16.msra.mxu0 %v7815
    %9954 = vmatprep.subr.bf16.mxu0 %v7824
    %9955 = vmatpush1.bf16.msra.mxu0 %v7823
    %9956 = vmatprep.subr.bf16.mxu0 %v7832
    %9957 = vmatpush1.bf16.msra.mxu0 %v7831
    %9958 = vmatprep.subr.bf16.mxu0 %v7840
    %9959 = vmatpush1.bf16.msra.mxu0 %v7839
    %9960 = vmatprep.subr.bf16.mxu0 %v7848
    %9961 = vmatpush1.bf16.msra.mxu0 %v7847
    %9962 = vmatprep.subr.bf16.mxu0 %v7856
    %9963 = vmatpush1.bf16.msra.mxu0 %v7855
    %9964 = vmatprep.subr.bf16.mxu0 %v7864
    %9965 = vmatpush1.bf16.msra.mxu0 %v7863
    %9966 = vmatprep.subr.bf16.mxu0 %v7872
    %9967 = vmatpush1.bf16.msra.mxu0 %v7871
    %9968 = vmatprep.subr.bf16.mxu0 %v7880
    %9969 = vmatpush1.bf16.msra.mxu0 %v7879
    %9970 = vmatprep.subr.bf16.mxu0 %v7888
    %9971 = vmatpush1.bf16.msra.mxu0 %v7887
    %9972 = vmatprep.subr.bf16.mxu0 %v7896
    %9973 = vmatpush1.bf16.msra.mxu0 %v7895
    %9974 = vmatprep.subr.bf16.mxu0 %v7904
    %9975 = vmatpush1.bf16.msra.mxu0 %v7903
    %9976 = vmatprep.subr.bf16.mxu0 %v7912
    %9977 = vmatpush1.bf16.msra.mxu0 %v7911
    %9978 = vmatprep.subr.bf16.mxu0 %v7920
    %9979 = vmatpush1.bf16.msra.mxu0 %v7919
    %9980 = vmatprep.subr.bf16.mxu0 %v7928
    %9981 = vmatpush1.bf16.msra.mxu0 %v7927
    %9982 = vmatprep.subr.bf16.mxu0 %v7936
    %9983 = vmatpush1.bf16.msra.mxu0 %v7935
    %9984 = vmatprep.mubr.bf16.mxu0 %v220
    %9985 = vmatmul.mubr.bf16.gmra.mrb[0].mxu0 %v219
    %v9986 = vpop.f32.mrb[0].mxu0
    %v9987 = vadd.f32 %v9944, %v9986
    %v9988 = vpop.f32.mrb[0].mxu0
    %v9989 = vadd.f32 %v9946, %v9988
    %v9990 = vpop.f32.mrb[0].mxu0
    %v9991 = vadd.f32 %v9948, %v9990
    %v9992 = vpop.f32.mrb[0].mxu0
    %v9993 = vadd.f32 %v9950, %v9992
    %9994 = vdwg.mxu0
    %9995 = vmatprep.subr.bf16.mxu0 %v6410
    %9996 = vmatpush1.bf16.msra.mxu0 %v6409
    %9997 = vmatprep.subr.bf16.mxu0 %v6418
    %9998 = vmatpush1.bf16.msra.mxu0 %v6417
    %9999 = vmatprep.subr.bf16.mxu0 %v6426
    %10000 = vmatpush1.bf16.msra.mxu0 %v6425
    %10001 = vmatprep.subr.bf16.mxu0 %v6434
    %10002 = vmatpush1.bf16.msra.mxu0 %v6433
    %10003 = vmatprep.subr.bf16.mxu0 %v6442
    %10004 = vmatpush1.bf16.msra.mxu0 %v6441
    %10005 = vmatprep.subr.bf16.mxu0 %v6450
    %10006 = vmatpush1.bf16.msra.mxu0 %v6449
    %10007 = vmatprep.subr.bf16.mxu0 %v6458
    %10008 = vmatpush1.bf16.msra.mxu0 %v6457
    %10009 = vmatprep.subr.bf16.mxu0 %v6466
    %10010 = vmatpush1.bf16.msra.mxu0 %v6465
    %10011 = vmatprep.subr.bf16.mxu0 %v6474
    %10012 = vmatpush1.bf16.msra.mxu0 %v6473
    %10013 = vmatprep.subr.bf16.mxu0 %v6482
    %10014 = vmatpush1.bf16.msra.mxu0 %v6481
    %10015 = vmatprep.subr.bf16.mxu0 %v6490
    %10016 = vmatpush1.bf16.msra.mxu0 %v6489
    %10017 = vmatprep.subr.bf16.mxu0 %v6498
    %10018 = vmatpush1.bf16.msra.mxu0 %v6497
    %10019 = vmatprep.subr.bf16.mxu0 %v6506
    %10020 = vmatpush1.bf16.msra.mxu0 %v6505
    %10021 = vmatprep.subr.bf16.mxu0 %v6514
    %10022 = vmatpush1.bf16.msra.mxu0 %v6513
    %10023 = vmatprep.subr.bf16.mxu0 %v6522
    %10024 = vmatpush1.bf16.msra.mxu0 %v6521
    %10025 = vmatprep.subr.bf16.mxu0 %v6530
    %10026 = vmatpush1.bf16.msra.mxu0 %v6529
    %10027 = vmatprep.mubr.bf16.mxu0 %v198
    %10028 = vmatmul.mubr.bf16.gmra.mrb[0].mxu0 %v197
    %v10029 = vpop.f32.mrb[0].mxu0
    %v10030 = vadd.f32 %v1770, %v10029
    %v10031 = vpop.f32.mrb[0].mxu0
    %v10032 = vadd.f32 %v1774, %v10031
    %v10033 = vpop.f32.mrb[0].mxu0
    %v10034 = vadd.f32 %v1770, %v10033
    %v10035 = vpop.f32.mrb[0].mxu0
    %v10036 = vadd.f32 %v1774, %v10035
    %10037 = vdwg.mxu0
    %10038 = vmatprep.subr.bf16.mxu0 %v6538
    %10039 = vmatpush1.bf16.msra.mxu0 %v6537
    %10040 = vmatprep.subr.bf16.mxu0 %v6546
    %10041 = vmatpush1.bf16.msra.mxu0 %v6545
    %10042 = vmatprep.subr.bf16.mxu0 %v6554
    %10043 = vmatpush1.bf16.msra.mxu0 %v6553
    %10044 = vmatprep.subr.bf16.mxu0 %v6562
    %10045 = vmatpush1.bf16.msra.mxu0 %v6561
    %10046 = vmatprep.subr.bf16.mxu0 %v6570
    %10047 = vmatpush1.bf16.msra.mxu0 %v6569
    %10048 = vmatprep.subr.bf16.mxu0 %v6578
    %10049 = vmatpush1.bf16.msra.mxu0 %v6577
    %10050 = vmatprep.subr.bf16.mxu0 %v6586
    %10051 = vmatpush1.bf16.msra.mxu0 %v6585
    %10052 = vmatprep.subr.bf16.mxu0 %v6594
    %10053 = vmatpush1.bf16.msra.mxu0 %v6593
    %10054 = vmatprep.subr.bf16.mxu0 %v6602
    %10055 = vmatpush1.bf16.msra.mxu0 %v6601
    %10056 = vmatprep.subr.bf16.mxu0 %v6610
    %10057 = vmatpush1.bf16.msra.mxu0 %v6609
    %10058 = vmatprep.subr.bf16.mxu0 %v6618
    %10059 = vmatpush1.bf16.msra.mxu0 %v6617
    %10060 = vmatprep.subr.bf16.mxu0 %v6626
    %10061 = vmatpush1.bf16.msra.mxu0 %v6625
    %10062 = vmatprep.subr.bf16.mxu0 %v6634
    %10063 = vmatpush1.bf16.msra.mxu0 %v6633
    %10064 = vmatprep.subr.bf16.mxu0 %v6642
    %10065 = vmatpush1.bf16.msra.mxu0 %v6641
    %10066 = vmatprep.subr.bf16.mxu0 %v6650
    %10067 = vmatpush1.bf16.msra.mxu0 %v6649
    %10068 = vmatprep.subr.bf16.mxu0 %v6658
    %10069 = vmatpush1.bf16.msra.mxu0 %v6657
    %10070 = vmatprep.mubr.bf16.mxu0 %v200
    %10071 = vmatmul.mubr.bf16.gmra.mrb[0].mxu0 %v199
    %v10072 = vpop.f32.mrb[0].mxu0
    %v10073 = vadd.f32 %v10030, %v10072
    %v10074 = vpop.f32.mrb[0].mxu0
    %v10075 = vadd.f32 %v10032, %v10074
    %v10076 = vpop.f32.mrb[0].mxu0
    %v10077 = vadd.f32 %v10034, %v10076
    %v10078 = vpop.f32.mrb[0].mxu0
    %v10079 = vadd.f32 %v10036, %v10078
    %10080 = vdwg.mxu0
    %10081 = vmatprep.subr.bf16.mxu0 %v6666
    %10082 = vmatpush1.bf16.msra.mxu0 %v6665
    %10083 = vmatprep.subr.bf16.mxu0 %v6674
    %10084 = vmatpush1.bf16.msra.mxu0 %v6673
    %10085 = vmatprep.subr.bf16.mxu0 %v6682
    %10086 = vmatpush1.bf16.msra.mxu0 %v6681
    %10087 = vmatprep.subr.bf16.mxu0 %v6690
    %10088 = vmatpush1.bf16.msra.mxu0 %v6689
    %10089 = vmatprep.subr.bf16.mxu0 %v6698
    %10090 = vmatpush1.bf16.msra.mxu0 %v6697
    %10091 = vmatprep.subr.bf16.mxu0 %v6706
    %10092 = vmatpush1.bf16.msra.mxu0 %v6705
    %10093 = vmatprep.subr.bf16.mxu0 %v6714
    %10094 = vmatpush1.bf16.msra.mxu0 %v6713
    %10095 = vmatprep.subr.bf16.mxu0 %v6722
    %10096 = vmatpush1.bf16.msra.mxu0 %v6721
    %10097 = vmatprep.subr.bf16.mxu0 %v6730
    %10098 = vmatpush1.bf16.msra.mxu0 %v6729
    %10099 = vmatprep.subr.bf16.mxu0 %v6738
    %10100 = vmatpush1.bf16.msra.mxu0 %v6737
    %10101 = vmatprep.subr.bf16.mxu0 %v6746
    %10102 = vmatpush1.bf16.msra.mxu0 %v6745
    %10103 = vmatprep.subr.bf16.mxu0 %v6754
    %10104 = vmatpush1.bf16.msra.mxu0 %v6753
    %10105 = vmatprep.subr.bf16.mxu0 %v6762
    %10106 = vmatpush1.bf16.msra.mxu0 %v6761
    %10107 = vmatprep.subr.bf16.mxu0 %v6770
    %10108 = vmatpush1.bf16.msra.mxu0 %v6769
    %10109 = vmatprep.subr.bf16.mxu0 %v6778
    %10110 = vmatpush1.bf16.msra.mxu0 %v6777
    %10111 = vmatprep.subr.bf16.mxu0 %v6786
    %10112 = vmatpush1.bf16.msra.mxu0 %v6785
    %10113 = vmatprep.mubr.bf16.mxu0 %v202
    %10114 = vmatmul.mubr.bf16.gmra.mrb[0].mxu0 %v201
    %v10115 = vpop.f32.mrb[0].mxu0
    %v10116 = vadd.f32 %v10073, %v10115
    %v10117 = vpop.f32.mrb[0].mxu0
    %v10118 = vadd.f32 %v10075, %v10117
    %v10119 = vpop.f32.mrb[0].mxu0
    %v10120 = vadd.f32 %v10077, %v10119
    %v10121 = vpop.f32.mrb[0].mxu0
    %v10122 = vadd.f32 %v10079, %v10121
    %10123 = vdwg.mxu0
    %10124 = vmatprep.subr.bf16.mxu0 %v6794
    %10125 = vmatpush1.bf16.msra.mxu0 %v6793
    %10126 = vmatprep.subr.bf16.mxu0 %v6802
    %10127 = vmatpush1.bf16.msra.mxu0 %v6801
    %10128 = vmatprep.subr.bf16.mxu0 %v6810
    %10129 = vmatpush1.bf16.msra.mxu0 %v6809
    %10130 = vmatprep.subr.bf16.mxu0 %v6818
    %10131 = vmatpush1.bf16.msra.mxu0 %v6817
    %10132 = vmatprep.subr.bf16.mxu0 %v6826
    %10133 = vmatpush1.bf16.msra.mxu0 %v6825
    %10134 = vmatprep.subr.bf16.mxu0 %v6834
    %10135 = vmatpush1.bf16.msra.mxu0 %v6833
    %10136 = vmatprep.subr.bf16.mxu0 %v6842
    %10137 = vmatpush1.bf16.msra.mxu0 %v6841
    %10138 = vmatprep.subr.bf16.mxu0 %v6850
    %10139 = vmatpush1.bf16.msra.mxu0 %v6849
    %10140 = vmatprep.subr.bf16.mxu0 %v6858
    %10141 = vmatpush1.bf16.msra.mxu0 %v6857
    %10142 = vmatprep.subr.bf16.mxu0 %v6866
    %10143 = vmatpush1.bf16.msra.mxu0 %v6865
    %10144 = vmatprep.subr.bf16.mxu0 %v6874
    %10145 = vmatpush1.bf16.msra.mxu0 %v6873
    %10146 = vmatprep.subr.bf16.mxu0 %v6882
    %10147 = vmatpush1.bf16.msra.mxu0 %v6881
    %10148 = vmatprep.subr.bf16.mxu0 %v6890
    %10149 = vmatpush1.bf16.msra.mxu0 %v6889
    %10150 = vmatprep.subr.bf16.mxu0 %v6898
    %10151 = vmatpush1.bf16.msra.mxu0 %v6897
    %10152 = vmatprep.subr.bf16.mxu0 %v6906
    %10153 = vmatpush1.bf16.msra.mxu0 %v6905
    %10154 = vmatprep.subr.bf16.mxu0 %v6914
    %10155 = vmatpush1.bf16.msra.mxu0 %v6913
    %10156 = vmatprep.mubr.bf16.mxu0 %v204
    %10157 = vmatmul.mubr.bf16.gmra.mrb[0].mxu0 %v203
    %v10158 = vpop.f32.mrb[0].mxu0
    %v10159 = vadd.f32 %v10116, %v10158
    %v10160 = vpop.f32.mrb[0].mxu0
    %v10161 = vadd.f32 %v10118, %v10160
    %v10162 = vpop.f32.mrb[0].mxu0
    %v10163 = vadd.f32 %v10120, %v10162
    %v10164 = vpop.f32.mrb[0].mxu0
    %v10165 = vadd.f32 %v10122, %v10164
    %10166 = vdwg.mxu0
    %10167 = vmatprep.subr.bf16.mxu0 %v6922
    %10168 = vmatpush1.bf16.msra.mxu0 %v6921
    %10169 = vmatprep.subr.bf16.mxu0 %v6930
    %10170 = vmatpush1.bf16.msra.mxu0 %v6929
    %10171 = vmatprep.subr.bf16.mxu0 %v6938
    %10172 = vmatpush1.bf16.msra.mxu0 %v6937
    %10173 = vmatprep.subr.bf16.mxu0 %v6946
    %10174 = vmatpush1.bf16.msra.mxu0 %v6945
    %10175 = vmatprep.subr.bf16.mxu0 %v6954
    %10176 = vmatpush1.bf16.msra.mxu0 %v6953
    %10177 = vmatprep.subr.bf16.mxu0 %v6962
    %10178 = vmatpush1.bf16.msra.mxu0 %v6961
    %10179 = vmatprep.subr.bf16.mxu0 %v6970
    %10180 = vmatpush1.bf16.msra.mxu0 %v6969
    %10181 = vmatprep.subr.bf16.mxu0 %v6978
    %10182 = vmatpush1.bf16.msra.mxu0 %v6977
    %10183 = vmatprep.subr.bf16.mxu0 %v6986
    %10184 = vmatpush1.bf16.msra.mxu0 %v6985
    %10185 = vmatprep.subr.bf16.mxu0 %v6994
    %10186 = vmatpush1.bf16.msra.mxu0 %v6993
    %10187 = vmatprep.subr.bf16.mxu0 %v7002
    %10188 = vmatpush1.bf16.msra.mxu0 %v7001
    %10189 = vmatprep.subr.bf16.mxu0 %v7010
    %10190 = vmatpush1.bf16.msra.mxu0 %v7009
    %10191 = vmatprep.subr.bf16.mxu0 %v7018
    %10192 = vmatpush1.bf16.msra.mxu0 %v7017
    %10193 = vmatprep.subr.bf16.mxu0 %v7026
    %10194 = vmatpush1.bf16.msra.mxu0 %v7025
    %10195 = vmatprep.subr.bf16.mxu0 %v7034
    %10196 = vmatpush1.bf16.msra.mxu0 %v7033
    %10197 = vmatprep.subr.bf16.mxu0 %v7042
    %10198 = vmatpush1.bf16.msra.mxu0 %v7041
    %10199 = vmatprep.mubr.bf16.mxu0 %v206
    %10200 = vmatmul.mubr.bf16.gmra.mrb[0].mxu0 %v205
    %v10201 = vpop.f32.mrb[0].mxu0
    %v10202 = vadd.f32 %v10159, %v10201
    %v10203 = vpop.f32.mrb[0].mxu0
    %v10204 = vadd.f32 %v10161, %v10203
    %v10205 = vpop.f32.mrb[0].mxu0
    %v10206 = vadd.f32 %v10163, %v10205
    %v10207 = vpop.f32.mrb[0].mxu0
    %v10208 = vadd.f32 %v10165, %v10207
    %10209 = vdwg.mxu0
    %10210 = vmatprep.subr.bf16.mxu0 %v7050
    %10211 = vmatpush1.bf16.msra.mxu0 %v7049
    %10212 = vmatprep.subr.bf16.mxu0 %v7058
    %10213 = vmatpush1.bf16.msra.mxu0 %v7057
    %10214 = vmatprep.subr.bf16.mxu0 %v7066
    %10215 = vmatpush1.bf16.msra.mxu0 %v7065
    %10216 = vmatprep.subr.bf16.mxu0 %v7074
    %10217 = vmatpush1.bf16.msra.mxu0 %v7073
    %10218 = vmatprep.subr.bf16.mxu0 %v7082
    %10219 = vmatpush1.bf16.msra.mxu0 %v7081
    %10220 = vmatprep.subr.bf16.mxu0 %v7090
    %10221 = vmatpush1.bf16.msra.mxu0 %v7089
    %10222 = vmatprep.subr.bf16.mxu0 %v7098
    %10223 = vmatpush1.bf16.msra.mxu0 %v7097
    %10224 = vmatprep.subr.bf16.mxu0 %v7106
    %10225 = vmatpush1.bf16.msra.mxu0 %v7105
    %10226 = vmatprep.subr.bf16.mxu0 %v7114
    %10227 = vmatpush1.bf16.msra.mxu0 %v7113
    %10228 = vmatprep.subr.bf16.mxu0 %v7122
    %10229 = vmatpush1.bf16.msra.mxu0 %v7121
    %10230 = vmatprep.subr.bf16.mxu0 %v7130
    %10231 = vmatpush1.bf16.msra.mxu0 %v7129
    %10232 = vmatprep.subr.bf16.mxu0 %v7138
    %10233 = vmatpush1.bf16.msra.mxu0 %v7137
    %10234 = vmatprep.subr.bf16.mxu0 %v7146
    %10235 = vmatpush1.bf16.msra.mxu0 %v7145
    %10236 = vmatprep.subr.bf16.mxu0 %v7154
    %10237 = vmatpush1.bf16.msra.mxu0 %v7153
    %10238 = vmatprep.subr.bf16.mxu0 %v7162
    %10239 = vmatpush1.bf16.msra.mxu0 %v7161
    %10240 = vmatprep.subr.bf16.mxu0 %v7170
    %10241 = vmatpush1.bf16.msra.mxu0 %v7169
    %10242 = vmatprep.mubr.bf16.mxu0 %v208
    %10243 = vmatmul.mubr.bf16.gmra.mrb[0].mxu0 %v207
    %v10244 = vpop.f32.mrb[0].mxu0
    %v10245 = vadd.f32 %v10202, %v10244
    %v10246 = vpop.f32.mrb[0].mxu0
    %v10247 = vadd.f32 %v10204, %v10246
    %v10248 = vpop.f32.mrb[0].mxu0
    %v10249 = vadd.f32 %v10206, %v10248
    %v10250 = vpop.f32.mrb[0].mxu0
    %v10251 = vadd.f32 %v10208, %v10250
    %10252 = vdwg.mxu0
    %10253 = vmatprep.subr.bf16.mxu0 %v7178
    %10254 = vmatpush1.bf16.msra.mxu0 %v7177
    %10255 = vmatprep.subr.bf16.mxu0 %v7186
    %10256 = vmatpush1.bf16.msra.mxu0 %v7185
    %10257 = vmatprep.subr.bf16.mxu0 %v7194
    %10258 = vmatpush1.bf16.msra.mxu0 %v7193
    %10259 = vmatprep.subr.bf16.mxu0 %v7202
    %10260 = vmatpush1.bf16.msra.mxu0 %v7201
    %10261 = vmatprep.subr.bf16.mxu0 %v7210
    %10262 = vmatpush1.bf16.msra.mxu0 %v7209
    %10263 = vmatprep.subr.bf16.mxu0 %v7218
    %10264 = vmatpush1.bf16.msra.mxu0 %v7217
    %10265 = vmatprep.subr.bf16.mxu0 %v7226
    %10266 = vmatpush1.bf16.msra.mxu0 %v7225
    %10267 = vmatprep.subr.bf16.mxu0 %v7234
    %10268 = vmatpush1.bf16.msra.mxu0 %v7233
    %10269 = vmatprep.subr.bf16.mxu0 %v7242
    %10270 = vmatpush1.bf16.msra.mxu0 %v7241
    %10271 = vmatprep.subr.bf16.mxu0 %v7250
    %10272 = vmatpush1.bf16.msra.mxu0 %v7249
    %10273 = vmatprep.subr.bf16.mxu0 %v7258
    %10274 = vmatpush1.bf16.msra.mxu0 %v7257
    %10275 = vmatprep.subr.bf16.mxu0 %v7266
    %10276 = vmatpush1.bf16.msra.mxu0 %v7265
    %10277 = vmatprep.subr.bf16.mxu0 %v7274
    %10278 = vmatpush1.bf16.msra.mxu0 %v7273
    %10279 = vmatprep.subr.bf16.mxu0 %v7282
    %10280 = vmatpush1.bf16.msra.mxu0 %v7281
    %10281 = vmatprep.subr.bf16.mxu0 %v7290
    %10282 = vmatpush1.bf16.msra.mxu0 %v7289
    %10283 = vmatprep.subr.bf16.mxu0 %v7298
    %10284 = vmatpush1.bf16.msra.mxu0 %v7297
    %10285 = vmatprep.mubr.bf16.mxu0 %v210
    %10286 = vmatmul.mubr.bf16.gmra.mrb[0].mxu0 %v209
    %v10287 = vpop.f32.mrb[0].mxu0
    %v10288 = vadd.f32 %v10245, %v10287
    %v10289 = vpop.f32.mrb[0].mxu0
    %v10290 = vadd.f32 %v10247, %v10289
    %v10291 = vpop.f32.mrb[0].mxu0
    %v10292 = vadd.f32 %v10249, %v10291
    %v10293 = vpop.f32.mrb[0].mxu0
    %v10294 = vadd.f32 %v10251, %v10293
    %10295 = vdwg.mxu0
    %10296 = vmatprep.subr.bf16.mxu0 %v7306
    %10297 = vmatpush1.bf16.msra.mxu0 %v7305
    %10298 = vmatprep.subr.bf16.mxu0 %v7314
    %10299 = vmatpush1.bf16.msra.mxu0 %v7313
    %10300 = vmatprep.subr.bf16.mxu0 %v7322
    %10301 = vmatpush1.bf16.msra.mxu0 %v7321
    %10302 = vmatprep.subr.bf16.mxu0 %v7330
    %10303 = vmatpush1.bf16.msra.mxu0 %v7329
    %10304 = vmatprep.subr.bf16.mxu0 %v7338
    %10305 = vmatpush1.bf16.msra.mxu0 %v7337
    %10306 = vmatprep.subr.bf16.mxu0 %v7346
    %10307 = vmatpush1.bf16.msra.mxu0 %v7345
    %10308 = vmatprep.subr.bf16.mxu0 %v7354
    %10309 = vmatpush1.bf16.msra.mxu0 %v7353
    %10310 = vmatprep.subr.bf16.mxu0 %v7362
    %10311 = vmatpush1.bf16.msra.mxu0 %v7361
    %10312 = vmatprep.subr.bf16.mxu0 %v7370
    %10313 = vmatpush1.bf16.msra.mxu0 %v7369
    %10314 = vmatprep.subr.bf16.mxu0 %v7378
    %10315 = vmatpush1.bf16.msra.mxu0 %v7377
    %10316 = vmatprep.subr.bf16.mxu0 %v7386
    %10317 = vmatpush1.bf16.msra.mxu0 %v7385
    %10318 = vmatprep.subr.bf16.mxu0 %v7394
    %10319 = vmatpush1.bf16.msra.mxu0 %v7393
    %10320 = vmatprep.subr.bf16.mxu0 %v7402
    %10321 = vmatpush1.bf16.msra.mxu0 %v7401
    %10322 = vmatprep.subr.bf16.mxu0 %v7410
    %10323 = vmatpush1.bf16.msra.mxu0 %v7409
    %10324 = vmatprep.subr.bf16.mxu0 %v7418
    %10325 = vmatpush1.bf16.msra.mxu0 %v7417
    %10326 = vmatprep.subr.bf16.mxu0 %v7426
    %10327 = vmatpush1.bf16.msra.mxu0 %v7425
    %10328 = vmatprep.mubr.bf16.mxu0 %v212
    %10329 = vmatmul.mubr.bf16.gmra.mrb[0].mxu0 %v211
    %v10330 = vpop.f32.mrb[0].mxu0
    %v10331 = vadd.f32 %v10288, %v10330
    %v10332 = vpop.f32.mrb[0].mxu0
    %v10333 = vadd.f32 %v10290, %v10332
    %v10334 = vpop.f32.mrb[0].mxu0
    %v10335 = vadd.f32 %v10292, %v10334
    %v10336 = vpop.f32.mrb[0].mxu0
    %v10337 = vadd.f32 %v10294, %v10336
    %10338 = vdwg.mxu0
    %10339 = vmatprep.subr.bf16.mxu0 %v7434
    %10340 = vmatpush1.bf16.msra.mxu0 %v7433
    %10341 = vmatprep.subr.bf16.mxu0 %v7442
    %10342 = vmatpush1.bf16.msra.mxu0 %v7441
    %10343 = vmatprep.subr.bf16.mxu0 %v7450
    %10344 = vmatpush1.bf16.msra.mxu0 %v7449
    %10345 = vmatprep.subr.bf16.mxu0 %v7458
    %10346 = vmatpush1.bf16.msra.mxu0 %v7457
    %10347 = vmatprep.subr.bf16.mxu0 %v7466
    %10348 = vmatpush1.bf16.msra.mxu0 %v7465
    %10349 = vmatprep.subr.bf16.mxu0 %v7474
    %10350 = vmatpush1.bf16.msra.mxu0 %v7473
    %10351 = vmatprep.subr.bf16.mxu0 %v7482
    %10352 = vmatpush1.bf16.msra.mxu0 %v7481
    %10353 = vmatprep.subr.bf16.mxu0 %v7490
    %10354 = vmatpush1.bf16.msra.mxu0 %v7489
    %10355 = vmatprep.subr.bf16.mxu0 %v7498
    %10356 = vmatpush1.bf16.msra.mxu0 %v7497
    %10357 = vmatprep.subr.bf16.mxu0 %v7506
    %10358 = vmatpush1.bf16.msra.mxu0 %v7505
    %10359 = vmatprep.subr.bf16.mxu0 %v7514
    %10360 = vmatpush1.bf16.msra.mxu0 %v7513
    %10361 = vmatprep.subr.bf16.mxu0 %v7522
    %10362 = vmatpush1.bf16.msra.mxu0 %v7521
    %10363 = vmatprep.subr.bf16.mxu0 %v7530
    %10364 = vmatpush1.bf16.msra.mxu0 %v7529
    %10365 = vmatprep.subr.bf16.mxu0 %v7538
    %10366 = vmatpush1.bf16.msra.mxu0 %v7537
    %10367 = vmatprep.subr.bf16.mxu0 %v7546
    %10368 = vmatpush1.bf16.msra.mxu0 %v7545
    %10369 = vmatprep.subr.bf16.mxu0 %v7554
    %10370 = vmatpush1.bf16.msra.mxu0 %v7553
    %10371 = vmatprep.mubr.bf16.mxu0 %v214
    %10372 = vmatmul.mubr.bf16.gmra.mrb[0].mxu0 %v213
    %v10373 = vpop.f32.mrb[0].mxu0
    %v10374 = vadd.f32 %v10331, %v10373
    %v10375 = vpop.f32.mrb[0].mxu0
    %v10376 = vadd.f32 %v10333, %v10375
    %v10377 = vpop.f32.mrb[0].mxu0
    %v10378 = vadd.f32 %v10335, %v10377
    %v10379 = vpop.f32.mrb[0].mxu0
    %v10380 = vadd.f32 %v10337, %v10379
    %10381 = vdwg.mxu0
    %10382 = vmatprep.subr.bf16.mxu0 %v7562
    %10383 = vmatpush1.bf16.msra.mxu0 %v7561
    %10384 = vmatprep.subr.bf16.mxu0 %v7570
    %10385 = vmatpush1.bf16.msra.mxu0 %v7569
    %10386 = vmatprep.subr.bf16.mxu0 %v7578
    %10387 = vmatpush1.bf16.msra.mxu0 %v7577
    %10388 = vmatprep.subr.bf16.mxu0 %v7586
    %10389 = vmatpush1.bf16.msra.mxu0 %v7585
    %10390 = vmatprep.subr.bf16.mxu0 %v7594
    %10391 = vmatpush1.bf16.msra.mxu0 %v7593
    %10392 = vmatprep.subr.bf16.mxu0 %v7602
    %10393 = vmatpush1.bf16.msra.mxu0 %v7601
    %10394 = vmatprep.subr.bf16.mxu0 %v7610
    %10395 = vmatpush1.bf16.msra.mxu0 %v7609
    %10396 = vmatprep.subr.bf16.mxu0 %v7618
    %10397 = vmatpush1.bf16.msra.mxu0 %v7617
    %10398 = vmatprep.subr.bf16.mxu0 %v7626
    %10399 = vmatpush1.bf16.msra.mxu0 %v7625
    %10400 = vmatprep.subr.bf16.mxu0 %v7634
    %10401 = vmatpush1.bf16.msra.mxu0 %v7633
    %10402 = vmatprep.subr.bf16.mxu0 %v7642
    %10403 = vmatpush1.bf16.msra.mxu0 %v7641
    %10404 = vmatprep.subr.bf16.mxu0 %v7650
    %10405 = vmatpush1.bf16.msra.mxu0 %v7649
    %10406 = vmatprep.subr.bf16.mxu0 %v7658
    %10407 = vmatpush1.bf16.msra.mxu0 %v7657
    %10408 = vmatprep.subr.bf16.mxu0 %v7666
    %10409 = vmatpush1.bf16.msra.mxu0 %v7665
    %10410 = vmatprep.subr.bf16.mxu0 %v7674
    %10411 = vmatpush1.bf16.msra.mxu0 %v7673
    %10412 = vmatprep.subr.bf16.mxu0 %v7682
    %10413 = vmatpush1.bf16.msra.mxu0 %v7681
    %10414 = vmatprep.mubr.bf16.mxu0 %v216
    %10415 = vmatmul.mubr.bf16.gmra.mrb[0].mxu0 %v215
    %v10416 = vpop.f32.mrb[0].mxu0
    %v10417 = vadd.f32 %v10374, %v10416
    %v10418 = vpop.f32.mrb[0].mxu0
    %v10419 = vadd.f32 %v10376, %v10418
    %v10420 = vpop.f32.mrb[0].mxu0
    %v10421 = vadd.f32 %v10378, %v10420
    %v10422 = vpop.f32.mrb[0].mxu0
    %v10423 = vadd.f32 %v10380, %v10422
    %10424 = vdwg.mxu0
    %10425 = vmatprep.subr.bf16.mxu0 %v7690
    %10426 = vmatpush1.bf16.msra.mxu0 %v7689
    %10427 = vmatprep.subr.bf16.mxu0 %v7698
    %10428 = vmatpush1.bf16.msra.mxu0 %v7697
    %10429 = vmatprep.subr.bf16.mxu0 %v7706
    %10430 = vmatpush1.bf16.msra.mxu0 %v7705
    %10431 = vmatprep.subr.bf16.mxu0 %v7714
    %10432 = vmatpush1.bf16.msra.mxu0 %v7713
    %10433 = vmatprep.subr.bf16.mxu0 %v7722
    %10434 = vmatpush1.bf16.msra.mxu0 %v7721
    %10435 = vmatprep.subr.bf16.mxu0 %v7730
    %10436 = vmatpush1.bf16.msra.mxu0 %v7729
    %10437 = vmatprep.subr.bf16.mxu0 %v7738
    %10438 = vmatpush1.bf16.msra.mxu0 %v7737
    %10439 = vmatprep.subr.bf16.mxu0 %v7746
    %10440 = vmatpush1.bf16.msra.mxu0 %v7745
    %10441 = vmatprep.subr.bf16.mxu0 %v7754
    %10442 = vmatpush1.bf16.msra.mxu0 %v7753
    %10443 = vmatprep.subr.bf16.mxu0 %v7762
    %10444 = vmatpush1.bf16.msra.mxu0 %v7761
    %10445 = vmatprep.subr.bf16.mxu0 %v7770
    %10446 = vmatpush1.bf16.msra.mxu0 %v7769
    %10447 = vmatprep.subr.bf16.mxu0 %v7778
    %10448 = vmatpush1.bf16.msra.mxu0 %v7777
    %10449 = vmatprep.subr.bf16.mxu0 %v7786
    %10450 = vmatpush1.bf16.msra.mxu0 %v7785
    %10451 = vmatprep.subr.bf16.mxu0 %v7794
    %10452 = vmatpush1.bf16.msra.mxu0 %v7793
    %10453 = vmatprep.subr.bf16.mxu0 %v7802
    %10454 = vmatpush1.bf16.msra.mxu0 %v7801
    %10455 = vmatprep.subr.bf16.mxu0 %v7810
    %10456 = vmatpush1.bf16.msra.mxu0 %v7809
    %10457 = vmatprep.mubr.bf16.mxu0 %v218
    %10458 = vmatmul.mubr.bf16.gmra.mrb[0].mxu0 %v217
    %v10459 = vpop.f32.mrb[0].mxu0
    %v10460 = vadd.f32 %v10417, %v10459
    %v10461 = vpop.f32.mrb[0].mxu0
    %v10462 = vadd.f32 %v10419, %v10461
    %v10463 = vpop.f32.mrb[0].mxu0
    %v10464 = vadd.f32 %v10421, %v10463
    %v10465 = vpop.f32.mrb[0].mxu0
    %v10466 = vadd.f32 %v10423, %v10465
    %10467 = vdwg.mxu0
    %10468 = vmatprep.subr.bf16.mxu0 %v7818
    %10469 = vmatpush1.bf16.msra.mxu0 %v7817
    %10470 = vmatprep.subr.bf16.mxu0 %v7826
    %10471 = vmatpush1.bf16.msra.mxu0 %v7825
    %10472 = vmatprep.subr.bf16.mxu0 %v7834
    %10473 = vmatpush1.bf16.msra.mxu0 %v7833
    %10474 = vmatprep.subr.bf16.mxu0 %v7842
    %10475 = vmatpush1.bf16.msra.mxu0 %v7841
    %10476 = vmatprep.subr.bf16.mxu0 %v7850
    %10477 = vmatpush1.bf16.msra.mxu0 %v7849
    %10478 = vmatprep.subr.bf16.mxu0 %v7858
    %10479 = vmatpush1.bf16.msra.mxu0 %v7857
    %10480 = vmatprep.subr.bf16.mxu0 %v7866
    %10481 = vmatpush1.bf16.msra.mxu0 %v7865
    %10482 = vmatprep.subr.bf16.mxu0 %v7874
    %10483 = vmatpush1.bf16.msra.mxu0 %v7873
    %10484 = vmatprep.subr.bf16.mxu0 %v7882
    %10485 = vmatpush1.bf16.msra.mxu0 %v7881
    %10486 = vmatprep.subr.bf16.mxu0 %v7890
    %10487 = vmatpush1.bf16.msra.mxu0 %v7889
    %10488 = vmatprep.subr.bf16.mxu0 %v7898
    %10489 = vmatpush1.bf16.msra.mxu0 %v7897
    %10490 = vmatprep.subr.bf16.mxu0 %v7906
    %10491 = vmatpush1.bf16.msra.mxu0 %v7905
    %10492 = vmatprep.subr.bf16.mxu0 %v7914
    %10493 = vmatpush1.bf16.msra.mxu0 %v7913
    %10494 = vmatprep.subr.bf16.mxu0 %v7922
    %10495 = vmatpush1.bf16.msra.mxu0 %v7921
    %10496 = vmatprep.subr.bf16.mxu0 %v7930
    %10497 = vmatpush1.bf16.msra.mxu0 %v7929
    %10498 = vmatprep.subr.bf16.mxu0 %v7938
    %10499 = vmatpush1.bf16.msra.mxu0 %v7937
    %10500 = vmatprep.mubr.bf16.mxu0 %v220
    %10501 = vmatmul.mubr.bf16.gmra.mrb[0].mxu0 %v219
    %v10502 = vpop.f32.mrb[0].mxu0
    %v10503 = vadd.f32 %v10460, %v10502
    %v10504 = vpop.f32.mrb[0].mxu0
    %v10505 = vadd.f32 %v10462, %v10504
    %v10506 = vpop.f32.mrb[0].mxu0
    %v10507 = vadd.f32 %v10464, %v10506
    %v10508 = vpop.f32.mrb[0].mxu0
    %v10509 = vadd.f32 %v10466, %v10508
    %10510 = vdwg.mxu0
    %10511 = vmatprep.subr.bf16.mxu0 %v6412
    %10512 = vmatpush1.bf16.msra.mxu0 %v6411
    %10513 = vmatprep.subr.bf16.mxu0 %v6420
    %10514 = vmatpush1.bf16.msra.mxu0 %v6419
    %10515 = vmatprep.subr.bf16.mxu0 %v6428
    %10516 = vmatpush1.bf16.msra.mxu0 %v6427
    %10517 = vmatprep.subr.bf16.mxu0 %v6436
    %10518 = vmatpush1.bf16.msra.mxu0 %v6435
    %10519 = vmatprep.subr.bf16.mxu0 %v6444
    %10520 = vmatpush1.bf16.msra.mxu0 %v6443
    %10521 = vmatprep.subr.bf16.mxu0 %v6452
    %10522 = vmatpush1.bf16.msra.mxu0 %v6451
    %10523 = vmatprep.subr.bf16.mxu0 %v6460
    %10524 = vmatpush1.bf16.msra.mxu0 %v6459
    %10525 = vmatprep.subr.bf16.mxu0 %v6468
    %10526 = vmatpush1.bf16.msra.mxu0 %v6467
    %10527 = vmatprep.subr.bf16.mxu0 %v6476
    %10528 = vmatpush1.bf16.msra.mxu0 %v6475
    %10529 = vmatprep.subr.bf16.mxu0 %v6484
    %10530 = vmatpush1.bf16.msra.mxu0 %v6483
    %10531 = vmatprep.subr.bf16.mxu0 %v6492
    %10532 = vmatpush1.bf16.msra.mxu0 %v6491
    %10533 = vmatprep.subr.bf16.mxu0 %v6500
    %10534 = vmatpush1.bf16.msra.mxu0 %v6499
    %10535 = vmatprep.subr.bf16.mxu0 %v6508
    %10536 = vmatpush1.bf16.msra.mxu0 %v6507
    %10537 = vmatprep.subr.bf16.mxu0 %v6516
    %10538 = vmatpush1.bf16.msra.mxu0 %v6515
    %10539 = vmatprep.subr.bf16.mxu0 %v6524
    %10540 = vmatpush1.bf16.msra.mxu0 %v6523
    %10541 = vmatprep.subr.bf16.mxu0 %v6532
    %10542 = vmatpush1.bf16.msra.mxu0 %v6531
    %10543 = vmatprep.mubr.bf16.mxu0 %v198
    %10544 = vmatmul.mubr.bf16.gmra.mrb[0].mxu0 %v197
    %v10545 = vpop.f32.mrb[0].mxu0
    %v10546 = vadd.f32 %v1778, %v10545
    %v10547 = vpop.f32.mrb[0].mxu0
    %v10548 = vadd.f32 %v1782, %v10547
    %v10549 = vpop.f32.mrb[0].mxu0
    %v10550 = vadd.f32 %v1778, %v10549
    %v10551 = vpop.f32.mrb[0].mxu0
    %v10552 = vadd.f32 %v1782, %v10551
    %10553 = vdwg.mxu0
    %10554 = vmatprep.subr.bf16.mxu0 %v6540
    %10555 = vmatpush1.bf16.msra.mxu0 %v6539
    %10556 = vmatprep.subr.bf16.mxu0 %v6548
    %10557 = vmatpush1.bf16.msra.mxu0 %v6547
    %10558 = vmatprep.subr.bf16.mxu0 %v6556
    %10559 = vmatpush1.bf16.msra.mxu0 %v6555
    %10560 = vmatprep.subr.bf16.mxu0 %v6564
    %10561 = vmatpush1.bf16.msra.mxu0 %v6563
    %10562 = vmatprep.subr.bf16.mxu0 %v6572
    %10563 = vmatpush1.bf16.msra.mxu0 %v6571
    %10564 = vmatprep.subr.bf16.mxu0 %v6580
    %10565 = vmatpush1.bf16.msra.mxu0 %v6579
    %10566 = vmatprep.subr.bf16.mxu0 %v6588
    %10567 = vmatpush1.bf16.msra.mxu0 %v6587
    %10568 = vmatprep.subr.bf16.mxu0 %v6596
    %10569 = vmatpush1.bf16.msra.mxu0 %v6595
    %10570 = vmatprep.subr.bf16.mxu0 %v6604
    %10571 = vmatpush1.bf16.msra.mxu0 %v6603
    %10572 = vmatprep.subr.bf16.mxu0 %v6612
    %10573 = vmatpush1.bf16.msra.mxu0 %v6611
    %10574 = vmatprep.subr.bf16.mxu0 %v6620
    %10575 = vmatpush1.bf16.msra.mxu0 %v6619
    %10576 = vmatprep.subr.bf16.mxu0 %v6628
    %10577 = vmatpush1.bf16.msra.mxu0 %v6627
    %10578 = vmatprep.subr.bf16.mxu0 %v6636
    %10579 = vmatpush1.bf16.msra.mxu0 %v6635
    %10580 = vmatprep.subr.bf16.mxu0 %v6644
    %10581 = vmatpush1.bf16.msra.mxu0 %v6643
    %10582 = vmatprep.subr.bf16.mxu0 %v6652
    %10583 = vmatpush1.bf16.msra.mxu0 %v6651
    %10584 = vmatprep.subr.bf16.mxu0 %v6660
    %10585 = vmatpush1.bf16.msra.mxu0 %v6659
    %10586 = vmatprep.mubr.bf16.mxu0 %v200
    %10587 = vmatmul.mubr.bf16.gmra.mrb[0].mxu0 %v199
    %v10588 = vpop.f32.mrb[0].mxu0
    %v10589 = vadd.f32 %v10546, %v10588
    %v10590 = vpop.f32.mrb[0].mxu0
    %v10591 = vadd.f32 %v10548, %v10590
    %v10592 = vpop.f32.mrb[0].mxu0
    %v10593 = vadd.f32 %v10550, %v10592
    %v10594 = vpop.f32.mrb[0].mxu0
    %v10595 = vadd.f32 %v10552, %v10594
    %10596 = vdwg.mxu0
    %10597 = vmatprep.subr.bf16.mxu0 %v6668
    %10598 = vmatpush1.bf16.msra.mxu0 %v6667
    %10599 = vmatprep.subr.bf16.mxu0 %v6676
    %10600 = vmatpush1.bf16.msra.mxu0 %v6675
    %10601 = vmatprep.subr.bf16.mxu0 %v6684
    %10602 = vmatpush1.bf16.msra.mxu0 %v6683
    %10603 = vmatprep.subr.bf16.mxu0 %v6692
    %10604 = vmatpush1.bf16.msra.mxu0 %v6691
    %10605 = vmatprep.subr.bf16.mxu0 %v6700
    %10606 = vmatpush1.bf16.msra.mxu0 %v6699
    %10607 = vmatprep.subr.bf16.mxu0 %v6708
    %10608 = vmatpush1.bf16.msra.mxu0 %v6707
    %10609 = vmatprep.subr.bf16.mxu0 %v6716
    %10610 = vmatpush1.bf16.msra.mxu0 %v6715
    %10611 = vmatprep.subr.bf16.mxu0 %v6724
    %10612 = vmatpush1.bf16.msra.mxu0 %v6723
    %10613 = vmatprep.subr.bf16.mxu0 %v6732
    %10614 = vmatpush1.bf16.msra.mxu0 %v6731
    %10615 = vmatprep.subr.bf16.mxu0 %v6740
    %10616 = vmatpush1.bf16.msra.mxu0 %v6739
    %10617 = vmatprep.subr.bf16.mxu0 %v6748
    %10618 = vmatpush1.bf16.msra.mxu0 %v6747
    %10619 = vmatprep.subr.bf16.mxu0 %v6756
    %10620 = vmatpush1.bf16.msra.mxu0 %v6755
    %10621 = vmatprep.subr.bf16.mxu0 %v6764
    %10622 = vmatpush1.bf16.msra.mxu0 %v6763
    %10623 = vmatprep.subr.bf16.mxu0 %v6772
    %10624 = vmatpush1.bf16.msra.mxu0 %v6771
    %10625 = vmatprep.subr.bf16.mxu0 %v6780
    %10626 = vmatpush1.bf16.msra.mxu0 %v6779
    %10627 = vmatprep.subr.bf16.mxu0 %v6788
    %10628 = vmatpush1.bf16.msra.mxu0 %v6787
    %10629 = vmatprep.mubr.bf16.mxu0 %v202
    %10630 = vmatmul.mubr.bf16.gmra.mrb[0].mxu0 %v201
    %v10631 = vpop.f32.mrb[0].mxu0
    %v10632 = vadd.f32 %v10589, %v10631
    %v10633 = vpop.f32.mrb[0].mxu0
    %v10634 = vadd.f32 %v10591, %v10633
    %v10635 = vpop.f32.mrb[0].mxu0
    %v10636 = vadd.f32 %v10593, %v10635
    %v10637 = vpop.f32.mrb[0].mxu0
    %v10638 = vadd.f32 %v10595, %v10637
    %10639 = vdwg.mxu0
    %10640 = vmatprep.subr.bf16.mxu0 %v6796
    %10641 = vmatpush1.bf16.msra.mxu0 %v6795
    %10642 = vmatprep.subr.bf16.mxu0 %v6804
    %10643 = vmatpush1.bf16.msra.mxu0 %v6803
    %10644 = vmatprep.subr.bf16.mxu0 %v6812
    %10645 = vmatpush1.bf16.msra.mxu0 %v6811
    %10646 = vmatprep.subr.bf16.mxu0 %v6820
    %10647 = vmatpush1.bf16.msra.mxu0 %v6819
    %10648 = vmatprep.subr.bf16.mxu0 %v6828
    %10649 = vmatpush1.bf16.msra.mxu0 %v6827
    %10650 = vmatprep.subr.bf16.mxu0 %v6836
    %10651 = vmatpush1.bf16.msra.mxu0 %v6835
    %10652 = vmatprep.subr.bf16.mxu0 %v6844
    %10653 = vmatpush1.bf16.msra.mxu0 %v6843
    %10654 = vmatprep.subr.bf16.mxu0 %v6852
    %10655 = vmatpush1.bf16.msra.mxu0 %v6851
    %10656 = vmatprep.subr.bf16.mxu0 %v6860
    %10657 = vmatpush1.bf16.msra.mxu0 %v6859
    %10658 = vmatprep.subr.bf16.mxu0 %v6868
    %10659 = vmatpush1.bf16.msra.mxu0 %v6867
    %10660 = vmatprep.subr.bf16.mxu0 %v6876
    %10661 = vmatpush1.bf16.msra.mxu0 %v6875
    %10662 = vmatprep.subr.bf16.mxu0 %v6884
    %10663 = vmatpush1.bf16.msra.mxu0 %v6883
    %10664 = vmatprep.subr.bf16.mxu0 %v6892
    %10665 = vmatpush1.bf16.msra.mxu0 %v6891
    %10666 = vmatprep.subr.bf16.mxu0 %v6900
    %10667 = vmatpush1.bf16.msra.mxu0 %v6899
    %10668 = vmatprep.subr.bf16.mxu0 %v6908
    %10669 = vmatpush1.bf16.msra.mxu0 %v6907
    %10670 = vmatprep.subr.bf16.mxu0 %v6916
    %10671 = vmatpush1.bf16.msra.mxu0 %v6915
    %10672 = vmatprep.mubr.bf16.mxu0 %v204
    %10673 = vmatmul.mubr.bf16.gmra.mrb[0].mxu0 %v203
    %v10674 = vpop.f32.mrb[0].mxu0
    %v10675 = vadd.f32 %v10632, %v10674
    %v10676 = vpop.f32.mrb[0].mxu0
    %v10677 = vadd.f32 %v10634, %v10676
    %v10678 = vpop.f32.mrb[0].mxu0
    %v10679 = vadd.f32 %v10636, %v10678
    %v10680 = vpop.f32.mrb[0].mxu0
    %v10681 = vadd.f32 %v10638, %v10680
    %10682 = vdwg.mxu0
    %10683 = vmatprep.subr.bf16.mxu0 %v6924
    %10684 = vmatpush1.bf16.msra.mxu0 %v6923
    %10685 = vmatprep.subr.bf16.mxu0 %v6932
    %10686 = vmatpush1.bf16.msra.mxu0 %v6931
    %10687 = vmatprep.subr.bf16.mxu0 %v6940
    %10688 = vmatpush1.bf16.msra.mxu0 %v6939
    %10689 = vmatprep.subr.bf16.mxu0 %v6948
    %10690 = vmatpush1.bf16.msra.mxu0 %v6947
    %10691 = vmatprep.subr.bf16.mxu0 %v6956
    %10692 = vmatpush1.bf16.msra.mxu0 %v6955
    %10693 = vmatprep.subr.bf16.mxu0 %v6964
    %10694 = vmatpush1.bf16.msra.mxu0 %v6963
    %10695 = vmatprep.subr.bf16.mxu0 %v6972
    %10696 = vmatpush1.bf16.msra.mxu0 %v6971
    %10697 = vmatprep.subr.bf16.mxu0 %v6980
    %10698 = vmatpush1.bf16.msra.mxu0 %v6979
    %10699 = vmatprep.subr.bf16.mxu0 %v6988
    %10700 = vmatpush1.bf16.msra.mxu0 %v6987
    %10701 = vmatprep.subr.bf16.mxu0 %v6996
    %10702 = vmatpush1.bf16.msra.mxu0 %v6995
    %10703 = vmatprep.subr.bf16.mxu0 %v7004
    %10704 = vmatpush1.bf16.msra.mxu0 %v7003
    %10705 = vmatprep.subr.bf16.mxu0 %v7012
    %10706 = vmatpush1.bf16.msra.mxu0 %v7011
    %10707 = vmatprep.subr.bf16.mxu0 %v7020
    %10708 = vmatpush1.bf16.msra.mxu0 %v7019
    %10709 = vmatprep.subr.bf16.mxu0 %v7028
    %10710 = vmatpush1.bf16.msra.mxu0 %v7027
    %10711 = vmatprep.subr.bf16.mxu0 %v7036
    %10712 = vmatpush1.bf16.msra.mxu0 %v7035
    %10713 = vmatprep.subr.bf16.mxu0 %v7044
    %10714 = vmatpush1.bf16.msra.mxu0 %v7043
    %10715 = vmatprep.mubr.bf16.mxu0 %v206
    %10716 = vmatmul.mubr.bf16.gmra.mrb[0].mxu0 %v205
    %v10717 = vpop.f32.mrb[0].mxu0
    %v10718 = vadd.f32 %v10675, %v10717
    %v10719 = vpop.f32.mrb[0].mxu0
    %v10720 = vadd.f32 %v10677, %v10719
    %v10721 = vpop.f32.mrb[0].mxu0
    %v10722 = vadd.f32 %v10679, %v10721
    %v10723 = vpop.f32.mrb[0].mxu0
    %v10724 = vadd.f32 %v10681, %v10723
    %10725 = vdwg.mxu0
    %10726 = vmatprep.subr.bf16.mxu0 %v7052
    %10727 = vmatpush1.bf16.msra.mxu0 %v7051
    %10728 = vmatprep.subr.bf16.mxu0 %v7060
    %10729 = vmatpush1.bf16.msra.mxu0 %v7059
    %10730 = vmatprep.subr.bf16.mxu0 %v7068
    %10731 = vmatpush1.bf16.msra.mxu0 %v7067
    %10732 = vmatprep.subr.bf16.mxu0 %v7076
    %10733 = vmatpush1.bf16.msra.mxu0 %v7075
    %10734 = vmatprep.subr.bf16.mxu0 %v7084
    %10735 = vmatpush1.bf16.msra.mxu0 %v7083
    %10736 = vmatprep.subr.bf16.mxu0 %v7092
    %10737 = vmatpush1.bf16.msra.mxu0 %v7091
    %10738 = vmatprep.subr.bf16.mxu0 %v7100
    %10739 = vmatpush1.bf16.msra.mxu0 %v7099
    %10740 = vmatprep.subr.bf16.mxu0 %v7108
    %10741 = vmatpush1.bf16.msra.mxu0 %v7107
    %10742 = vmatprep.subr.bf16.mxu0 %v7116
    %10743 = vmatpush1.bf16.msra.mxu0 %v7115
    %10744 = vmatprep.subr.bf16.mxu0 %v7124
    %10745 = vmatpush1.bf16.msra.mxu0 %v7123
    %10746 = vmatprep.subr.bf16.mxu0 %v7132
    %10747 = vmatpush1.bf16.msra.mxu0 %v7131
    %10748 = vmatprep.subr.bf16.mxu0 %v7140
    %10749 = vmatpush1.bf16.msra.mxu0 %v7139
    %10750 = vmatprep.subr.bf16.mxu0 %v7148
    %10751 = vmatpush1.bf16.msra.mxu0 %v7147
    %10752 = vmatprep.subr.bf16.mxu0 %v7156
    %10753 = vmatpush1.bf16.msra.mxu0 %v7155
    %10754 = vmatprep.subr.bf16.mxu0 %v7164
    %10755 = vmatpush1.bf16.msra.mxu0 %v7163
    %10756 = vmatprep.subr.bf16.mxu0 %v7172
    %10757 = vmatpush1.bf16.msra.mxu0 %v7171
    %10758 = vmatprep.mubr.bf16.mxu0 %v208
    %10759 = vmatmul.mubr.bf16.gmra.mrb[0].mxu0 %v207
    %v10760 = vpop.f32.mrb[0].mxu0
    %v10761 = vadd.f32 %v10718, %v10760
    %v10762 = vpop.f32.mrb[0].mxu0
    %v10763 = vadd.f32 %v10720, %v10762
    %v10764 = vpop.f32.mrb[0].mxu0
    %v10765 = vadd.f32 %v10722, %v10764
    %v10766 = vpop.f32.mrb[0].mxu0
    %v10767 = vadd.f32 %v10724, %v10766
    %10768 = vdwg.mxu0
    %10769 = vmatprep.subr.bf16.mxu0 %v7180
    %10770 = vmatpush1.bf16.msra.mxu0 %v7179
    %10771 = vmatprep.subr.bf16.mxu0 %v7188
    %10772 = vmatpush1.bf16.msra.mxu0 %v7187
    %10773 = vmatprep.subr.bf16.mxu0 %v7196
    %10774 = vmatpush1.bf16.msra.mxu0 %v7195
    %10775 = vmatprep.subr.bf16.mxu0 %v7204
    %10776 = vmatpush1.bf16.msra.mxu0 %v7203
    %10777 = vmatprep.subr.bf16.mxu0 %v7212
    %10778 = vmatpush1.bf16.msra.mxu0 %v7211
    %10779 = vmatprep.subr.bf16.mxu0 %v7220
    %10780 = vmatpush1.bf16.msra.mxu0 %v7219
    %10781 = vmatprep.subr.bf16.mxu0 %v7228
    %10782 = vmatpush1.bf16.msra.mxu0 %v7227
    %10783 = vmatprep.subr.bf16.mxu0 %v7236
    %10784 = vmatpush1.bf16.msra.mxu0 %v7235
    %10785 = vmatprep.subr.bf16.mxu0 %v7244
    %10786 = vmatpush1.bf16.msra.mxu0 %v7243
    %10787 = vmatprep.subr.bf16.mxu0 %v7252
    %10788 = vmatpush1.bf16.msra.mxu0 %v7251
    %10789 = vmatprep.subr.bf16.mxu0 %v7260
    %10790 = vmatpush1.bf16.msra.mxu0 %v7259
    %10791 = vmatprep.subr.bf16.mxu0 %v7268
    %10792 = vmatpush1.bf16.msra.mxu0 %v7267
    %10793 = vmatprep.subr.bf16.mxu0 %v7276
    %10794 = vmatpush1.bf16.msra.mxu0 %v7275
    %10795 = vmatprep.subr.bf16.mxu0 %v7284
    %10796 = vmatpush1.bf16.msra.mxu0 %v7283
    %10797 = vmatprep.subr.bf16.mxu0 %v7292
    %10798 = vmatpush1.bf16.msra.mxu0 %v7291
    %10799 = vmatprep.subr.bf16.mxu0 %v7300
    %10800 = vmatpush1.bf16.msra.mxu0 %v7299
    %10801 = vmatprep.mubr.bf16.mxu0 %v210
    %10802 = vmatmul.mubr.bf16.gmra.mrb[0].mxu0 %v209
    %v10803 = vpop.f32.mrb[0].mxu0
    %v10804 = vadd.f32 %v10761, %v10803
    %v10805 = vpop.f32.mrb[0].mxu0
    %v10806 = vadd.f32 %v10763, %v10805
    %v10807 = vpop.f32.mrb[0].mxu0
    %v10808 = vadd.f32 %v10765, %v10807
    %v10809 = vpop.f32.mrb[0].mxu0
    %v10810 = vadd.f32 %v10767, %v10809
    %10811 = vdwg.mxu0
    %10812 = vmatprep.subr.bf16.mxu0 %v7308
    %10813 = vmatpush1.bf16.msra.mxu0 %v7307
    %10814 = vmatprep.subr.bf16.mxu0 %v7316
    %10815 = vmatpush1.bf16.msra.mxu0 %v7315
    %10816 = vmatprep.subr.bf16.mxu0 %v7324
    %10817 = vmatpush1.bf16.msra.mxu0 %v7323
    %10818 = vmatprep.subr.bf16.mxu0 %v7332
    %10819 = vmatpush1.bf16.msra.mxu0 %v7331
    %10820 = vmatprep.subr.bf16.mxu0 %v7340
    %10821 = vmatpush1.bf16.msra.mxu0 %v7339
    %10822 = vmatprep.subr.bf16.mxu0 %v7348
    %10823 = vmatpush1.bf16.msra.mxu0 %v7347
    %10824 = vmatprep.subr.bf16.mxu0 %v7356
    %10825 = vmatpush1.bf16.msra.mxu0 %v7355
    %10826 = vmatprep.subr.bf16.mxu0 %v7364
    %10827 = vmatpush1.bf16.msra.mxu0 %v7363
    %10828 = vmatprep.subr.bf16.mxu0 %v7372
    %10829 = vmatpush1.bf16.msra.mxu0 %v7371
    %10830 = vmatprep.subr.bf16.mxu0 %v7380
    %10831 = vmatpush1.bf16.msra.mxu0 %v7379
    %10832 = vmatprep.subr.bf16.mxu0 %v7388
    %10833 = vmatpush1.bf16.msra.mxu0 %v7387
    %10834 = vmatprep.subr.bf16.mxu0 %v7396
    %10835 = vmatpush1.bf16.msra.mxu0 %v7395
    %10836 = vmatprep.subr.bf16.mxu0 %v7404
    %10837 = vmatpush1.bf16.msra.mxu0 %v7403
    %10838 = vmatprep.subr.bf16.mxu0 %v7412
    %10839 = vmatpush1.bf16.msra.mxu0 %v7411
    %10840 = vmatprep.subr.bf16.mxu0 %v7420
    %10841 = vmatpush1.bf16.msra.mxu0 %v7419
    %10842 = vmatprep.subr.bf16.mxu0 %v7428
    %10843 = vmatpush1.bf16.msra.mxu0 %v7427
    %10844 = vmatprep.mubr.bf16.mxu0 %v212
    %10845 = vmatmul.mubr.bf16.gmra.mrb[0].mxu0 %v211
    %v10846 = vpop.f32.mrb[0].mxu0
    %v10847 = vadd.f32 %v10804, %v10846
    %v10848 = vpop.f32.mrb[0].mxu0
    %v10849 = vadd.f32 %v10806, %v10848
    %v10850 = vpop.f32.mrb[0].mxu0
    %v10851 = vadd.f32 %v10808, %v10850
    %v10852 = vpop.f32.mrb[0].mxu0
    %v10853 = vadd.f32 %v10810, %v10852
    %10854 = vdwg.mxu0
    %10855 = vmatprep.subr.bf16.mxu0 %v7436
    %10856 = vmatpush1.bf16.msra.mxu0 %v7435
    %10857 = vmatprep.subr.bf16.mxu0 %v7444
    %10858 = vmatpush1.bf16.msra.mxu0 %v7443
    %10859 = vmatprep.subr.bf16.mxu0 %v7452
    %10860 = vmatpush1.bf16.msra.mxu0 %v7451
    %10861 = vmatprep.subr.bf16.mxu0 %v7460
    %10862 = vmatpush1.bf16.msra.mxu0 %v7459
    %10863 = vmatprep.subr.bf16.mxu0 %v7468
    %10864 = vmatpush1.bf16.msra.mxu0 %v7467
    %10865 = vmatprep.subr.bf16.mxu0 %v7476
    %10866 = vmatpush1.bf16.msra.mxu0 %v7475
    %10867 = vmatprep.subr.bf16.mxu0 %v7484
    %10868 = vmatpush1.bf16.msra.mxu0 %v7483
    %10869 = vmatprep.subr.bf16.mxu0 %v7492
    %10870 = vmatpush1.bf16.msra.mxu0 %v7491
    %10871 = vmatprep.subr.bf16.mxu0 %v7500
    %10872 = vmatpush1.bf16.msra.mxu0 %v7499
    %10873 = vmatprep.subr.bf16.mxu0 %v7508
    %10874 = vmatpush1.bf16.msra.mxu0 %v7507
    %10875 = vmatprep.subr.bf16.mxu0 %v7516
    %10876 = vmatpush1.bf16.msra.mxu0 %v7515
    %10877 = vmatprep.subr.bf16.mxu0 %v7524
    %10878 = vmatpush1.bf16.msra.mxu0 %v7523
    %10879 = vmatprep.subr.bf16.mxu0 %v7532
    %10880 = vmatpush1.bf16.msra.mxu0 %v7531
    %10881 = vmatprep.subr.bf16.mxu0 %v7540
    %10882 = vmatpush1.bf16.msra.mxu0 %v7539
    %10883 = vmatprep.subr.bf16.mxu0 %v7548
    %10884 = vmatpush1.bf16.msra.mxu0 %v7547
    %10885 = vmatprep.subr.bf16.mxu0 %v7556
    %10886 = vmatpush1.bf16.msra.mxu0 %v7555
    %10887 = vmatprep.mubr.bf16.mxu0 %v214
    %10888 = vmatmul.mubr.bf16.gmra.mrb[0].mxu0 %v213
    %v10889 = vpop.f32.mrb[0].mxu0
    %v10890 = vadd.f32 %v10847, %v10889
    %v10891 = vpop.f32.mrb[0].mxu0
    %v10892 = vadd.f32 %v10849, %v10891
    %v10893 = vpop.f32.mrb[0].mxu0
    %v10894 = vadd.f32 %v10851, %v10893
    %v10895 = vpop.f32.mrb[0].mxu0
    %v10896 = vadd.f32 %v10853, %v10895
    %10897 = vdwg.mxu0
    %10898 = vmatprep.subr.bf16.mxu0 %v7564
    %10899 = vmatpush1.bf16.msra.mxu0 %v7563
    %10900 = vmatprep.subr.bf16.mxu0 %v7572
    %10901 = vmatpush1.bf16.msra.mxu0 %v7571
    %10902 = vmatprep.subr.bf16.mxu0 %v7580
    %10903 = vmatpush1.bf16.msra.mxu0 %v7579
    %10904 = vmatprep.subr.bf16.mxu0 %v7588
    %10905 = vmatpush1.bf16.msra.mxu0 %v7587
    %10906 = vmatprep.subr.bf16.mxu0 %v7596
    %10907 = vmatpush1.bf16.msra.mxu0 %v7595
    %10908 = vmatprep.subr.bf16.mxu0 %v7604
    %10909 = vmatpush1.bf16.msra.mxu0 %v7603
    %10910 = vmatprep.subr.bf16.mxu0 %v7612
    %10911 = vmatpush1.bf16.msra.mxu0 %v7611
    %10912 = vmatprep.subr.bf16.mxu0 %v7620
    %10913 = vmatpush1.bf16.msra.mxu0 %v7619
    %10914 = vmatprep.subr.bf16.mxu0 %v7628
    %10915 = vmatpush1.bf16.msra.mxu0 %v7627
    %10916 = vmatprep.subr.bf16.mxu0 %v7636
    %10917 = vmatpush1.bf16.msra.mxu0 %v7635
    %10918 = vmatprep.subr.bf16.mxu0 %v7644
    %10919 = vmatpush1.bf16.msra.mxu0 %v7643
    %10920 = vmatprep.subr.bf16.mxu0 %v7652
    %10921 = vmatpush1.bf16.msra.mxu0 %v7651
    %10922 = vmatprep.subr.bf16.mxu0 %v7660
    %10923 = vmatpush1.bf16.msra.mxu0 %v7659
    %10924 = vmatprep.subr.bf16.mxu0 %v7668
    %10925 = vmatpush1.bf16.msra.mxu0 %v7667
    %10926 = vmatprep.subr.bf16.mxu0 %v7676
    %10927 = vmatpush1.bf16.msra.mxu0 %v7675
    %10928 = vmatprep.subr.bf16.mxu0 %v7684
    %10929 = vmatpush1.bf16.msra.mxu0 %v7683
    %10930 = vmatprep.mubr.bf16.mxu0 %v216
    %10931 = vmatmul.mubr.bf16.gmra.mrb[0].mxu0 %v215
    %v10932 = vpop.f32.mrb[0].mxu0
    %v10933 = vadd.f32 %v10890, %v10932
    %v10934 = vpop.f32.mrb[0].mxu0
    %v10935 = vadd.f32 %v10892, %v10934
    %v10936 = vpop.f32.mrb[0].mxu0
    %v10937 = vadd.f32 %v10894, %v10936
    %v10938 = vpop.f32.mrb[0].mxu0
    %v10939 = vadd.f32 %v10896, %v10938
    %10940 = vdwg.mxu0
    %10941 = vmatprep.subr.bf16.mxu0 %v7692
    %10942 = vmatpush1.bf16.msra.mxu0 %v7691
    %10943 = vmatprep.subr.bf16.mxu0 %v7700
    %10944 = vmatpush1.bf16.msra.mxu0 %v7699
    %10945 = vmatprep.subr.bf16.mxu0 %v7708
    %10946 = vmatpush1.bf16.msra.mxu0 %v7707
    %10947 = vmatprep.subr.bf16.mxu0 %v7716
    %10948 = vmatpush1.bf16.msra.mxu0 %v7715
    %10949 = vmatprep.subr.bf16.mxu0 %v7724
    %10950 = vmatpush1.bf16.msra.mxu0 %v7723
    %10951 = vmatprep.subr.bf16.mxu0 %v7732
    %10952 = vmatpush1.bf16.msra.mxu0 %v7731
    %10953 = vmatprep.subr.bf16.mxu0 %v7740
    %10954 = vmatpush1.bf16.msra.mxu0 %v7739
    %10955 = vmatprep.subr.bf16.mxu0 %v7748
    %10956 = vmatpush1.bf16.msra.mxu0 %v7747
    %10957 = vmatprep.subr.bf16.mxu0 %v7756
    %10958 = vmatpush1.bf16.msra.mxu0 %v7755
    %10959 = vmatprep.subr.bf16.mxu0 %v7764
    %10960 = vmatpush1.bf16.msra.mxu0 %v7763
    %10961 = vmatprep.subr.bf16.mxu0 %v7772
    %10962 = vmatpush1.bf16.msra.mxu0 %v7771
    %10963 = vmatprep.subr.bf16.mxu0 %v7780
    %10964 = vmatpush1.bf16.msra.mxu0 %v7779
    %10965 = vmatprep.subr.bf16.mxu0 %v7788
    %10966 = vmatpush1.bf16.msra.mxu0 %v7787
    %10967 = vmatprep.subr.bf16.mxu0 %v7796
    %10968 = vmatpush1.bf16.msra.mxu0 %v7795
    %10969 = vmatprep.subr.bf16.mxu0 %v7804
    %10970 = vmatpush1.bf16.msra.mxu0 %v7803
    %10971 = vmatprep.subr.bf16.mxu0 %v7812
    %10972 = vmatpush1.bf16.msra.mxu0 %v7811
    %10973 = vmatprep.mubr.bf16.mxu0 %v218
    %10974 = vmatmul.mubr.bf16.gmra.mrb[0].mxu0 %v217
    %v10975 = vpop.f32.mrb[0].mxu0
    %v10976 = vadd.f32 %v10933, %v10975
    %v10977 = vpop.f32.mrb[0].mxu0
    %v10978 = vadd.f32 %v10935, %v10977
    %v10979 = vpop.f32.mrb[0].mxu0
    %v10980 = vadd.f32 %v10937, %v10979
    %v10981 = vpop.f32.mrb[0].mxu0
    %v10982 = vadd.f32 %v10939, %v10981
    %10983 = vdwg.mxu0
    %10984 = vmatprep.subr.bf16.mxu0 %v7820
    %10985 = vmatpush1.bf16.msra.mxu0 %v7819
    %10986 = vmatprep.subr.bf16.mxu0 %v7828
    %10987 = vmatpush1.bf16.msra.mxu0 %v7827
    %10988 = vmatprep.subr.bf16.mxu0 %v7836
    %10989 = vmatpush1.bf16.msra.mxu0 %v7835
    %10990 = vmatprep.subr.bf16.mxu0 %v7844
    %10991 = vmatpush1.bf16.msra.mxu0 %v7843
    %10992 = vmatprep.subr.bf16.mxu0 %v7852
    %10993 = vmatpush1.bf16.msra.mxu0 %v7851
    %10994 = vmatprep.subr.bf16.mxu0 %v7860
    %10995 = vmatpush1.bf16.msra.mxu0 %v7859
    %10996 = vmatprep.subr.bf16.mxu0 %v7868
    %10997 = vmatpush1.bf16.msra.mxu0 %v7867
    %10998 = vmatprep.subr.bf16.mxu0 %v7876
    %10999 = vmatpush1.bf16.msra.mxu0 %v7875
    %11000 = vmatprep.subr.bf16.mxu0 %v7884
    %11001 = vmatpush1.bf16.msra.mxu0 %v7883
    %11002 = vmatprep.subr.bf16.mxu0 %v7892
    %11003 = vmatpush1.bf16.msra.mxu0 %v7891
    %11004 = vmatprep.subr.bf16.mxu0 %v7900
    %11005 = vmatpush1.bf16.msra.mxu0 %v7899
    %11006 = vmatprep.subr.bf16.mxu0 %v7908
    %11007 = vmatpush1.bf16.msra.mxu0 %v7907
    %11008 = vmatprep.subr.bf16.mxu0 %v7916
    %11009 = vmatpush1.bf16.msra.mxu0 %v7915
    %11010 = vmatprep.subr.bf16.mxu0 %v7924
    %11011 = vmatpush1.bf16.msra.mxu0 %v7923
    %11012 = vmatprep.subr.bf16.mxu0 %v7932
    %11013 = vmatpush1.bf16.msra.mxu0 %v7931
    %11014 = vmatprep.subr.bf16.mxu0 %v7940
    %11015 = vmatpush1.bf16.msra.mxu0 %v7939
    %11016 = vmatprep.mubr.bf16.mxu0 %v220
    %11017 = vmatmul.mubr.bf16.gmra.mrb[0].mxu0 %v219
    %v11018 = vpop.f32.mrb[0].mxu0
    %v11019 = vadd.f32 %v10976, %v11018
    %v11020 = vpop.f32.mrb[0].mxu0
    %v11021 = vadd.f32 %v10978, %v11020
    %v11022 = vpop.f32.mrb[0].mxu0
    %v11023 = vadd.f32 %v10980, %v11022
    %v11024 = vpop.f32.mrb[0].mxu0
    %v11025 = vadd.f32 %v10982, %v11024
    %11026 = vdwg.mxu0
    %11027 = vmatprep.subr.bf16.mxu0 %v6414
    %11028 = vmatpush1.bf16.msra.mxu0 %v6413
    %11029 = vmatprep.subr.bf16.mxu0 %v6422
    %11030 = vmatpush1.bf16.msra.mxu0 %v6421
    %11031 = vmatprep.subr.bf16.mxu0 %v6430
    %11032 = vmatpush1.bf16.msra.mxu0 %v6429
    %11033 = vmatprep.subr.bf16.mxu0 %v6438
    %11034 = vmatpush1.bf16.msra.mxu0 %v6437
    %11035 = vmatprep.subr.bf16.mxu0 %v6446
    %11036 = vmatpush1.bf16.msra.mxu0 %v6445
    %11037 = vmatprep.subr.bf16.mxu0 %v6454
    %11038 = vmatpush1.bf16.msra.mxu0 %v6453
    %11039 = vmatprep.subr.bf16.mxu0 %v6462
    %11040 = vmatpush1.bf16.msra.mxu0 %v6461
    %11041 = vmatprep.subr.bf16.mxu0 %v6470
    %11042 = vmatpush1.bf16.msra.mxu0 %v6469
    %11043 = vmatprep.subr.bf16.mxu0 %v6478
    %11044 = vmatpush1.bf16.msra.mxu0 %v6477
    %11045 = vmatprep.subr.bf16.mxu0 %v6486
    %11046 = vmatpush1.bf16.msra.mxu0 %v6485
    %11047 = vmatprep.subr.bf16.mxu0 %v6494
    %11048 = vmatpush1.bf16.msra.mxu0 %v6493
    %11049 = vmatprep.subr.bf16.mxu0 %v6502
    %11050 = vmatpush1.bf16.msra.mxu0 %v6501
    %11051 = vmatprep.subr.bf16.mxu0 %v6510
    %11052 = vmatpush1.bf16.msra.mxu0 %v6509
    %11053 = vmatprep.subr.bf16.mxu0 %v6518
    %11054 = vmatpush1.bf16.msra.mxu0 %v6517
    %11055 = vmatprep.subr.bf16.mxu0 %v6526
    %11056 = vmatpush1.bf16.msra.mxu0 %v6525
    %11057 = vmatprep.subr.bf16.mxu0 %v6534
    %11058 = vmatpush1.bf16.msra.mxu0 %v6533
    %11059 = vmatprep.mubr.bf16.mxu0 %v198
    %11060 = vmatmul.mubr.bf16.gmra.mrb[0].mxu0 %v197
    %v11061 = vpop.f32.mrb[0].mxu0
    %v11062 = vadd.f32 %v1786, %v11061
    %v11063 = vpop.f32.mrb[0].mxu0
    %v11064 = vadd.f32 %v1790, %v11063
    %v11065 = vpop.f32.mrb[0].mxu0
    %v11066 = vadd.f32 %v1786, %v11065
    %v11067 = vpop.f32.mrb[0].mxu0
    %v11068 = vadd.f32 %v1790, %v11067
    %11069 = vdwg.mxu0
    %11070 = vmatprep.subr.bf16.mxu0 %v6542
    %11071 = vmatpush1.bf16.msra.mxu0 %v6541
    %11072 = vmatprep.subr.bf16.mxu0 %v6550
    %11073 = vmatpush1.bf16.msra.mxu0 %v6549
    %11074 = vmatprep.subr.bf16.mxu0 %v6558
    %11075 = vmatpush1.bf16.msra.mxu0 %v6557
    %11076 = vmatprep.subr.bf16.mxu0 %v6566
    %11077 = vmatpush1.bf16.msra.mxu0 %v6565
    %11078 = vmatprep.subr.bf16.mxu0 %v6574
    %11079 = vmatpush1.bf16.msra.mxu0 %v6573
    %11080 = vmatprep.subr.bf16.mxu0 %v6582
    %11081 = vmatpush1.bf16.msra.mxu0 %v6581
    %11082 = vmatprep.subr.bf16.mxu0 %v6590
    %11083 = vmatpush1.bf16.msra.mxu0 %v6589
    %11084 = vmatprep.subr.bf16.mxu0 %v6598
    %11085 = vmatpush1.bf16.msra.mxu0 %v6597
    %11086 = vmatprep.subr.bf16.mxu0 %v6606
    %11087 = vmatpush1.bf16.msra.mxu0 %v6605
    %11088 = vmatprep.subr.bf16.mxu0 %v6614
    %11089 = vmatpush1.bf16.msra.mxu0 %v6613
    %11090 = vmatprep.subr.bf16.mxu0 %v6622
    %11091 = vmatpush1.bf16.msra.mxu0 %v6621
    %11092 = vmatprep.subr.bf16.mxu0 %v6630
    %11093 = vmatpush1.bf16.msra.mxu0 %v6629
    %11094 = vmatprep.subr.bf16.mxu0 %v6638
    %11095 = vmatpush1.bf16.msra.mxu0 %v6637
    %11096 = vmatprep.subr.bf16.mxu0 %v6646
    %11097 = vmatpush1.bf16.msra.mxu0 %v6645
    %11098 = vmatprep.subr.bf16.mxu0 %v6654
    %11099 = vmatpush1.bf16.msra.mxu0 %v6653
    %11100 = vmatprep.subr.bf16.mxu0 %v6662
    %11101 = vmatpush1.bf16.msra.mxu0 %v6661
    %11102 = vmatprep.mubr.bf16.mxu0 %v200
    %11103 = vmatmul.mubr.bf16.gmra.mrb[0].mxu0 %v199
    %v11104 = vpop.f32.mrb[0].mxu0
    %v11105 = vadd.f32 %v11062, %v11104
    %v11106 = vpop.f32.mrb[0].mxu0
    %v11107 = vadd.f32 %v11064, %v11106
    %v11108 = vpop.f32.mrb[0].mxu0
    %v11109 = vadd.f32 %v11066, %v11108
    %v11110 = vpop.f32.mrb[0].mxu0
    %v11111 = vadd.f32 %v11068, %v11110
    %11112 = vdwg.mxu0
    %11113 = vmatprep.subr.bf16.mxu0 %v6670
    %11114 = vmatpush1.bf16.msra.mxu0 %v6669
    %11115 = vmatprep.subr.bf16.mxu0 %v6678
    %11116 = vmatpush1.bf16.msra.mxu0 %v6677
    %11117 = vmatprep.subr.bf16.mxu0 %v6686
    %11118 = vmatpush1.bf16.msra.mxu0 %v6685
    %11119 = vmatprep.subr.bf16.mxu0 %v6694
    %11120 = vmatpush1.bf16.msra.mxu0 %v6693
    %11121 = vmatprep.subr.bf16.mxu0 %v6702
    %11122 = vmatpush1.bf16.msra.mxu0 %v6701
    %11123 = vmatprep.subr.bf16.mxu0 %v6710
    %11124 = vmatpush1.bf16.msra.mxu0 %v6709
    %11125 = vmatprep.subr.bf16.mxu0 %v6718
    %11126 = vmatpush1.bf16.msra.mxu0 %v6717
    %11127 = vmatprep.subr.bf16.mxu0 %v6726
    %11128 = vmatpush1.bf16.msra.mxu0 %v6725
    %11129 = vmatprep.subr.bf16.mxu0 %v6734
    %11130 = vmatpush1.bf16.msra.mxu0 %v6733
    %11131 = vmatprep.subr.bf16.mxu0 %v6742
    %11132 = vmatpush1.bf16.msra.mxu0 %v6741
    %11133 = vmatprep.subr.bf16.mxu0 %v6750
    %11134 = vmatpush1.bf16.msra.mxu0 %v6749
    %11135 = vmatprep.subr.bf16.mxu0 %v6758
    %11136 = vmatpush1.bf16.msra.mxu0 %v6757
    %11137 = vmatprep.subr.bf16.mxu0 %v6766
    %11138 = vmatpush1.bf16.msra.mxu0 %v6765
    %11139 = vmatprep.subr.bf16.mxu0 %v6774
    %11140 = vmatpush1.bf16.msra.mxu0 %v6773
    %11141 = vmatprep.subr.bf16.mxu0 %v6782
    %11142 = vmatpush1.bf16.msra.mxu0 %v6781
    %11143 = vmatprep.subr.bf16.mxu0 %v6790
    %11144 = vmatpush1.bf16.msra.mxu0 %v6789
    %11145 = vmatprep.mubr.bf16.mxu0 %v202
    %11146 = vmatmul.mubr.bf16.gmra.mrb[0].mxu0 %v201
    %v11147 = vpop.f32.mrb[0].mxu0
    %v11148 = vadd.f32 %v11105, %v11147
    %v11149 = vpop.f32.mrb[0].mxu0
    %v11150 = vadd.f32 %v11107, %v11149
    %v11151 = vpop.f32.mrb[0].mxu0
    %v11152 = vadd.f32 %v11109, %v11151
    %v11153 = vpop.f32.mrb[0].mxu0
    %v11154 = vadd.f32 %v11111, %v11153
    %11155 = vdwg.mxu0
    %11156 = vmatprep.subr.bf16.mxu0 %v6798
    %11157 = vmatpush1.bf16.msra.mxu0 %v6797
    %11158 = vmatprep.subr.bf16.mxu0 %v6806
    %11159 = vmatpush1.bf16.msra.mxu0 %v6805
    %11160 = vmatprep.subr.bf16.mxu0 %v6814
    %11161 = vmatpush1.bf16.msra.mxu0 %v6813
    %11162 = vmatprep.subr.bf16.mxu0 %v6822
    %11163 = vmatpush1.bf16.msra.mxu0 %v6821
    %11164 = vmatprep.subr.bf16.mxu0 %v6830
    %11165 = vmatpush1.bf16.msra.mxu0 %v6829
    %11166 = vmatprep.subr.bf16.mxu0 %v6838
    %11167 = vmatpush1.bf16.msra.mxu0 %v6837
    %11168 = vmatprep.subr.bf16.mxu0 %v6846
    %11169 = vmatpush1.bf16.msra.mxu0 %v6845
    %11170 = vmatprep.subr.bf16.mxu0 %v6854
    %11171 = vmatpush1.bf16.msra.mxu0 %v6853
    %11172 = vmatprep.subr.bf16.mxu0 %v6862
    %11173 = vmatpush1.bf16.msra.mxu0 %v6861
    %11174 = vmatprep.subr.bf16.mxu0 %v6870
    %11175 = vmatpush1.bf16.msra.mxu0 %v6869
    %11176 = vmatprep.subr.bf16.mxu0 %v6878
    %11177 = vmatpush1.bf16.msra.mxu0 %v6877
    %11178 = vmatprep.subr.bf16.mxu0 %v6886
    %11179 = vmatpush1.bf16.msra.mxu0 %v6885
    %11180 = vmatprep.subr.bf16.mxu0 %v6894
    %11181 = vmatpush1.bf16.msra.mxu0 %v6893
    %11182 = vmatprep.subr.bf16.mxu0 %v6902
    %11183 = vmatpush1.bf16.msra.mxu0 %v6901
    %11184 = vmatprep.subr.bf16.mxu0 %v6910
    %11185 = vmatpush1.bf16.msra.mxu0 %v6909
    %11186 = vmatprep.subr.bf16.mxu0 %v6918
    %11187 = vmatpush1.bf16.msra.mxu0 %v6917
    %11188 = vmatprep.mubr.bf16.mxu0 %v204
    %11189 = vmatmul.mubr.bf16.gmra.mrb[0].mxu0 %v203
    %v11190 = vpop.f32.mrb[0].mxu0
    %v11191 = vadd.f32 %v11148, %v11190
    %v11192 = vpop.f32.mrb[0].mxu0
    %v11193 = vadd.f32 %v11150, %v11192
    %v11194 = vpop.f32.mrb[0].mxu0
    %v11195 = vadd.f32 %v11152, %v11194
    %v11196 = vpop.f32.mrb[0].mxu0
    %v11197 = vadd.f32 %v11154, %v11196
    %11198 = vdwg.mxu0
    %11199 = vmatprep.subr.bf16.mxu0 %v6926
    %11200 = vmatpush1.bf16.msra.mxu0 %v6925
    %11201 = vmatprep.subr.bf16.mxu0 %v6934
    %11202 = vmatpush1.bf16.msra.mxu0 %v6933
    %11203 = vmatprep.subr.bf16.mxu0 %v6942
    %11204 = vmatpush1.bf16.msra.mxu0 %v6941
    %11205 = vmatprep.subr.bf16.mxu0 %v6950
    %11206 = vmatpush1.bf16.msra.mxu0 %v6949
    %11207 = vmatprep.subr.bf16.mxu0 %v6958
    %11208 = vmatpush1.bf16.msra.mxu0 %v6957
    %11209 = vmatprep.subr.bf16.mxu0 %v6966
    %11210 = vmatpush1.bf16.msra.mxu0 %v6965
    %11211 = vmatprep.subr.bf16.mxu0 %v6974
    %11212 = vmatpush1.bf16.msra.mxu0 %v6973
    %11213 = vmatprep.subr.bf16.mxu0 %v6982
    %11214 = vmatpush1.bf16.msra.mxu0 %v6981
    %11215 = vmatprep.subr.bf16.mxu0 %v6990
    %11216 = vmatpush1.bf16.msra.mxu0 %v6989
    %11217 = vmatprep.subr.bf16.mxu0 %v6998
    %11218 = vmatpush1.bf16.msra.mxu0 %v6997
    %11219 = vmatprep.subr.bf16.mxu0 %v7006
    %11220 = vmatpush1.bf16.msra.mxu0 %v7005
    %11221 = vmatprep.subr.bf16.mxu0 %v7014
    %11222 = vmatpush1.bf16.msra.mxu0 %v7013
    %11223 = vmatprep.subr.bf16.mxu0 %v7022
    %11224 = vmatpush1.bf16.msra.mxu0 %v7021
    %11225 = vmatprep.subr.bf16.mxu0 %v7030
    %11226 = vmatpush1.bf16.msra.mxu0 %v7029
    %11227 = vmatprep.subr.bf16.mxu0 %v7038
    %11228 = vmatpush1.bf16.msra.mxu0 %v7037
    %11229 = vmatprep.subr.bf16.mxu0 %v7046
    %11230 = vmatpush1.bf16.msra.mxu0 %v7045
    %11231 = vmatprep.mubr.bf16.mxu0 %v206
    %11232 = vmatmul.mubr.bf16.gmra.mrb[0].mxu0 %v205
    %v11233 = vpop.f32.mrb[0].mxu0
    %v11234 = vadd.f32 %v11191, %v11233
    %v11235 = vpop.f32.mrb[0].mxu0
    %v11236 = vadd.f32 %v11193, %v11235
    %v11237 = vpop.f32.mrb[0].mxu0
    %v11238 = vadd.f32 %v11195, %v11237
    %v11239 = vpop.f32.mrb[0].mxu0
    %v11240 = vadd.f32 %v11197, %v11239
    %11241 = vdwg.mxu0
    %11242 = vmatprep.subr.bf16.mxu0 %v7054
    %11243 = vmatpush1.bf16.msra.mxu0 %v7053
    %11244 = vmatprep.subr.bf16.mxu0 %v7062
    %11245 = vmatpush1.bf16.msra.mxu0 %v7061
    %11246 = vmatprep.subr.bf16.mxu0 %v7070
    %11247 = vmatpush1.bf16.msra.mxu0 %v7069
    %11248 = vmatprep.subr.bf16.mxu0 %v7078
    %11249 = vmatpush1.bf16.msra.mxu0 %v7077
    %11250 = vmatprep.subr.bf16.mxu0 %v7086
    %11251 = vmatpush1.bf16.msra.mxu0 %v7085
    %11252 = vmatprep.subr.bf16.mxu0 %v7094
    %11253 = vmatpush1.bf16.msra.mxu0 %v7093
    %11254 = vmatprep.subr.bf16.mxu0 %v7102
    %11255 = vmatpush1.bf16.msra.mxu0 %v7101
    %11256 = vmatprep.subr.bf16.mxu0 %v7110
    %11257 = vmatpush1.bf16.msra.mxu0 %v7109
    %11258 = vmatprep.subr.bf16.mxu0 %v7118
    %11259 = vmatpush1.bf16.msra.mxu0 %v7117
    %11260 = vmatprep.subr.bf16.mxu0 %v7126
    %11261 = vmatpush1.bf16.msra.mxu0 %v7125
    %11262 = vmatprep.subr.bf16.mxu0 %v7134
    %11263 = vmatpush1.bf16.msra.mxu0 %v7133
    %11264 = vmatprep.subr.bf16.mxu0 %v7142
    %11265 = vmatpush1.bf16.msra.mxu0 %v7141
    %11266 = vmatprep.subr.bf16.mxu0 %v7150
    %11267 = vmatpush1.bf16.msra.mxu0 %v7149
    %11268 = vmatprep.subr.bf16.mxu0 %v7158
    %11269 = vmatpush1.bf16.msra.mxu0 %v7157
    %11270 = vmatprep.subr.bf16.mxu0 %v7166
    %11271 = vmatpush1.bf16.msra.mxu0 %v7165
    %11272 = vmatprep.subr.bf16.mxu0 %v7174
    %11273 = vmatpush1.bf16.msra.mxu0 %v7173
    %11274 = vmatprep.mubr.bf16.mxu0 %v208
    %11275 = vmatmul.mubr.bf16.gmra.mrb[0].mxu0 %v207
    %v11276 = vpop.f32.mrb[0].mxu0
    %v11277 = vadd.f32 %v11234, %v11276
    %v11278 = vpop.f32.mrb[0].mxu0
    %v11279 = vadd.f32 %v11236, %v11278
    %v11280 = vpop.f32.mrb[0].mxu0
    %v11281 = vadd.f32 %v11238, %v11280
    %v11282 = vpop.f32.mrb[0].mxu0
    %v11283 = vadd.f32 %v11240, %v11282
    %11284 = vdwg.mxu0
    %11285 = vmatprep.subr.bf16.mxu0 %v7182
    %11286 = vmatpush1.bf16.msra.mxu0 %v7181
    %11287 = vmatprep.subr.bf16.mxu0 %v7190
    %11288 = vmatpush1.bf16.msra.mxu0 %v7189
    %11289 = vmatprep.subr.bf16.mxu0 %v7198
    %11290 = vmatpush1.bf16.msra.mxu0 %v7197
    %11291 = vmatprep.subr.bf16.mxu0 %v7206
    %11292 = vmatpush1.bf16.msra.mxu0 %v7205
    %11293 = vmatprep.subr.bf16.mxu0 %v7214
    %11294 = vmatpush1.bf16.msra.mxu0 %v7213
    %11295 = vmatprep.subr.bf16.mxu0 %v7222
    %11296 = vmatpush1.bf16.msra.mxu0 %v7221
    %11297 = vmatprep.subr.bf16.mxu0 %v7230
    %11298 = vmatpush1.bf16.msra.mxu0 %v7229
    %11299 = vmatprep.subr.bf16.mxu0 %v7238
    %11300 = vmatpush1.bf16.msra.mxu0 %v7237
    %11301 = vmatprep.subr.bf16.mxu0 %v7246
    %11302 = vmatpush1.bf16.msra.mxu0 %v7245
    %11303 = vmatprep.subr.bf16.mxu0 %v7254
    %11304 = vmatpush1.bf16.msra.mxu0 %v7253
    %11305 = vmatprep.subr.bf16.mxu0 %v7262
    %11306 = vmatpush1.bf16.msra.mxu0 %v7261
    %11307 = vmatprep.subr.bf16.mxu0 %v7270
    %11308 = vmatpush1.bf16.msra.mxu0 %v7269
    %11309 = vmatprep.subr.bf16.mxu0 %v7278
    %11310 = vmatpush1.bf16.msra.mxu0 %v7277
    %11311 = vmatprep.subr.bf16.mxu0 %v7286
    %11312 = vmatpush1.bf16.msra.mxu0 %v7285
    %11313 = vmatprep.subr.bf16.mxu0 %v7294
    %11314 = vmatpush1.bf16.msra.mxu0 %v7293
    %11315 = vmatprep.subr.bf16.mxu0 %v7302
    %11316 = vmatpush1.bf16.msra.mxu0 %v7301
    %11317 = vmatprep.mubr.bf16.mxu0 %v210
    %11318 = vmatmul.mubr.bf16.gmra.mrb[0].mxu0 %v209
    %v11319 = vpop.f32.mrb[0].mxu0
    %v11320 = vadd.f32 %v11277, %v11319
    %v11321 = vpop.f32.mrb[0].mxu0
    %v11322 = vadd.f32 %v11279, %v11321
    %v11323 = vpop.f32.mrb[0].mxu0
    %v11324 = vadd.f32 %v11281, %v11323
    %v11325 = vpop.f32.mrb[0].mxu0
    %v11326 = vadd.f32 %v11283, %v11325
    %11327 = vdwg.mxu0
    %11328 = vmatprep.subr.bf16.mxu0 %v7310
    %11329 = vmatpush1.bf16.msra.mxu0 %v7309
    %11330 = vmatprep.subr.bf16.mxu0 %v7318
    %11331 = vmatpush1.bf16.msra.mxu0 %v7317
    %11332 = vmatprep.subr.bf16.mxu0 %v7326
    %11333 = vmatpush1.bf16.msra.mxu0 %v7325
    %11334 = vmatprep.subr.bf16.mxu0 %v7334
    %11335 = vmatpush1.bf16.msra.mxu0 %v7333
    %11336 = vmatprep.subr.bf16.mxu0 %v7342
    %11337 = vmatpush1.bf16.msra.mxu0 %v7341
    %11338 = vmatprep.subr.bf16.mxu0 %v7350
    %11339 = vmatpush1.bf16.msra.mxu0 %v7349
    %11340 = vmatprep.subr.bf16.mxu0 %v7358
    %11341 = vmatpush1.bf16.msra.mxu0 %v7357
    %11342 = vmatprep.subr.bf16.mxu0 %v7366
    %11343 = vmatpush1.bf16.msra.mxu0 %v7365
    %11344 = vmatprep.subr.bf16.mxu0 %v7374
    %11345 = vmatpush1.bf16.msra.mxu0 %v7373
    %11346 = vmatprep.subr.bf16.mxu0 %v7382
    %11347 = vmatpush1.bf16.msra.mxu0 %v7381
    %11348 = vmatprep.subr.bf16.mxu0 %v7390
    %11349 = vmatpush1.bf16.msra.mxu0 %v7389
    %11350 = vmatprep.subr.bf16.mxu0 %v7398
    %11351 = vmatpush1.bf16.msra.mxu0 %v7397
    %11352 = vmatprep.subr.bf16.mxu0 %v7406
    %11353 = vmatpush1.bf16.msra.mxu0 %v7405
    %11354 = vmatprep.subr.bf16.mxu0 %v7414
    %11355 = vmatpush1.bf16.msra.mxu0 %v7413
    %11356 = vmatprep.subr.bf16.mxu0 %v7422
    %11357 = vmatpush1.bf16.msra.mxu0 %v7421
    %11358 = vmatprep.subr.bf16.mxu0 %v7430
    %11359 = vmatpush1.bf16.msra.mxu0 %v7429
    %11360 = vmatprep.mubr.bf16.mxu0 %v212
    %11361 = vmatmul.mubr.bf16.gmra.mrb[0].mxu0 %v211
    %v11362 = vpop.f32.mrb[0].mxu0
    %v11363 = vadd.f32 %v11320, %v11362
    %v11364 = vpop.f32.mrb[0].mxu0
    %v11365 = vadd.f32 %v11322, %v11364
    %v11366 = vpop.f32.mrb[0].mxu0
    %v11367 = vadd.f32 %v11324, %v11366
    %v11368 = vpop.f32.mrb[0].mxu0
    %v11369 = vadd.f32 %v11326, %v11368
    %11370 = vdwg.mxu0
    %11371 = vmatprep.subr.bf16.mxu0 %v7438
    %11372 = vmatpush1.bf16.msra.mxu0 %v7437
    %11373 = vmatprep.subr.bf16.mxu0 %v7446
    %11374 = vmatpush1.bf16.msra.mxu0 %v7445
    %11375 = vmatprep.subr.bf16.mxu0 %v7454
    %11376 = vmatpush1.bf16.msra.mxu0 %v7453
    %11377 = vmatprep.subr.bf16.mxu0 %v7462
    %11378 = vmatpush1.bf16.msra.mxu0 %v7461
    %11379 = vmatprep.subr.bf16.mxu0 %v7470
    %11380 = vmatpush1.bf16.msra.mxu0 %v7469
    %11381 = vmatprep.subr.bf16.mxu0 %v7478
    %11382 = vmatpush1.bf16.msra.mxu0 %v7477
    %11383 = vmatprep.subr.bf16.mxu0 %v7486
    %11384 = vmatpush1.bf16.msra.mxu0 %v7485
    %11385 = vmatprep.subr.bf16.mxu0 %v7494
    %11386 = vmatpush1.bf16.msra.mxu0 %v7493
    %11387 = vmatprep.subr.bf16.mxu0 %v7502
    %11388 = vmatpush1.bf16.msra.mxu0 %v7501
    %11389 = vmatprep.subr.bf16.mxu0 %v7510
    %11390 = vmatpush1.bf16.msra.mxu0 %v7509
    %11391 = vmatprep.subr.bf16.mxu0 %v7518
    %11392 = vmatpush1.bf16.msra.mxu0 %v7517
    %11393 = vmatprep.subr.bf16.mxu0 %v7526
    %11394 = vmatpush1.bf16.msra.mxu0 %v7525
    %11395 = vmatprep.subr.bf16.mxu0 %v7534
    %11396 = vmatpush1.bf16.msra.mxu0 %v7533
    %11397 = vmatprep.subr.bf16.mxu0 %v7542
    %11398 = vmatpush1.bf16.msra.mxu0 %v7541
    %11399 = vmatprep.subr.bf16.mxu0 %v7550
    %11400 = vmatpush1.bf16.msra.mxu0 %v7549
    %11401 = vmatprep.subr.bf16.mxu0 %v7558
    %11402 = vmatpush1.bf16.msra.mxu0 %v7557
    %11403 = vmatprep.mubr.bf16.mxu0 %v214
    %11404 = vmatmul.mubr.bf16.gmra.mrb[0].mxu0 %v213
    %v11405 = vpop.f32.mrb[0].mxu0
    %v11406 = vadd.f32 %v11363, %v11405
    %v11407 = vpop.f32.mrb[0].mxu0
    %v11408 = vadd.f32 %v11365, %v11407
    %v11409 = vpop.f32.mrb[0].mxu0
    %v11410 = vadd.f32 %v11367, %v11409
    %v11411 = vpop.f32.mrb[0].mxu0
    %v11412 = vadd.f32 %v11369, %v11411
    %11413 = vdwg.mxu0
    %11414 = vmatprep.subr.bf16.mxu0 %v7566
    %11415 = vmatpush1.bf16.msra.mxu0 %v7565
    %11416 = vmatprep.subr.bf16.mxu0 %v7574
    %11417 = vmatpush1.bf16.msra.mxu0 %v7573
    %11418 = vmatprep.subr.bf16.mxu0 %v7582
    %11419 = vmatpush1.bf16.msra.mxu0 %v7581
    %11420 = vmatprep.subr.bf16.mxu0 %v7590
    %11421 = vmatpush1.bf16.msra.mxu0 %v7589
    %11422 = vmatprep.subr.bf16.mxu0 %v7598
    %11423 = vmatpush1.bf16.msra.mxu0 %v7597
    %11424 = vmatprep.subr.bf16.mxu0 %v7606
    %11425 = vmatpush1.bf16.msra.mxu0 %v7605
    %11426 = vmatprep.subr.bf16.mxu0 %v7614
    %11427 = vmatpush1.bf16.msra.mxu0 %v7613
    %11428 = vmatprep.subr.bf16.mxu0 %v7622
    %11429 = vmatpush1.bf16.msra.mxu0 %v7621
    %11430 = vmatprep.subr.bf16.mxu0 %v7630
    %11431 = vmatpush1.bf16.msra.mxu0 %v7629
    %11432 = vmatprep.subr.bf16.mxu0 %v7638
    %11433 = vmatpush1.bf16.msra.mxu0 %v7637
    %11434 = vmatprep.subr.bf16.mxu0 %v7646
    %11435 = vmatpush1.bf16.msra.mxu0 %v7645
    %11436 = vmatprep.subr.bf16.mxu0 %v7654
    %11437 = vmatpush1.bf16.msra.mxu0 %v7653
    %11438 = vmatprep.subr.bf16.mxu0 %v7662
    %11439 = vmatpush1.bf16.msra.mxu0 %v7661
    %11440 = vmatprep.subr.bf16.mxu0 %v7670
    %11441 = vmatpush1.bf16.msra.mxu0 %v7669
    %11442 = vmatprep.subr.bf16.mxu0 %v7678
    %11443 = vmatpush1.bf16.msra.mxu0 %v7677
    %11444 = vmatprep.subr.bf16.mxu0 %v7686
    %11445 = vmatpush1.bf16.msra.mxu0 %v7685
    %11446 = vmatprep.mubr.bf16.mxu0 %v216
    %11447 = vmatmul.mubr.bf16.gmra.mrb[0].mxu0 %v215
    %v11448 = vpop.f32.mrb[0].mxu0
    %v11449 = vadd.f32 %v11406, %v11448
    %v11450 = vpop.f32.mrb[0].mxu0
    %v11451 = vadd.f32 %v11408, %v11450
    %v11452 = vpop.f32.mrb[0].mxu0
    %v11453 = vadd.f32 %v11410, %v11452
    %v11454 = vpop.f32.mrb[0].mxu0
    %v11455 = vadd.f32 %v11412, %v11454
    %11456 = vdwg.mxu0
    %11457 = vmatprep.subr.bf16.mxu0 %v7694
    %11458 = vmatpush1.bf16.msra.mxu0 %v7693
    %11459 = vmatprep.subr.bf16.mxu0 %v7702
    %11460 = vmatpush1.bf16.msra.mxu0 %v7701
    %11461 = vmatprep.subr.bf16.mxu0 %v7710
    %11462 = vmatpush1.bf16.msra.mxu0 %v7709
    %11463 = vmatprep.subr.bf16.mxu0 %v7718
    %11464 = vmatpush1.bf16.msra.mxu0 %v7717
    %11465 = vmatprep.subr.bf16.mxu0 %v7726
    %11466 = vmatpush1.bf16.msra.mxu0 %v7725
    %11467 = vmatprep.subr.bf16.mxu0 %v7734
    %11468 = vmatpush1.bf16.msra.mxu0 %v7733
    %11469 = vmatprep.subr.bf16.mxu0 %v7742
    %11470 = vmatpush1.bf16.msra.mxu0 %v7741
    %11471 = vmatprep.subr.bf16.mxu0 %v7750
    %11472 = vmatpush1.bf16.msra.mxu0 %v7749
    %11473 = vmatprep.subr.bf16.mxu0 %v7758
    %11474 = vmatpush1.bf16.msra.mxu0 %v7757
    %11475 = vmatprep.subr.bf16.mxu0 %v7766
    %11476 = vmatpush1.bf16.msra.mxu0 %v7765
    %11477 = vmatprep.subr.bf16.mxu0 %v7774
    %11478 = vmatpush1.bf16.msra.mxu0 %v7773
    %11479 = vmatprep.subr.bf16.mxu0 %v7782
    %11480 = vmatpush1.bf16.msra.mxu0 %v7781
    %11481 = vmatprep.subr.bf16.mxu0 %v7790
    %11482 = vmatpush1.bf16.msra.mxu0 %v7789
    %11483 = vmatprep.subr.bf16.mxu0 %v7798
    %11484 = vmatpush1.bf16.msra.mxu0 %v7797
    %11485 = vmatprep.subr.bf16.mxu0 %v7806
    %11486 = vmatpush1.bf16.msra.mxu0 %v7805
    %11487 = vmatprep.subr.bf16.mxu0 %v7814
    %11488 = vmatpush1.bf16.msra.mxu0 %v7813
    %11489 = vmatprep.mubr.bf16.mxu0 %v218
    %11490 = vmatmul.mubr.bf16.gmra.mrb[0].mxu0 %v217
    %v11491 = vpop.f32.mrb[0].mxu0
    %v11492 = vadd.f32 %v11449, %v11491
    %v11493 = vpop.f32.mrb[0].mxu0
    %v11494 = vadd.f32 %v11451, %v11493
    %v11495 = vpop.f32.mrb[0].mxu0
    %v11496 = vadd.f32 %v11453, %v11495
    %v11497 = vpop.f32.mrb[0].mxu0
    %v11498 = vadd.f32 %v11455, %v11497
    %11499 = vdwg.mxu0
    %11500 = vmatprep.subr.bf16.mxu0 %v7822
    %11501 = vmatpush1.bf16.msra.mxu0 %v7821
    %11502 = vmatprep.subr.bf16.mxu0 %v7830
    %11503 = vmatpush1.bf16.msra.mxu0 %v7829
    %11504 = vmatprep.subr.bf16.mxu0 %v7838
    %11505 = vmatpush1.bf16.msra.mxu0 %v7837
    %11506 = vmatprep.subr.bf16.mxu0 %v7846
    %11507 = vmatpush1.bf16.msra.mxu0 %v7845
    %11508 = vmatprep.subr.bf16.mxu0 %v7854
    %11509 = vmatpush1.bf16.msra.mxu0 %v7853
    %11510 = vmatprep.subr.bf16.mxu0 %v7862
    %11511 = vmatpush1.bf16.msra.mxu0 %v7861
    %11512 = vmatprep.subr.bf16.mxu0 %v7870
    %11513 = vmatpush1.bf16.msra.mxu0 %v7869
    %11514 = vmatprep.subr.bf16.mxu0 %v7878
    %11515 = vmatpush1.bf16.msra.mxu0 %v7877
    %11516 = vmatprep.subr.bf16.mxu0 %v7886
    %11517 = vmatpush1.bf16.msra.mxu0 %v7885
    %11518 = vmatprep.subr.bf16.mxu0 %v7894
    %11519 = vmatpush1.bf16.msra.mxu0 %v7893
    %11520 = vmatprep.subr.bf16.mxu0 %v7902
    %11521 = vmatpush1.bf16.msra.mxu0 %v7901
    %11522 = vmatprep.subr.bf16.mxu0 %v7910
    %11523 = vmatpush1.bf16.msra.mxu0 %v7909
    %11524 = vmatprep.subr.bf16.mxu0 %v7918
    %11525 = vmatpush1.bf16.msra.mxu0 %v7917
    %11526 = vmatprep.subr.bf16.mxu0 %v7926
    %11527 = vmatpush1.bf16.msra.mxu0 %v7925
    %11528 = vmatprep.subr.bf16.mxu0 %v7934
    %11529 = vmatpush1.bf16.msra.mxu0 %v7933
    %11530 = vmatprep.subr.bf16.mxu0 %v7942
    %11531 = vmatpush1.bf16.msra.mxu0 %v7941
    %11532 = vmatprep.mubr.bf16.mxu0 %v220
    %11533 = vmatmul.mubr.bf16.gmra.mrb[0].mxu0 %v219
    %v11534 = vpop.f32.mrb[0].mxu0
    %v11535 = vadd.f32 %v11492, %v11534
    %v11536 = vpop.f32.mrb[0].mxu0
    %v11537 = vadd.f32 %v11494, %v11536
    %v11538 = vpop.f32.mrb[0].mxu0
    %v11539 = vadd.f32 %v11496, %v11538
    %v11540 = vpop.f32.mrb[0].mxu0
    %v11541 = vadd.f32 %v11498, %v11540
    %11542 = vdwg.mxu0
    %v11543 = vpack.c.bf16 %v9991, %v9987
    %v11544 = vpack.c.bf16 %v9993, %v9989
    %v11545 = vpack.c.bf16 %v10507, %v10503
    %v11546 = vpack.c.bf16 %v10509, %v10505
    %v11547 = vpack.c.bf16 %v11023, %v11019
    %v11548 = vpack.c.bf16 %v11025, %v11021
    %v11549 = vpack.c.bf16 %v11539, %v11535
    %v11550 = vpack.c.bf16 %v11541, %v11537
    %v11551 = vmul.bf16 %v11543, 1045249613
    %v11552 = vmul.bf16 %v11544, 1045249613
    %v11553 = vmul.bf16 %v11545, 1045249613
    %v11554 = vmul.bf16 %v11546, 1045249613
    %v11555 = vmul.bf16 %v11547, 1045249613
    %v11556 = vmul.bf16 %v11548, 1045249613
    %v11557 = vmul.bf16 %v11549, 1045249613
    %v11558 = vmul.bf16 %v11550, 1045249613
    %v11559 = vmax.bf16 %v11543, %v11551
    %v11560 = vmax.bf16 %v11544, %v11552
    %v11561 = vmax.bf16 %v11545, %v11553
    %v11562 = vmax.bf16 %v11546, %v11554
    %v11563 = vmax.bf16 %v11547, %v11555
    %v11564 = vmax.bf16 %v11548, %v11556
    %v11565 = vmax.bf16 %v11549, %v11557
    %v11566 = vmax.bf16 %v11550, %v11558
    %v11567 = vlaneseq
    %v11568 = vshrl.u32 %v11567, 7
    %v11569 = vadd.s32 %v11568, 8
    %v11570 = vlaneseq
    %v11571 = vand.u32 %v11570, 127
    %v11572 = vadd.s32 %v11571, 128
    %v11573 = vadd.s32 %v11571, 256
    %v11574 = vadd.s32 %v11571, 384
    %v11575 = vadd.s32 %v11571, 512
    %v11576 = vadd.s32 %v11571, 640
    %v11577 = vadd.s32 %v11571, 768
    %v11578 = vadd.s32 %v11571, 896
    %v11579 = vmul.u32 %v11568, 1024
    %v11580 = vmul.u32 %v11569, 1024
    %v11581 = vadd.s32 %v11579, %v11571
    %v11582 = vadd.s32 %v11579, %v11572
    %v11583 = vadd.s32 %v11579, %v11573
    %v11584 = vadd.s32 %v11579, %v11574
    %v11585 = vadd.s32 %v11579, %v11575
    %v11586 = vadd.s32 %v11579, %v11576
    %v11587 = vadd.s32 %v11579, %v11577
    %v11588 = vadd.s32 %v11579, %v11578
    %v11589 = vadd.s32 %v11580, %v11571
    %v11590 = vadd.s32 %v11580, %v11572
    %v11591 = vadd.s32 %v11580, %v11573
    %v11592 = vadd.s32 %v11580, %v11574
    %v11593 = vadd.s32 %v11580, %v11575
    %v11594 = vadd.s32 %v11580, %v11576
    %v11595 = vadd.s32 %v11580, %v11577
    %v11596 = vadd.s32 %v11580, %v11578
    %v11597 = vstv %s148
    %v11598 = vxor.u32 %v11581, %v11597
    %v11599 = vxor.u32 %v11582, %v11597
    %v11600 = vxor.u32 %v11583, %v11597
    %v11601 = vxor.u32 %v11584, %v11597
    %v11602 = vxor.u32 %v11585, %v11597
    %v11603 = vxor.u32 %v11586, %v11597
    %v11604 = vxor.u32 %v11587, %v11597
    %v11605 = vxor.u32 %v11588, %v11597
    %v11606 = vxor.u32 %v11589, %v11597
    %v11607 = vxor.u32 %v11590, %v11597
    %v11608 = vxor.u32 %v11591, %v11597
    %v11609 = vxor.u32 %v11592, %v11597
    %v11610 = vxor.u32 %v11593, %v11597
    %v11611 = vxor.u32 %v11594, %v11597
    %v11612 = vxor.u32 %v11595, %v11597
    %v11613 = vxor.u32 %v11596, %v11597
    %v11614 = vxor.u32 %v11598, 2246822507
    %v11615 = vxor.u32 %v11599, 2246822507
    %v11616 = vxor.u32 %v11600, 2246822507
    %v11617 = vxor.u32 %v11601, 2246822507
    %v11618 = vxor.u32 %v11602, 2246822507
    %v11619 = vxor.u32 %v11603, 2246822507
    %v11620 = vxor.u32 %v11604, 2246822507
    %v11621 = vxor.u32 %v11605, 2246822507
    %v11622 = vxor.u32 %v11606, 2246822507
    %v11623 = vxor.u32 %v11607, 2246822507
    %v11624 = vxor.u32 %v11608, 2246822507
    %v11625 = vxor.u32 %v11609, 2246822507
    %v11626 = vxor.u32 %v11610, 2246822507
    %v11627 = vxor.u32 %v11611, 2246822507
    %v11628 = vxor.u32 %v11612, 2246822507
    %v11629 = vxor.u32 %v11613, 2246822507
    %v11630 = vshrl.u32 %v11614, 16
    %v11631 = vshrl.u32 %v11615, 16
    %v11632 = vshrl.u32 %v11616, 16
    %v11633 = vshrl.u32 %v11617, 16
    %v11634 = vshrl.u32 %v11618, 16
    %v11635 = vshrl.u32 %v11619, 16
    %v11636 = vshrl.u32 %v11620, 16
    %v11637 = vshrl.u32 %v11621, 16
    %v11638 = vshrl.u32 %v11622, 16
    %v11639 = vshrl.u32 %v11623, 16
    %v11640 = vshrl.u32 %v11624, 16
    %v11641 = vshrl.u32 %v11625, 16
    %v11642 = vshrl.u32 %v11626, 16
    %v11643 = vshrl.u32 %v11627, 16
    %v11644 = vshrl.u32 %v11628, 16
    %v11645 = vshrl.u32 %v11629, 16
    %v11646 = vxor.u32 %v11614, %v11630
    %v11647 = vxor.u32 %v11615, %v11631
    %v11648 = vxor.u32 %v11616, %v11632
    %v11649 = vxor.u32 %v11617, %v11633
    %v11650 = vxor.u32 %v11618, %v11634
    %v11651 = vxor.u32 %v11619, %v11635
    %v11652 = vxor.u32 %v11620, %v11636
    %v11653 = vxor.u32 %v11621, %v11637
    %v11654 = vxor.u32 %v11622, %v11638
    %v11655 = vxor.u32 %v11623, %v11639
    %v11656 = vxor.u32 %v11624, %v11640
    %v11657 = vxor.u32 %v11625, %v11641
    %v11658 = vxor.u32 %v11626, %v11642
    %v11659 = vxor.u32 %v11627, %v11643
    %v11660 = vxor.u32 %v11628, %v11644
    %v11661 = vxor.u32 %v11629, %v11645
    %v11662 = vmul.u32 %v11646, 2146121005
    %v11663 = vmul.u32 %v11647, 2146121005
    %v11664 = vmul.u32 %v11648, 2146121005
    %v11665 = vmul.u32 %v11649, 2146121005
    %v11666 = vmul.u32 %v11650, 2146121005
    %v11667 = vmul.u32 %v11651, 2146121005
    %v11668 = vmul.u32 %v11652, 2146121005
    %v11669 = vmul.u32 %v11653, 2146121005
    %v11670 = vmul.u32 %v11654, 2146121005
    %v11671 = vmul.u32 %v11655, 2146121005
    %v11672 = vmul.u32 %v11656, 2146121005
    %v11673 = vmul.u32 %v11657, 2146121005
    %v11674 = vmul.u32 %v11658, 2146121005
    %v11675 = vmul.u32 %v11659, 2146121005
    %v11676 = vmul.u32 %v11660, 2146121005
    %v11677 = vmul.u32 %v11661, 2146121005
    %v11678 = vshrl.u32 %v11662, 15
    %v11679 = vshrl.u32 %v11663, 15
    %v11680 = vshrl.u32 %v11664, 15
    %v11681 = vshrl.u32 %v11665, 15
    %v11682 = vshrl.u32 %v11666, 15
    %v11683 = vshrl.u32 %v11667, 15
    %v11684 = vshrl.u32 %v11668, 15
    %v11685 = vshrl.u32 %v11669, 15
    %v11686 = vshrl.u32 %v11670, 15
    %v11687 = vshrl.u32 %v11671, 15
    %v11688 = vshrl.u32 %v11672, 15
    %v11689 = vshrl.u32 %v11673, 15
    %v11690 = vshrl.u32 %v11674, 15
    %v11691 = vshrl.u32 %v11675, 15
    %v11692 = vshrl.u32 %v11676, 15
    %v11693 = vshrl.u32 %v11677, 15
    %v11694 = vxor.u32 %v11662, %v11678
    %v11695 = vxor.u32 %v11663, %v11679
    %v11696 = vxor.u32 %v11664, %v11680
    %v11697 = vxor.u32 %v11665, %v11681
    %v11698 = vxor.u32 %v11666, %v11682
    %v11699 = vxor.u32 %v11667, %v11683
    %v11700 = vxor.u32 %v11668, %v11684
    %v11701 = vxor.u32 %v11669, %v11685
    %v11702 = vxor.u32 %v11670, %v11686
    %v11703 = vxor.u32 %v11671, %v11687
    %v11704 = vxor.u32 %v11672, %v11688
    %v11705 = vxor.u32 %v11673, %v11689
    %v11706 = vxor.u32 %v11674, %v11690
    %v11707 = vxor.u32 %v11675, %v11691
    %v11708 = vxor.u32 %v11676, %v11692
    %v11709 = vxor.u32 %v11677, %v11693
    %v11710 = vmul.u32 %v11694, 2221713035
    %v11711 = vmul.u32 %v11695, 2221713035
    %v11712 = vmul.u32 %v11696, 2221713035
    %v11713 = vmul.u32 %v11697, 2221713035
    %v11714 = vmul.u32 %v11698, 2221713035
    %v11715 = vmul.u32 %v11699, 2221713035
    %v11716 = vmul.u32 %v11700, 2221713035
    %v11717 = vmul.u32 %v11701, 2221713035
    %v11718 = vmul.u32 %v11702, 2221713035
    %v11719 = vmul.u32 %v11703, 2221713035
    %v11720 = vmul.u32 %v11704, 2221713035
    %v11721 = vmul.u32 %v11705, 2221713035
    %v11722 = vmul.u32 %v11706, 2221713035
    %v11723 = vmul.u32 %v11707, 2221713035
    %v11724 = vmul.u32 %v11708, 2221713035
    %v11725 = vmul.u32 %v11709, 2221713035
    %v11726 = vshrl.u32 %v11710, 16
    %v11727 = vshrl.u32 %v11711, 16
    %v11728 = vshrl.u32 %v11712, 16
    %v11729 = vshrl.u32 %v11713, 16
    %v11730 = vshrl.u32 %v11714, 16
    %v11731 = vshrl.u32 %v11715, 16
    %v11732 = vshrl.u32 %v11716, 16
    %v11733 = vshrl.u32 %v11717, 16
    %v11734 = vshrl.u32 %v11718, 16
    %v11735 = vshrl.u32 %v11719, 16
    %v11736 = vshrl.u32 %v11720, 16
    %v11737 = vshrl.u32 %v11721, 16
    %v11738 = vshrl.u32 %v11722, 16
    %v11739 = vshrl.u32 %v11723, 16
    %v11740 = vshrl.u32 %v11724, 16
    %v11741 = vshrl.u32 %v11725, 16
    %v11742 = vxor.u32 %v11710, %v11726
    %v11743 = vxor.u32 %v11711, %v11727
    %v11744 = vxor.u32 %v11712, %v11728
    %v11745 = vxor.u32 %v11713, %v11729
    %v11746 = vxor.u32 %v11714, %v11730
    %v11747 = vxor.u32 %v11715, %v11731
    %v11748 = vxor.u32 %v11716, %v11732
    %v11749 = vxor.u32 %v11717, %v11733
    %v11750 = vxor.u32 %v11718, %v11734
    %v11751 = vxor.u32 %v11719, %v11735
    %v11752 = vxor.u32 %v11720, %v11736
    %v11753 = vxor.u32 %v11721, %v11737
    %v11754 = vxor.u32 %v11722, %v11738
    %v11755 = vxor.u32 %v11723, %v11739
    %v11756 = vxor.u32 %v11724, %v11740
    %v11757 = vxor.u32 %v11725, %v11741
    %vm11758 = vcmp.ge.u32.totalorder %v11742, 1288490188
    %vm11759 = vcmp.ge.u32.totalorder %v11743, 1288490188
    %vm11760 = vcmp.ge.u32.totalorder %v11744, 1288490188
    %vm11761 = vcmp.ge.u32.totalorder %v11745, 1288490188
    %vm11762 = vcmp.ge.u32.totalorder %v11746, 1288490188
    %vm11763 = vcmp.ge.u32.totalorder %v11747, 1288490188
    %vm11764 = vcmp.ge.u32.totalorder %v11748, 1288490188
    %vm11765 = vcmp.ge.u32.totalorder %v11749, 1288490188
    %vm11766 = vcmp.ge.u32.totalorder %v11750, 1288490188
    %vm11767 = vcmp.ge.u32.totalorder %v11751, 1288490188
    %vm11768 = vcmp.ge.u32.totalorder %v11752, 1288490188
    %vm11769 = vcmp.ge.u32.totalorder %v11753, 1288490188
    %vm11770 = vcmp.ge.u32.totalorder %v11754, 1288490188
    %vm11771 = vcmp.ge.u32.totalorder %v11755, 1288490188
    %vm11772 = vcmp.ge.u32.totalorder %v11756, 1288490188
    %vm11773 = vcmp.ge.u32.totalorder %v11757, 1288490188
    %v11774 = vmul.bf16 %v11559, 1068974007
    %v11775 = vmul.bf16 %v11560, 1068974007
    %v11776 = vmul.bf16 %v11561, 1068974007
    %v11777 = vmul.bf16 %v11562, 1068974007
    %v11778 = vmul.bf16 %v11563, 1068974007
    %v11779 = vmul.bf16 %v11564, 1068974007
    %v11780 = vmul.bf16 %v11565, 1068974007
    %v11781 = vmul.bf16 %v11566, 1068974007
    %vm11782 = vmpackc.low %vm11766, %vm11758
    %vm11783 = vmpackc.low %vm11767, %vm11759
    %vm11784 = vmpackc.low %vm11768, %vm11760
    %vm11785 = vmpackc.low %vm11769, %vm11761
    %vm11786 = vmpackc.low %vm11770, %vm11762
    %vm11787 = vmpackc.low %vm11771, %vm11763
    %vm11788 = vmpackc.low %vm11772, %vm11764
    %vm11789 = vmpackc.low %vm11773, %vm11765
    %v11790 = vsel %vm11782, %v11774, 0
    %v11791 = vsel %vm11783, %v11775, 0
    %v11792 = vsel %vm11784, %v11776, 0
    %v11793 = vsel %vm11785, %v11777, 0
    %v11794 = vsel %vm11786, %v11778, 0
    %v11795 = vsel %vm11787, %v11779, 0
    %v11796 = vsel %vm11788, %v11780, 0
    %v11797 = vsel %vm11789, %v11781, 0
    %v11798 = vld [vmem:[#allocation8] sm:$0xff]
    %v11799 = vld [vmem:[#allocation8 + $0x8] sm:$0xff]
    %v11800 = vld [vmem:[#allocation8 + $0x10] sm:$0xff]
    %v11801 = vld [vmem:[#allocation8 + $0x18] sm:$0xff]
    %v11802 = vld [vmem:[#allocation8 + $0x20] sm:$0xff]
    %v11803 = vld [vmem:[#allocation8 + $0x28] sm:$0xff]
    %v11804 = vld [vmem:[#allocation8 + $0x30] sm:$0xff]
    %v11805 = vld [vmem:[#allocation8 + $0x38] sm:$0xff]
    %v11806 = vld [vmem:[#allocation8 + $0x40] sm:$0xff]
    %v11807 = vld [vmem:[#allocation8 + $0x48] sm:$0xff]
    %v11808 = vld [vmem:[#allocation8 + $0x50] sm:$0xff]
    %v11809 = vld [vmem:[#allocation8 + $0x58] sm:$0xff]
    %v11810 = vld [vmem:[#allocation8 + $0x60] sm:$0xff]
    %v11811 = vld [vmem:[#allocation8 + $0x68] sm:$0xff]
    %v11812 = vld [vmem:[#allocation8 + $0x70] sm:$0xff]
    %v11813 = vld [vmem:[#allocation8 + $0x78] sm:$0xff]
    %v11814 = vld [vmem:[#allocation8 + $0x80] sm:$0xff]
    %v11815 = vld [vmem:[#allocation8 + $0x88] sm:$0xff]
    %v11816 = vld [vmem:[#allocation8 + $0x90] sm:$0xff]
    %v11817 = vld [vmem:[#allocation8 + $0x98] sm:$0xff]
    %v11818 = vld [vmem:[#allocation8 + $0xa0] sm:$0xff]
    %v11819 = vld [vmem:[#allocation8 + $0xa8] sm:$0xff]
    %v11820 = vld [vmem:[#allocation8 + $0xb0] sm:$0xff]
    %v11821 = vld [vmem:[#allocation8 + $0xb8] sm:$0xff]
    %v11822 = vld [vmem:[#allocation8 + $0xc0] sm:$0xff]
    %v11823 = vld [vmem:[#allocation8 + $0xc8] sm:$0xff]
    %v11824 = vld [vmem:[#allocation8 + $0xd0] sm:$0xff]
    %v11825 = vld [vmem:[#allocation8 + $0xd8] sm:$0xff]
    %v11826 = vld [vmem:[#allocation8 + $0xe0] sm:$0xff]
    %v11827 = vld [vmem:[#allocation8 + $0xe8] sm:$0xff]
    %v11828 = vld [vmem:[#allocation8 + $0xf0] sm:$0xff]
    %v11829 = vld [vmem:[#allocation8 + $0xf8] sm:$0xff]
    %v11830 = vld [vmem:[#allocation8 + $0x100] sm:$0xff]
    %v11831 = vld [vmem:[#allocation8 + $0x108] sm:$0xff]
    %v11832 = vld [vmem:[#allocation8 + $0x110] sm:$0xff]
    %v11833 = vld [vmem:[#allocation8 + $0x118] sm:$0xff]
    %v11834 = vld [vmem:[#allocation8 + $0x120] sm:$0xff]
    %v11835 = vld [vmem:[#allocation8 + $0x128] sm:$0xff]
    %v11836 = vld [vmem:[#allocation8 + $0x130] sm:$0xff]
    %v11837 = vld [vmem:[#allocation8 + $0x138] sm:$0xff]
    %v11838 = vld [vmem:[#allocation8 + $0x140] sm:$0xff]
    %v11839 = vld [vmem:[#allocation8 + $0x148] sm:$0xff]
    %v11840 = vld [vmem:[#allocation8 + $0x150] sm:$0xff]
    %v11841 = vld [vmem:[#allocation8 + $0x158] sm:$0xff]
    %v11842 = vld [vmem:[#allocation8 + $0x160] sm:$0xff]
    %v11843 = vld [vmem:[#allocation8 + $0x168] sm:$0xff]
    %v11844 = vld [vmem:[#allocation8 + $0x170] sm:$0xff]
    %v11845 = vld [vmem:[#allocation8 + $0x178] sm:$0xff]
    %v11846 = vld [vmem:[#allocation8 + $0x180] sm:$0xff]
    %v11847 = vld [vmem:[#allocation8 + $0x188] sm:$0xff]
    %v11848 = vld [vmem:[#allocation8 + $0x190] sm:$0xff]
    %v11849 = vld [vmem:[#allocation8 + $0x198] sm:$0xff]
    %v11850 = vld [vmem:[#allocation8 + $0x1a0] sm:$0xff]
    %v11851 = vld [vmem:[#allocation8 + $0x1a8] sm:$0xff]
    %v11852 = vld [vmem:[#allocation8 + $0x1b0] sm:$0xff]
    %v11853 = vld [vmem:[#allocation8 + $0x1b8] sm:$0xff]
    %v11854 = vld [vmem:[#allocation8 + $0x1c0] sm:$0xff]
    %v11855 = vld [vmem:[#allocation8 + $0x1c8] sm:$0xff]
    %v11856 = vld [vmem:[#allocation8 + $0x1d0] sm:$0xff]
    %v11857 = vld [vmem:[#allocation8 + $0x1d8] sm:$0xff]
    %v11858 = vld [vmem:[#allocation8 + $0x1e0] sm:$0xff]
    %v11859 = vld [vmem:[#allocation8 + $0x1e8] sm:$0xff]
    %v11860 = vld [vmem:[#allocation8 + $0x1f0] sm:$0xff]
    %v11861 = vld [vmem:[#allocation8 + $0x1f8] sm:$0xff]
    %v11862 = vld [vmem:[#allocation8 + $0x200] sm:$0xff]
    %v11863 = vld [vmem:[#allocation8 + $0x208] sm:$0xff]
    %v11864 = vld [vmem:[#allocation8 + $0x210] sm:$0xff]
    %v11865 = vld [vmem:[#allocation8 + $0x218] sm:$0xff]
    %v11866 = vld [vmem:[#allocation8 + $0x220] sm:$0xff]
    %v11867 = vld [vmem:[#allocation8 + $0x228] sm:$0xff]
    %v11868 = vld [vmem:[#allocation8 + $0x230] sm:$0xff]
    %v11869 = vld [vmem:[#allocation8 + $0x238] sm:$0xff]
    %v11870 = vld [vmem:[#allocation8 + $0x240] sm:$0xff]
    %v11871 = vld [vmem:[#allocation8 + $0x248] sm:$0xff]
    %v11872 = vld [vmem:[#allocation8 + $0x250] sm:$0xff]
    %v11873 = vld [vmem:[#allocation8 + $0x258] sm:$0xff]
    %v11874 = vld [vmem:[#allocation8 + $0x260] sm:$0xff]
    %v11875 = vld [vmem:[#allocation8 + $0x268] sm:$0xff]
    %v11876 = vld [vmem:[#allocation8 + $0x270] sm:$0xff]
    %v11877 = vld [vmem:[#allocation8 + $0x278] sm:$0xff]
    %v11878 = vld [vmem:[#allocation8 + $0x280] sm:$0xff]
    %v11879 = vld [vmem:[#allocation8 + $0x288] sm:$0xff]
    %v11880 = vld [vmem:[#allocation8 + $0x290] sm:$0xff]
    %v11881 = vld [vmem:[#allocation8 + $0x298] sm:$0xff]
    %v11882 = vld [vmem:[#allocation8 + $0x2a0] sm:$0xff]
    %v11883 = vld [vmem:[#allocation8 + $0x2a8] sm:$0xff]
    %v11884 = vld [vmem:[#allocation8 + $0x2b0] sm:$0xff]
    %v11885 = vld [vmem:[#allocation8 + $0x2b8] sm:$0xff]
    %v11886 = vld [vmem:[#allocation8 + $0x2c0] sm:$0xff]
    %v11887 = vld [vmem:[#allocation8 + $0x2c8] sm:$0xff]
    %v11888 = vld [vmem:[#allocation8 + $0x2d0] sm:$0xff]
    %v11889 = vld [vmem:[#allocation8 + $0x2d8] sm:$0xff]
    %v11890 = vld [vmem:[#allocation8 + $0x2e0] sm:$0xff]
    %v11891 = vld [vmem:[#allocation8 + $0x2e8] sm:$0xff]
    %v11892 = vld [vmem:[#allocation8 + $0x2f0] sm:$0xff]
    %v11893 = vld [vmem:[#allocation8 + $0x2f8] sm:$0xff]
    %v11894 = vld [vmem:[#allocation8 + $0x300] sm:$0xff]
    %v11895 = vld [vmem:[#allocation8 + $0x308] sm:$0xff]
    %v11896 = vld [vmem:[#allocation8 + $0x310] sm:$0xff]
    %v11897 = vld [vmem:[#allocation8 + $0x318] sm:$0xff]
    %v11898 = vld [vmem:[#allocation8 + $0x320] sm:$0xff]
    %v11899 = vld [vmem:[#allocation8 + $0x328] sm:$0xff]
    %v11900 = vld [vmem:[#allocation8 + $0x330] sm:$0xff]
    %v11901 = vld [vmem:[#allocation8 + $0x338] sm:$0xff]
    %v11902 = vld [vmem:[#allocation8 + $0x340] sm:$0xff]
    %v11903 = vld [vmem:[#allocation8 + $0x348] sm:$0xff]
    %v11904 = vld [vmem:[#allocation8 + $0x350] sm:$0xff]
    %v11905 = vld [vmem:[#allocation8 + $0x358] sm:$0xff]
    %v11906 = vld [vmem:[#allocation8 + $0x360] sm:$0xff]
    %v11907 = vld [vmem:[#allocation8 + $0x368] sm:$0xff]
    %v11908 = vld [vmem:[#allocation8 + $0x370] sm:$0xff]
    %v11909 = vld [vmem:[#allocation8 + $0x378] sm:$0xff]
    %v11910 = vld [vmem:[#allocation8 + $0x380] sm:$0xff]
    %v11911 = vld [vmem:[#allocation8 + $0x388] sm:$0xff]
    %v11912 = vld [vmem:[#allocation8 + $0x390] sm:$0xff]
    %v11913 = vld [vmem:[#allocation8 + $0x398] sm:$0xff]
    %v11914 = vld [vmem:[#allocation8 + $0x3a0] sm:$0xff]
    %v11915 = vld [vmem:[#allocation8 + $0x3a8] sm:$0xff]
    %v11916 = vld [vmem:[#allocation8 + $0x3b0] sm:$0xff]
    %v11917 = vld [vmem:[#allocation8 + $0x3b8] sm:$0xff]
    %v11918 = vld [vmem:[#allocation8 + $0x3c0] sm:$0xff]
    %v11919 = vld [vmem:[#allocation8 + $0x3c8] sm:$0xff]
    %v11920 = vld [vmem:[#allocation8 + $0x3d0] sm:$0xff]
    %v11921 = vld [vmem:[#allocation8 + $0x3d8] sm:$0xff]
    %v11922 = vld [vmem:[#allocation8 + $0x3e0] sm:$0xff]
    %v11923 = vld [vmem:[#allocation8 + $0x3e8] sm:$0xff]
    %v11924 = vld [vmem:[#allocation8 + $0x3f0] sm:$0xff]
    %v11925 = vld [vmem:[#allocation8 + $0x3f8] sm:$0xff]
    %v11926 = vld [vmem:[#allocation8 + $0x400] sm:$0xff]
    %v11927 = vld [vmem:[#allocation8 + $0x408] sm:$0xff]
    %v11928 = vld [vmem:[#allocation8 + $0x410] sm:$0xff]
    %v11929 = vld [vmem:[#allocation8 + $0x418] sm:$0xff]
    %v11930 = vld [vmem:[#allocation8 + $0x420] sm:$0xff]
    %v11931 = vld [vmem:[#allocation8 + $0x428] sm:$0xff]
    %v11932 = vld [vmem:[#allocation8 + $0x430] sm:$0xff]
    %v11933 = vld [vmem:[#allocation8 + $0x438] sm:$0xff]
    %v11934 = vld [vmem:[#allocation8 + $0x440] sm:$0xff]
    %v11935 = vld [vmem:[#allocation8 + $0x448] sm:$0xff]
    %v11936 = vld [vmem:[#allocation8 + $0x450] sm:$0xff]
    %v11937 = vld [vmem:[#allocation8 + $0x458] sm:$0xff]
    %v11938 = vld [vmem:[#allocation8 + $0x460] sm:$0xff]
    %v11939 = vld [vmem:[#allocation8 + $0x468] sm:$0xff]
    %v11940 = vld [vmem:[#allocation8 + $0x470] sm:$0xff]
    %v11941 = vld [vmem:[#allocation8 + $0x478] sm:$0xff]
    %v11942 = vld [vmem:[#allocation8 + $0x480] sm:$0xff]
    %v11943 = vld [vmem:[#allocation8 + $0x488] sm:$0xff]
    %v11944 = vld [vmem:[#allocation8 + $0x490] sm:$0xff]
    %v11945 = vld [vmem:[#allocation8 + $0x498] sm:$0xff]
    %v11946 = vld [vmem:[#allocation8 + $0x4a0] sm:$0xff]
    %v11947 = vld [vmem:[#allocation8 + $0x4a8] sm:$0xff]
    %v11948 = vld [vmem:[#allocation8 + $0x4b0] sm:$0xff]
    %v11949 = vld [vmem:[#allocation8 + $0x4b8] sm:$0xff]
    %v11950 = vld [vmem:[#allocation8 + $0x4c0] sm:$0xff]
    %v11951 = vld [vmem:[#allocation8 + $0x4c8] sm:$0xff]
    %v11952 = vld [vmem:[#allocation8 + $0x4d0] sm:$0xff]
    %v11953 = vld [vmem:[#allocation8 + $0x4d8] sm:$0xff]
    %v11954 = vld [vmem:[#allocation8 + $0x4e0] sm:$0xff]
    %v11955 = vld [vmem:[#allocation8 + $0x4e8] sm:$0xff]
    %v11956 = vld [vmem:[#allocation8 + $0x4f0] sm:$0xff]
    %v11957 = vld [vmem:[#allocation8 + $0x4f8] sm:$0xff]
    %v11958 = vld [vmem:[#allocation8 + $0x500] sm:$0xff]
    %v11959 = vld [vmem:[#allocation8 + $0x508] sm:$0xff]
    %v11960 = vld [vmem:[#allocation8 + $0x510] sm:$0xff]
    %v11961 = vld [vmem:[#allocation8 + $0x518] sm:$0xff]
    %v11962 = vld [vmem:[#allocation8 + $0x520] sm:$0xff]
    %v11963 = vld [vmem:[#allocation8 + $0x528] sm:$0xff]
    %v11964 = vld [vmem:[#allocation8 + $0x530] sm:$0xff]
    %v11965 = vld [vmem:[#allocation8 + $0x538] sm:$0xff]
    %v11966 = vld [vmem:[#allocation8 + $0x540] sm:$0xff]
    %v11967 = vld [vmem:[#allocation8 + $0x548] sm:$0xff]
    %v11968 = vld [vmem:[#allocation8 + $0x550] sm:$0xff]
    %v11969 = vld [vmem:[#allocation8 + $0x558] sm:$0xff]
    %v11970 = vld [vmem:[#allocation8 + $0x560] sm:$0xff]
    %v11971 = vld [vmem:[#allocation8 + $0x568] sm:$0xff]
    %v11972 = vld [vmem:[#allocation8 + $0x570] sm:$0xff]
    %v11973 = vld [vmem:[#allocation8 + $0x578] sm:$0xff]
    %v11974 = vld [vmem:[#allocation8 + $0x580] sm:$0xff]
    %v11975 = vld [vmem:[#allocation8 + $0x588] sm:$0xff]
    %v11976 = vld [vmem:[#allocation8 + $0x590] sm:$0xff]
    %v11977 = vld [vmem:[#allocation8 + $0x598] sm:$0xff]
    %v11978 = vld [vmem:[#allocation8 + $0x5a0] sm:$0xff]
    %v11979 = vld [vmem:[#allocation8 + $0x5a8] sm:$0xff]
    %v11980 = vld [vmem:[#allocation8 + $0x5b0] sm:$0xff]
    %v11981 = vld [vmem:[#allocation8 + $0x5b8] sm:$0xff]
    %v11982 = vld [vmem:[#allocation8 + $0x5c0] sm:$0xff]
    %v11983 = vld [vmem:[#allocation8 + $0x5c8] sm:$0xff]
    %v11984 = vld [vmem:[#allocation8 + $0x5d0] sm:$0xff]
    %v11985 = vld [vmem:[#allocation8 + $0x5d8] sm:$0xff]
    %v11986 = vld [vmem:[#allocation8 + $0x5e0] sm:$0xff]
    %v11987 = vld [vmem:[#allocation8 + $0x5e8] sm:$0xff]
    %v11988 = vld [vmem:[#allocation8 + $0x5f0] sm:$0xff]
    %v11989 = vld [vmem:[#allocation8 + $0x5f8] sm:$0xff]
    %v11990 = vld [vmem:[#allocation8 + $0x600] sm:$0xff]
    %v11991 = vld [vmem:[#allocation8 + $0x608] sm:$0xff]
    %v11992 = vld [vmem:[#allocation8 + $0x610] sm:$0xff]
    %v11993 = vld [vmem:[#allocation8 + $0x618] sm:$0xff]
    %v11994 = vld [vmem:[#allocation8 + $0x620] sm:$0xff]
    %v11995 = vld [vmem:[#allocation8 + $0x628] sm:$0xff]
    %v11996 = vld [vmem:[#allocation8 + $0x630] sm:$0xff]
    %v11997 = vld [vmem:[#allocation8 + $0x638] sm:$0xff]
    %v11998 = vld [vmem:[#allocation8 + $0x640] sm:$0xff]
    %v11999 = vld [vmem:[#allocation8 + $0x648] sm:$0xff]
    %v12000 = vld [vmem:[#allocation8 + $0x650] sm:$0xff]
    %v12001 = vld [vmem:[#allocation8 + $0x658] sm:$0xff]
    %v12002 = vld [vmem:[#allocation8 + $0x660] sm:$0xff]
    %v12003 = vld [vmem:[#allocation8 + $0x668] sm:$0xff]
    %v12004 = vld [vmem:[#allocation8 + $0x670] sm:$0xff]
    %v12005 = vld [vmem:[#allocation8 + $0x678] sm:$0xff]
    %v12006 = vld [vmem:[#allocation8 + $0x680] sm:$0xff]
    %v12007 = vld [vmem:[#allocation8 + $0x688] sm:$0xff]
    %v12008 = vld [vmem:[#allocation8 + $0x690] sm:$0xff]
    %v12009 = vld [vmem:[#allocation8 + $0x698] sm:$0xff]
    %v12010 = vld [vmem:[#allocation8 + $0x6a0] sm:$0xff]
    %v12011 = vld [vmem:[#allocation8 + $0x6a8] sm:$0xff]
    %v12012 = vld [vmem:[#allocation8 + $0x6b0] sm:$0xff]
    %v12013 = vld [vmem:[#allocation8 + $0x6b8] sm:$0xff]
    %v12014 = vld [vmem:[#allocation8 + $0x6c0] sm:$0xff]
    %v12015 = vld [vmem:[#allocation8 + $0x6c8] sm:$0xff]
    %v12016 = vld [vmem:[#allocation8 + $0x6d0] sm:$0xff]
    %v12017 = vld [vmem:[#allocation8 + $0x6d8] sm:$0xff]
    %v12018 = vld [vmem:[#allocation8 + $0x6e0] sm:$0xff]
    %v12019 = vld [vmem:[#allocation8 + $0x6e8] sm:$0xff]
    %v12020 = vld [vmem:[#allocation8 + $0x6f0] sm:$0xff]
    %v12021 = vld [vmem:[#allocation8 + $0x6f8] sm:$0xff]
    %v12022 = vld [vmem:[#allocation8 + $0x700] sm:$0xff]
    %v12023 = vld [vmem:[#allocation8 + $0x708] sm:$0xff]
    %v12024 = vld [vmem:[#allocation8 + $0x710] sm:$0xff]
    %v12025 = vld [vmem:[#allocation8 + $0x718] sm:$0xff]
    %v12026 = vld [vmem:[#allocation8 + $0x720] sm:$0xff]
    %v12027 = vld [vmem:[#allocation8 + $0x728] sm:$0xff]
    %v12028 = vld [vmem:[#allocation8 + $0x730] sm:$0xff]
    %v12029 = vld [vmem:[#allocation8 + $0x738] sm:$0xff]
    %v12030 = vld [vmem:[#allocation8 + $0x740] sm:$0xff]
    %v12031 = vld [vmem:[#allocation8 + $0x748] sm:$0xff]
    %v12032 = vld [vmem:[#allocation8 + $0x750] sm:$0xff]
    %v12033 = vld [vmem:[#allocation8 + $0x758] sm:$0xff]
    %v12034 = vld [vmem:[#allocation8 + $0x760] sm:$0xff]
    %v12035 = vld [vmem:[#allocation8 + $0x768] sm:$0xff]
    %v12036 = vld [vmem:[#allocation8 + $0x770] sm:$0xff]
    %v12037 = vld [vmem:[#allocation8 + $0x778] sm:$0xff]
    %v12038 = vld [vmem:[#allocation8 + $0x780] sm:$0xff]
    %v12039 = vld [vmem:[#allocation8 + $0x788] sm:$0xff]
    %v12040 = vld [vmem:[#allocation8 + $0x790] sm:$0xff]
    %v12041 = vld [vmem:[#allocation8 + $0x798] sm:$0xff]
    %v12042 = vld [vmem:[#allocation8 + $0x7a0] sm:$0xff]
    %v12043 = vld [vmem:[#allocation8 + $0x7a8] sm:$0xff]
    %v12044 = vld [vmem:[#allocation8 + $0x7b0] sm:$0xff]
    %v12045 = vld [vmem:[#allocation8 + $0x7b8] sm:$0xff]
    %v12046 = vld [vmem:[#allocation8 + $0x7c0] sm:$0xff]
    %v12047 = vld [vmem:[#allocation8 + $0x7c8] sm:$0xff]
    %v12048 = vld [vmem:[#allocation8 + $0x7d0] sm:$0xff]
    %v12049 = vld [vmem:[#allocation8 + $0x7d8] sm:$0xff]
    %v12050 = vld [vmem:[#allocation8 + $0x7e0] sm:$0xff]
    %v12051 = vld [vmem:[#allocation8 + $0x7e8] sm:$0xff]
    %v12052 = vld [vmem:[#allocation8 + $0x7f0] sm:$0xff]
    %v12053 = vld [vmem:[#allocation8 + $0x7f8] sm:$0xff]
    %v12054 = vld [vmem:[#allocation9] sm:$0xf]
    %v12056 = vlaneseq
    %v12057 = vshrl.u32 %v12056, 7
    %v12058 = vsub.s32 0, %v12057
    %v12059 = vrot.slane %v12054, %v12058
    %v12060 = vlaneseq
    %v12061 = vshrl.u32 %v12060, 7
    %v12062 = vsub.s32 1, %v12061
    %v12063 = vrot.slane %v12054, %v12062
    %v12064 = vlaneseq
    %v12065 = vshrl.u32 %v12064, 7
    %v12066 = vsub.s32 2, %v12065
    %v12067 = vrot.slane %v12054, %v12066
    %v12068 = vlaneseq
    %v12069 = vshrl.u32 %v12068, 7
    %v12070 = vsub.s32 3, %v12069
    %v12071 = vrot.slane %v12054, %v12070
    %v12332 = vunpack.c.l.b16 %v11798
    %v12333 = vunpack.c.h.b16 %v11798
    %v12334 = vunpack.c.l.b16 %v11799
    %v12335 = vunpack.c.h.b16 %v11799
    %v12336 = vunpack.c.l.b16 %v11800
    %v12337 = vunpack.c.h.b16 %v11800
    %v12338 = vunpack.c.l.b16 %v11801
    %v12339 = vunpack.c.h.b16 %v11801
    %v12340 = vunpack.c.l.b16 %v11802
    %v12341 = vunpack.c.h.b16 %v11802
    %v12342 = vunpack.c.l.b16 %v11803
    %v12343 = vunpack.c.h.b16 %v11803
    %v12344 = vunpack.c.l.b16 %v11804
    %v12345 = vunpack.c.h.b16 %v11804
    %v12346 = vunpack.c.l.b16 %v11805
    %v12347 = vunpack.c.h.b16 %v11805
    %v12348 = vunpack.c.l.b16 %v11806
    %v12349 = vunpack.c.h.b16 %v11806
    %v12350 = vunpack.c.l.b16 %v11807
    %v12351 = vunpack.c.h.b16 %v11807
    %v12352 = vunpack.c.l.b16 %v11808
    %v12353 = vunpack.c.h.b16 %v11808
    %v12354 = vunpack.c.l.b16 %v11809
    %v12355 = vunpack.c.h.b16 %v11809
    %v12356 = vunpack.c.l.b16 %v11810
    %v12357 = vunpack.c.h.b16 %v11810
    %v12358 = vunpack.c.l.b16 %v11811
    %v12359 = vunpack.c.h.b16 %v11811
    %v12360 = vunpack.c.l.b16 %v11812
    %v12361 = vunpack.c.h.b16 %v11812
    %v12362 = vunpack.c.l.b16 %v11813
    %v12363 = vunpack.c.h.b16 %v11813
    %v12364 = vunpack.c.l.b16 %v11814
    %v12365 = vunpack.c.h.b16 %v11814
    %v12366 = vunpack.c.l.b16 %v11815
    %v12367 = vunpack.c.h.b16 %v11815
    %v12368 = vunpack.c.l.b16 %v11816
    %v12369 = vunpack.c.h.b16 %v11816
    %v12370 = vunpack.c.l.b16 %v11817
    %v12371 = vunpack.c.h.b16 %v11817
    %v12372 = vunpack.c.l.b16 %v11818
    %v12373 = vunpack.c.h.b16 %v11818
    %v12374 = vunpack.c.l.b16 %v11819
    %v12375 = vunpack.c.h.b16 %v11819
    %v12376 = vunpack.c.l.b16 %v11820
    %v12377 = vunpack.c.h.b16 %v11820
    %v12378 = vunpack.c.l.b16 %v11821
    %v12379 = vunpack.c.h.b16 %v11821
    %v12380 = vunpack.c.l.b16 %v11822
    %v12381 = vunpack.c.h.b16 %v11822
    %v12382 = vunpack.c.l.b16 %v11823
    %v12383 = vunpack.c.h.b16 %v11823
    %v12384 = vunpack.c.l.b16 %v11824
    %v12385 = vunpack.c.h.b16 %v11824
    %v12386 = vunpack.c.l.b16 %v11825
    %v12387 = vunpack.c.h.b16 %v11825
    %v12388 = vunpack.c.l.b16 %v11826
    %v12389 = vunpack.c.h.b16 %v11826
    %v12390 = vunpack.c.l.b16 %v11827
    %v12391 = vunpack.c.h.b16 %v11827
    %v12392 = vunpack.c.l.b16 %v11828
    %v12393 = vunpack.c.h.b16 %v11828
    %v12394 = vunpack.c.l.b16 %v11829
    %v12395 = vunpack.c.h.b16 %v11829
    %v12396 = vunpack.c.l.b16 %v11830
    %v12397 = vunpack.c.h.b16 %v11830
    %v12398 = vunpack.c.l.b16 %v11831
    %v12399 = vunpack.c.h.b16 %v11831
    %v12400 = vunpack.c.l.b16 %v11832
    %v12401 = vunpack.c.h.b16 %v11832
    %v12402 = vunpack.c.l.b16 %v11833
    %v12403 = vunpack.c.h.b16 %v11833
    %v12404 = vunpack.c.l.b16 %v11834
    %v12405 = vunpack.c.h.b16 %v11834
    %v12406 = vunpack.c.l.b16 %v11835
    %v12407 = vunpack.c.h.b16 %v11835
    %v12408 = vunpack.c.l.b16 %v11836
    %v12409 = vunpack.c.h.b16 %v11836
    %v12410 = vunpack.c.l.b16 %v11837
    %v12411 = vunpack.c.h.b16 %v11837
    %v12412 = vunpack.c.l.b16 %v11838
    %v12413 = vunpack.c.h.b16 %v11838
    %v12414 = vunpack.c.l.b16 %v11839
    %v12415 = vunpack.c.h.b16 %v11839
    %v12416 = vunpack.c.l.b16 %v11840
    %v12417 = vunpack.c.h.b16 %v11840
    %v12418 = vunpack.c.l.b16 %v11841
    %v12419 = vunpack.c.h.b16 %v11841
    %v12420 = vunpack.c.l.b16 %v11842
    %v12421 = vunpack.c.h.b16 %v11842
    %v12422 = vunpack.c.l.b16 %v11843
    %v12423 = vunpack.c.h.b16 %v11843
    %v12424 = vunpack.c.l.b16 %v11844
    %v12425 = vunpack.c.h.b16 %v11844
    %v12426 = vunpack.c.l.b16 %v11845
    %v12427 = vunpack.c.h.b16 %v11845
    %v12428 = vunpack.c.l.b16 %v11846
    %v12429 = vunpack.c.h.b16 %v11846
    %v12430 = vunpack.c.l.b16 %v11847
    %v12431 = vunpack.c.h.b16 %v11847
    %v12432 = vunpack.c.l.b16 %v11848
    %v12433 = vunpack.c.h.b16 %v11848
    %v12434 = vunpack.c.l.b16 %v11849
    %v12435 = vunpack.c.h.b16 %v11849
    %v12436 = vunpack.c.l.b16 %v11850
    %v12437 = vunpack.c.h.b16 %v11850
    %v12438 = vunpack.c.l.b16 %v11851
    %v12439 = vunpack.c.h.b16 %v11851
    %v12440 = vunpack.c.l.b16 %v11852
    %v12441 = vunpack.c.h.b16 %v11852
    %v12442 = vunpack.c.l.b16 %v11853
    %v12443 = vunpack.c.h.b16 %v11853
    %v12444 = vunpack.c.l.b16 %v11854
    %v12445 = vunpack.c.h.b16 %v11854
    %v12446 = vunpack.c.l.b16 %v11855
    %v12447 = vunpack.c.h.b16 %v11855
    %v12448 = vunpack.c.l.b16 %v11856
    %v12449 = vunpack.c.h.b16 %v11856
    %v12450 = vunpack.c.l.b16 %v11857
    %v12451 = vunpack.c.h.b16 %v11857
    %v12452 = vunpack.c.l.b16 %v11858
    %v12453 = vunpack.c.h.b16 %v11858
    %v12454 = vunpack.c.l.b16 %v11859
    %v12455 = vunpack.c.h.b16 %v11859
    %v12456 = vunpack.c.l.b16 %v11860
    %v12457 = vunpack.c.h.b16 %v11860
    %v12458 = vunpack.c.l.b16 %v11861
    %v12459 = vunpack.c.h.b16 %v11861
    %v12460 = vunpack.c.l.b16 %v11862
    %v12461 = vunpack.c.h.b16 %v11862
    %v12462 = vunpack.c.l.b16 %v11863
    %v12463 = vunpack.c.h.b16 %v11863
    %v12464 = vunpack.c.l.b16 %v11864
    %v12465 = vunpack.c.h.b16 %v11864
    %v12466 = vunpack.c.l.b16 %v11865
    %v12467 = vunpack.c.h.b16 %v11865
    %v12468 = vunpack.c.l.b16 %v11866
    %v12469 = vunpack.c.h.b16 %v11866
    %v12470 = vunpack.c.l.b16 %v11867
    %v12471 = vunpack.c.h.b16 %v11867
    %v12472 = vunpack.c.l.b16 %v11868
    %v12473 = vunpack.c.h.b16 %v11868
    %v12474 = vunpack.c.l.b16 %v11869
    %v12475 = vunpack.c.h.b16 %v11869
    %v12476 = vunpack.c.l.b16 %v11870
    %v12477 = vunpack.c.h.b16 %v11870
    %v12478 = vunpack.c.l.b16 %v11871
    %v12479 = vunpack.c.h.b16 %v11871
    %v12480 = vunpack.c.l.b16 %v11872
    %v12481 = vunpack.c.h.b16 %v11872
    %v12482 = vunpack.c.l.b16 %v11873
    %v12483 = vunpack.c.h.b16 %v11873
    %v12484 = vunpack.c.l.b16 %v11874
    %v12485 = vunpack.c.h.b16 %v11874
    %v12486 = vunpack.c.l.b16 %v11875
    %v12487 = vunpack.c.h.b16 %v11875
    %v12488 = vunpack.c.l.b16 %v11876
    %v12489 = vunpack.c.h.b16 %v11876
    %v12490 = vunpack.c.l.b16 %v11877
    %v12491 = vunpack.c.h.b16 %v11877
    %v12492 = vunpack.c.l.b16 %v11878
    %v12493 = vunpack.c.h.b16 %v11878
    %v12494 = vunpack.c.l.b16 %v11879
    %v12495 = vunpack.c.h.b16 %v11879
    %v12496 = vunpack.c.l.b16 %v11880
    %v12497 = vunpack.c.h.b16 %v11880
    %v12498 = vunpack.c.l.b16 %v11881
    %v12499 = vunpack.c.h.b16 %v11881
    %v12500 = vunpack.c.l.b16 %v11882
    %v12501 = vunpack.c.h.b16 %v11882
    %v12502 = vunpack.c.l.b16 %v11883
    %v12503 = vunpack.c.h.b16 %v11883
    %v12504 = vunpack.c.l.b16 %v11884
    %v12505 = vunpack.c.h.b16 %v11884
    %v12506 = vunpack.c.l.b16 %v11885
    %v12507 = vunpack.c.h.b16 %v11885
    %v12508 = vunpack.c.l.b16 %v11886
    %v12509 = vunpack.c.h.b16 %v11886
    %v12510 = vunpack.c.l.b16 %v11887
    %v12511 = vunpack.c.h.b16 %v11887
    %v12512 = vunpack.c.l.b16 %v11888
    %v12513 = vunpack.c.h.b16 %v11888
    %v12514 = vunpack.c.l.b16 %v11889
    %v12515 = vunpack.c.h.b16 %v11889
    %v12516 = vunpack.c.l.b16 %v11890
    %v12517 = vunpack.c.h.b16 %v11890
    %v12518 = vunpack.c.l.b16 %v11891
    %v12519 = vunpack.c.h.b16 %v11891
    %v12520 = vunpack.c.l.b16 %v11892
    %v12521 = vunpack.c.h.b16 %v11892
    %v12522 = vunpack.c.l.b16 %v11893
    %v12523 = vunpack.c.h.b16 %v11893
    %v12524 = vunpack.c.l.b16 %v11894
    %v12525 = vunpack.c.h.b16 %v11894
    %v12526 = vunpack.c.l.b16 %v11895
    %v12527 = vunpack.c.h.b16 %v11895
    %v12528 = vunpack.c.l.b16 %v11896
    %v12529 = vunpack.c.h.b16 %v11896
    %v12530 = vunpack.c.l.b16 %v11897
    %v12531 = vunpack.c.h.b16 %v11897
    %v12532 = vunpack.c.l.b16 %v11898
    %v12533 = vunpack.c.h.b16 %v11898
    %v12534 = vunpack.c.l.b16 %v11899
    %v12535 = vunpack.c.h.b16 %v11899
    %v12536 = vunpack.c.l.b16 %v11900
    %v12537 = vunpack.c.h.b16 %v11900
    %v12538 = vunpack.c.l.b16 %v11901
    %v12539 = vunpack.c.h.b16 %v11901
    %v12540 = vunpack.c.l.b16 %v11902
    %v12541 = vunpack.c.h.b16 %v11902
    %v12542 = vunpack.c.l.b16 %v11903
    %v12543 = vunpack.c.h.b16 %v11903
    %v12544 = vunpack.c.l.b16 %v11904
    %v12545 = vunpack.c.h.b16 %v11904
    %v12546 = vunpack.c.l.b16 %v11905
    %v12547 = vunpack.c.h.b16 %v11905
    %v12548 = vunpack.c.l.b16 %v11906
    %v12549 = vunpack.c.h.b16 %v11906
    %v12550 = vunpack.c.l.b16 %v11907
    %v12551 = vunpack.c.h.b16 %v11907
    %v12552 = vunpack.c.l.b16 %v11908
    %v12553 = vunpack.c.h.b16 %v11908
    %v12554 = vunpack.c.l.b16 %v11909
    %v12555 = vunpack.c.h.b16 %v11909
    %v12556 = vunpack.c.l.b16 %v11910
    %v12557 = vunpack.c.h.b16 %v11910
    %v12558 = vunpack.c.l.b16 %v11911
    %v12559 = vunpack.c.h.b16 %v11911
    %v12560 = vunpack.c.l.b16 %v11912
    %v12561 = vunpack.c.h.b16 %v11912
    %v12562 = vunpack.c.l.b16 %v11913
    %v12563 = vunpack.c.h.b16 %v11913
    %v12564 = vunpack.c.l.b16 %v11914
    %v12565 = vunpack.c.h.b16 %v11914
    %v12566 = vunpack.c.l.b16 %v11915
    %v12567 = vunpack.c.h.b16 %v11915
    %v12568 = vunpack.c.l.b16 %v11916
    %v12569 = vunpack.c.h.b16 %v11916
    %v12570 = vunpack.c.l.b16 %v11917
    %v12571 = vunpack.c.h.b16 %v11917
    %v12572 = vunpack.c.l.b16 %v11918
    %v12573 = vunpack.c.h.b16 %v11918
    %v12574 = vunpack.c.l.b16 %v11919
    %v12575 = vunpack.c.h.b16 %v11919
    %v12576 = vunpack.c.l.b16 %v11920
    %v12577 = vunpack.c.h.b16 %v11920
    %v12578 = vunpack.c.l.b16 %v11921
    %v12579 = vunpack.c.h.b16 %v11921
    %v12580 = vunpack.c.l.b16 %v11922
    %v12581 = vunpack.c.h.b16 %v11922
    %v12582 = vunpack.c.l.b16 %v11923
    %v12583 = vunpack.c.h.b16 %v11923
    %v12584 = vunpack.c.l.b16 %v11924
    %v12585 = vunpack.c.h.b16 %v11924
    %v12586 = vunpack.c.l.b16 %v11925
    %v12587 = vunpack.c.h.b16 %v11925
    %v12588 = vunpack.c.l.b16 %v11926
    %v12589 = vunpack.c.h.b16 %v11926
    %v12590 = vunpack.c.l.b16 %v11927
    %v12591 = vunpack.c.h.b16 %v11927
    %v12592 = vunpack.c.l.b16 %v11928
    %v12593 = vunpack.c.h.b16 %v11928
    %v12594 = vunpack.c.l.b16 %v11929
    %v12595 = vunpack.c.h.b16 %v11929
    %v12596 = vunpack.c.l.b16 %v11930
    %v12597 = vunpack.c.h.b16 %v11930
    %v12598 = vunpack.c.l.b16 %v11931
    %v12599 = vunpack.c.h.b16 %v11931
    %v12600 = vunpack.c.l.b16 %v11932
    %v12601 = vunpack.c.h.b16 %v11932
    %v12602 = vunpack.c.l.b16 %v11933
    %v12603 = vunpack.c.h.b16 %v11933
    %v12604 = vunpack.c.l.b16 %v11934
    %v12605 = vunpack.c.h.b16 %v11934
    %v12606 = vunpack.c.l.b16 %v11935
    %v12607 = vunpack.c.h.b16 %v11935
    %v12608 = vunpack.c.l.b16 %v11936
    %v12609 = vunpack.c.h.b16 %v11936
    %v12610 = vunpack.c.l.b16 %v11937
    %v12611 = vunpack.c.h.b16 %v11937
    %v12612 = vunpack.c.l.b16 %v11938
    %v12613 = vunpack.c.h.b16 %v11938
    %v12614 = vunpack.c.l.b16 %v11939
    %v12615 = vunpack.c.h.b16 %v11939
    %v12616 = vunpack.c.l.b16 %v11940
    %v12617 = vunpack.c.h.b16 %v11940
    %v12618 = vunpack.c.l.b16 %v11941
    %v12619 = vunpack.c.h.b16 %v11941
    %v12620 = vunpack.c.l.b16 %v11942
    %v12621 = vunpack.c.h.b16 %v11942
    %v12622 = vunpack.c.l.b16 %v11943
    %v12623 = vunpack.c.h.b16 %v11943
    %v12624 = vunpack.c.l.b16 %v11944
    %v12625 = vunpack.c.h.b16 %v11944
    %v12626 = vunpack.c.l.b16 %v11945
    %v12627 = vunpack.c.h.b16 %v11945
    %v12628 = vunpack.c.l.b16 %v11946
    %v12629 = vunpack.c.h.b16 %v11946
    %v12630 = vunpack.c.l.b16 %v11947
    %v12631 = vunpack.c.h.b16 %v11947
    %v12632 = vunpack.c.l.b16 %v11948
    %v12633 = vunpack.c.h.b16 %v11948
    %v12634 = vunpack.c.l.b16 %v11949
    %v12635 = vunpack.c.h.b16 %v11949
    %v12636 = vunpack.c.l.b16 %v11950
    %v12637 = vunpack.c.h.b16 %v11950
    %v12638 = vunpack.c.l.b16 %v11951
    %v12639 = vunpack.c.h.b16 %v11951
    %v12640 = vunpack.c.l.b16 %v11952
    %v12641 = vunpack.c.h.b16 %v11952
    %v12642 = vunpack.c.l.b16 %v11953
    %v12643 = vunpack.c.h.b16 %v11953
    %v12644 = vunpack.c.l.b16 %v11954
    %v12645 = vunpack.c.h.b16 %v11954
    %v12646 = vunpack.c.l.b16 %v11955
    %v12647 = vunpack.c.h.b16 %v11955
    %v12648 = vunpack.c.l.b16 %v11956
    %v12649 = vunpack.c.h.b16 %v11956
    %v12650 = vunpack.c.l.b16 %v11957
    %v12651 = vunpack.c.h.b16 %v11957
    %v12652 = vunpack.c.l.b16 %v11958
    %v12653 = vunpack.c.h.b16 %v11958
    %v12654 = vunpack.c.l.b16 %v11959
    %v12655 = vunpack.c.h.b16 %v11959
    %v12656 = vunpack.c.l.b16 %v11960
    %v12657 = vunpack.c.h.b16 %v11960
    %v12658 = vunpack.c.l.b16 %v11961
    %v12659 = vunpack.c.h.b16 %v11961
    %v12660 = vunpack.c.l.b16 %v11962
    %v12661 = vunpack.c.h.b16 %v11962
    %v12662 = vunpack.c.l.b16 %v11963
    %v12663 = vunpack.c.h.b16 %v11963
    %v12664 = vunpack.c.l.b16 %v11964
    %v12665 = vunpack.c.h.b16 %v11964
    %v12666 = vunpack.c.l.b16 %v11965
    %v12667 = vunpack.c.h.b16 %v11965
    %v12668 = vunpack.c.l.b16 %v11966
    %v12669 = vunpack.c.h.b16 %v11966
    %v12670 = vunpack.c.l.b16 %v11967
    %v12671 = vunpack.c.h.b16 %v11967
    %v12672 = vunpack.c.l.b16 %v11968
    %v12673 = vunpack.c.h.b16 %v11968
    %v12674 = vunpack.c.l.b16 %v11969
    %v12675 = vunpack.c.h.b16 %v11969
    %v12676 = vunpack.c.l.b16 %v11970
    %v12677 = vunpack.c.h.b16 %v11970
    %v12678 = vunpack.c.l.b16 %v11971
    %v12679 = vunpack.c.h.b16 %v11971
    %v12680 = vunpack.c.l.b16 %v11972
    %v12681 = vunpack.c.h.b16 %v11972
    %v12682 = vunpack.c.l.b16 %v11973
    %v12683 = vunpack.c.h.b16 %v11973
    %v12684 = vunpack.c.l.b16 %v11974
    %v12685 = vunpack.c.h.b16 %v11974
    %v12686 = vunpack.c.l.b16 %v11975
    %v12687 = vunpack.c.h.b16 %v11975
    %v12688 = vunpack.c.l.b16 %v11976
    %v12689 = vunpack.c.h.b16 %v11976
    %v12690 = vunpack.c.l.b16 %v11977
    %v12691 = vunpack.c.h.b16 %v11977
    %v12692 = vunpack.c.l.b16 %v11978
    %v12693 = vunpack.c.h.b16 %v11978
    %v12694 = vunpack.c.l.b16 %v11979
    %v12695 = vunpack.c.h.b16 %v11979
    %v12696 = vunpack.c.l.b16 %v11980
    %v12697 = vunpack.c.h.b16 %v11980
    %v12698 = vunpack.c.l.b16 %v11981
    %v12699 = vunpack.c.h.b16 %v11981
    %v12700 = vunpack.c.l.b16 %v11982
    %v12701 = vunpack.c.h.b16 %v11982
    %v12702 = vunpack.c.l.b16 %v11983
    %v12703 = vunpack.c.h.b16 %v11983
    %v12704 = vunpack.c.l.b16 %v11984
    %v12705 = vunpack.c.h.b16 %v11984
    %v12706 = vunpack.c.l.b16 %v11985
    %v12707 = vunpack.c.h.b16 %v11985
    %v12708 = vunpack.c.l.b16 %v11986
    %v12709 = vunpack.c.h.b16 %v11986
    %v12710 = vunpack.c.l.b16 %v11987
    %v12711 = vunpack.c.h.b16 %v11987
    %v12712 = vunpack.c.l.b16 %v11988
    %v12713 = vunpack.c.h.b16 %v11988
    %v12714 = vunpack.c.l.b16 %v11989
    %v12715 = vunpack.c.h.b16 %v11989
    %v12716 = vunpack.c.l.b16 %v11990
    %v12717 = vunpack.c.h.b16 %v11990
    %v12718 = vunpack.c.l.b16 %v11991
    %v12719 = vunpack.c.h.b16 %v11991
    %v12720 = vunpack.c.l.b16 %v11992
    %v12721 = vunpack.c.h.b16 %v11992
    %v12722 = vunpack.c.l.b16 %v11993
    %v12723 = vunpack.c.h.b16 %v11993
    %v12724 = vunpack.c.l.b16 %v11994
    %v12725 = vunpack.c.h.b16 %v11994
    %v12726 = vunpack.c.l.b16 %v11995
    %v12727 = vunpack.c.h.b16 %v11995
    %v12728 = vunpack.c.l.b16 %v11996
    %v12729 = vunpack.c.h.b16 %v11996
    %v12730 = vunpack.c.l.b16 %v11997
    %v12731 = vunpack.c.h.b16 %v11997
    %v12732 = vunpack.c.l.b16 %v11998
    %v12733 = vunpack.c.h.b16 %v11998
    %v12734 = vunpack.c.l.b16 %v11999
    %v12735 = vunpack.c.h.b16 %v11999
    %v12736 = vunpack.c.l.b16 %v12000
    %v12737 = vunpack.c.h.b16 %v12000
    %v12738 = vunpack.c.l.b16 %v12001
    %v12739 = vunpack.c.h.b16 %v12001
    %v12740 = vunpack.c.l.b16 %v12002
    %v12741 = vunpack.c.h.b16 %v12002
    %v12742 = vunpack.c.l.b16 %v12003
    %v12743 = vunpack.c.h.b16 %v12003
    %v12744 = vunpack.c.l.b16 %v12004
    %v12745 = vunpack.c.h.b16 %v12004
    %v12746 = vunpack.c.l.b16 %v12005
    %v12747 = vunpack.c.h.b16 %v12005
    %v12748 = vunpack.c.l.b16 %v12006
    %v12749 = vunpack.c.h.b16 %v12006
    %v12750 = vunpack.c.l.b16 %v12007
    %v12751 = vunpack.c.h.b16 %v12007
    %v12752 = vunpack.c.l.b16 %v12008
    %v12753 = vunpack.c.h.b16 %v12008
    %v12754 = vunpack.c.l.b16 %v12009
    %v12755 = vunpack.c.h.b16 %v12009
    %v12756 = vunpack.c.l.b16 %v12010
    %v12757 = vunpack.c.h.b16 %v12010
    %v12758 = vunpack.c.l.b16 %v12011
    %v12759 = vunpack.c.h.b16 %v12011
    %v12760 = vunpack.c.l.b16 %v12012
    %v12761 = vunpack.c.h.b16 %v12012
    %v12762 = vunpack.c.l.b16 %v12013
    %v12763 = vunpack.c.h.b16 %v12013
    %v12764 = vunpack.c.l.b16 %v12014
    %v12765 = vunpack.c.h.b16 %v12014
    %v12766 = vunpack.c.l.b16 %v12015
    %v12767 = vunpack.c.h.b16 %v12015
    %v12768 = vunpack.c.l.b16 %v12016
    %v12769 = vunpack.c.h.b16 %v12016
    %v12770 = vunpack.c.l.b16 %v12017
    %v12771 = vunpack.c.h.b16 %v12017
    %v12772 = vunpack.c.l.b16 %v12018
    %v12773 = vunpack.c.h.b16 %v12018
    %v12774 = vunpack.c.l.b16 %v12019
    %v12775 = vunpack.c.h.b16 %v12019
    %v12776 = vunpack.c.l.b16 %v12020
    %v12777 = vunpack.c.h.b16 %v12020
    %v12778 = vunpack.c.l.b16 %v12021
    %v12779 = vunpack.c.h.b16 %v12021
    %v12780 = vunpack.c.l.b16 %v12022
    %v12781 = vunpack.c.h.b16 %v12022
    %v12782 = vunpack.c.l.b16 %v12023
    %v12783 = vunpack.c.h.b16 %v12023
    %v12784 = vunpack.c.l.b16 %v12024
    %v12785 = vunpack.c.h.b16 %v12024
    %v12786 = vunpack.c.l.b16 %v12025
    %v12787 = vunpack.c.h.b16 %v12025
    %v12788 = vunpack.c.l.b16 %v12026
    %v12789 = vunpack.c.h.b16 %v12026
    %v12790 = vunpack.c.l.b16 %v12027
    %v12791 = vunpack.c.h.b16 %v12027
    %v12792 = vunpack.c.l.b16 %v12028
    %v12793 = vunpack.c.h.b16 %v12028
    %v12794 = vunpack.c.l.b16 %v12029
    %v12795 = vunpack.c.h.b16 %v12029
    %v12796 = vunpack.c.l.b16 %v12030
    %v12797 = vunpack.c.h.b16 %v12030
    %v12798 = vunpack.c.l.b16 %v12031
    %v12799 = vunpack.c.h.b16 %v12031
    %v12800 = vunpack.c.l.b16 %v12032
    %v12801 = vunpack.c.h.b16 %v12032
    %v12802 = vunpack.c.l.b16 %v12033
    %v12803 = vunpack.c.h.b16 %v12033
    %v12804 = vunpack.c.l.b16 %v12034
    %v12805 = vunpack.c.h.b16 %v12034
    %v12806 = vunpack.c.l.b16 %v12035
    %v12807 = vunpack.c.h.b16 %v12035
    %v12808 = vunpack.c.l.b16 %v12036
    %v12809 = vunpack.c.h.b16 %v12036
    %v12810 = vunpack.c.l.b16 %v12037
    %v12811 = vunpack.c.h.b16 %v12037
    %v12812 = vunpack.c.l.b16 %v12038
    %v12813 = vunpack.c.h.b16 %v12038
    %v12814 = vunpack.c.l.b16 %v12039
    %v12815 = vunpack.c.h.b16 %v12039
    %v12816 = vunpack.c.l.b16 %v12040
    %v12817 = vunpack.c.h.b16 %v12040
    %v12818 = vunpack.c.l.b16 %v12041
    %v12819 = vunpack.c.h.b16 %v12041
    %v12820 = vunpack.c.l.b16 %v12042
    %v12821 = vunpack.c.h.b16 %v12042
    %v12822 = vunpack.c.l.b16 %v12043
    %v12823 = vunpack.c.h.b16 %v12043
    %v12824 = vunpack.c.l.b16 %v12044
    %v12825 = vunpack.c.h.b16 %v12044
    %v12826 = vunpack.c.l.b16 %v12045
    %v12827 = vunpack.c.h.b16 %v12045
    %v12828 = vunpack.c.l.b16 %v12046
    %v12829 = vunpack.c.h.b16 %v12046
    %v12830 = vunpack.c.l.b16 %v12047
    %v12831 = vunpack.c.h.b16 %v12047
    %v12832 = vunpack.c.l.b16 %v12048
    %v12833 = vunpack.c.h.b16 %v12048
    %v12834 = vunpack.c.l.b16 %v12049
    %v12835 = vunpack.c.h.b16 %v12049
    %v12836 = vunpack.c.l.b16 %v12050
    %v12837 = vunpack.c.h.b16 %v12050
    %v12838 = vunpack.c.l.b16 %v12051
    %v12839 = vunpack.c.h.b16 %v12051
    %v12840 = vunpack.c.l.b16 %v12052
    %v12841 = vunpack.c.h.b16 %v12052
    %v12842 = vunpack.c.l.b16 %v12053
    %v12843 = vunpack.c.h.b16 %v12053
    %v12844 = vpack.c.b16 %v12336, %v12332
    %v12845 = vpack.c.b16 %v12337, %v12333
    %v12846 = vpack.c.b16 %v12338, %v12334
    %v12847 = vpack.c.b16 %v12339, %v12335
    %v12848 = vpack.c.b16 %v12344, %v12340
    %v12849 = vpack.c.b16 %v12345, %v12341
    %v12850 = vpack.c.b16 %v12346, %v12342
    %v12851 = vpack.c.b16 %v12347, %v12343
    %v12852 = vpack.c.b16 %v12352, %v12348
    %v12853 = vpack.c.b16 %v12353, %v12349
    %v12854 = vpack.c.b16 %v12354, %v12350
    %v12855 = vpack.c.b16 %v12355, %v12351
    %v12856 = vpack.c.b16 %v12360, %v12356
    %v12857 = vpack.c.b16 %v12361, %v12357
    %v12858 = vpack.c.b16 %v12362, %v12358
    %v12859 = vpack.c.b16 %v12363, %v12359
    %v12860 = vpack.c.b16 %v12368, %v12364
    %v12861 = vpack.c.b16 %v12369, %v12365
    %v12862 = vpack.c.b16 %v12370, %v12366
    %v12863 = vpack.c.b16 %v12371, %v12367
    %v12864 = vpack.c.b16 %v12376, %v12372
    %v12865 = vpack.c.b16 %v12377, %v12373
    %v12866 = vpack.c.b16 %v12378, %v12374
    %v12867 = vpack.c.b16 %v12379, %v12375
    %v12868 = vpack.c.b16 %v12384, %v12380
    %v12869 = vpack.c.b16 %v12385, %v12381
    %v12870 = vpack.c.b16 %v12386, %v12382
    %v12871 = vpack.c.b16 %v12387, %v12383
    %v12872 = vpack.c.b16 %v12392, %v12388
    %v12873 = vpack.c.b16 %v12393, %v12389
    %v12874 = vpack.c.b16 %v12394, %v12390
    %v12875 = vpack.c.b16 %v12395, %v12391
    %v12876 = vpack.c.b16 %v12400, %v12396
    %v12877 = vpack.c.b16 %v12401, %v12397
    %v12878 = vpack.c.b16 %v12402, %v12398
    %v12879 = vpack.c.b16 %v12403, %v12399
    %v12880 = vpack.c.b16 %v12408, %v12404
    %v12881 = vpack.c.b16 %v12409, %v12405
    %v12882 = vpack.c.b16 %v12410, %v12406
    %v12883 = vpack.c.b16 %v12411, %v12407
    %v12884 = vpack.c.b16 %v12416, %v12412
    %v12885 = vpack.c.b16 %v12417, %v12413
    %v12886 = vpack.c.b16 %v12418, %v12414
    %v12887 = vpack.c.b16 %v12419, %v12415
    %v12888 = vpack.c.b16 %v12424, %v12420
    %v12889 = vpack.c.b16 %v12425, %v12421
    %v12890 = vpack.c.b16 %v12426, %v12422
    %v12891 = vpack.c.b16 %v12427, %v12423
    %v12892 = vpack.c.b16 %v12432, %v12428
    %v12893 = vpack.c.b16 %v12433, %v12429
    %v12894 = vpack.c.b16 %v12434, %v12430
    %v12895 = vpack.c.b16 %v12435, %v12431
    %v12896 = vpack.c.b16 %v12440, %v12436
    %v12897 = vpack.c.b16 %v12441, %v12437
    %v12898 = vpack.c.b16 %v12442, %v12438
    %v12899 = vpack.c.b16 %v12443, %v12439
    %v12900 = vpack.c.b16 %v12448, %v12444
    %v12901 = vpack.c.b16 %v12449, %v12445
    %v12902 = vpack.c.b16 %v12450, %v12446
    %v12903 = vpack.c.b16 %v12451, %v12447
    %v12904 = vpack.c.b16 %v12456, %v12452
    %v12905 = vpack.c.b16 %v12457, %v12453
    %v12906 = vpack.c.b16 %v12458, %v12454
    %v12907 = vpack.c.b16 %v12459, %v12455
    %v12908 = vpack.c.b16 %v12464, %v12460
    %v12909 = vpack.c.b16 %v12465, %v12461
    %v12910 = vpack.c.b16 %v12466, %v12462
    %v12911 = vpack.c.b16 %v12467, %v12463
    %v12912 = vpack.c.b16 %v12472, %v12468
    %v12913 = vpack.c.b16 %v12473, %v12469
    %v12914 = vpack.c.b16 %v12474, %v12470
    %v12915 = vpack.c.b16 %v12475, %v12471
    %v12916 = vpack.c.b16 %v12480, %v12476
    %v12917 = vpack.c.b16 %v12481, %v12477
    %v12918 = vpack.c.b16 %v12482, %v12478
    %v12919 = vpack.c.b16 %v12483, %v12479
    %v12920 = vpack.c.b16 %v12488, %v12484
    %v12921 = vpack.c.b16 %v12489, %v12485
    %v12922 = vpack.c.b16 %v12490, %v12486
    %v12923 = vpack.c.b16 %v12491, %v12487
    %v12924 = vpack.c.b16 %v12496, %v12492
    %v12925 = vpack.c.b16 %v12497, %v12493
    %v12926 = vpack.c.b16 %v12498, %v12494
    %v12927 = vpack.c.b16 %v12499, %v12495
    %v12928 = vpack.c.b16 %v12504, %v12500
    %v12929 = vpack.c.b16 %v12505, %v12501
    %v12930 = vpack.c.b16 %v12506, %v12502
    %v12931 = vpack.c.b16 %v12507, %v12503
    %v12932 = vpack.c.b16 %v12512, %v12508
    %v12933 = vpack.c.b16 %v12513, %v12509
    %v12934 = vpack.c.b16 %v12514, %v12510
    %v12935 = vpack.c.b16 %v12515, %v12511
    %v12936 = vpack.c.b16 %v12520, %v12516
    %v12937 = vpack.c.b16 %v12521, %v12517
    %v12938 = vpack.c.b16 %v12522, %v12518
    %v12939 = vpack.c.b16 %v12523, %v12519
    %v12940 = vpack.c.b16 %v12528, %v12524
    %v12941 = vpack.c.b16 %v12529, %v12525
    %v12942 = vpack.c.b16 %v12530, %v12526
    %v12943 = vpack.c.b16 %v12531, %v12527
    %v12944 = vpack.c.b16 %v12536, %v12532
    %v12945 = vpack.c.b16 %v12537, %v12533
    %v12946 = vpack.c.b16 %v12538, %v12534
    %v12947 = vpack.c.b16 %v12539, %v12535
    %v12948 = vpack.c.b16 %v12544, %v12540
    %v12949 = vpack.c.b16 %v12545, %v12541
    %v12950 = vpack.c.b16 %v12546, %v12542
    %v12951 = vpack.c.b16 %v12547, %v12543
    %v12952 = vpack.c.b16 %v12552, %v12548
    %v12953 = vpack.c.b16 %v12553, %v12549
    %v12954 = vpack.c.b16 %v12554, %v12550
    %v12955 = vpack.c.b16 %v12555, %v12551
    %v12956 = vpack.c.b16 %v12560, %v12556
    %v12957 = vpack.c.b16 %v12561, %v12557
    %v12958 = vpack.c.b16 %v12562, %v12558
    %v12959 = vpack.c.b16 %v12563, %v12559
    %v12960 = vpack.c.b16 %v12568, %v12564
    %v12961 = vpack.c.b16 %v12569, %v12565
    %v12962 = vpack.c.b16 %v12570, %v12566
    %v12963 = vpack.c.b16 %v12571, %v12567
    %v12964 = vpack.c.b16 %v12576, %v12572
    %v12965 = vpack.c.b16 %v12577, %v12573
    %v12966 = vpack.c.b16 %v12578, %v12574
    %v12967 = vpack.c.b16 %v12579, %v12575
    %v12968 = vpack.c.b16 %v12584, %v12580
    %v12969 = vpack.c.b16 %v12585, %v12581
    %v12970 = vpack.c.b16 %v12586, %v12582
    %v12971 = vpack.c.b16 %v12587, %v12583
    %v12972 = vpack.c.b16 %v12592, %v12588
    %v12973 = vpack.c.b16 %v12593, %v12589
    %v12974 = vpack.c.b16 %v12594, %v12590
    %v12975 = vpack.c.b16 %v12595, %v12591
    %v12976 = vpack.c.b16 %v12600, %v12596
    %v12977 = vpack.c.b16 %v12601, %v12597
    %v12978 = vpack.c.b16 %v12602, %v12598
    %v12979 = vpack.c.b16 %v12603, %v12599
    %v12980 = vpack.c.b16 %v12608, %v12604
    %v12981 = vpack.c.b16 %v12609, %v12605
    %v12982 = vpack.c.b16 %v12610, %v12606
    %v12983 = vpack.c.b16 %v12611, %v12607
    %v12984 = vpack.c.b16 %v12616, %v12612
    %v12985 = vpack.c.b16 %v12617, %v12613
    %v12986 = vpack.c.b16 %v12618, %v12614
    %v12987 = vpack.c.b16 %v12619, %v12615
    %v12988 = vpack.c.b16 %v12624, %v12620
    %v12989 = vpack.c.b16 %v12625, %v12621
    %v12990 = vpack.c.b16 %v12626, %v12622
    %v12991 = vpack.c.b16 %v12627, %v12623
    %v12992 = vpack.c.b16 %v12632, %v12628
    %v12993 = vpack.c.b16 %v12633, %v12629
    %v12994 = vpack.c.b16 %v12634, %v12630
    %v12995 = vpack.c.b16 %v12635, %v12631
    %v12996 = vpack.c.b16 %v12640, %v12636
    %v12997 = vpack.c.b16 %v12641, %v12637
    %v12998 = vpack.c.b16 %v12642, %v12638
    %v12999 = vpack.c.b16 %v12643, %v12639
    %v13000 = vpack.c.b16 %v12648, %v12644
    %v13001 = vpack.c.b16 %v12649, %v12645
    %v13002 = vpack.c.b16 %v12650, %v12646
    %v13003 = vpack.c.b16 %v12651, %v12647
    %v13004 = vpack.c.b16 %v12656, %v12652
    %v13005 = vpack.c.b16 %v12657, %v12653
    %v13006 = vpack.c.b16 %v12658, %v12654
    %v13007 = vpack.c.b16 %v12659, %v12655
    %v13008 = vpack.c.b16 %v12664, %v12660
    %v13009 = vpack.c.b16 %v12665, %v12661
    %v13010 = vpack.c.b16 %v12666, %v12662
    %v13011 = vpack.c.b16 %v12667, %v12663
    %v13012 = vpack.c.b16 %v12672, %v12668
    %v13013 = vpack.c.b16 %v12673, %v12669
    %v13014 = vpack.c.b16 %v12674, %v12670
    %v13015 = vpack.c.b16 %v12675, %v12671
    %v13016 = vpack.c.b16 %v12680, %v12676
    %v13017 = vpack.c.b16 %v12681, %v12677
    %v13018 = vpack.c.b16 %v12682, %v12678
    %v13019 = vpack.c.b16 %v12683, %v12679
    %v13020 = vpack.c.b16 %v12688, %v12684
    %v13021 = vpack.c.b16 %v12689, %v12685
    %v13022 = vpack.c.b16 %v12690, %v12686
    %v13023 = vpack.c.b16 %v12691, %v12687
    %v13024 = vpack.c.b16 %v12696, %v12692
    %v13025 = vpack.c.b16 %v12697, %v12693
    %v13026 = vpack.c.b16 %v12698, %v12694
    %v13027 = vpack.c.b16 %v12699, %v12695
    %v13028 = vpack.c.b16 %v12704, %v12700
    %v13029 = vpack.c.b16 %v12705, %v12701
    %v13030 = vpack.c.b16 %v12706, %v12702
    %v13031 = vpack.c.b16 %v12707, %v12703
    %v13032 = vpack.c.b16 %v12712, %v12708
    %v13033 = vpack.c.b16 %v12713, %v12709
    %v13034 = vpack.c.b16 %v12714, %v12710
    %v13035 = vpack.c.b16 %v12715, %v12711
    %v13036 = vpack.c.b16 %v12720, %v12716
    %v13037 = vpack.c.b16 %v12721, %v12717
    %v13038 = vpack.c.b16 %v12722, %v12718
    %v13039 = vpack.c.b16 %v12723, %v12719
    %v13040 = vpack.c.b16 %v12728, %v12724
    %v13041 = vpack.c.b16 %v12729, %v12725
    %v13042 = vpack.c.b16 %v12730, %v12726
    %v13043 = vpack.c.b16 %v12731, %v12727
    %v13044 = vpack.c.b16 %v12736, %v12732
    %v13045 = vpack.c.b16 %v12737, %v12733
    %v13046 = vpack.c.b16 %v12738, %v12734
    %v13047 = vpack.c.b16 %v12739, %v12735
    %v13048 = vpack.c.b16 %v12744, %v12740
    %v13049 = vpack.c.b16 %v12745, %v12741
    %v13050 = vpack.c.b16 %v12746, %v12742
    %v13051 = vpack.c.b16 %v12747, %v12743
    %v13052 = vpack.c.b16 %v12752, %v12748
    %v13053 = vpack.c.b16 %v12753, %v12749
    %v13054 = vpack.c.b16 %v12754, %v12750
    %v13055 = vpack.c.b16 %v12755, %v12751
    %v13056 = vpack.c.b16 %v12760, %v12756
    %v13057 = vpack.c.b16 %v12761, %v12757
    %v13058 = vpack.c.b16 %v12762, %v12758
    %v13059 = vpack.c.b16 %v12763, %v12759
    %v13060 = vpack.c.b16 %v12768, %v12764
    %v13061 = vpack.c.b16 %v12769, %v12765
    %v13062 = vpack.c.b16 %v12770, %v12766
    %v13063 = vpack.c.b16 %v12771, %v12767
    %v13064 = vpack.c.b16 %v12776, %v12772
    %v13065 = vpack.c.b16 %v12777, %v12773
    %v13066 = vpack.c.b16 %v12778, %v12774
    %v13067 = vpack.c.b16 %v12779, %v12775
    %v13068 = vpack.c.b16 %v12784, %v12780
    %v13069 = vpack.c.b16 %v12785, %v12781
    %v13070 = vpack.c.b16 %v12786, %v12782
    %v13071 = vpack.c.b16 %v12787, %v12783
    %v13072 = vpack.c.b16 %v12792, %v12788
    %v13073 = vpack.c.b16 %v12793, %v12789
    %v13074 = vpack.c.b16 %v12794, %v12790
    %v13075 = vpack.c.b16 %v12795, %v12791
    %v13076 = vpack.c.b16 %v12800, %v12796
    %v13077 = vpack.c.b16 %v12801, %v12797
    %v13078 = vpack.c.b16 %v12802, %v12798
    %v13079 = vpack.c.b16 %v12803, %v12799
    %v13080 = vpack.c.b16 %v12808, %v12804
    %v13081 = vpack.c.b16 %v12809, %v12805
    %v13082 = vpack.c.b16 %v12810, %v12806
    %v13083 = vpack.c.b16 %v12811, %v12807
    %v13084 = vpack.c.b16 %v12816, %v12812
    %v13085 = vpack.c.b16 %v12817, %v12813
    %v13086 = vpack.c.b16 %v12818, %v12814
    %v13087 = vpack.c.b16 %v12819, %v12815
    %v13088 = vpack.c.b16 %v12824, %v12820
    %v13089 = vpack.c.b16 %v12825, %v12821
    %v13090 = vpack.c.b16 %v12826, %v12822
    %v13091 = vpack.c.b16 %v12827, %v12823
    %v13092 = vpack.c.b16 %v12832, %v12828
    %v13093 = vpack.c.b16 %v12833, %v12829
    %v13094 = vpack.c.b16 %v12834, %v12830
    %v13095 = vpack.c.b16 %v12835, %v12831
    %v13096 = vpack.c.b16 %v12840, %v12836
    %v13097 = vpack.c.b16 %v12841, %v12837
    %v13098 = vpack.c.b16 %v12842, %v12838
    %v13099 = vpack.c.b16 %v12843, %v12839
    %13356 = vmatprep.subr.bf16.mxu0 %v12845
    %13357 = vmatpush1.bf16.msra.mxu0 %v12844
    %13358 = vmatprep.subr.bf16.mxu0 %v12849
    %13359 = vmatpush1.bf16.msra.mxu0 %v12848
    %13360 = vmatprep.subr.bf16.mxu0 %v12853
    %13361 = vmatpush1.bf16.msra.mxu0 %v12852
    %13362 = vmatprep.subr.bf16.mxu0 %v12857
    %13363 = vmatpush1.bf16.msra.mxu0 %v12856
    %13364 = vmatprep.subr.bf16.mxu0 %v12861
    %13365 = vmatpush1.bf16.msra.mxu0 %v12860
    %13366 = vmatprep.subr.bf16.mxu0 %v12865
    %13367 = vmatpush1.bf16.msra.mxu0 %v12864
    %13368 = vmatprep.subr.bf16.mxu0 %v12869
    %13369 = vmatpush1.bf16.msra.mxu0 %v12868
    %13370 = vmatprep.subr.bf16.mxu0 %v12873
    %13371 = vmatpush1.bf16.msra.mxu0 %v12872
    %13372 = vmatprep.subr.bf16.mxu0 %v12877
    %13373 = vmatpush1.bf16.msra.mxu0 %v12876
    %13374 = vmatprep.subr.bf16.mxu0 %v12881
    %13375 = vmatpush1.bf16.msra.mxu0 %v12880
    %13376 = vmatprep.subr.bf16.mxu0 %v12885
    %13377 = vmatpush1.bf16.msra.mxu0 %v12884
    %13378 = vmatprep.subr.bf16.mxu0 %v12889
    %13379 = vmatpush1.bf16.msra.mxu0 %v12888
    %13380 = vmatprep.subr.bf16.mxu0 %v12893
    %13381 = vmatpush1.bf16.msra.mxu0 %v12892
    %13382 = vmatprep.subr.bf16.mxu0 %v12897
    %13383 = vmatpush1.bf16.msra.mxu0 %v12896
    %13384 = vmatprep.subr.bf16.mxu0 %v12901
    %13385 = vmatpush1.bf16.msra.mxu0 %v12900
    %13386 = vmatprep.subr.bf16.mxu0 %v12905
    %13387 = vmatpush1.bf16.msra.mxu0 %v12904
    %13388 = vmatprep.mubr.bf16.mxu0 %v11791
    %13389 = vmatmul.mubr.bf16.gmra.mrb[0].mxu0 %v11790
    %v13390 = vpop.f32.mrb[0].mxu0
    %v13391 = vadd.f32 %v12059, %v13390
    %v13392 = vpop.f32.mrb[0].mxu0
    %v13393 = vadd.f32 %v12063, %v13392
    %v13394 = vpop.f32.mrb[0].mxu0
    %v13395 = vadd.f32 %v12059, %v13394
    %v13396 = vpop.f32.mrb[0].mxu0
    %v13397 = vadd.f32 %v12063, %v13396
    %13398 = vdwg.mxu0
    %13399 = vmatprep.subr.bf16.mxu0 %v12909
    %13400 = vmatpush1.bf16.msra.mxu0 %v12908
    %13401 = vmatprep.subr.bf16.mxu0 %v12913
    %13402 = vmatpush1.bf16.msra.mxu0 %v12912
    %13403 = vmatprep.subr.bf16.mxu0 %v12917
    %13404 = vmatpush1.bf16.msra.mxu0 %v12916
    %13405 = vmatprep.subr.bf16.mxu0 %v12921
    %13406 = vmatpush1.bf16.msra.mxu0 %v12920
    %13407 = vmatprep.subr.bf16.mxu0 %v12925
    %13408 = vmatpush1.bf16.msra.mxu0 %v12924
    %13409 = vmatprep.subr.bf16.mxu0 %v12929
    %13410 = vmatpush1.bf16.msra.mxu0 %v12928
    %13411 = vmatprep.subr.bf16.mxu0 %v12933
    %13412 = vmatpush1.bf16.msra.mxu0 %v12932
    %13413 = vmatprep.subr.bf16.mxu0 %v12937
    %13414 = vmatpush1.bf16.msra.mxu0 %v12936
    %13415 = vmatprep.subr.bf16.mxu0 %v12941
    %13416 = vmatpush1.bf16.msra.mxu0 %v12940
    %13417 = vmatprep.subr.bf16.mxu0 %v12945
    %13418 = vmatpush1.bf16.msra.mxu0 %v12944
    %13419 = vmatprep.subr.bf16.mxu0 %v12949
    %13420 = vmatpush1.bf16.msra.mxu0 %v12948
    %13421 = vmatprep.subr.bf16.mxu0 %v12953
    %13422 = vmatpush1.bf16.msra.mxu0 %v12952
    %13423 = vmatprep.subr.bf16.mxu0 %v12957
    %13424 = vmatpush1.bf16.msra.mxu0 %v12956
    %13425 = vmatprep.subr.bf16.mxu0 %v12961
    %13426 = vmatpush1.bf16.msra.mxu0 %v12960
    %13427 = vmatprep.subr.bf16.mxu0 %v12965
    %13428 = vmatpush1.bf16.msra.mxu0 %v12964
    %13429 = vmatprep.subr.bf16.mxu0 %v12969
    %13430 = vmatpush1.bf16.msra.mxu0 %v12968
    %13431 = vmatprep.mubr.bf16.mxu0 %v11793
    %13432 = vmatmul.mubr.bf16.gmra.mrb[0].mxu0 %v11792
    %v13433 = vpop.f32.mrb[0].mxu0
    %v13434 = vadd.f32 %v13391, %v13433
    %v13435 = vpop.f32.mrb[0].mxu0
    %v13436 = vadd.f32 %v13393, %v13435
    %v13437 = vpop.f32.mrb[0].mxu0
    %v13438 = vadd.f32 %v13395, %v13437
    %v13439 = vpop.f32.mrb[0].mxu0
    %v13440 = vadd.f32 %v13397, %v13439
    %13441 = vdwg.mxu0
    %13442 = vmatprep.subr.bf16.mxu0 %v12973
    %13443 = vmatpush1.bf16.msra.mxu0 %v12972
    %13444 = vmatprep.subr.bf16.mxu0 %v12977
    %13445 = vmatpush1.bf16.msra.mxu0 %v12976
    %13446 = vmatprep.subr.bf16.mxu0 %v12981
    %13447 = vmatpush1.bf16.msra.mxu0 %v12980
    %13448 = vmatprep.subr.bf16.mxu0 %v12985
    %13449 = vmatpush1.bf16.msra.mxu0 %v12984
    %13450 = vmatprep.subr.bf16.mxu0 %v12989
    %13451 = vmatpush1.bf16.msra.mxu0 %v12988
    %13452 = vmatprep.subr.bf16.mxu0 %v12993
    %13453 = vmatpush1.bf16.msra.mxu0 %v12992
    %13454 = vmatprep.subr.bf16.mxu0 %v12997
    %13455 = vmatpush1.bf16.msra.mxu0 %v12996
    %13456 = vmatprep.subr.bf16.mxu0 %v13001
    %13457 = vmatpush1.bf16.msra.mxu0 %v13000
    %13458 = vmatprep.subr.bf16.mxu0 %v13005
    %13459 = vmatpush1.bf16.msra.mxu0 %v13004
    %13460 = vmatprep.subr.bf16.mxu0 %v13009
    %13461 = vmatpush1.bf16.msra.mxu0 %v13008
    %13462 = vmatprep.subr.bf16.mxu0 %v13013
    %13463 = vmatpush1.bf16.msra.mxu0 %v13012
    %13464 = vmatprep.subr.bf16.mxu0 %v13017
    %13465 = vmatpush1.bf16.msra.mxu0 %v13016
    %13466 = vmatprep.subr.bf16.mxu0 %v13021
    %13467 = vmatpush1.bf16.msra.mxu0 %v13020
    %13468 = vmatprep.subr.bf16.mxu0 %v13025
    %13469 = vmatpush1.bf16.msra.mxu0 %v13024
    %13470 = vmatprep.subr.bf16.mxu0 %v13029
    %13471 = vmatpush1.bf16.msra.mxu0 %v13028
    %13472 = vmatprep.subr.bf16.mxu0 %v13033
    %13473 = vmatpush1.bf16.msra.mxu0 %v13032
    %13474 = vmatprep.mubr.bf16.mxu0 %v11795
    %13475 = vmatmul.mubr.bf16.gmra.mrb[0].mxu0 %v11794
    %v13476 = vpop.f32.mrb[0].mxu0
    %v13477 = vadd.f32 %v13434, %v13476
    %v13478 = vpop.f32.mrb[0].mxu0
    %v13479 = vadd.f32 %v13436, %v13478
    %v13480 = vpop.f32.mrb[0].mxu0
    %v13481 = vadd.f32 %v13438, %v13480
    %v13482 = vpop.f32.mrb[0].mxu0
    %v13483 = vadd.f32 %v13440, %v13482
    %13484 = vdwg.mxu0
    %13485 = vmatprep.subr.bf16.mxu0 %v13037
    %13486 = vmatpush1.bf16.msra.mxu0 %v13036
    %13487 = vmatprep.subr.bf16.mxu0 %v13041
    %13488 = vmatpush1.bf16.msra.mxu0 %v13040
    %13489 = vmatprep.subr.bf16.mxu0 %v13045
    %13490 = vmatpush1.bf16.msra.mxu0 %v13044
    %13491 = vmatprep.subr.bf16.mxu0 %v13049
    %13492 = vmatpush1.bf16.msra.mxu0 %v13048
    %13493 = vmatprep.subr.bf16.mxu0 %v13053
    %13494 = vmatpush1.bf16.msra.mxu0 %v13052
    %13495 = vmatprep.subr.bf16.mxu0 %v13057
    %13496 = vmatpush1.bf16.msra.mxu0 %v13056
    %13497 = vmatprep.subr.bf16.mxu0 %v13061
    %13498 = vmatpush1.bf16.msra.mxu0 %v13060
    %13499 = vmatprep.subr.bf16.mxu0 %v13065
    %13500 = vmatpush1.bf16.msra.mxu0 %v13064
    %13501 = vmatprep.subr.bf16.mxu0 %v13069
    %13502 = vmatpush1.bf16.msra.mxu0 %v13068
    %13503 = vmatprep.subr.bf16.mxu0 %v13073
    %13504 = vmatpush1.bf16.msra.mxu0 %v13072
    %13505 = vmatprep.subr.bf16.mxu0 %v13077
    %13506 = vmatpush1.bf16.msra.mxu0 %v13076
    %13507 = vmatprep.subr.bf16.mxu0 %v13081
    %13508 = vmatpush1.bf16.msra.mxu0 %v13080
    %13509 = vmatprep.subr.bf16.mxu0 %v13085
    %13510 = vmatpush1.bf16.msra.mxu0 %v13084
    %13511 = vmatprep.subr.bf16.mxu0 %v13089
    %13512 = vmatpush1.bf16.msra.mxu0 %v13088
    %13513 = vmatprep.subr.bf16.mxu0 %v13093
    %13514 = vmatpush1.bf16.msra.mxu0 %v13092
    %13515 = vmatprep.subr.bf16.mxu0 %v13097
    %13516 = vmatpush1.bf16.msra.mxu0 %v13096
    %13517 = vmatprep.mubr.bf16.mxu0 %v11797
    %13518 = vmatmul.mubr.bf16.gmra.mrb[0].mxu0 %v11796
    %v13519 = vpop.f32.mrb[0].mxu0
    %v13520 = vadd.f32 %v13477, %v13519
    %v13521 = vpop.f32.mrb[0].mxu0
    %v13522 = vadd.f32 %v13479, %v13521
    %v13523 = vpop.f32.mrb[0].mxu0
    %v13524 = vadd.f32 %v13481, %v13523
    %v13525 = vpop.f32.mrb[0].mxu0
    %v13526 = vadd.f32 %v13483, %v13525
    %13527 = vdwg.mxu0
    %13528 = vmatprep.subr.bf16.mxu0 %v12847
    %13529 = vmatpush1.bf16.msra.mxu0 %v12846
    %13530 = vmatprep.subr.bf16.mxu0 %v12851
    %13531 = vmatpush1.bf16.msra.mxu0 %v12850
    %13532 = vmatprep.subr.bf16.mxu0 %v12855
    %13533 = vmatpush1.bf16.msra.mxu0 %v12854
    %13534 = vmatprep.subr.bf16.mxu0 %v12859
    %13535 = vmatpush1.bf16.msra.mxu0 %v12858
    %13536 = vmatprep.subr.bf16.mxu0 %v12863
    %13537 = vmatpush1.bf16.msra.mxu0 %v12862
    %13538 = vmatprep.subr.bf16.mxu0 %v12867
    %13539 = vmatpush1.bf16.msra.mxu0 %v12866
    %13540 = vmatprep.subr.bf16.mxu0 %v12871
    %13541 = vmatpush1.bf16.msra.mxu0 %v12870
    %13542 = vmatprep.subr.bf16.mxu0 %v12875
    %13543 = vmatpush1.bf16.msra.mxu0 %v12874
    %13544 = vmatprep.subr.bf16.mxu0 %v12879
    %13545 = vmatpush1.bf16.msra.mxu0 %v12878
    %13546 = vmatprep.subr.bf16.mxu0 %v12883
    %13547 = vmatpush1.bf16.msra.mxu0 %v12882
    %13548 = vmatprep.subr.bf16.mxu0 %v12887
    %13549 = vmatpush1.bf16.msra.mxu0 %v12886
    %13550 = vmatprep.subr.bf16.mxu0 %v12891
    %13551 = vmatpush1.bf16.msra.mxu0 %v12890
    %13552 = vmatprep.subr.bf16.mxu0 %v12895
    %13553 = vmatpush1.bf16.msra.mxu0 %v12894
    %13554 = vmatprep.subr.bf16.mxu0 %v12899
    %13555 = vmatpush1.bf16.msra.mxu0 %v12898
    %13556 = vmatprep.subr.bf16.mxu0 %v12903
    %13557 = vmatpush1.bf16.msra.mxu0 %v12902
    %13558 = vmatprep.subr.bf16.mxu0 %v12907
    %13559 = vmatpush1.bf16.msra.mxu0 %v12906
    %13560 = vmatprep.mubr.bf16.mxu0 %v11791
    %13561 = vmatmul.mubr.bf16.gmra.mrb[0].mxu0 %v11790
    %v13562 = vpop.f32.mrb[0].mxu0
    %v13563 = vadd.f32 %v12067, %v13562
    %v13564 = vpop.f32.mrb[0].mxu0
    %v13565 = vadd.f32 %v12071, %v13564
    %v13566 = vpop.f32.mrb[0].mxu0
    %v13567 = vadd.f32 %v12067, %v13566
    %v13568 = vpop.f32.mrb[0].mxu0
    %v13569 = vadd.f32 %v12071, %v13568
    %13570 = vdwg.mxu0
    %13571 = vmatprep.subr.bf16.mxu0 %v12911
    %13572 = vmatpush1.bf16.msra.mxu0 %v12910
    %13573 = vmatprep.subr.bf16.mxu0 %v12915
    %13574 = vmatpush1.bf16.msra.mxu0 %v12914
    %13575 = vmatprep.subr.bf16.mxu0 %v12919
    %13576 = vmatpush1.bf16.msra.mxu0 %v12918
    %13577 = vmatprep.subr.bf16.mxu0 %v12923
    %13578 = vmatpush1.bf16.msra.mxu0 %v12922
    %13579 = vmatprep.subr.bf16.mxu0 %v12927
    %13580 = vmatpush1.bf16.msra.mxu0 %v12926
    %13581 = vmatprep.subr.bf16.mxu0 %v12931
    %13582 = vmatpush1.bf16.msra.mxu0 %v12930
    %13583 = vmatprep.subr.bf16.mxu0 %v12935
    %13584 = vmatpush1.bf16.msra.mxu0 %v12934
    %13585 = vmatprep.subr.bf16.mxu0 %v12939
    %13586 = vmatpush1.bf16.msra.mxu0 %v12938
    %13587 = vmatprep.subr.bf16.mxu0 %v12943
    %13588 = vmatpush1.bf16.msra.mxu0 %v12942
    %13589 = vmatprep.subr.bf16.mxu0 %v12947
    %13590 = vmatpush1.bf16.msra.mxu0 %v12946
    %13591 = vmatprep.subr.bf16.mxu0 %v12951
    %13592 = vmatpush1.bf16.msra.mxu0 %v12950
    %13593 = vmatprep.subr.bf16.mxu0 %v12955
    %13594 = vmatpush1.bf16.msra.mxu0 %v12954
    %13595 = vmatprep.subr.bf16.mxu0 %v12959
    %13596 = vmatpush1.bf16.msra.mxu0 %v12958
    %13597 = vmatprep.subr.bf16.mxu0 %v12963
    %13598 = vmatpush1.bf16.msra.mxu0 %v12962
    %13599 = vmatprep.subr.bf16.mxu0 %v12967
    %13600 = vmatpush1.bf16.msra.mxu0 %v12966
    %13601 = vmatprep.subr.bf16.mxu0 %v12971
    %13602 = vmatpush1.bf16.msra.mxu0 %v12970
    %13603 = vmatprep.mubr.bf16.mxu0 %v11793
    %13604 = vmatmul.mubr.bf16.gmra.mrb[0].mxu0 %v11792
    %v13605 = vpop.f32.mrb[0].mxu0
    %v13606 = vadd.f32 %v13563, %v13605
    %v13607 = vpop.f32.mrb[0].mxu0
    %v13608 = vadd.f32 %v13565, %v13607
    %v13609 = vpop.f32.mrb[0].mxu0
    %v13610 = vadd.f32 %v13567, %v13609
    %v13611 = vpop.f32.mrb[0].mxu0
    %v13612 = vadd.f32 %v13569, %v13611
    %13613 = vdwg.mxu0
    %13614 = vmatprep.subr.bf16.mxu0 %v12975
    %13615 = vmatpush1.bf16.msra.mxu0 %v12974
    %13616 = vmatprep.subr.bf16.mxu0 %v12979
    %13617 = vmatpush1.bf16.msra.mxu0 %v12978
    %13618 = vmatprep.subr.bf16.mxu0 %v12983
    %13619 = vmatpush1.bf16.msra.mxu0 %v12982
    %13620 = vmatprep.subr.bf16.mxu0 %v12987
    %13621 = vmatpush1.bf16.msra.mxu0 %v12986
    %13622 = vmatprep.subr.bf16.mxu0 %v12991
    %13623 = vmatpush1.bf16.msra.mxu0 %v12990
    %13624 = vmatprep.subr.bf16.mxu0 %v12995
    %13625 = vmatpush1.bf16.msra.mxu0 %v12994
    %13626 = vmatprep.subr.bf16.mxu0 %v12999
    %13627 = vmatpush1.bf16.msra.mxu0 %v12998
    %13628 = vmatprep.subr.bf16.mxu0 %v13003
    %13629 = vmatpush1.bf16.msra.mxu0 %v13002
    %13630 = vmatprep.subr.bf16.mxu0 %v13007
    %13631 = vmatpush1.bf16.msra.mxu0 %v13006
    %13632 = vmatprep.subr.bf16.mxu0 %v13011
    %13633 = vmatpush1.bf16.msra.mxu0 %v13010
    %13634 = vmatprep.subr.bf16.mxu0 %v13015
    %13635 = vmatpush1.bf16.msra.mxu0 %v13014
    %13636 = vmatprep.subr.bf16.mxu0 %v13019
    %13637 = vmatpush1.bf16.msra.mxu0 %v13018
    %13638 = vmatprep.subr.bf16.mxu0 %v13023
    %13639 = vmatpush1.bf16.msra.mxu0 %v13022
    %13640 = vmatprep.subr.bf16.mxu0 %v13027
    %13641 = vmatpush1.bf16.msra.mxu0 %v13026
    %13642 = vmatprep.subr.bf16.mxu0 %v13031
    %13643 = vmatpush1.bf16.msra.mxu0 %v13030
    %13644 = vmatprep.subr.bf16.mxu0 %v13035
    %13645 = vmatpush1.bf16.msra.mxu0 %v13034
    %13646 = vmatprep.mubr.bf16.mxu0 %v11795
    %13647 = vmatmul.mubr.bf16.gmra.mrb[0].mxu0 %v11794
    %v13648 = vpop.f32.mrb[0].mxu0
    %v13649 = vadd.f32 %v13606, %v13648
    %v13650 = vpop.f32.mrb[0].mxu0
    %v13651 = vadd.f32 %v13608, %v13650
    %v13652 = vpop.f32.mrb[0].mxu0
    %v13653 = vadd.f32 %v13610, %v13652
    %v13654 = vpop.f32.mrb[0].mxu0
    %v13655 = vadd.f32 %v13612, %v13654
    %13656 = vdwg.mxu0
    %13657 = vmatprep.subr.bf16.mxu0 %v13039
    %13658 = vmatpush1.bf16.msra.mxu0 %v13038
    %13659 = vmatprep.subr.bf16.mxu0 %v13043
    %13660 = vmatpush1.bf16.msra.mxu0 %v13042
    %13661 = vmatprep.subr.bf16.mxu0 %v13047
    %13662 = vmatpush1.bf16.msra.mxu0 %v13046
    %13663 = vmatprep.subr.bf16.mxu0 %v13051
    %13664 = vmatpush1.bf16.msra.mxu0 %v13050
    %13665 = vmatprep.subr.bf16.mxu0 %v13055
    %13666 = vmatpush1.bf16.msra.mxu0 %v13054
    %13667 = vmatprep.subr.bf16.mxu0 %v13059
    %13668 = vmatpush1.bf16.msra.mxu0 %v13058
    %13669 = vmatprep.subr.bf16.mxu0 %v13063
    %13670 = vmatpush1.bf16.msra.mxu0 %v13062
    %13671 = vmatprep.subr.bf16.mxu0 %v13067
    %13672 = vmatpush1.bf16.msra.mxu0 %v13066
    %13673 = vmatprep.subr.bf16.mxu0 %v13071
    %13674 = vmatpush1.bf16.msra.mxu0 %v13070
    %13675 = vmatprep.subr.bf16.mxu0 %v13075
    %13676 = vmatpush1.bf16.msra.mxu0 %v13074
    %13677 = vmatprep.subr.bf16.mxu0 %v13079
    %13678 = vmatpush1.bf16.msra.mxu0 %v13078
    %13679 = vmatprep.subr.bf16.mxu0 %v13083
    %13680 = vmatpush1.bf16.msra.mxu0 %v13082
    %13681 = vmatprep.subr.bf16.mxu0 %v13087
    %13682 = vmatpush1.bf16.msra.mxu0 %v13086
    %13683 = vmatprep.subr.bf16.mxu0 %v13091
    %13684 = vmatpush1.bf16.msra.mxu0 %v13090
    %13685 = vmatprep.subr.bf16.mxu0 %v13095
    %13686 = vmatpush1.bf16.msra.mxu0 %v13094
    %13687 = vmatprep.subr.bf16.mxu0 %v13099
    %13688 = vmatpush1.bf16.msra.mxu0 %v13098
    %13689 = vmatprep.mubr.bf16.mxu0 %v11797
    %13690 = vmatmul.mubr.bf16.gmra.mrb[0].mxu0 %v11796
    %v13691 = vpop.f32.mrb[0].mxu0
    %v13692 = vadd.f32 %v13649, %v13691
    %v13693 = vpop.f32.mrb[0].mxu0
    %v13694 = vadd.f32 %v13651, %v13693
    %v13695 = vpop.f32.mrb[0].mxu0
    %v13696 = vadd.f32 %v13653, %v13695
    %v13697 = vpop.f32.mrb[0].mxu0
    %v13698 = vadd.f32 %v13655, %v13697
    %13699 = vdwg.mxu0
    %v13700 = vpack.c.bf16 %v13524, %v13520
    %v13701 = vpack.c.bf16 %v13526, %v13522
    %v13702 = vpack.c.bf16 %v13696, %v13692
    %v13703 = vpack.c.bf16 %v13698, %v13694
    %v13704 = vmul.bf16 %v13700, 1045249613
    %v13705 = vmul.bf16 %v13701, 1045249613
    %v13706 = vmul.bf16 %v13702, 1045249613
    %v13707 = vmul.bf16 %v13703, 1045249613
    %v13708 = vmax.bf16 %v13700, %v13704
    %v13709 = vmax.bf16 %v13701, %v13705
    %v13710 = vmax.bf16 %v13702, %v13706
    %v13711 = vmax.bf16 %v13703, %v13707
    %v13712 = vmul.u32 %v11568, 512
    %v13713 = vmul.u32 %v11569, 512
    %v13714 = vadd.s32 %v13712, %v11571
    %v13715 = vadd.s32 %v13712, %v11572
    %v13716 = vadd.s32 %v13712, %v11573
    %v13717 = vadd.s32 %v13712, %v11574
    %v13718 = vadd.s32 %v13713, %v11571
    %v13719 = vadd.s32 %v13713, %v11572
    %v13720 = vadd.s32 %v13713, %v11573
    %v13721 = vadd.s32 %v13713, %v11574
    %v13722 = vxor.u32 %v13714, %v11597
    %v13723 = vxor.u32 %v13715, %v11597
    %v13724 = vxor.u32 %v13716, %v11597
    %v13725 = vxor.u32 %v13717, %v11597
    %v13726 = vxor.u32 %v13718, %v11597
    %v13727 = vxor.u32 %v13719, %v11597
    %v13728 = vxor.u32 %v13720, %v11597
    %v13729 = vxor.u32 %v13721, %v11597
    %v13730 = vxor.u32 %v13722, 3266489909
    %v13731 = vxor.u32 %v13723, 3266489909
    %v13732 = vxor.u32 %v13724, 3266489909
    %v13733 = vxor.u32 %v13725, 3266489909
    %v13734 = vxor.u32 %v13726, 3266489909
    %v13735 = vxor.u32 %v13727, 3266489909
    %v13736 = vxor.u32 %v13728, 3266489909
    %v13737 = vxor.u32 %v13729, 3266489909
    %v13738 = vshrl.u32 %v13730, 16
    %v13739 = vshrl.u32 %v13731, 16
    %v13740 = vshrl.u32 %v13732, 16
    %v13741 = vshrl.u32 %v13733, 16
    %v13742 = vshrl.u32 %v13734, 16
    %v13743 = vshrl.u32 %v13735, 16
    %v13744 = vshrl.u32 %v13736, 16
    %v13745 = vshrl.u32 %v13737, 16
    %v13746 = vxor.u32 %v13730, %v13738
    %v13747 = vxor.u32 %v13731, %v13739
    %v13748 = vxor.u32 %v13732, %v13740
    %v13749 = vxor.u32 %v13733, %v13741
    %v13750 = vxor.u32 %v13734, %v13742
    %v13751 = vxor.u32 %v13735, %v13743
    %v13752 = vxor.u32 %v13736, %v13744
    %v13753 = vxor.u32 %v13737, %v13745
    %v13754 = vmul.u32 %v13746, 2146121005
    %v13755 = vmul.u32 %v13747, 2146121005
    %v13756 = vmul.u32 %v13748, 2146121005
    %v13757 = vmul.u32 %v13749, 2146121005
    %v13758 = vmul.u32 %v13750, 2146121005
    %v13759 = vmul.u32 %v13751, 2146121005
    %v13760 = vmul.u32 %v13752, 2146121005
    %v13761 = vmul.u32 %v13753, 2146121005
    %v13762 = vshrl.u32 %v13754, 15
    %v13763 = vshrl.u32 %v13755, 15
    %v13764 = vshrl.u32 %v13756, 15
    %v13765 = vshrl.u32 %v13757, 15
    %v13766 = vshrl.u32 %v13758, 15
    %v13767 = vshrl.u32 %v13759, 15
    %v13768 = vshrl.u32 %v13760, 15
    %v13769 = vshrl.u32 %v13761, 15
    %v13770 = vxor.u32 %v13754, %v13762
    %v13771 = vxor.u32 %v13755, %v13763
    %v13772 = vxor.u32 %v13756, %v13764
    %v13773 = vxor.u32 %v13757, %v13765
    %v13774 = vxor.u32 %v13758, %v13766
    %v13775 = vxor.u32 %v13759, %v13767
    %v13776 = vxor.u32 %v13760, %v13768
    %v13777 = vxor.u32 %v13761, %v13769
    %v13778 = vmul.u32 %v13770, 2221713035
    %v13779 = vmul.u32 %v13771, 2221713035
    %v13780 = vmul.u32 %v13772, 2221713035
    %v13781 = vmul.u32 %v13773, 2221713035
    %v13782 = vmul.u32 %v13774, 2221713035
    %v13783 = vmul.u32 %v13775, 2221713035
    %v13784 = vmul.u32 %v13776, 2221713035
    %v13785 = vmul.u32 %v13777, 2221713035
    %v13786 = vshrl.u32 %v13778, 16
    %v13787 = vshrl.u32 %v13779, 16
    %v13788 = vshrl.u32 %v13780, 16
    %v13789 = vshrl.u32 %v13781, 16
    %v13790 = vshrl.u32 %v13782, 16
    %v13791 = vshrl.u32 %v13783, 16
    %v13792 = vshrl.u32 %v13784, 16
    %v13793 = vshrl.u32 %v13785, 16
    %v13794 = vxor.u32 %v13778, %v13786
    %v13795 = vxor.u32 %v13779, %v13787
    %v13796 = vxor.u32 %v13780, %v13788
    %v13797 = vxor.u32 %v13781, %v13789
    %v13798 = vxor.u32 %v13782, %v13790
    %v13799 = vxor.u32 %v13783, %v13791
    %v13800 = vxor.u32 %v13784, %v13792
    %v13801 = vxor.u32 %v13785, %v13793
    %vm13802 = vcmp.ge.u32.totalorder %v13794, 1288490188
    %vm13803 = vcmp.ge.u32.totalorder %v13795, 1288490188
    %vm13804 = vcmp.ge.u32.totalorder %v13796, 1288490188
    %vm13805 = vcmp.ge.u32.totalorder %v13797, 1288490188
    %vm13806 = vcmp.ge.u32.totalorder %v13798, 1288490188
    %vm13807 = vcmp.ge.u32.totalorder %v13799, 1288490188
    %vm13808 = vcmp.ge.u32.totalorder %v13800, 1288490188
    %vm13809 = vcmp.ge.u32.totalorder %v13801, 1288490188
    %v13810 = vmul.bf16 %v13708, 1068974007
    %v13811 = vmul.bf16 %v13709, 1068974007
    %v13812 = vmul.bf16 %v13710, 1068974007
    %v13813 = vmul.bf16 %v13711, 1068974007
    %vm13814 = vmpackc.low %vm13806, %vm13802
    %vm13815 = vmpackc.low %vm13807, %vm13803
    %vm13816 = vmpackc.low %vm13808, %vm13804
    %vm13817 = vmpackc.low %vm13809, %vm13805
    %v13818 = vsel %vm13814, %v13810, 0
    %v13819 = vsel %vm13815, %v13811, 0
    %v13820 = vsel %vm13816, %v13812, 0
    %v13821 = vsel %vm13817, %v13813, 0
    %v13822 = vld [vmem:[#allocation11] sm:$0xff]
    %v13823 = vld [vmem:[#allocation11 + $0x8] sm:$0xff]
    %v13824 = vld [vmem:[#allocation11 + $0x10] sm:$0xff]
    %v13825 = vld [vmem:[#allocation11 + $0x18] sm:$0xff]
    %v13826 = vld [vmem:[#allocation11 + $0x20] sm:$0xff]
    %v13827 = vld [vmem:[#allocation11 + $0x28] sm:$0xff]
    %v13828 = vld [vmem:[#allocation11 + $0x30] sm:$0xff]
    %v13829 = vld [vmem:[#allocation11 + $0x38] sm:$0xff]
    %v13830 = vld [vmem:[#allocation11 + $0x40] sm:$0xff]
    %v13831 = vld [vmem:[#allocation11 + $0x48] sm:$0xff]
    %v13832 = vld [vmem:[#allocation11 + $0x50] sm:$0xff]
    %v13833 = vld [vmem:[#allocation11 + $0x58] sm:$0xff]
    %v13834 = vld [vmem:[#allocation11 + $0x60] sm:$0xff]
    %v13835 = vld [vmem:[#allocation11 + $0x68] sm:$0xff]
    %v13836 = vld [vmem:[#allocation11 + $0x70] sm:$0xff]
    %v13837 = vld [vmem:[#allocation11 + $0x78] sm:$0xff]
    %v13838 = vld [vmem:[#allocation11 + $0x80] sm:$0xff]
    %v13839 = vld [vmem:[#allocation11 + $0x88] sm:$0xff]
    %v13840 = vld [vmem:[#allocation11 + $0x90] sm:$0xff]
    %v13841 = vld [vmem:[#allocation11 + $0x98] sm:$0xff]
    %v13842 = vld [vmem:[#allocation11 + $0xa0] sm:$0xff]
    %v13843 = vld [vmem:[#allocation11 + $0xa8] sm:$0xff]
    %v13844 = vld [vmem:[#allocation11 + $0xb0] sm:$0xff]
    %v13845 = vld [vmem:[#allocation11 + $0xb8] sm:$0xff]
    %v13846 = vld [vmem:[#allocation11 + $0xc0] sm:$0xff]
    %v13847 = vld [vmem:[#allocation11 + $0xc8] sm:$0xff]
    %v13848 = vld [vmem:[#allocation11 + $0xd0] sm:$0xff]
    %v13849 = vld [vmem:[#allocation11 + $0xd8] sm:$0xff]
    %v13850 = vld [vmem:[#allocation11 + $0xe0] sm:$0xff]
    %v13851 = vld [vmem:[#allocation11 + $0xe8] sm:$0xff]
    %v13852 = vld [vmem:[#allocation11 + $0xf0] sm:$0xff]
    %v13853 = vld [vmem:[#allocation11 + $0xf8] sm:$0xff]
    %v13854 = vld [vmem:[#allocation11 + $0x100] sm:$0xff]
    %v13855 = vld [vmem:[#allocation11 + $0x108] sm:$0xff]
    %v13856 = vld [vmem:[#allocation11 + $0x110] sm:$0xff]
    %v13857 = vld [vmem:[#allocation11 + $0x118] sm:$0xff]
    %v13858 = vld [vmem:[#allocation11 + $0x120] sm:$0xff]
    %v13859 = vld [vmem:[#allocation11 + $0x128] sm:$0xff]
    %v13860 = vld [vmem:[#allocation11 + $0x130] sm:$0xff]
    %v13861 = vld [vmem:[#allocation11 + $0x138] sm:$0xff]
    %v13862 = vld [vmem:[#allocation11 + $0x140] sm:$0xff]
    %v13863 = vld [vmem:[#allocation11 + $0x148] sm:$0xff]
    %v13864 = vld [vmem:[#allocation11 + $0x150] sm:$0xff]
    %v13865 = vld [vmem:[#allocation11 + $0x158] sm:$0xff]
    %v13866 = vld [vmem:[#allocation11 + $0x160] sm:$0xff]
    %v13867 = vld [vmem:[#allocation11 + $0x168] sm:$0xff]
    %v13868 = vld [vmem:[#allocation11 + $0x170] sm:$0xff]
    %v13869 = vld [vmem:[#allocation11 + $0x178] sm:$0xff]
    %v13870 = vld [vmem:[#allocation11 + $0x180] sm:$0xff]
    %v13871 = vld [vmem:[#allocation11 + $0x188] sm:$0xff]
    %v13872 = vld [vmem:[#allocation11 + $0x190] sm:$0xff]
    %v13873 = vld [vmem:[#allocation11 + $0x198] sm:$0xff]
    %v13874 = vld [vmem:[#allocation11 + $0x1a0] sm:$0xff]
    %v13875 = vld [vmem:[#allocation11 + $0x1a8] sm:$0xff]
    %v13876 = vld [vmem:[#allocation11 + $0x1b0] sm:$0xff]
    %v13877 = vld [vmem:[#allocation11 + $0x1b8] sm:$0xff]
    %v13878 = vld [vmem:[#allocation11 + $0x1c0] sm:$0xff]
    %v13879 = vld [vmem:[#allocation11 + $0x1c8] sm:$0xff]
    %v13880 = vld [vmem:[#allocation11 + $0x1d0] sm:$0xff]
    %v13881 = vld [vmem:[#allocation11 + $0x1d8] sm:$0xff]
    %v13882 = vld [vmem:[#allocation11 + $0x1e0] sm:$0xff]
    %v13883 = vld [vmem:[#allocation11 + $0x1e8] sm:$0xff]
    %v13884 = vld [vmem:[#allocation11 + $0x1f0] sm:$0xff]
    %v13885 = vld [vmem:[#allocation11 + $0x1f8] sm:$0xff]
    %v13886 = vld [vmem:[#allocation12] sm:$0x3]
    %v13888 = vlaneseq
    %v13889 = vshrl.u32 %v13888, 7
    %v13890 = vsub.s32 0, %v13889
    %v13891 = vrot.slane %v13886, %v13890
    %v13892 = vlaneseq
    %v13893 = vshrl.u32 %v13892, 7
    %v13894 = vsub.s32 1, %v13893
    %v13895 = vrot.slane %v13886, %v13894
    %v13962 = vunpack.c.l.b16 %v13822
    %v13963 = vunpack.c.h.b16 %v13822
    %v13964 = vunpack.c.l.b16 %v13823
    %v13965 = vunpack.c.h.b16 %v13823
    %v13966 = vunpack.c.l.b16 %v13824
    %v13967 = vunpack.c.h.b16 %v13824
    %v13968 = vunpack.c.l.b16 %v13825
    %v13969 = vunpack.c.h.b16 %v13825
    %v13970 = vunpack.c.l.b16 %v13826
    %v13971 = vunpack.c.h.b16 %v13826
    %v13972 = vunpack.c.l.b16 %v13827
    %v13973 = vunpack.c.h.b16 %v13827
    %v13974 = vunpack.c.l.b16 %v13828
    %v13975 = vunpack.c.h.b16 %v13828
    %v13976 = vunpack.c.l.b16 %v13829
    %v13977 = vunpack.c.h.b16 %v13829
    %v13978 = vunpack.c.l.b16 %v13830
    %v13979 = vunpack.c.h.b16 %v13830
    %v13980 = vunpack.c.l.b16 %v13831
    %v13981 = vunpack.c.h.b16 %v13831
    %v13982 = vunpack.c.l.b16 %v13832
    %v13983 = vunpack.c.h.b16 %v13832
    %v13984 = vunpack.c.l.b16 %v13833
    %v13985 = vunpack.c.h.b16 %v13833
    %v13986 = vunpack.c.l.b16 %v13834
    %v13987 = vunpack.c.h.b16 %v13834
    %v13988 = vunpack.c.l.b16 %v13835
    %v13989 = vunpack.c.h.b16 %v13835
    %v13990 = vunpack.c.l.b16 %v13836
    %v13991 = vunpack.c.h.b16 %v13836
    %v13992 = vunpack.c.l.b16 %v13837
    %v13993 = vunpack.c.h.b16 %v13837
    %v13994 = vunpack.c.l.b16 %v13838
    %v13995 = vunpack.c.h.b16 %v13838
    %v13996 = vunpack.c.l.b16 %v13839
    %v13997 = vunpack.c.h.b16 %v13839
    %v13998 = vunpack.c.l.b16 %v13840
    %v13999 = vunpack.c.h.b16 %v13840
    %v14000 = vunpack.c.l.b16 %v13841
    %v14001 = vunpack.c.h.b16 %v13841
    %v14002 = vunpack.c.l.b16 %v13842
    %v14003 = vunpack.c.h.b16 %v13842
    %v14004 = vunpack.c.l.b16 %v13843
    %v14005 = vunpack.c.h.b16 %v13843
    %v14006 = vunpack.c.l.b16 %v13844
    %v14007 = vunpack.c.h.b16 %v13844
    %v14008 = vunpack.c.l.b16 %v13845
    %v14009 = vunpack.c.h.b16 %v13845
    %v14010 = vunpack.c.l.b16 %v13846
    %v14011 = vunpack.c.h.b16 %v13846
    %v14012 = vunpack.c.l.b16 %v13847
    %v14013 = vunpack.c.h.b16 %v13847
    %v14014 = vunpack.c.l.b16 %v13848
    %v14015 = vunpack.c.h.b16 %v13848
    %v14016 = vunpack.c.l.b16 %v13849
    %v14017 = vunpack.c.h.b16 %v13849
    %v14018 = vunpack.c.l.b16 %v13850
    %v14019 = vunpack.c.h.b16 %v13850
    %v14020 = vunpack.c.l.b16 %v13851
    %v14021 = vunpack.c.h.b16 %v13851
    %v14022 = vunpack.c.l.b16 %v13852
    %v14023 = vunpack.c.h.b16 %v13852
    %v14024 = vunpack.c.l.b16 %v13853
    %v14025 = vunpack.c.h.b16 %v13853
    %v14026 = vunpack.c.l.b16 %v13854
    %v14027 = vunpack.c.h.b16 %v13854
    %v14028 = vunpack.c.l.b16 %v13855
    %v14029 = vunpack.c.h.b16 %v13855
    %v14030 = vunpack.c.l.b16 %v13856
    %v14031 = vunpack.c.h.b16 %v13856
    %v14032 = vunpack.c.l.b16 %v13857
    %v14033 = vunpack.c.h.b16 %v13857
    %v14034 = vunpack.c.l.b16 %v13858
    %v14035 = vunpack.c.h.b16 %v13858
    %v14036 = vunpack.c.l.b16 %v13859
    %v14037 = vunpack.c.h.b16 %v13859
    %v14038 = vunpack.c.l.b16 %v13860
    %v14039 = vunpack.c.h.b16 %v13860
    %v14040 = vunpack.c.l.b16 %v13861
    %v14041 = vunpack.c.h.b16 %v13861
    %v14042 = vunpack.c.l.b16 %v13862
    %v14043 = vunpack.c.h.b16 %v13862
    %v14044 = vunpack.c.l.b16 %v13863
    %v14045 = vunpack.c.h.b16 %v13863
    %v14046 = vunpack.c.l.b16 %v13864
    %v14047 = vunpack.c.h.b16 %v13864
    %v14048 = vunpack.c.l.b16 %v13865
    %v14049 = vunpack.c.h.b16 %v13865
    %v14050 = vunpack.c.l.b16 %v13866
    %v14051 = vunpack.c.h.b16 %v13866
    %v14052 = vunpack.c.l.b16 %v13867
    %v14053 = vunpack.c.h.b16 %v13867
    %v14054 = vunpack.c.l.b16 %v13868
    %v14055 = vunpack.c.h.b16 %v13868
    %v14056 = vunpack.c.l.b16 %v13869
    %v14057 = vunpack.c.h.b16 %v13869
    %v14058 = vunpack.c.l.b16 %v13870
    %v14059 = vunpack.c.h.b16 %v13870
    %v14060 = vunpack.c.l.b16 %v13871
    %v14061 = vunpack.c.h.b16 %v13871
    %v14062 = vunpack.c.l.b16 %v13872
    %v14063 = vunpack.c.h.b16 %v13872
    %v14064 = vunpack.c.l.b16 %v13873
    %v14065 = vunpack.c.h.b16 %v13873
    %v14066 = vunpack.c.l.b16 %v13874
    %v14067 = vunpack.c.h.b16 %v13874
    %v14068 = vunpack.c.l.b16 %v13875
    %v14069 = vunpack.c.h.b16 %v13875
    %v14070 = vunpack.c.l.b16 %v13876
    %v14071 = vunpack.c.h.b16 %v13876
    %v14072 = vunpack.c.l.b16 %v13877
    %v14073 = vunpack.c.h.b16 %v13877
    %v14074 = vunpack.c.l.b16 %v13878
    %v14075 = vunpack.c.h.b16 %v13878
    %v14076 = vunpack.c.l.b16 %v13879
    %v14077 = vunpack.c.h.b16 %v13879
    %v14078 = vunpack.c.l.b16 %v13880
    %v14079 = vunpack.c.h.b16 %v13880
    %v14080 = vunpack.c.l.b16 %v13881
    %v14081 = vunpack.c.h.b16 %v13881
    %v14082 = vunpack.c.l.b16 %v13882
    %v14083 = vunpack.c.h.b16 %v13882
    %v14084 = vunpack.c.l.b16 %v13883
    %v14085 = vunpack.c.h.b16 %v13883
    %v14086 = vunpack.c.l.b16 %v13884
    %v14087 = vunpack.c.h.b16 %v13884
    %v14088 = vunpack.c.l.b16 %v13885
    %v14089 = vunpack.c.h.b16 %v13885
    %v14090 = vpack.c.b16 %v13964, %v13962
    %v14091 = vpack.c.b16 %v13965, %v13963
    %v14092 = vpack.c.b16 %v13968, %v13966
    %v14093 = vpack.c.b16 %v13969, %v13967
    %v14094 = vpack.c.b16 %v13972, %v13970
    %v14095 = vpack.c.b16 %v13973, %v13971
    %v14096 = vpack.c.b16 %v13976, %v13974
    %v14097 = vpack.c.b16 %v13977, %v13975
    %v14098 = vpack.c.b16 %v13980, %v13978
    %v14099 = vpack.c.b16 %v13981, %v13979
    %v14100 = vpack.c.b16 %v13984, %v13982
    %v14101 = vpack.c.b16 %v13985, %v13983
    %v14102 = vpack.c.b16 %v13988, %v13986
    %v14103 = vpack.c.b16 %v13989, %v13987
    %v14104 = vpack.c.b16 %v13992, %v13990
    %v14105 = vpack.c.b16 %v13993, %v13991
    %v14106 = vpack.c.b16 %v13996, %v13994
    %v14107 = vpack.c.b16 %v13997, %v13995
    %v14108 = vpack.c.b16 %v14000, %v13998
    %v14109 = vpack.c.b16 %v14001, %v13999
    %v14110 = vpack.c.b16 %v14004, %v14002
    %v14111 = vpack.c.b16 %v14005, %v14003
    %v14112 = vpack.c.b16 %v14008, %v14006
    %v14113 = vpack.c.b16 %v14009, %v14007
    %v14114 = vpack.c.b16 %v14012, %v14010
    %v14115 = vpack.c.b16 %v14013, %v14011
    %v14116 = vpack.c.b16 %v14016, %v14014
    %v14117 = vpack.c.b16 %v14017, %v14015
    %v14118 = vpack.c.b16 %v14020, %v14018
    %v14119 = vpack.c.b16 %v14021, %v14019
    %v14120 = vpack.c.b16 %v14024, %v14022
    %v14121 = vpack.c.b16 %v14025, %v14023
    %v14122 = vpack.c.b16 %v14028, %v14026
    %v14123 = vpack.c.b16 %v14029, %v14027
    %v14124 = vpack.c.b16 %v14032, %v14030
    %v14125 = vpack.c.b16 %v14033, %v14031
    %v14126 = vpack.c.b16 %v14036, %v14034
    %v14127 = vpack.c.b16 %v14037, %v14035
    %v14128 = vpack.c.b16 %v14040, %v14038
    %v14129 = vpack.c.b16 %v14041, %v14039
    %v14130 = vpack.c.b16 %v14044, %v14042
    %v14131 = vpack.c.b16 %v14045, %v14043
    %v14132 = vpack.c.b16 %v14048, %v14046
    %v14133 = vpack.c.b16 %v14049, %v14047
    %v14134 = vpack.c.b16 %v14052, %v14050
    %v14135 = vpack.c.b16 %v14053, %v14051
    %v14136 = vpack.c.b16 %v14056, %v14054
    %v14137 = vpack.c.b16 %v14057, %v14055
    %v14138 = vpack.c.b16 %v14060, %v14058
    %v14139 = vpack.c.b16 %v14061, %v14059
    %v14140 = vpack.c.b16 %v14064, %v14062
    %v14141 = vpack.c.b16 %v14065, %v14063
    %v14142 = vpack.c.b16 %v14068, %v14066
    %v14143 = vpack.c.b16 %v14069, %v14067
    %v14144 = vpack.c.b16 %v14072, %v14070
    %v14145 = vpack.c.b16 %v14073, %v14071
    %v14146 = vpack.c.b16 %v14076, %v14074
    %v14147 = vpack.c.b16 %v14077, %v14075
    %v14148 = vpack.c.b16 %v14080, %v14078
    %v14149 = vpack.c.b16 %v14081, %v14079
    %v14150 = vpack.c.b16 %v14084, %v14082
    %v14151 = vpack.c.b16 %v14085, %v14083
    %v14152 = vpack.c.b16 %v14088, %v14086
    %v14153 = vpack.c.b16 %v14089, %v14087
    %14218 = vmatprep.subr.bf16.mxu0 %v14091
    %14219 = vmatpush1.bf16.msra.mxu0 %v14090
    %14220 = vmatprep.subr.bf16.mxu0 %v14093
    %14221 = vmatpush1.bf16.msra.mxu0 %v14092
    %14222 = vmatprep.subr.bf16.mxu0 %v14095
    %14223 = vmatpush1.bf16.msra.mxu0 %v14094
    %14224 = vmatprep.subr.bf16.mxu0 %v14097
    %14225 = vmatpush1.bf16.msra.mxu0 %v14096
    %14226 = vmatprep.subr.bf16.mxu0 %v14099
    %14227 = vmatpush1.bf16.msra.mxu0 %v14098
    %14228 = vmatprep.subr.bf16.mxu0 %v14101
    %14229 = vmatpush1.bf16.msra.mxu0 %v14100
    %14230 = vmatprep.subr.bf16.mxu0 %v14103
    %14231 = vmatpush1.bf16.msra.mxu0 %v14102
    %14232 = vmatprep.subr.bf16.mxu0 %v14105
    %14233 = vmatpush1.bf16.msra.mxu0 %v14104
    %14234 = vmatprep.subr.bf16.mxu0 %v14107
    %14235 = vmatpush1.bf16.msra.mxu0 %v14106
    %14236 = vmatprep.subr.bf16.mxu0 %v14109
    %14237 = vmatpush1.bf16.msra.mxu0 %v14108
    %14238 = vmatprep.subr.bf16.mxu0 %v14111
    %14239 = vmatpush1.bf16.msra.mxu0 %v14110
    %14240 = vmatprep.subr.bf16.mxu0 %v14113
    %14241 = vmatpush1.bf16.msra.mxu0 %v14112
    %14242 = vmatprep.subr.bf16.mxu0 %v14115
    %14243 = vmatpush1.bf16.msra.mxu0 %v14114
    %14244 = vmatprep.subr.bf16.mxu0 %v14117
    %14245 = vmatpush1.bf16.msra.mxu0 %v14116
    %14246 = vmatprep.subr.bf16.mxu0 %v14119
    %14247 = vmatpush1.bf16.msra.mxu0 %v14118
    %14248 = vmatprep.subr.bf16.mxu0 %v14121
    %14249 = vmatpush1.bf16.msra.mxu0 %v14120
    %14250 = vmatprep.mubr.bf16.mxu0 %v13819
    %14251 = vmatmul.mubr.bf16.gmra.mrb[0].mxu0 %v13818
    %v14252 = vpop.f32.mrb[0].mxu0
    %v14253 = vadd.f32 %v13891, %v14252
    %v14254 = vpop.f32.mrb[0].mxu0
    %v14255 = vadd.f32 %v13895, %v14254
    %v14256 = vpop.f32.mrb[0].mxu0
    %v14257 = vadd.f32 %v13891, %v14256
    %v14258 = vpop.f32.mrb[0].mxu0
    %v14259 = vadd.f32 %v13895, %v14258
    %14260 = vdwg.mxu0
    %14261 = vmatprep.subr.bf16.mxu0 %v14123
    %14262 = vmatpush1.bf16.msra.mxu0 %v14122
    %14263 = vmatprep.subr.bf16.mxu0 %v14125
    %14264 = vmatpush1.bf16.msra.mxu0 %v14124
    %14265 = vmatprep.subr.bf16.mxu0 %v14127
    %14266 = vmatpush1.bf16.msra.mxu0 %v14126
    %14267 = vmatprep.subr.bf16.mxu0 %v14129
    %14268 = vmatpush1.bf16.msra.mxu0 %v14128
    %14269 = vmatprep.subr.bf16.mxu0 %v14131
    %14270 = vmatpush1.bf16.msra.mxu0 %v14130
    %14271 = vmatprep.subr.bf16.mxu0 %v14133
    %14272 = vmatpush1.bf16.msra.mxu0 %v14132
    %14273 = vmatprep.subr.bf16.mxu0 %v14135
    %14274 = vmatpush1.bf16.msra.mxu0 %v14134
    %14275 = vmatprep.subr.bf16.mxu0 %v14137
    %14276 = vmatpush1.bf16.msra.mxu0 %v14136
    %14277 = vmatprep.subr.bf16.mxu0 %v14139
    %14278 = vmatpush1.bf16.msra.mxu0 %v14138
    %14279 = vmatprep.subr.bf16.mxu0 %v14141
    %14280 = vmatpush1.bf16.msra.mxu0 %v14140
    %14281 = vmatprep.subr.bf16.mxu0 %v14143
    %14282 = vmatpush1.bf16.msra.mxu0 %v14142
    %14283 = vmatprep.subr.bf16.mxu0 %v14145
    %14284 = vmatpush1.bf16.msra.mxu0 %v14144
    %14285 = vmatprep.subr.bf16.mxu0 %v14147
    %14286 = vmatpush1.bf16.msra.mxu0 %v14146
    %14287 = vmatprep.subr.bf16.mxu0 %v14149
    %14288 = vmatpush1.bf16.msra.mxu0 %v14148
    %14289 = vmatprep.subr.bf16.mxu0 %v14151
    %14290 = vmatpush1.bf16.msra.mxu0 %v14150
    %14291 = vmatprep.subr.bf16.mxu0 %v14153
    %14292 = vmatpush1.bf16.msra.mxu0 %v14152
    %14293 = vmatprep.mubr.bf16.mxu0 %v13821
    %14294 = vmatmul.mubr.bf16.gmra.mrb[0].mxu0 %v13820
    %v14295 = vpop.f32.mrb[0].mxu0
    %v14296 = vadd.f32 %v14253, %v14295
    %v14297 = vpop.f32.mrb[0].mxu0
    %v14298 = vadd.f32 %v14255, %v14297
    %v14299 = vpop.f32.mrb[0].mxu0
    %v14300 = vadd.f32 %v14257, %v14299
    %v14301 = vpop.f32.mrb[0].mxu0
    %v14302 = vadd.f32 %v14259, %v14301
    %14303 = vdwg.mxu0
    %v14304 = vpack.c.bf16 %v14300, %v14296
    %v14305 = vpack.c.bf16 %v14302, %v14298
    %v14306 = vmul.bf16 %v14304, 1045249613
    %v14307 = vmul.bf16 %v14305, 1045249613
    %v14308 = vmax.bf16 %v14304, %v14306
    %v14309 = vmax.bf16 %v14305, %v14307
    %v14310 = vmul.u32 %v11568, 256
    %v14311 = vmul.u32 %v11569, 256
    %v14312 = vadd.s32 %v14310, %v11571
    %v14313 = vadd.s32 %v14310, %v11572
    %v14314 = vadd.s32 %v14311, %v11571
    %v14315 = vadd.s32 %v14311, %v11572
    %v14316 = vxor.u32 %v14312, %v11597
    %v14317 = vxor.u32 %v14313, %v11597
    %v14318 = vxor.u32 %v14314, %v11597
    %v14319 = vxor.u32 %v14315, %v11597
    %v14320 = vxor.u32 %v14316, 668265263
    %v14321 = vxor.u32 %v14317, 668265263
    %v14322 = vxor.u32 %v14318, 668265263
    %v14323 = vxor.u32 %v14319, 668265263
    %v14324 = vshrl.u32 %v14320, 16
    %v14325 = vshrl.u32 %v14321, 16
    %v14326 = vshrl.u32 %v14322, 16
    %v14327 = vshrl.u32 %v14323, 16
    %v14328 = vxor.u32 %v14320, %v14324
    %v14329 = vxor.u32 %v14321, %v14325
    %v14330 = vxor.u32 %v14322, %v14326
    %v14331 = vxor.u32 %v14323, %v14327
    %v14332 = vmul.u32 %v14328, 2146121005
    %v14333 = vmul.u32 %v14329, 2146121005
    %v14334 = vmul.u32 %v14330, 2146121005
    %v14335 = vmul.u32 %v14331, 2146121005
    %v14336 = vshrl.u32 %v14332, 15
    %v14337 = vshrl.u32 %v14333, 15
    %v14338 = vshrl.u32 %v14334, 15
    %v14339 = vshrl.u32 %v14335, 15
    %v14340 = vxor.u32 %v14332, %v14336
    %v14341 = vxor.u32 %v14333, %v14337
    %v14342 = vxor.u32 %v14334, %v14338
    %v14343 = vxor.u32 %v14335, %v14339
    %v14344 = vmul.u32 %v14340, 2221713035
    %v14345 = vmul.u32 %v14341, 2221713035
    %v14346 = vmul.u32 %v14342, 2221713035
    %v14347 = vmul.u32 %v14343, 2221713035
    %v14348 = vshrl.u32 %v14344, 16
    %v14349 = vshrl.u32 %v14345, 16
    %v14350 = vshrl.u32 %v14346, 16
    %v14351 = vshrl.u32 %v14347, 16
    %v14352 = vxor.u32 %v14344, %v14348
    %v14353 = vxor.u32 %v14345, %v14349
    %v14354 = vxor.u32 %v14346, %v14350
    %v14355 = vxor.u32 %v14347, %v14351
    %vm14356 = vcmp.ge.u32.totalorder %v14352, 1288490188
    %vm14357 = vcmp.ge.u32.totalorder %v14353, 1288490188
    %vm14358 = vcmp.ge.u32.totalorder %v14354, 1288490188
    %vm14359 = vcmp.ge.u32.totalorder %v14355, 1288490188
    %v14360 = vmul.bf16 %v14308, 1068974007
    %v14361 = vmul.bf16 %v14309, 1068974007
    %vm14362 = vmpackc.low %vm14358, %vm14356
    %vm14363 = vmpackc.low %vm14359, %vm14357
    %v14364 = vsel %vm14362, %v14360, 0
    %v14365 = vsel %vm14363, %v14361, 0
    %v14366 = vld [vmem:[#allocation14] sm:$0xf]
    %v14367 = vld [vmem:[#allocation14 + $0x4] sm:$0xf]
    %v14368 = vld [vmem:[#allocation14 + $0x8] sm:$0xf]
    %v14369 = vld [vmem:[#allocation14 + $0xc] sm:$0xf]
    %v14370 = vld [vmem:[#allocation14 + $0x10] sm:$0xf]
    %v14371 = vld [vmem:[#allocation14 + $0x14] sm:$0xf]
    %v14372 = vld [vmem:[#allocation14 + $0x18] sm:$0xf]
    %v14373 = vld [vmem:[#allocation14 + $0x1c] sm:$0xf]
    %v14374 = vld [vmem:[#allocation14 + $0x20] sm:$0xf]
    %v14375 = vld [vmem:[#allocation14 + $0x24] sm:$0xf]
    %v14376 = vld [vmem:[#allocation14 + $0x28] sm:$0xf]
    %v14377 = vld [vmem:[#allocation14 + $0x2c] sm:$0xf]
    %v14378 = vld [vmem:[#allocation14 + $0x30] sm:$0xf]
    %v14379 = vld [vmem:[#allocation14 + $0x34] sm:$0xf]
    %v14380 = vld [vmem:[#allocation14 + $0x38] sm:$0xf]
    %v14381 = vld [vmem:[#allocation14 + $0x3c] sm:$0xf]
    %v14382 = vld [vmem:[#allocation14 + $0x40] sm:$0xf]
    %v14383 = vld [vmem:[#allocation14 + $0x44] sm:$0xf]
    %v14384 = vld [vmem:[#allocation14 + $0x48] sm:$0xf]
    %v14385 = vld [vmem:[#allocation14 + $0x4c] sm:$0xf]
    %v14386 = vld [vmem:[#allocation14 + $0x50] sm:$0xf]
    %v14387 = vld [vmem:[#allocation14 + $0x54] sm:$0xf]
    %v14388 = vld [vmem:[#allocation14 + $0x58] sm:$0xf]
    %v14389 = vld [vmem:[#allocation14 + $0x5c] sm:$0xf]
    %v14390 = vld [vmem:[#allocation14 + $0x60] sm:$0xf]
    %v14391 = vld [vmem:[#allocation14 + $0x64] sm:$0xf]
    %v14392 = vld [vmem:[#allocation14 + $0x68] sm:$0xf]
    %v14393 = vld [vmem:[#allocation14 + $0x6c] sm:$0xf]
    %v14394 = vld [vmem:[#allocation14 + $0x70] sm:$0xf]
    %v14395 = vld [vmem:[#allocation14 + $0x74] sm:$0xf]
    %v14396 = vld [vmem:[#allocation14 + $0x78] sm:$0xf]
    %v14397 = vld [vmem:[#allocation14 + $0x7c] sm:$0xf]
    %v14398 = vld [vmem:[#allocation15] sm:$0x1]
    %v14400 = vlaneseq
    %v14401 = vshrl.u32 %v14400, 7
    %v14402 = vsub.s32 0, %v14401
    %v14403 = vrot.slane %v14398, %v14402
    %v14437 = vunpack.c.l.b16 %v14366
    %v14438 = vunpack.c.l.b16 %v14367
    %v14439 = vunpack.c.l.b16 %v14368
    %v14440 = vunpack.c.l.b16 %v14369
    %v14441 = vunpack.c.l.b16 %v14370
    %v14442 = vunpack.c.l.b16 %v14371
    %v14443 = vunpack.c.l.b16 %v14372
    %v14444 = vunpack.c.l.b16 %v14373
    %v14445 = vunpack.c.l.b16 %v14374
    %v14446 = vunpack.c.l.b16 %v14375
    %v14447 = vunpack.c.l.b16 %v14376
    %v14448 = vunpack.c.l.b16 %v14377
    %v14449 = vunpack.c.l.b16 %v14378
    %v14450 = vunpack.c.l.b16 %v14379
    %v14451 = vunpack.c.l.b16 %v14380
    %v14452 = vunpack.c.l.b16 %v14381
    %v14453 = vunpack.c.l.b16 %v14382
    %v14454 = vunpack.c.l.b16 %v14383
    %v14455 = vunpack.c.l.b16 %v14384
    %v14456 = vunpack.c.l.b16 %v14385
    %v14457 = vunpack.c.l.b16 %v14386
    %v14458 = vunpack.c.l.b16 %v14387
    %v14459 = vunpack.c.l.b16 %v14388
    %v14460 = vunpack.c.l.b16 %v14389
    %v14461 = vunpack.c.l.b16 %v14390
    %v14462 = vunpack.c.l.b16 %v14391
    %v14463 = vunpack.c.l.b16 %v14392
    %v14464 = vunpack.c.l.b16 %v14393
    %v14465 = vunpack.c.l.b16 %v14394
    %v14466 = vunpack.c.l.b16 %v14395
    %v14467 = vunpack.c.l.b16 %v14396
    %v14468 = vunpack.c.l.b16 %v14397
    %v14469 = vpack.c.b16 %v14438, %v14437
    %v14470 = vpack.c.b16 %v14440, %v14439
    %v14471 = vpack.c.b16 %v14442, %v14441
    %v14472 = vpack.c.b16 %v14444, %v14443
    %v14473 = vpack.c.b16 %v14446, %v14445
    %v14474 = vpack.c.b16 %v14448, %v14447
    %v14475 = vpack.c.b16 %v14450, %v14449
    %v14476 = vpack.c.b16 %v14452, %v14451
    %v14477 = vpack.c.b16 %v14454, %v14453
    %v14478 = vpack.c.b16 %v14456, %v14455
    %v14479 = vpack.c.b16 %v14458, %v14457
    %v14480 = vpack.c.b16 %v14460, %v14459
    %v14481 = vpack.c.b16 %v14462, %v14461
    %v14482 = vpack.c.b16 %v14464, %v14463
    %v14483 = vpack.c.b16 %v14466, %v14465
    %v14484 = vpack.c.b16 %v14468, %v14467
    %14501 = vmatprep.subr.bf16.mxu0 0
    %14502 = vmatpush1.bf16.msra.mxu0 %v14469
    %14503 = vmatprep.subr.bf16.mxu0 0
    %14504 = vmatpush1.bf16.msra.mxu0 %v14470
    %14505 = vmatprep.subr.bf16.mxu0 0
    %14506 = vmatpush1.bf16.msra.mxu0 %v14471
    %14507 = vmatprep.subr.bf16.mxu0 0
    %14508 = vmatpush1.bf16.msra.mxu0 %v14472
    %14509 = vmatprep.subr.bf16.mxu0 0
    %14510 = vmatpush1.bf16.msra.mxu0 %v14473
    %14511 = vmatprep.subr.bf16.mxu0 0
    %14512 = vmatpush1.bf16.msra.mxu0 %v14474
    %14513 = vmatprep.subr.bf16.mxu0 0
    %14514 = vmatpush1.bf16.msra.mxu0 %v14475
    %14515 = vmatprep.subr.bf16.mxu0 0
    %14516 = vmatpush1.bf16.msra.mxu0 %v14476
    %14517 = vmatprep.subr.bf16.mxu0 0
    %14518 = vmatpush1.bf16.msra.mxu0 %v14477
    %14519 = vmatprep.subr.bf16.mxu0 0
    %14520 = vmatpush1.bf16.msra.mxu0 %v14478
    %14521 = vmatprep.subr.bf16.mxu0 0
    %14522 = vmatpush1.bf16.msra.mxu0 %v14479
    %14523 = vmatprep.subr.bf16.mxu0 0
    %14524 = vmatpush1.bf16.msra.mxu0 %v14480
    %14525 = vmatprep.subr.bf16.mxu0 0
    %14526 = vmatpush1.bf16.msra.mxu0 %v14481
    %14527 = vmatprep.subr.bf16.mxu0 0
    %14528 = vmatpush1.bf16.msra.mxu0 %v14482
    %14529 = vmatprep.subr.bf16.mxu0 0
    %14530 = vmatpush1.bf16.msra.mxu0 %v14483
    %14531 = vmatprep.subr.bf16.mxu0 0
    %14532 = vmatpush1.bf16.msra.mxu0 %v14484
    %14533 = vmatprep.mubr.bf16.mxu0 %v14365
    %14534 = vmatmul.mubr.bf16.gmra.mrb[0].mxu0 %v14364
    %v14535 = vpop.f32.mrb[0].mxu0
    %v14536 = vadd.f32 %v14403, %v14535
    %v14537 = vpop.f32.mrb[0].mxu0
    %v14538 = vpop.f32.mrb[0].mxu0
    %v14539 = vadd.f32 %v14403, %v14538
    %v14540 = vpop.f32.mrb[0].mxu0
    %14541 = vdwg.mxu0
    %v14542 = vxor.u32 %v14536, 2147483648
    %v14543 = vxor.u32 %v14539, 2147483648
    %v14544 = vmul.f32 %v14542, 1.442695
    %v14545 = vpow.pop %v14544
    %v14546 = vmul.f32 %v14543, 1.442695
    %v14547 = vpow.pop %v14546
    %v14548 = vadd.f32 %v14545, 1.0
    %v14549 = vadd.f32 %v14547, 1.0
    %v14550 = vrcp.pop %v14548
    %v14551 = vmul.f32 1.0, %v14550
    %v14552 = vrcp.pop %v14549
    %v14553 = vmul.f32 1.0, %v14552
    %14554 = vst [vmem:[%s10] sm:$0xff] %v14551
    %14555 = vst [vmem:[%s10 + $0x8] sm:$0xff] %v14553
    // Predicated region
    $region70: #{discriminator_forward.1} parent=1 // pred_check
      _
    $region71: #{discriminator_forward.1} parent=1 // pred_check_branch
      %14557 = sbr.rel (0) target = $region73
    $region72: #{discriminator_forward.1} parent=1 // pred_region
      _
    $region73: #{discriminator_forward.1} parent=1 // pred_fallthru
      _
    // Predicated region
    $region74: #{discriminator_forward.1} parent=1 // pred_check
      _
    $region75: #{discriminator_forward.1} parent=1 // pred_check_branch
      %14559 = sbr.rel (0) target = $region77
    $region76: #{discriminator_forward.1} parent=1 // pred_region
      _
    $region77: #{discriminator_forward.1} parent=1 // pred_fallthru
      _
    %14560 = vsyncpa [#allocation5], 1
    %14561 = vsyncpa [#allocation7], 1
    %14562 = vsyncpa [#allocation10], 1
    %14563 = vsyncpa [#allocation13], 1
    %14564 = vsyncpa [#allocation16], 1

</llo_original>
